<compile_context>
chip_gen: v6e
topology: v6e:2x2x1
jax: 0.10.0
libtpu: 0.0.40
codegen_flags: <defaults>
</compile_context>

<pallas_src>
import functools

import jax
import jax.numpy as jnp
from jax.experimental import pallas as pl
from jax.experimental.pallas import tpu as pltpu

NEG_SLOPE = 0.01   # F.leaky_relu default negative_slope
BN_EPS = 1e-5      # nn.BatchNorm2d default eps


# ----------------------------- Pallas kernel --------------------------------

def _fused_layer_kernel(p_ref, w_ref, b_ref, g_ref, be_ref, o_ref, pad_ref,
                        *, count):
    """leaky_relu -> conv (im2col matmul) -> +bias -> BatchNorm2d (training).

    p_ref  : (M, K)    bf16  im2col patches (pre-activation)
    w_ref  : (K, Cout) bf16  packed conv weight
    b_ref  : (1, Cout) f32   conv bias
    g_ref  : (1, Cout) f32   BN gamma
    be_ref : (1, Cout) f32   BN beta
    o_ref  : (M, Cout) f32   BN-normalized conv output
    pad_ref: (1, Cout) f32   BN value of a zero pixel (for the asym F.pad)

    count: elements per channel the BN statistics run over.  For the layers
    the reference follows with F.pad(...,(1,0,1,0)) before BN this is
    N*(Ho+1)*(Wo+1); the padded zeros add nothing to either sum, so only the
    divisor differs from M.
    """
    p = p_ref[...]
    p = jnp.where(p >= 0, p, NEG_SLOPE * p)                   # leaky_relu
    y = jnp.dot(p, w_ref[...], preferred_element_type=jnp.float32)
    y = y + b_ref[...]                                        # (M, Cout) f32

    inv_count = 1.0 / count
    s1 = jnp.sum(y, axis=0, keepdims=True)                    # single pass:
    s2 = jnp.sum(y * y, axis=0, keepdims=True)                # sum, sum of sq
    mean = s1 * inv_count
    var = jnp.maximum(s2 * inv_count - mean * mean, 0.0)      # biased var
    scale = jax.lax.rsqrt(var + BN_EPS) * g_ref[...]
    shift = be_ref[...] - mean * scale
    o_ref[...] = y * scale + shift
    pad_ref[...] = shift          # == (0 - mean) * inv_std * gamma + beta


def _full_spec(shape):
    # Whole-array single block; block_shape equals the full array dims, so no
    # (8,128) padding is needed and each layer is one VMEM-resident tile.
    return pl.BlockSpec(shape, lambda i: (0,) * len(shape))


_CPARAMS = pltpu.CompilerParams(dimension_semantics=("arbitrary",))


# ----------------------------- layer wrapper --------------------------------

def _extract_patches(x, kh, kw, stride, dilation, padding):
    """Zero-pad + gather dilated/strided conv patches. x: (N,H,W,C) NHWC."""
    x = jnp.pad(x, ((0, 0), (padding, padding), (padding, padding), (0, 0)))
    n, hp, wp, c = x.shape
    ho = (hp - dilation * (kh - 1) - 1) // stride + 1
    wo = (wp - dilation * (kw - 1) - 1) // stride + 1
    cols = []
    for i in range(kh):
        for j in range(kw):
            sl = x[:, i * dilation: i * dilation + (ho - 1) * stride + 1: stride,
                      j * dilation: j * dilation + (wo - 1) * stride + 1: stride, :]
            cols.append(sl)
    patches = jnp.concatenate(cols, axis=-1)        # (N, Ho, Wo, KH*KW*C)
    return patches, ho, wo


def fused_conv_bn(x, layer, *, stride, dilation, padding, asym_pad_after):
    """One reference layer: conv(leaky_relu(x)) [-> asym pad] -> BatchNorm."""
    wm, bias, gamma, beta = layer["wm"], layer["b"], layer["g"], layer["be"]
    cout, kh, kw = layer["cout"], layer["kh"], layer["kw"]

    n, _, _, cin = x.shape
    patches, ho, wo = _extract_patches(x, kh, kw, stride, dilation, padding)
    m = n * ho * wo
    k = kh * kw * cin
    assert wm.shape == (k, cout)
    p2 = patches.reshape(m, k).astype(jnp.bfloat16)      # bf16 MXU operand

    # BN statistics count: bn1/bn2 see the asymmetrically zero-padded tensor.
    count = float(n * (ho + 1) * (wo + 1)) if asym_pad_after else float(m)

    kernel = functools.partial(_fused_layer_kernel, count=count)
    out, pad_val = pl.pallas_call(
        kernel,
        grid=(1,),
        in_specs=[_full_spec((m, k)),
                  _full_spec((k, cout)),
                  _full_spec((1, cout)),
                  _full_spec((1, cout)),
                  _full_spec((1, cout))],
        out_specs=[_full_spec((m, cout)), _full_spec((1, cout))],
        out_shape=(jax.ShapeDtypeStruct((m, cout), jnp.float32),
                   jax.ShapeDtypeStruct((1, cout), jnp.float32)),
        compiler_params=_CPARAMS,
    )(p2, wm, bias, gamma, beta)

    y = out.reshape(n, ho, wo, cout)
    if asym_pad_after:
        # Rebuild F.pad(...,(1,0,1,0)) AFTER BN in one op: the padded pixels
        # hold BN(0) per channel, emitted by the kernel as `shift`.
        pv = pad_val[0]                                           # (cout,)
        full = jnp.broadcast_to(pv, (n, ho + 1, wo + 1, cout))
        y = jax.lax.dynamic_update_slice(full, y, (0, 1, 1, 0))
    return y


# ------------------------------ full forward --------------------------------

def dvae_encoder_forward(x_nchw, params):
    x = jnp.transpose(x_nchw.astype(jnp.float32), (0, 2, 3, 1))   # -> NHWC
    x = fused_conv_bn(x, params["l1"], stride=1, dilation=1, padding=2,
                      asym_pad_after=True)
    x = fused_conv_bn(x, params["l2"], stride=2, dilation=2, padding=3,
                      asym_pad_after=True)
    x = fused_conv_bn(x, params["l3"], stride=1, dilation=2, padding=5,
                      asym_pad_after=False)
    x = fused_conv_bn(x, params["l4"], stride=3, dilation=2, padding=0,
                      asym_pad_after=False)
    return jnp.transpose(x, (0, 3, 1, 2))                         # -> NCHW


# ------------------------------ parameters ----------------------------------

def _pack_layer(w, b, gamma, beta):
    """Pre-pack conv + BN params once at init: (KH*KW*Cin, Cout) bf16 weight
    matrix with rows ordered (kh, kw, cin) to match patch extraction."""
    cout, cin, kh, kw = w.shape
    k = kh * kw * cin
    wm = jnp.transpose(w, (2, 3, 1, 0)).reshape(k, cout).astype(jnp.bfloat16)
    return dict(wm=wm, b=b.reshape(1, cout), g=gamma.reshape(1, cout),
                be=beta.reshape(1, cout), cout=cout, kh=kh, kw=kw)


def init_params(key):
    def conv_init(k, cout, cin, kh, kw):
        k1, k2 = jax.random.split(k)
        fan_in = cin * kh * kw
        bound = 1.0 / (fan_in ** 0.5)              # PyTorch default conv init
        w = jax.random.uniform(k1, (cout, cin, kh, kw), jnp.float32, -bound, bound)
        b = jax.random.uniform(k2, (cout,), jnp.float32, -bound, bound)
        return w, b

    keys = jax.random.split(key, 4)
    cfg = [(8, 4, 6, 6), (16, 8, 5, 5), (16, 16, 6, 6), (16, 16, 5, 5)]
    packed, raw = {}, {}
    for idx, (cout, cin, kh, kw) in enumerate(cfg, start=1):
        w, b = conv_init(keys[idx - 1], cout, cin, kh, kw)
        gamma = jnp.ones((cout,), jnp.float32)      # BatchNorm2d defaults
        beta = jnp.zeros((cout,), jnp.float32)
        packed[f"l{idx}"] = _pack_layer(w, b, gamma, beta)
        raw[f"l{idx}"] = (w, b, gamma, beta)
    return packed, raw


# -------------------- pure-JAX f32 reference (validation) -------------------

def _reference_forward(x_nchw, raw):
    def conv(x, w, b, stride, dilation, padding):
        out = jax.lax.conv_general_dilated(
            x, w, window_strides=(stride, stride),
            padding=((padding, padding), (padding, padding)),
            rhs_dilation=(dilation, dilation),
            dimension_numbers=("NCHW", "OIHW", "NCHW"),
            precision=jax.lax.Precision.HIGHEST)
        return out + b[None, :, None, None]

    def bn(x, gamma, beta):
        mean = jnp.mean(x, axis=(0, 2, 3), keepdims=True)
        var = jnp.mean((x - mean) ** 2, axis=(0, 2, 3), keepdims=True)
        return ((x - mean) * jax.lax.rsqrt(var + BN_EPS)
                * gamma[None, :, None, None] + beta[None, :, None, None])

    lrelu = lambda v: jnp.where(v >= 0, v, NEG_SLOPE * v)
    asym_pad = lambda v: jnp.pad(v, ((0, 0), (0, 0), (1, 0), (1, 0)))

    x = x_nchw.astype(jnp.float32)
    w, b, g, be = raw["l1"]; x = bn(asym_pad(conv(lrelu(x), w, b, 1, 1, 2)), g, be)
    w, b, g, be = raw["l2"]; x = bn(asym_pad(conv(lrelu(x), w, b, 2, 2, 3)), g, be)
    w, b, g, be = raw["l3"]; x = bn(conv(lrelu(x), w, b, 1, 2, 5), g, be)
    w, b, g, be = raw["l4"]; x = bn(conv(lrelu(x), w, b, 3, 2, 0), g, be)
    return x


if __name__ == "__main__":
    key = jax.random.PRNGKey(0)
    pkey, xkey = jax.random.split(key)
    params, raw_params = init_params(pkey)

    # Small input; must be >= 18x18 spatially for conv4 to have a valid output.
    x = jax.random.normal(xkey, (2, 4, 32, 32), jnp.float32)      # NCHW

    fwd = jax.jit(functools.partial(dvae_encoder_forward, params=params))
    out = jax.block_until_ready(fwd(x))

    assert out.shape == (2, 16, 3, 3), out.shape
    assert out.dtype == jnp.float32
    assert bool(jnp.all(jnp.isfinite(out)))

    # Loose validation against an f32 XLA reference (kernel matmuls are bf16).
    ref = jax.block_until_ready(_reference_forward(x, raw_params))
    err = jnp.abs(out - ref)
    assert float(jnp.max(err)) < 0.5, ("max_err", float(jnp.max(err)))
    assert float(jnp.mean(err)) < 0.1, ("mean_err", float(jnp.mean(err)))
    print("KERNEL_OK")
</pallas_src>

<mosaic_0001>
module attributes {stable_mosaic.version = 11 : i64} {
  func.func @_fused_layer_kernel(%arg0: i32, %arg1: memref<1922x144xbf16, #tpu.memory_space<vmem>>, %arg2: memref<144x8xbf16, #tpu.memory_space<vmem>>, %arg3: memref<1x8xf32, #tpu.memory_space<vmem>>, %arg4: memref<1x8xf32, #tpu.memory_space<vmem>>, %arg5: memref<1x8xf32, #tpu.memory_space<vmem>>, %arg6: memref<1922x8xf32, #tpu.memory_space<vmem>>, %arg7: memref<1x8xf32, #tpu.memory_space<vmem>>) attributes {dimension_semantics = [#tpu.dimension_semantics<arbitrary>], iteration_bounds = array<i64: 1>, scalar_prefetch = 0 : i64, scratch_operands = 0 : i64, tpu.core_type = #tpu.core_type<tc>, window_params = [{pipeline_mode = #tpu.pipeline_mode<synchronous>, transform_indices = @transform_0, window_bounds = array<i64: 1922, 144>}, {pipeline_mode = #tpu.pipeline_mode<synchronous>, transform_indices = @transform_1, window_bounds = array<i64: 144, 8>}, {pipeline_mode = #tpu.pipeline_mode<synchronous>, transform_indices = @transform_2, window_bounds = array<i64: 1, 8>}, {pipeline_mode = #tpu.pipeline_mode<synchronous>, transform_indices = @transform_3, window_bounds = array<i64: 1, 8>}, {pipeline_mode = #tpu.pipeline_mode<synchronous>, transform_indices = @transform_4, window_bounds = array<i64: 1, 8>}, {pipeline_mode = #tpu.pipeline_mode<synchronous>, transform_indices = @transform_5, window_bounds = array<i64: 1922, 8>}, {pipeline_mode = #tpu.pipeline_mode<synchronous>, transform_indices = @transform_6, window_bounds = array<i64: 1, 8>}]} {
    %c0 = arith.constant 0 : index
    %c0_0 = arith.constant 0 : index
    %0 = vector.load %arg1[%c0, %c0_0] : memref<1922x144xbf16, #tpu.memory_space<vmem>>, vector<1922x144xbf16>
    %cst = arith.constant 0.000000e+00 : bf16
    %1 = vector.broadcast %cst : bf16 to vector<1922x144xbf16>
    %2 = arith.cmpf oge, %0, %1 : vector<1922x144xbf16>
    %cst_1 = arith.constant 1.000980e-02 : bf16
    %3 = vector.broadcast %cst_1 : bf16 to vector<1922x144xbf16>
    %4 = arith.mulf %3, %0 : vector<1922x144xbf16>
    %5 = arith.select %2, %0, %4 : vector<1922x144xi1>, vector<1922x144xbf16>
    %c0_2 = arith.constant 0 : index
    %c0_3 = arith.constant 0 : index
    %6 = vector.load %arg2[%c0_2, %c0_3] : memref<144x8xbf16, #tpu.memory_space<vmem>>, vector<144x8xbf16>
    %cst_4 = arith.constant dense<0.000000e+00> : vector<1922x8xf32>
    %7 = tpu.matmul %5, %6, %cst_4 {dimension_numbers = #tpu.dot_dimension_numbers<[1], [0], [0], [1], [0, 0, 1, 1], [], []>} : vector<1922x144xbf16>, vector<144x8xbf16>, vector<1922x8xf32> -> vector<1922x8xf32>
    %c0_5 = arith.constant 0 : index
    %c0_6 = arith.constant 0 : index
    %8 = vector.load %arg3[%c0_5, %c0_6] : memref<1x8xf32, #tpu.memory_space<vmem>>, vector<1x8xf32>
    %9 = vector.broadcast %8 : vector<1x8xf32> to vector<1922x8xf32>
    %10 = arith.addf %7, %9 : vector<1922x8xf32>
    %cst_7 = arith.constant dense<0.000000e+00> : vector<8xf32>
    %11 = vector.multi_reduction <add>, %10, %cst_7 [0] : vector<1922x8xf32> to vector<8xf32>
    %12 = vector.shape_cast %11 : vector<8xf32> to vector<1x8xf32>
    %13 = arith.mulf %10, %10 : vector<1922x8xf32>
    %cst_8 = arith.constant dense<0.000000e+00> : vector<8xf32>
    %14 = vector.multi_reduction <add>, %13, %cst_8 [0] : vector<1922x8xf32> to vector<8xf32>
    %15 = vector.shape_cast %14 : vector<8xf32> to vector<1x8xf32>
    %cst_9 = arith.constant 4.8828125E-4 : f32
    %16 = vector.broadcast %cst_9 : f32 to vector<1x8xf32>
    %17 = arith.mulf %12, %16 : vector<1x8xf32>
    %cst_10 = arith.constant 4.8828125E-4 : f32
    %18 = vector.broadcast %cst_10 : f32 to vector<1x8xf32>
    %19 = arith.mulf %15, %18 : vector<1x8xf32>
    %20 = arith.mulf %17, %17 : vector<1x8xf32>
    %21 = arith.subf %19, %20 : vector<1x8xf32>
    %cst_11 = arith.constant 0.000000e+00 : f32
    %22 = vector.broadcast %cst_11 : f32 to vector<1x8xf32>
    %23 = arith.maximumf %21, %22 : vector<1x8xf32>
    %cst_12 = arith.constant 9.99999974E-6 : f32
    %24 = vector.broadcast %cst_12 : f32 to vector<1x8xf32>
    %25 = arith.addf %23, %24 : vector<1x8xf32>
    %26 = math.rsqrt %25 : vector<1x8xf32>
    %c0_13 = arith.constant 0 : index
    %c0_14 = arith.constant 0 : index
    %27 = vector.load %arg4[%c0_13, %c0_14] : memref<1x8xf32, #tpu.memory_space<vmem>>, vector<1x8xf32>
    %28 = arith.mulf %26, %27 : vector<1x8xf32>
    %c0_15 = arith.constant 0 : index
    %c0_16 = arith.constant 0 : index
    %29 = vector.load %arg5[%c0_15, %c0_16] : memref<1x8xf32, #tpu.memory_space<vmem>>, vector<1x8xf32>
    %30 = arith.mulf %17, %28 : vector<1x8xf32>
    %31 = arith.subf %29, %30 : vector<1x8xf32>
    %32 = vector.broadcast %28 : vector<1x8xf32> to vector<1922x8xf32>
    %33 = arith.mulf %10, %32 : vector<1922x8xf32>
    %34 = vector.broadcast %31 : vector<1x8xf32> to vector<1922x8xf32>
    %35 = arith.addf %33, %34 : vector<1922x8xf32>
    %c0_17 = arith.constant 0 : index
    %c0_18 = arith.constant 0 : index
    %36 = vector.load %arg6[%c0_17, %c0_18] : memref<1922x8xf32, #tpu.memory_space<vmem>>, vector<1922x8xf32>
    tpu.vector_store %arg6[%c0_17, %c0_18], %35 {strides = array<i32>} : memref<1922x8xf32, #tpu.memory_space<vmem>>, vector<1922x8xf32>,
    %c0_19 = arith.constant 0 : index
    %c0_20 = arith.constant 0 : index
    %37 = vector.load %arg7[%c0_19, %c0_20] : memref<1x8xf32, #tpu.memory_space<vmem>>, vector<1x8xf32>
    tpu.vector_store %arg7[%c0_19, %c0_20], %31 {strides = array<i32>} : memref<1x8xf32, #tpu.memory_space<vmem>>, vector<1x8xf32>,
    return
  }
  func.func @transform_0(%arg0: i32) -> (i32, i32) {
    %c0_i32 = arith.constant 0 : i32
    %c0_i32_0 = arith.constant 0 : i32
    %c0_i32_1 = arith.constant 0 : i32
    return %c0_i32, %c0_i32_0 : i32, i32
  }
  func.func @transform_1(%arg0: i32) -> (i32, i32) {
    %c0_i32 = arith.constant 0 : i32
    %c0_i32_0 = arith.constant 0 : i32
    %c0_i32_1 = arith.constant 0 : i32
    return %c0_i32, %c0_i32_0 : i32, i32
  }
  func.func @transform_2(%arg0: i32) -> (i32, i32) {
    %c0_i32 = arith.constant 0 : i32
    %c0_i32_0 = arith.constant 0 : i32
    %c0_i32_1 = arith.constant 0 : i32
    return %c0_i32, %c0_i32_0 : i32, i32
  }
  func.func @transform_3(%arg0: i32) -> (i32, i32) {
    %c0_i32 = arith.constant 0 : i32
    %c0_i32_0 = arith.constant 0 : i32
    %c0_i32_1 = arith.constant 0 : i32
    return %c0_i32, %c0_i32_0 : i32, i32
  }
  func.func @transform_4(%arg0: i32) -> (i32, i32) {
    %c0_i32 = arith.constant 0 : i32
    %c0_i32_0 = arith.constant 0 : i32
    %c0_i32_1 = arith.constant 0 : i32
    return %c0_i32, %c0_i32_0 : i32, i32
  }
  func.func @transform_5(%arg0: i32) -> (i32, i32) {
    %c0_i32 = arith.constant 0 : i32
    %c0_i32_0 = arith.constant 0 : i32
    %c0_i32_1 = arith.constant 0 : i32
    return %c0_i32, %c0_i32_0 : i32, i32
  }
  func.func @transform_6(%arg0: i32) -> (i32, i32) {
    %c0_i32 = arith.constant 0 : i32
    %c0_i32_0 = arith.constant 0 : i32
    %c0_i32_1 = arith.constant 0 : i32
    return %c0_i32, %c0_i32_0 : i32, i32
  }
}

module attributes {stable_mosaic.version = 11 : i64} {
  func.func @_fused_layer_kernel(%arg0: i32, %arg1: memref<450x200xbf16, #tpu.memory_space<vmem>>, %arg2: memref<200x16xbf16, #tpu.memory_space<vmem>>, %arg3: memref<1x16xf32, #tpu.memory_space<vmem>>, %arg4: memref<1x16xf32, #tpu.memory_space<vmem>>, %arg5: memref<1x16xf32, #tpu.memory_space<vmem>>, %arg6: memref<450x16xf32, #tpu.memory_space<vmem>>, %arg7: memref<1x16xf32, #tpu.memory_space<vmem>>) attributes {dimension_semantics = [#tpu.dimension_semantics<arbitrary>], iteration_bounds = array<i64: 1>, scalar_prefetch = 0 : i64, scratch_operands = 0 : i64, tpu.core_type = #tpu.core_type<tc>, window_params = [{pipeline_mode = #tpu.pipeline_mode<synchronous>, transform_indices = @transform_0, window_bounds = array<i64: 450, 200>}, {pipeline_mode = #tpu.pipeline_mode<synchronous>, transform_indices = @transform_1, window_bounds = array<i64: 200, 16>}, {pipeline_mode = #tpu.pipeline_mode<synchronous>, transform_indices = @transform_2, window_bounds = array<i64: 1, 16>}, {pipeline_mode = #tpu.pipeline_mode<synchronous>, transform_indices = @transform_3, window_bounds = array<i64: 1, 16>}, {pipeline_mode = #tpu.pipeline_mode<synchronous>, transform_indices = @transform_4, window_bounds = array<i64: 1, 16>}, {pipeline_mode = #tpu.pipeline_mode<synchronous>, transform_indices = @transform_5, window_bounds = array<i64: 450, 16>}, {pipeline_mode = #tpu.pipeline_mode<synchronous>, transform_indices = @transform_6, window_bounds = array<i64: 1, 16>}]} {
    %c0 = arith.constant 0 : index
    %c0_0 = arith.constant 0 : index
    %0 = vector.load %arg1[%c0, %c0_0] : memref<450x200xbf16, #tpu.memory_space<vmem>>, vector<450x200xbf16>
    %cst = arith.constant 0.000000e+00 : bf16
    %1 = vector.broadcast %cst : bf16 to vector<450x200xbf16>
    %2 = arith.cmpf oge, %0, %1 : vector<450x200xbf16>
    %cst_1 = arith.constant 1.000980e-02 : bf16
    %3 = vector.broadcast %cst_1 : bf16 to vector<450x200xbf16>
    %4 = arith.mulf %3, %0 : vector<450x200xbf16>
    %5 = arith.select %2, %0, %4 : vector<450x200xi1>, vector<450x200xbf16>
    %c0_2 = arith.constant 0 : index
    %c0_3 = arith.constant 0 : index
    %6 = vector.load %arg2[%c0_2, %c0_3] : memref<200x16xbf16, #tpu.memory_space<vmem>>, vector<200x16xbf16>
    %cst_4 = arith.constant dense<0.000000e+00> : vector<450x16xf32>
    %7 = tpu.matmul %5, %6, %cst_4 {dimension_numbers = #tpu.dot_dimension_numbers<[1], [0], [0], [1], [0, 0, 1, 1], [], []>} : vector<450x200xbf16>, vector<200x16xbf16>, vector<450x16xf32> -> vector<450x16xf32>
    %c0_5 = arith.constant 0 : index
    %c0_6 = arith.constant 0 : index
    %8 = vector.load %arg3[%c0_5, %c0_6] : memref<1x16xf32, #tpu.memory_space<vmem>>, vector<1x16xf32>
    %9 = vector.broadcast %8 : vector<1x16xf32> to vector<450x16xf32>
    %10 = arith.addf %7, %9 : vector<450x16xf32>
    %cst_7 = arith.constant dense<0.000000e+00> : vector<16xf32>
    %11 = vector.multi_reduction <add>, %10, %cst_7 [0] : vector<450x16xf32> to vector<16xf32>
    %12 = vector.shape_cast %11 : vector<16xf32> to vector<1x16xf32>
    %13 = arith.mulf %10, %10 : vector<450x16xf32>
    %cst_8 = arith.constant dense<0.000000e+00> : vector<16xf32>
    %14 = vector.multi_reduction <add>, %13, %cst_8 [0] : vector<450x16xf32> to vector<16xf32>
    %15 = vector.shape_cast %14 : vector<16xf32> to vector<1x16xf32>
    %cst_9 = arith.constant 0.001953125 : f32
    %16 = vector.broadcast %cst_9 : f32 to vector<1x16xf32>
    %17 = arith.mulf %12, %16 : vector<1x16xf32>
    %cst_10 = arith.constant 0.001953125 : f32
    %18 = vector.broadcast %cst_10 : f32 to vector<1x16xf32>
    %19 = arith.mulf %15, %18 : vector<1x16xf32>
    %20 = arith.mulf %17, %17 : vector<1x16xf32>
    %21 = arith.subf %19, %20 : vector<1x16xf32>
    %cst_11 = arith.constant 0.000000e+00 : f32
    %22 = vector.broadcast %cst_11 : f32 to vector<1x16xf32>
    %23 = arith.maximumf %21, %22 : vector<1x16xf32>
    %cst_12 = arith.constant 9.99999974E-6 : f32
    %24 = vector.broadcast %cst_12 : f32 to vector<1x16xf32>
    %25 = arith.addf %23, %24 : vector<1x16xf32>
    %26 = math.rsqrt %25 : vector<1x16xf32>
    %c0_13 = arith.constant 0 : index
    %c0_14 = arith.constant 0 : index
    %27 = vector.load %arg4[%c0_13, %c0_14] : memref<1x16xf32, #tpu.memory_space<vmem>>, vector<1x16xf32>
    %28 = arith.mulf %26, %27 : vector<1x16xf32>
    %c0_15 = arith.constant 0 : index
    %c0_16 = arith.constant 0 : index
    %29 = vector.load %arg5[%c0_15, %c0_16] : memref<1x16xf32, #tpu.memory_space<vmem>>, vector<1x16xf32>
    %30 = arith.mulf %17, %28 : vector<1x16xf32>
    %31 = arith.subf %29, %30 : vector<1x16xf32>
    %32 = vector.broadcast %28 : vector<1x16xf32> to vector<450x16xf32>
    %33 = arith.mulf %10, %32 : vector<450x16xf32>
    %34 = vector.broadcast %31 : vector<1x16xf32> to vector<450x16xf32>
    %35 = arith.addf %33, %34 : vector<450x16xf32>
    %c0_17 = arith.constant 0 : index
    %c0_18 = arith.constant 0 : index
    %36 = vector.load %arg6[%c0_17, %c0_18] : memref<450x16xf32, #tpu.memory_space<vmem>>, vector<450x16xf32>
    tpu.vector_store %arg6[%c0_17, %c0_18], %35 {strides = array<i32>} : memref<450x16xf32, #tpu.memory_space<vmem>>, vector<450x16xf32>,
    %c0_19 = arith.constant 0 : index
    %c0_20 = arith.constant 0 : index
    %37 = vector.load %arg7[%c0_19, %c0_20] : memref<1x16xf32, #tpu.memory_space<vmem>>, vector<1x16xf32>
    tpu.vector_store %arg7[%c0_19, %c0_20], %31 {strides = array<i32>} : memref<1x16xf32, #tpu.memory_space<vmem>>, vector<1x16xf32>,
    return
  }
  func.func @transform_0(%arg0: i32) -> (i32, i32) {
    %c0_i32 = arith.constant 0 : i32
    %c0_i32_0 = arith.constant 0 : i32
    %c0_i32_1 = arith.constant 0 : i32
    return %c0_i32, %c0_i32_0 : i32, i32
  }
  func.func @transform_1(%arg0: i32) -> (i32, i32) {
    %c0_i32 = arith.constant 0 : i32
    %c0_i32_0 = arith.constant 0 : i32
    %c0_i32_1 = arith.constant 0 : i32
    return %c0_i32, %c0_i32_0 : i32, i32
  }
  func.func @transform_2(%arg0: i32) -> (i32, i32) {
    %c0_i32 = arith.constant 0 : i32
    %c0_i32_0 = arith.constant 0 : i32
    %c0_i32_1 = arith.constant 0 : i32
    return %c0_i32, %c0_i32_0 : i32, i32
  }
  func.func @transform_3(%arg0: i32) -> (i32, i32) {
    %c0_i32 = arith.constant 0 : i32
    %c0_i32_0 = arith.constant 0 : i32
    %c0_i32_1 = arith.constant 0 : i32
    return %c0_i32, %c0_i32_0 : i32, i32
  }
  func.func @transform_4(%arg0: i32) -> (i32, i32) {
    %c0_i32 = arith.constant 0 : i32
    %c0_i32_0 = arith.constant 0 : i32
    %c0_i32_1 = arith.constant 0 : i32
    return %c0_i32, %c0_i32_0 : i32, i32
  }
  func.func @transform_5(%arg0: i32) -> (i32, i32) {
    %c0_i32 = arith.constant 0 : i32
    %c0_i32_0 = arith.constant 0 : i32
    %c0_i32_1 = arith.constant 0 : i32
    return %c0_i32, %c0_i32_0 : i32, i32
  }
  func.func @transform_6(%arg0: i32) -> (i32, i32) {
    %c0_i32 = arith.constant 0 : i32
    %c0_i32_0 = arith.constant 0 : i32
    %c0_i32_1 = arith.constant 0 : i32
    return %c0_i32, %c0_i32_0 : i32, i32
  }
}

module attributes {stable_mosaic.version = 11 : i64} {
  func.func @_fused_layer_kernel(%arg0: i32, %arg1: memref<512x576xbf16, #tpu.memory_space<vmem>>, %arg2: memref<576x16xbf16, #tpu.memory_space<vmem>>, %arg3: memref<1x16xf32, #tpu.memory_space<vmem>>, %arg4: memref<1x16xf32, #tpu.memory_space<vmem>>, %arg5: memref<1x16xf32, #tpu.memory_space<vmem>>, %arg6: memref<512x16xf32, #tpu.memory_space<vmem>>, %arg7: memref<1x16xf32, #tpu.memory_space<vmem>>) attributes {dimension_semantics = [#tpu.dimension_semantics<arbitrary>], iteration_bounds = array<i64: 1>, scalar_prefetch = 0 : i64, scratch_operands = 0 : i64, tpu.core_type = #tpu.core_type<tc>, window_params = [{pipeline_mode = #tpu.pipeline_mode<synchronous>, transform_indices = @transform_0, window_bounds = array<i64: 512, 576>}, {pipeline_mode = #tpu.pipeline_mode<synchronous>, transform_indices = @transform_1, window_bounds = array<i64: 576, 16>}, {pipeline_mode = #tpu.pipeline_mode<synchronous>, transform_indices = @transform_2, window_bounds = array<i64: 1, 16>}, {pipeline_mode = #tpu.pipeline_mode<synchronous>, transform_indices = @transform_3, window_bounds = array<i64: 1, 16>}, {pipeline_mode = #tpu.pipeline_mode<synchronous>, transform_indices = @transform_4, window_bounds = array<i64: 1, 16>}, {pipeline_mode = #tpu.pipeline_mode<synchronous>, transform_indices = @transform_5, window_bounds = array<i64: 512, 16>}, {pipeline_mode = #tpu.pipeline_mode<synchronous>, transform_indices = @transform_6, window_bounds = array<i64: 1, 16>}]} {
    %c0 = arith.constant 0 : index
    %c0_0 = arith.constant 0 : index
    %0 = vector.load %arg1[%c0, %c0_0] : memref<512x576xbf16, #tpu.memory_space<vmem>>, vector<512x576xbf16>
    %cst = arith.constant 0.000000e+00 : bf16
    %1 = vector.broadcast %cst : bf16 to vector<512x576xbf16>
    %2 = arith.cmpf oge, %0, %1 : vector<512x576xbf16>
    %cst_1 = arith.constant 1.000980e-02 : bf16
    %3 = vector.broadcast %cst_1 : bf16 to vector<512x576xbf16>
    %4 = arith.mulf %3, %0 : vector<512x576xbf16>
    %5 = arith.select %2, %0, %4 : vector<512x576xi1>, vector<512x576xbf16>
    %c0_2 = arith.constant 0 : index
    %c0_3 = arith.constant 0 : index
    %6 = vector.load %arg2[%c0_2, %c0_3] : memref<576x16xbf16, #tpu.memory_space<vmem>>, vector<576x16xbf16>
    %cst_4 = arith.constant dense<0.000000e+00> : vector<512x16xf32>
    %7 = tpu.matmul %5, %6, %cst_4 {dimension_numbers = #tpu.dot_dimension_numbers<[1], [0], [0], [1], [0, 0, 1, 1], [], []>} : vector<512x576xbf16>, vector<576x16xbf16>, vector<512x16xf32> -> vector<512x16xf32>
    %c0_5 = arith.constant 0 : index
    %c0_6 = arith.constant 0 : index
    %8 = vector.load %arg3[%c0_5, %c0_6] : memref<1x16xf32, #tpu.memory_space<vmem>>, vector<1x16xf32>
    %9 = vector.broadcast %8 : vector<1x16xf32> to vector<512x16xf32>
    %10 = arith.addf %7, %9 : vector<512x16xf32>
    %cst_7 = arith.constant dense<0.000000e+00> : vector<16xf32>
    %11 = vector.multi_reduction <add>, %10, %cst_7 [0] : vector<512x16xf32> to vector<16xf32>
    %12 = vector.shape_cast %11 : vector<16xf32> to vector<1x16xf32>
    %13 = arith.mulf %10, %10 : vector<512x16xf32>
    %cst_8 = arith.constant dense<0.000000e+00> : vector<16xf32>
    %14 = vector.multi_reduction <add>, %13, %cst_8 [0] : vector<512x16xf32> to vector<16xf32>
    %15 = vector.shape_cast %14 : vector<16xf32> to vector<1x16xf32>
    %cst_9 = arith.constant 0.001953125 : f32
    %16 = vector.broadcast %cst_9 : f32 to vector<1x16xf32>
    %17 = arith.mulf %12, %16 : vector<1x16xf32>
    %cst_10 = arith.constant 0.001953125 : f32
    %18 = vector.broadcast %cst_10 : f32 to vector<1x16xf32>
    %19 = arith.mulf %15, %18 : vector<1x16xf32>
    %20 = arith.mulf %17, %17 : vector<1x16xf32>
    %21 = arith.subf %19, %20 : vector<1x16xf32>
    %cst_11 = arith.constant 0.000000e+00 : f32
    %22 = vector.broadcast %cst_11 : f32 to vector<1x16xf32>
    %23 = arith.maximumf %21, %22 : vector<1x16xf32>
    %cst_12 = arith.constant 9.99999974E-6 : f32
    %24 = vector.broadcast %cst_12 : f32 to vector<1x16xf32>
    %25 = arith.addf %23, %24 : vector<1x16xf32>
    %26 = math.rsqrt %25 : vector<1x16xf32>
    %c0_13 = arith.constant 0 : index
    %c0_14 = arith.constant 0 : index
    %27 = vector.load %arg4[%c0_13, %c0_14] : memref<1x16xf32, #tpu.memory_space<vmem>>, vector<1x16xf32>
    %28 = arith.mulf %26, %27 : vector<1x16xf32>
    %c0_15 = arith.constant 0 : index
    %c0_16 = arith.constant 0 : index
    %29 = vector.load %arg5[%c0_15, %c0_16] : memref<1x16xf32, #tpu.memory_space<vmem>>, vector<1x16xf32>
    %30 = arith.mulf %17, %28 : vector<1x16xf32>
    %31 = arith.subf %29, %30 : vector<1x16xf32>
    %32 = vector.broadcast %28 : vector<1x16xf32> to vector<512x16xf32>
    %33 = arith.mulf %10, %32 : vector<512x16xf32>
    %34 = vector.broadcast %31 : vector<1x16xf32> to vector<512x16xf32>
    %35 = arith.addf %33, %34 : vector<512x16xf32>
    %c0_17 = arith.constant 0 : index
    %c0_18 = arith.constant 0 : index
    %36 = vector.load %arg6[%c0_17, %c0_18] : memref<512x16xf32, #tpu.memory_space<vmem>>, vector<512x16xf32>
    tpu.vector_store %arg6[%c0_17, %c0_18], %35 {strides = array<i32>} : memref<512x16xf32, #tpu.memory_space<vmem>>, vector<512x16xf32>,
    %c0_19 = arith.constant 0 : index
    %c0_20 = arith.constant 0 : index
    %37 = vector.load %arg7[%c0_19, %c0_20] : memref<1x16xf32, #tpu.memory_space<vmem>>, vector<1x16xf32>
    tpu.vector_store %arg7[%c0_19, %c0_20], %31 {strides = array<i32>} : memref<1x16xf32, #tpu.memory_space<vmem>>, vector<1x16xf32>,
    return
  }
  func.func @transform_0(%arg0: i32) -> (i32, i32) {
    %c0_i32 = arith.constant 0 : i32
    %c0_i32_0 = arith.constant 0 : i32
    %c0_i32_1 = arith.constant 0 : i32
    return %c0_i32, %c0_i32_0 : i32, i32
  }
  func.func @transform_1(%arg0: i32) -> (i32, i32) {
    %c0_i32 = arith.constant 0 : i32
    %c0_i32_0 = arith.constant 0 : i32
    %c0_i32_1 = arith.constant 0 : i32
    return %c0_i32, %c0_i32_0 : i32, i32
  }
  func.func @transform_2(%arg0: i32) -> (i32, i32) {
    %c0_i32 = arith.constant 0 : i32
    %c0_i32_0 = arith.constant 0 : i32
    %c0_i32_1 = arith.constant 0 : i32
    return %c0_i32, %c0_i32_0 : i32, i32
  }
  func.func @transform_3(%arg0: i32) -> (i32, i32) {
    %c0_i32 = arith.constant 0 : i32
    %c0_i32_0 = arith.constant 0 : i32
    %c0_i32_1 = arith.constant 0 : i32
    return %c0_i32, %c0_i32_0 : i32, i32
  }
  func.func @transform_4(%arg0: i32) -> (i32, i32) {
    %c0_i32 = arith.constant 0 : i32
    %c0_i32_0 = arith.constant 0 : i32
    %c0_i32_1 = arith.constant 0 : i32
    return %c0_i32, %c0_i32_0 : i32, i32
  }
  func.func @transform_5(%arg0: i32) -> (i32, i32) {
    %c0_i32 = arith.constant 0 : i32
    %c0_i32_0 = arith.constant 0 : i32
    %c0_i32_1 = arith.constant 0 : i32
    return %c0_i32, %c0_i32_0 : i32, i32
  }
  func.func @transform_6(%arg0: i32) -> (i32, i32) {
    %c0_i32 = arith.constant 0 : i32
    %c0_i32_0 = arith.constant 0 : i32
    %c0_i32_1 = arith.constant 0 : i32
    return %c0_i32, %c0_i32_0 : i32, i32
  }
}

module attributes {stable_mosaic.version = 11 : i64} {
  func.func @_fused_layer_kernel(%arg0: i32, %arg1: memref<18x400xbf16, #tpu.memory_space<vmem>>, %arg2: memref<400x16xbf16, #tpu.memory_space<vmem>>, %arg3: memref<1x16xf32, #tpu.memory_space<vmem>>, %arg4: memref<1x16xf32, #tpu.memory_space<vmem>>, %arg5: memref<1x16xf32, #tpu.memory_space<vmem>>, %arg6: memref<18x16xf32, #tpu.memory_space<vmem>>, %arg7: memref<1x16xf32, #tpu.memory_space<vmem>>) attributes {dimension_semantics = [#tpu.dimension_semantics<arbitrary>], iteration_bounds = array<i64: 1>, scalar_prefetch = 0 : i64, scratch_operands = 0 : i64, tpu.core_type = #tpu.core_type<tc>, window_params = [{pipeline_mode = #tpu.pipeline_mode<synchronous>, transform_indices = @transform_0, window_bounds = array<i64: 18, 400>}, {pipeline_mode = #tpu.pipeline_mode<synchronous>, transform_indices = @transform_1, window_bounds = array<i64: 400, 16>}, {pipeline_mode = #tpu.pipeline_mode<synchronous>, transform_indices = @transform_2, window_bounds = array<i64: 1, 16>}, {pipeline_mode = #tpu.pipeline_mode<synchronous>, transform_indices = @transform_3, window_bounds = array<i64: 1, 16>}, {pipeline_mode = #tpu.pipeline_mode<synchronous>, transform_indices = @transform_4, window_bounds = array<i64: 1, 16>}, {pipeline_mode = #tpu.pipeline_mode<synchronous>, transform_indices = @transform_5, window_bounds = array<i64: 18, 16>}, {pipeline_mode = #tpu.pipeline_mode<synchronous>, transform_indices = @transform_6, window_bounds = array<i64: 1, 16>}]} {
    %c0 = arith.constant 0 : index
    %c0_0 = arith.constant 0 : index
    %0 = vector.load %arg1[%c0, %c0_0] : memref<18x400xbf16, #tpu.memory_space<vmem>>, vector<18x400xbf16>
    %cst = arith.constant 0.000000e+00 : bf16
    %1 = vector.broadcast %cst : bf16 to vector<18x400xbf16>
    %2 = arith.cmpf oge, %0, %1 : vector<18x400xbf16>
    %cst_1 = arith.constant 1.000980e-02 : bf16
    %3 = vector.broadcast %cst_1 : bf16 to vector<18x400xbf16>
    %4 = arith.mulf %3, %0 : vector<18x400xbf16>
    %5 = arith.select %2, %0, %4 : vector<18x400xi1>, vector<18x400xbf16>
    %c0_2 = arith.constant 0 : index
    %c0_3 = arith.constant 0 : index
    %6 = vector.load %arg2[%c0_2, %c0_3] : memref<400x16xbf16, #tpu.memory_space<vmem>>, vector<400x16xbf16>
    %cst_4 = arith.constant dense<0.000000e+00> : vector<18x16xf32>
    %7 = tpu.matmul %5, %6, %cst_4 {dimension_numbers = #tpu.dot_dimension_numbers<[1], [0], [0], [1], [0, 0, 1, 1], [], []>} : vector<18x400xbf16>, vector<400x16xbf16>, vector<18x16xf32> -> vector<18x16xf32>
    %c0_5 = arith.constant 0 : index
    %c0_6 = arith.constant 0 : index
    %8 = vector.load %arg3[%c0_5, %c0_6] : memref<1x16xf32, #tpu.memory_space<vmem>>, vector<1x16xf32>
    %9 = vector.broadcast %8 : vector<1x16xf32> to vector<18x16xf32>
    %10 = arith.addf %7, %9 : vector<18x16xf32>
    %cst_7 = arith.constant dense<0.000000e+00> : vector<16xf32>
    %11 = vector.multi_reduction <add>, %10, %cst_7 [0] : vector<18x16xf32> to vector<16xf32>
    %12 = vector.shape_cast %11 : vector<16xf32> to vector<1x16xf32>
    %13 = arith.mulf %10, %10 : vector<18x16xf32>
    %cst_8 = arith.constant dense<0.000000e+00> : vector<16xf32>
    %14 = vector.multi_reduction <add>, %13, %cst_8 [0] : vector<18x16xf32> to vector<16xf32>
    %15 = vector.shape_cast %14 : vector<16xf32> to vector<1x16xf32>
    %cst_9 = arith.constant 0.055555556 : f32
    %16 = vector.broadcast %cst_9 : f32 to vector<1x16xf32>
    %17 = arith.mulf %12, %16 : vector<1x16xf32>
    %cst_10 = arith.constant 0.055555556 : f32
    %18 = vector.broadcast %cst_10 : f32 to vector<1x16xf32>
    %19 = arith.mulf %15, %18 : vector<1x16xf32>
    %20 = arith.mulf %17, %17 : vector<1x16xf32>
    %21 = arith.subf %19, %20 : vector<1x16xf32>
    %cst_11 = arith.constant 0.000000e+00 : f32
    %22 = vector.broadcast %cst_11 : f32 to vector<1x16xf32>
    %23 = arith.maximumf %21, %22 : vector<1x16xf32>
    %cst_12 = arith.constant 9.99999974E-6 : f32
    %24 = vector.broadcast %cst_12 : f32 to vector<1x16xf32>
    %25 = arith.addf %23, %24 : vector<1x16xf32>
    %26 = math.rsqrt %25 : vector<1x16xf32>
    %c0_13 = arith.constant 0 : index
    %c0_14 = arith.constant 0 : index
    %27 = vector.load %arg4[%c0_13, %c0_14] : memref<1x16xf32, #tpu.memory_space<vmem>>, vector<1x16xf32>
    %28 = arith.mulf %26, %27 : vector<1x16xf32>
    %c0_15 = arith.constant 0 : index
    %c0_16 = arith.constant 0 : index
    %29 = vector.load %arg5[%c0_15, %c0_16] : memref<1x16xf32, #tpu.memory_space<vmem>>, vector<1x16xf32>
    %30 = arith.mulf %17, %28 : vector<1x16xf32>
    %31 = arith.subf %29, %30 : vector<1x16xf32>
    %32 = vector.broadcast %28 : vector<1x16xf32> to vector<18x16xf32>
    %33 = arith.mulf %10, %32 : vector<18x16xf32>
    %34 = vector.broadcast %31 : vector<1x16xf32> to vector<18x16xf32>
    %35 = arith.addf %33, %34 : vector<18x16xf32>
    %c0_17 = arith.constant 0 : index
    %c0_18 = arith.constant 0 : index
    %36 = vector.load %arg6[%c0_17, %c0_18] : memref<18x16xf32, #tpu.memory_space<vmem>>, vector<18x16xf32>
    tpu.vector_store %arg6[%c0_17, %c0_18], %35 {strides = array<i32>} : memref<18x16xf32, #tpu.memory_space<vmem>>, vector<18x16xf32>,
    %c0_19 = arith.constant 0 : index
    %c0_20 = arith.constant 0 : index
    %37 = vector.load %arg7[%c0_19, %c0_20] : memref<1x16xf32, #tpu.memory_space<vmem>>, vector<1x16xf32>
    tpu.vector_store %arg7[%c0_19, %c0_20], %31 {strides = array<i32>} : memref<1x16xf32, #tpu.memory_space<vmem>>, vector<1x16xf32>,
    return
  }
  func.func @transform_0(%arg0: i32) -> (i32, i32) {
    %c0_i32 = arith.constant 0 : i32
    %c0_i32_0 = arith.constant 0 : i32
    %c0_i32_1 = arith.constant 0 : i32
    return %c0_i32, %c0_i32_0 : i32, i32
  }
  func.func @transform_1(%arg0: i32) -> (i32, i32) {
    %c0_i32 = arith.constant 0 : i32
    %c0_i32_0 = arith.constant 0 : i32
    %c0_i32_1 = arith.constant 0 : i32
    return %c0_i32, %c0_i32_0 : i32, i32
  }
  func.func @transform_2(%arg0: i32) -> (i32, i32) {
    %c0_i32 = arith.constant 0 : i32
    %c0_i32_0 = arith.constant 0 : i32
    %c0_i32_1 = arith.constant 0 : i32
    return %c0_i32, %c0_i32_0 : i32, i32
  }
  func.func @transform_3(%arg0: i32) -> (i32, i32) {
    %c0_i32 = arith.constant 0 : i32
    %c0_i32_0 = arith.constant 0 : i32
    %c0_i32_1 = arith.constant 0 : i32
    return %c0_i32, %c0_i32_0 : i32, i32
  }
  func.func @transform_4(%arg0: i32) -> (i32, i32) {
    %c0_i32 = arith.constant 0 : i32
    %c0_i32_0 = arith.constant 0 : i32
    %c0_i32_1 = arith.constant 0 : i32
    return %c0_i32, %c0_i32_0 : i32, i32
  }
  func.func @transform_5(%arg0: i32) -> (i32, i32) {
    %c0_i32 = arith.constant 0 : i32
    %c0_i32_0 = arith.constant 0 : i32
    %c0_i32_1 = arith.constant 0 : i32
    return %c0_i32, %c0_i32_0 : i32, i32
  }
  func.func @transform_6(%arg0: i32) -> (i32, i32) {
    %c0_i32 = arith.constant 0 : i32
    %c0_i32_0 = arith.constant 0 : i32
    %c0_i32_1 = arith.constant 0 : i32
    return %c0_i32, %c0_i32_0 : i32, i32
  }
}

</mosaic_0001>

<llo_original>
// kernel: dvae_encoder_forward.4
$region0: #{dvae_encoder_forward.4}
  #allocation0 [shape = 'u32[]', space=smem, size = 0x4, offset = 0x4, fixed_abs, tag = 'smem constant byte address 0x4 - core index']
  #allocation1 [shape = 'u32[144,128]{1,0:T(1,128)}', space=vmem, size = 0x12000, scoped, tag = 'internal scratch']
  %s0 = inlined_call_operand.vmem [shape: bf16[1922,144], index: 0, kind: input, shape index: {}]
  %s1 = inlined_call_operand.vmem [shape: bf16[144,8], index: 1, kind: input, shape index: {}]
  %s2 = inlined_call_operand.vmem [shape: f32[1,8], index: 2, kind: input, shape index: {}]
  %s3 = inlined_call_operand.vmem [shape: f32[1,8], index: 3, kind: input, shape index: {}]
  %s4 = inlined_call_operand.vmem [shape: f32[1,8], index: 4, kind: input, shape index: {}]
  %s5 = inlined_call_operand.vmem [shape: f32[1922,8], index: 5, kind: output, shape index: {0}]
  %s6 = inlined_call_operand.vmem [shape: f32[1,8], index: 6, kind: output, shape index: {1}]
  %7 = xla_tuple %s5, %s6
  %s8 = sld [smem:[#allocation0]]
  $region38: #{dvae_encoder_forward.4} parent=0
    _
  %s10 = ssub.s32 1, %s8
  %s11 = scalar_select 0, %s10, %s8
  // Predicated region
  $region2: #{dvae_encoder_forward.4} parent=0 // pred_check
    _
  $region3: #{dvae_encoder_forward.4} parent=0 // pred_check_branch
    %13 = sbr.rel (0) target = $region5
  $region4: #{dvae_encoder_forward.4} parent=0 // pred_region
    _
  $region5: #{dvae_encoder_forward.4} parent=0 // pred_fallthru
    _
  // Predicated region
  $region6: #{dvae_encoder_forward.4} parent=0 // pred_check
    _
  $region7: #{dvae_encoder_forward.4} parent=0 // pred_check_branch
    %15 = sbr.rel (0) target = $region9
  $region8: #{dvae_encoder_forward.4} parent=0 // pred_region
    _
  $region9: #{dvae_encoder_forward.4} parent=0 // pred_fallthru
    _
  // Predicated region
  $region10: #{dvae_encoder_forward.4} parent=0 // pred_check
    _
  $region11: #{dvae_encoder_forward.4} parent=0 // pred_check_branch
    %17 = sbr.rel (0) target = $region13
  $region12: #{dvae_encoder_forward.4} parent=0 // pred_region
    _
  $region13: #{dvae_encoder_forward.4} parent=0 // pred_fallthru
    _
  // Predicated region
  $region14: #{dvae_encoder_forward.4} parent=0 // pred_check
    _
  $region15: #{dvae_encoder_forward.4} parent=0 // pred_check_branch
    %19 = sbr.rel (0) target = $region17
  $region16: #{dvae_encoder_forward.4} parent=0 // pred_region
    _
  $region17: #{dvae_encoder_forward.4} parent=0 // pred_fallthru
    _
  // Predicated region
  $region18: #{dvae_encoder_forward.4} parent=0 // pred_check
    _
  $region19: #{dvae_encoder_forward.4} parent=0 // pred_check_branch
    %21 = sbr.rel (0) target = $region21
  $region20: #{dvae_encoder_forward.4} parent=0 // pred_region
    _
  $region21: #{dvae_encoder_forward.4} parent=0 // pred_fallthru
    _
  %v24 = vld [vmem:[%s0] sm:$0xff]
  %v25 = vld [vmem:[%s0 + $0x8] sm:$0xff]
  %v26 = vld [vmem:[%s0 + $0x10] sm:$0xff]
  %v27 = vld [vmem:[%s0 + $0x18] sm:$0xff]
  %v28 = vld [vmem:[%s0 + $0x20] sm:$0xff]
  %v29 = vld [vmem:[%s0 + $0x28] sm:$0xff]
  %v30 = vld [vmem:[%s0 + $0x30] sm:$0xff]
  %v31 = vld [vmem:[%s0 + $0x38] sm:$0xff]
  %v32 = vld [vmem:[%s0 + $0x40] sm:$0xff]
  %v33 = vld [vmem:[%s0 + $0x48] sm:$0xff]
  %v34 = vld [vmem:[%s0 + $0x50] sm:$0xff]
  %v35 = vld [vmem:[%s0 + $0x58] sm:$0xff]
  %v36 = vld [vmem:[%s0 + $0x60] sm:$0xff]
  %v37 = vld [vmem:[%s0 + $0x68] sm:$0xff]
  %v38 = vld [vmem:[%s0 + $0x70] sm:$0xff]
  %v39 = vld [vmem:[%s0 + $0x78] sm:$0xff]
  %v40 = vld [vmem:[%s0 + $0x80] sm:$0xff]
  %v41 = vld [vmem:[%s0 + $0x88] sm:$0xff]
  %v42 = vld [vmem:[%s0 + $0x90] sm:$0xff]
  %v43 = vld [vmem:[%s0 + $0x98] sm:$0xff]
  %v44 = vld [vmem:[%s0 + $0xa0] sm:$0xff]
  %v45 = vld [vmem:[%s0 + $0xa8] sm:$0xff]
  %v46 = vld [vmem:[%s0 + $0xb0] sm:$0xff]
  %v47 = vld [vmem:[%s0 + $0xb8] sm:$0xff]
  %v48 = vld [vmem:[%s0 + $0xc0] sm:$0xff]
  %v49 = vld [vmem:[%s0 + $0xc8] sm:$0xff]
  %v50 = vld [vmem:[%s0 + $0xd0] sm:$0xff]
  %v51 = vld [vmem:[%s0 + $0xd8] sm:$0xff]
  %v52 = vld [vmem:[%s0 + $0xe0] sm:$0xff]
  %v53 = vld [vmem:[%s0 + $0xe8] sm:$0xff]
  %v54 = vld [vmem:[%s0 + $0xf0] sm:$0xff]
  %v55 = vld [vmem:[%s0 + $0xf8] sm:$0xff]
  %v56 = vld [vmem:[%s0 + $0x100] sm:$0xff]
  %v57 = vld [vmem:[%s0 + $0x108] sm:$0xff]
  %v58 = vld [vmem:[%s0 + $0x110] sm:$0xff]
  %v59 = vld [vmem:[%s0 + $0x118] sm:$0xff]
  %v60 = vld [vmem:[%s0 + $0x120] sm:$0xff]
  %v61 = vld [vmem:[%s0 + $0x128] sm:$0xff]
  %v62 = vld [vmem:[%s0 + $0x130] sm:$0xff]
  %v63 = vld [vmem:[%s0 + $0x138] sm:$0xff]
  %v64 = vld [vmem:[%s0 + $0x140] sm:$0xff]
  %v65 = vld [vmem:[%s0 + $0x148] sm:$0xff]
  %v66 = vld [vmem:[%s0 + $0x150] sm:$0xff]
  %v67 = vld [vmem:[%s0 + $0x158] sm:$0xff]
  %v68 = vld [vmem:[%s0 + $0x160] sm:$0xff]
  %v69 = vld [vmem:[%s0 + $0x168] sm:$0xff]
  %v70 = vld [vmem:[%s0 + $0x170] sm:$0xff]
  %v71 = vld [vmem:[%s0 + $0x178] sm:$0xff]
  %v72 = vld [vmem:[%s0 + $0x180] sm:$0xff]
  %v73 = vld [vmem:[%s0 + $0x188] sm:$0xff]
  %v74 = vld [vmem:[%s0 + $0x190] sm:$0xff]
  %v75 = vld [vmem:[%s0 + $0x198] sm:$0xff]
  %v76 = vld [vmem:[%s0 + $0x1a0] sm:$0xff]
  %v77 = vld [vmem:[%s0 + $0x1a8] sm:$0xff]
  %v78 = vld [vmem:[%s0 + $0x1b0] sm:$0xff]
  %v79 = vld [vmem:[%s0 + $0x1b8] sm:$0xff]
  %v80 = vld [vmem:[%s0 + $0x1c0] sm:$0xff]
  %v81 = vld [vmem:[%s0 + $0x1c8] sm:$0xff]
  %v82 = vld [vmem:[%s0 + $0x1d0] sm:$0xff]
  %v83 = vld [vmem:[%s0 + $0x1d8] sm:$0xff]
  %v84 = vld [vmem:[%s0 + $0x1e0] sm:$0xff]
  %v85 = vld [vmem:[%s0 + $0x1e8] sm:$0xff]
  %v86 = vld [vmem:[%s0 + $0x1f0] sm:$0xff]
  %v87 = vld [vmem:[%s0 + $0x1f8] sm:$0xff]
  %v88 = vld [vmem:[%s0 + $0x200] sm:$0xff]
  %v89 = vld [vmem:[%s0 + $0x208] sm:$0xff]
  %v90 = vld [vmem:[%s0 + $0x210] sm:$0xff]
  %v91 = vld [vmem:[%s0 + $0x218] sm:$0xff]
  %v92 = vld [vmem:[%s0 + $0x220] sm:$0xff]
  %v93 = vld [vmem:[%s0 + $0x228] sm:$0xff]
  %v94 = vld [vmem:[%s0 + $0x230] sm:$0xff]
  %v95 = vld [vmem:[%s0 + $0x238] sm:$0xff]
  %v96 = vld [vmem:[%s0 + $0x240] sm:$0xff]
  %v97 = vld [vmem:[%s0 + $0x248] sm:$0xff]
  %v98 = vld [vmem:[%s0 + $0x250] sm:$0xff]
  %v99 = vld [vmem:[%s0 + $0x258] sm:$0xff]
  %v100 = vld [vmem:[%s0 + $0x260] sm:$0xff]
  %v101 = vld [vmem:[%s0 + $0x268] sm:$0xff]
  %v102 = vld [vmem:[%s0 + $0x270] sm:$0xff]
  %v103 = vld [vmem:[%s0 + $0x278] sm:$0xff]
  %v104 = vld [vmem:[%s0 + $0x280] sm:$0xff]
  %v105 = vld [vmem:[%s0 + $0x288] sm:$0xff]
  %v106 = vld [vmem:[%s0 + $0x290] sm:$0xff]
  %v107 = vld [vmem:[%s0 + $0x298] sm:$0xff]
  %v108 = vld [vmem:[%s0 + $0x2a0] sm:$0xff]
  %v109 = vld [vmem:[%s0 + $0x2a8] sm:$0xff]
  %v110 = vld [vmem:[%s0 + $0x2b0] sm:$0xff]
  %v111 = vld [vmem:[%s0 + $0x2b8] sm:$0xff]
  %v112 = vld [vmem:[%s0 + $0x2c0] sm:$0xff]
  %v113 = vld [vmem:[%s0 + $0x2c8] sm:$0xff]
  %v114 = vld [vmem:[%s0 + $0x2d0] sm:$0xff]
  %v115 = vld [vmem:[%s0 + $0x2d8] sm:$0xff]
  %v116 = vld [vmem:[%s0 + $0x2e0] sm:$0xff]
  %v117 = vld [vmem:[%s0 + $0x2e8] sm:$0xff]
  %v118 = vld [vmem:[%s0 + $0x2f0] sm:$0xff]
  %v119 = vld [vmem:[%s0 + $0x2f8] sm:$0xff]
  %v120 = vld [vmem:[%s0 + $0x300] sm:$0xff]
  %v121 = vld [vmem:[%s0 + $0x308] sm:$0xff]
  %v122 = vld [vmem:[%s0 + $0x310] sm:$0xff]
  %v123 = vld [vmem:[%s0 + $0x318] sm:$0xff]
  %v124 = vld [vmem:[%s0 + $0x320] sm:$0xff]
  %v125 = vld [vmem:[%s0 + $0x328] sm:$0xff]
  %v126 = vld [vmem:[%s0 + $0x330] sm:$0xff]
  %v127 = vld [vmem:[%s0 + $0x338] sm:$0xff]
  %v128 = vld [vmem:[%s0 + $0x340] sm:$0xff]
  %v129 = vld [vmem:[%s0 + $0x348] sm:$0xff]
  %v130 = vld [vmem:[%s0 + $0x350] sm:$0xff]
  %v131 = vld [vmem:[%s0 + $0x358] sm:$0xff]
  %v132 = vld [vmem:[%s0 + $0x360] sm:$0xff]
  %v133 = vld [vmem:[%s0 + $0x368] sm:$0xff]
  %v134 = vld [vmem:[%s0 + $0x370] sm:$0xff]
  %v135 = vld [vmem:[%s0 + $0x378] sm:$0xff]
  %v136 = vld [vmem:[%s0 + $0x380] sm:$0xff]
  %v137 = vld [vmem:[%s0 + $0x388] sm:$0xff]
  %v138 = vld [vmem:[%s0 + $0x390] sm:$0xff]
  %v139 = vld [vmem:[%s0 + $0x398] sm:$0xff]
  %v140 = vld [vmem:[%s0 + $0x3a0] sm:$0xff]
  %v141 = vld [vmem:[%s0 + $0x3a8] sm:$0xff]
  %v142 = vld [vmem:[%s0 + $0x3b0] sm:$0xff]
  %v143 = vld [vmem:[%s0 + $0x3b8] sm:$0xff]
  %v144 = vld [vmem:[%s0 + $0x3c0] sm:$0xff]
  %v145 = vld [vmem:[%s0 + $0x3c8] sm:$0xff]
  %v146 = vld [vmem:[%s0 + $0x3d0] sm:$0xff]
  %v147 = vld [vmem:[%s0 + $0x3d8] sm:$0xff]
  %v148 = vld [vmem:[%s0 + $0x3e0] sm:$0xff]
  %v149 = vld [vmem:[%s0 + $0x3e8] sm:$0xff]
  %v150 = vld [vmem:[%s0 + $0x3f0] sm:$0xff]
  %v151 = vld [vmem:[%s0 + $0x3f8] sm:$0xff]
  %v152 = vld [vmem:[%s0 + $0x400] sm:$0xff]
  %v153 = vld [vmem:[%s0 + $0x408] sm:$0xff]
  %v154 = vld [vmem:[%s0 + $0x410] sm:$0xff]
  %v155 = vld [vmem:[%s0 + $0x418] sm:$0xff]
  %v156 = vld [vmem:[%s0 + $0x420] sm:$0xff]
  %v157 = vld [vmem:[%s0 + $0x428] sm:$0xff]
  %v158 = vld [vmem:[%s0 + $0x430] sm:$0xff]
  %v159 = vld [vmem:[%s0 + $0x438] sm:$0xff]
  %v160 = vld [vmem:[%s0 + $0x440] sm:$0xff]
  %v161 = vld [vmem:[%s0 + $0x448] sm:$0xff]
  %v162 = vld [vmem:[%s0 + $0x450] sm:$0xff]
  %v163 = vld [vmem:[%s0 + $0x458] sm:$0xff]
  %v164 = vld [vmem:[%s0 + $0x460] sm:$0xff]
  %v165 = vld [vmem:[%s0 + $0x468] sm:$0xff]
  %v166 = vld [vmem:[%s0 + $0x470] sm:$0xff]
  %v167 = vld [vmem:[%s0 + $0x478] sm:$0xff]
  %v168 = vld [vmem:[%s0 + $0x480] sm:$0xff]
  %v169 = vld [vmem:[%s0 + $0x488] sm:$0xff]
  %v170 = vld [vmem:[%s0 + $0x490] sm:$0xff]
  %v171 = vld [vmem:[%s0 + $0x498] sm:$0xff]
  %v172 = vld [vmem:[%s0 + $0x4a0] sm:$0xff]
  %v173 = vld [vmem:[%s0 + $0x4a8] sm:$0xff]
  %v174 = vld [vmem:[%s0 + $0x4b0] sm:$0xff]
  %v175 = vld [vmem:[%s0 + $0x4b8] sm:$0xff]
  %v176 = vld [vmem:[%s0 + $0x4c0] sm:$0xff]
  %v177 = vld [vmem:[%s0 + $0x4c8] sm:$0xff]
  %v178 = vld [vmem:[%s0 + $0x4d0] sm:$0xff]
  %v179 = vld [vmem:[%s0 + $0x4d8] sm:$0xff]
  %v180 = vld [vmem:[%s0 + $0x4e0] sm:$0xff]
  %v181 = vld [vmem:[%s0 + $0x4e8] sm:$0xff]
  %v182 = vld [vmem:[%s0 + $0x4f0] sm:$0xff]
  %v183 = vld [vmem:[%s0 + $0x4f8] sm:$0xff]
  %v184 = vld [vmem:[%s0 + $0x500] sm:$0xff]
  %v185 = vld [vmem:[%s0 + $0x508] sm:$0xff]
  %v186 = vld [vmem:[%s0 + $0x510] sm:$0xff]
  %v187 = vld [vmem:[%s0 + $0x518] sm:$0xff]
  %v188 = vld [vmem:[%s0 + $0x520] sm:$0xff]
  %v189 = vld [vmem:[%s0 + $0x528] sm:$0xff]
  %v190 = vld [vmem:[%s0 + $0x530] sm:$0xff]
  %v191 = vld [vmem:[%s0 + $0x538] sm:$0xff]
  %v192 = vld [vmem:[%s0 + $0x540] sm:$0xff]
  %v193 = vld [vmem:[%s0 + $0x548] sm:$0xff]
  %v194 = vld [vmem:[%s0 + $0x550] sm:$0xff]
  %v195 = vld [vmem:[%s0 + $0x558] sm:$0xff]
  %v196 = vld [vmem:[%s0 + $0x560] sm:$0xff]
  %v197 = vld [vmem:[%s0 + $0x568] sm:$0xff]
  %v198 = vld [vmem:[%s0 + $0x570] sm:$0xff]
  %v199 = vld [vmem:[%s0 + $0x578] sm:$0xff]
  %v200 = vld [vmem:[%s0 + $0x580] sm:$0xff]
  %v201 = vld [vmem:[%s0 + $0x588] sm:$0xff]
  %v202 = vld [vmem:[%s0 + $0x590] sm:$0xff]
  %v203 = vld [vmem:[%s0 + $0x598] sm:$0xff]
  %v204 = vld [vmem:[%s0 + $0x5a0] sm:$0xff]
  %v205 = vld [vmem:[%s0 + $0x5a8] sm:$0xff]
  %v206 = vld [vmem:[%s0 + $0x5b0] sm:$0xff]
  %v207 = vld [vmem:[%s0 + $0x5b8] sm:$0xff]
  %v208 = vld [vmem:[%s0 + $0x5c0] sm:$0xff]
  %v209 = vld [vmem:[%s0 + $0x5c8] sm:$0xff]
  %v210 = vld [vmem:[%s0 + $0x5d0] sm:$0xff]
  %v211 = vld [vmem:[%s0 + $0x5d8] sm:$0xff]
  %v212 = vld [vmem:[%s0 + $0x5e0] sm:$0xff]
  %v213 = vld [vmem:[%s0 + $0x5e8] sm:$0xff]
  %v214 = vld [vmem:[%s0 + $0x5f0] sm:$0xff]
  %v215 = vld [vmem:[%s0 + $0x5f8] sm:$0xff]
  %v216 = vld [vmem:[%s0 + $0x600] sm:$0xff]
  %v217 = vld [vmem:[%s0 + $0x608] sm:$0xff]
  %v218 = vld [vmem:[%s0 + $0x610] sm:$0xff]
  %v219 = vld [vmem:[%s0 + $0x618] sm:$0xff]
  %v220 = vld [vmem:[%s0 + $0x620] sm:$0xff]
  %v221 = vld [vmem:[%s0 + $0x628] sm:$0xff]
  %v222 = vld [vmem:[%s0 + $0x630] sm:$0xff]
  %v223 = vld [vmem:[%s0 + $0x638] sm:$0xff]
  %v224 = vld [vmem:[%s0 + $0x640] sm:$0xff]
  %v225 = vld [vmem:[%s0 + $0x648] sm:$0xff]
  %v226 = vld [vmem:[%s0 + $0x650] sm:$0xff]
  %v227 = vld [vmem:[%s0 + $0x658] sm:$0xff]
  %v228 = vld [vmem:[%s0 + $0x660] sm:$0xff]
  %v229 = vld [vmem:[%s0 + $0x668] sm:$0xff]
  %v230 = vld [vmem:[%s0 + $0x670] sm:$0xff]
  %v231 = vld [vmem:[%s0 + $0x678] sm:$0xff]
  %v232 = vld [vmem:[%s0 + $0x680] sm:$0xff]
  %v233 = vld [vmem:[%s0 + $0x688] sm:$0xff]
  %v234 = vld [vmem:[%s0 + $0x690] sm:$0xff]
  %v235 = vld [vmem:[%s0 + $0x698] sm:$0xff]
  %v236 = vld [vmem:[%s0 + $0x6a0] sm:$0xff]
  %v237 = vld [vmem:[%s0 + $0x6a8] sm:$0xff]
  %v238 = vld [vmem:[%s0 + $0x6b0] sm:$0xff]
  %v239 = vld [vmem:[%s0 + $0x6b8] sm:$0xff]
  %v240 = vld [vmem:[%s0 + $0x6c0] sm:$0xff]
  %v241 = vld [vmem:[%s0 + $0x6c8] sm:$0xff]
  %v242 = vld [vmem:[%s0 + $0x6d0] sm:$0xff]
  %v243 = vld [vmem:[%s0 + $0x6d8] sm:$0xff]
  %v244 = vld [vmem:[%s0 + $0x6e0] sm:$0xff]
  %v245 = vld [vmem:[%s0 + $0x6e8] sm:$0xff]
  %v246 = vld [vmem:[%s0 + $0x6f0] sm:$0xff]
  %v247 = vld [vmem:[%s0 + $0x6f8] sm:$0xff]
  %v248 = vld [vmem:[%s0 + $0x700] sm:$0xff]
  %v249 = vld [vmem:[%s0 + $0x708] sm:$0xff]
  %v250 = vld [vmem:[%s0 + $0x710] sm:$0xff]
  %v251 = vld [vmem:[%s0 + $0x718] sm:$0xff]
  %v252 = vld [vmem:[%s0 + $0x720] sm:$0xff]
  %v253 = vld [vmem:[%s0 + $0x728] sm:$0xff]
  %v254 = vld [vmem:[%s0 + $0x730] sm:$0xff]
  %v255 = vld [vmem:[%s0 + $0x738] sm:$0xff]
  %v256 = vld [vmem:[%s0 + $0x740] sm:$0xff]
  %v257 = vld [vmem:[%s0 + $0x748] sm:$0xff]
  %v258 = vld [vmem:[%s0 + $0x750] sm:$0xff]
  %v259 = vld [vmem:[%s0 + $0x758] sm:$0xff]
  %v260 = vld [vmem:[%s0 + $0x760] sm:$0xff]
  %v261 = vld [vmem:[%s0 + $0x768] sm:$0xff]
  %v262 = vld [vmem:[%s0 + $0x770] sm:$0xff]
  %v263 = vld [vmem:[%s0 + $0x778] sm:$0xff]
  %v264 = vld [vmem:[%s0 + $0x780] sm:$0x11]
  %vm265 = vcmp.ge.bf16.partialorder %v24, 0
  %vm266 = vcmp.ge.bf16.partialorder %v25, 0
  %vm267 = vcmp.ge.bf16.partialorder %v26, 0
  %vm268 = vcmp.ge.bf16.partialorder %v27, 0
  %vm269 = vcmp.ge.bf16.partialorder %v28, 0
  %vm270 = vcmp.ge.bf16.partialorder %v29, 0
  %vm271 = vcmp.ge.bf16.partialorder %v30, 0
  %vm272 = vcmp.ge.bf16.partialorder %v31, 0
  %vm273 = vcmp.ge.bf16.partialorder %v32, 0
  %vm274 = vcmp.ge.bf16.partialorder %v33, 0
  %vm275 = vcmp.ge.bf16.partialorder %v34, 0
  %vm276 = vcmp.ge.bf16.partialorder %v35, 0
  %vm277 = vcmp.ge.bf16.partialorder %v36, 0
  %vm278 = vcmp.ge.bf16.partialorder %v37, 0
  %vm279 = vcmp.ge.bf16.partialorder %v38, 0
  %vm280 = vcmp.ge.bf16.partialorder %v39, 0
  %vm281 = vcmp.ge.bf16.partialorder %v40, 0
  %vm282 = vcmp.ge.bf16.partialorder %v41, 0
  %vm283 = vcmp.ge.bf16.partialorder %v42, 0
  %vm284 = vcmp.ge.bf16.partialorder %v43, 0
  %vm285 = vcmp.ge.bf16.partialorder %v44, 0
  %vm286 = vcmp.ge.bf16.partialorder %v45, 0
  %vm287 = vcmp.ge.bf16.partialorder %v46, 0
  %vm288 = vcmp.ge.bf16.partialorder %v47, 0
  %vm289 = vcmp.ge.bf16.partialorder %v48, 0
  %vm290 = vcmp.ge.bf16.partialorder %v49, 0
  %vm291 = vcmp.ge.bf16.partialorder %v50, 0
  %vm292 = vcmp.ge.bf16.partialorder %v51, 0
  %vm293 = vcmp.ge.bf16.partialorder %v52, 0
  %vm294 = vcmp.ge.bf16.partialorder %v53, 0
  %vm295 = vcmp.ge.bf16.partialorder %v54, 0
  %vm296 = vcmp.ge.bf16.partialorder %v55, 0
  %vm297 = vcmp.ge.bf16.partialorder %v56, 0
  %vm298 = vcmp.ge.bf16.partialorder %v57, 0
  %vm299 = vcmp.ge.bf16.partialorder %v58, 0
  %vm300 = vcmp.ge.bf16.partialorder %v59, 0
  %vm301 = vcmp.ge.bf16.partialorder %v60, 0
  %vm302 = vcmp.ge.bf16.partialorder %v61, 0
  %vm303 = vcmp.ge.bf16.partialorder %v62, 0
  %vm304 = vcmp.ge.bf16.partialorder %v63, 0
  %vm305 = vcmp.ge.bf16.partialorder %v64, 0
  %vm306 = vcmp.ge.bf16.partialorder %v65, 0
  %vm307 = vcmp.ge.bf16.partialorder %v66, 0
  %vm308 = vcmp.ge.bf16.partialorder %v67, 0
  %vm309 = vcmp.ge.bf16.partialorder %v68, 0
  %vm310 = vcmp.ge.bf16.partialorder %v69, 0
  %vm311 = vcmp.ge.bf16.partialorder %v70, 0
  %vm312 = vcmp.ge.bf16.partialorder %v71, 0
  %vm313 = vcmp.ge.bf16.partialorder %v72, 0
  %vm314 = vcmp.ge.bf16.partialorder %v73, 0
  %vm315 = vcmp.ge.bf16.partialorder %v74, 0
  %vm316 = vcmp.ge.bf16.partialorder %v75, 0
  %vm317 = vcmp.ge.bf16.partialorder %v76, 0
  %vm318 = vcmp.ge.bf16.partialorder %v77, 0
  %vm319 = vcmp.ge.bf16.partialorder %v78, 0
  %vm320 = vcmp.ge.bf16.partialorder %v79, 0
  %vm321 = vcmp.ge.bf16.partialorder %v80, 0
  %vm322 = vcmp.ge.bf16.partialorder %v81, 0
  %vm323 = vcmp.ge.bf16.partialorder %v82, 0
  %vm324 = vcmp.ge.bf16.partialorder %v83, 0
  %vm325 = vcmp.ge.bf16.partialorder %v84, 0
  %vm326 = vcmp.ge.bf16.partialorder %v85, 0
  %vm327 = vcmp.ge.bf16.partialorder %v86, 0
  %vm328 = vcmp.ge.bf16.partialorder %v87, 0
  %vm329 = vcmp.ge.bf16.partialorder %v88, 0
  %vm330 = vcmp.ge.bf16.partialorder %v89, 0
  %vm331 = vcmp.ge.bf16.partialorder %v90, 0
  %vm332 = vcmp.ge.bf16.partialorder %v91, 0
  %vm333 = vcmp.ge.bf16.partialorder %v92, 0
  %vm334 = vcmp.ge.bf16.partialorder %v93, 0
  %vm335 = vcmp.ge.bf16.partialorder %v94, 0
  %vm336 = vcmp.ge.bf16.partialorder %v95, 0
  %vm337 = vcmp.ge.bf16.partialorder %v96, 0
  %vm338 = vcmp.ge.bf16.partialorder %v97, 0
  %vm339 = vcmp.ge.bf16.partialorder %v98, 0
  %vm340 = vcmp.ge.bf16.partialorder %v99, 0
  %vm341 = vcmp.ge.bf16.partialorder %v100, 0
  %vm342 = vcmp.ge.bf16.partialorder %v101, 0
  %vm343 = vcmp.ge.bf16.partialorder %v102, 0
  %vm344 = vcmp.ge.bf16.partialorder %v103, 0
  %vm345 = vcmp.ge.bf16.partialorder %v104, 0
  %vm346 = vcmp.ge.bf16.partialorder %v105, 0
  %vm347 = vcmp.ge.bf16.partialorder %v106, 0
  %vm348 = vcmp.ge.bf16.partialorder %v107, 0
  %vm349 = vcmp.ge.bf16.partialorder %v108, 0
  %vm350 = vcmp.ge.bf16.partialorder %v109, 0
  %vm351 = vcmp.ge.bf16.partialorder %v110, 0
  %vm352 = vcmp.ge.bf16.partialorder %v111, 0
  %vm353 = vcmp.ge.bf16.partialorder %v112, 0
  %vm354 = vcmp.ge.bf16.partialorder %v113, 0
  %vm355 = vcmp.ge.bf16.partialorder %v114, 0
  %vm356 = vcmp.ge.bf16.partialorder %v115, 0
  %vm357 = vcmp.ge.bf16.partialorder %v116, 0
  %vm358 = vcmp.ge.bf16.partialorder %v117, 0
  %vm359 = vcmp.ge.bf16.partialorder %v118, 0
  %vm360 = vcmp.ge.bf16.partialorder %v119, 0
  %vm361 = vcmp.ge.bf16.partialorder %v120, 0
  %vm362 = vcmp.ge.bf16.partialorder %v121, 0
  %vm363 = vcmp.ge.bf16.partialorder %v122, 0
  %vm364 = vcmp.ge.bf16.partialorder %v123, 0
  %vm365 = vcmp.ge.bf16.partialorder %v124, 0
  %vm366 = vcmp.ge.bf16.partialorder %v125, 0
  %vm367 = vcmp.ge.bf16.partialorder %v126, 0
  %vm368 = vcmp.ge.bf16.partialorder %v127, 0
  %vm369 = vcmp.ge.bf16.partialorder %v128, 0
  %vm370 = vcmp.ge.bf16.partialorder %v129, 0
  %vm371 = vcmp.ge.bf16.partialorder %v130, 0
  %vm372 = vcmp.ge.bf16.partialorder %v131, 0
  %vm373 = vcmp.ge.bf16.partialorder %v132, 0
  %vm374 = vcmp.ge.bf16.partialorder %v133, 0
  %vm375 = vcmp.ge.bf16.partialorder %v134, 0
  %vm376 = vcmp.ge.bf16.partialorder %v135, 0
  %vm377 = vcmp.ge.bf16.partialorder %v136, 0
  %vm378 = vcmp.ge.bf16.partialorder %v137, 0
  %vm379 = vcmp.ge.bf16.partialorder %v138, 0
  %vm380 = vcmp.ge.bf16.partialorder %v139, 0
  %vm381 = vcmp.ge.bf16.partialorder %v140, 0
  %vm382 = vcmp.ge.bf16.partialorder %v141, 0
  %vm383 = vcmp.ge.bf16.partialorder %v142, 0
  %vm384 = vcmp.ge.bf16.partialorder %v143, 0
  %vm385 = vcmp.ge.bf16.partialorder %v144, 0
  %vm386 = vcmp.ge.bf16.partialorder %v145, 0
  %vm387 = vcmp.ge.bf16.partialorder %v146, 0
  %vm388 = vcmp.ge.bf16.partialorder %v147, 0
  %vm389 = vcmp.ge.bf16.partialorder %v148, 0
  %vm390 = vcmp.ge.bf16.partialorder %v149, 0
  %vm391 = vcmp.ge.bf16.partialorder %v150, 0
  %vm392 = vcmp.ge.bf16.partialorder %v151, 0
  %vm393 = vcmp.ge.bf16.partialorder %v152, 0
  %vm394 = vcmp.ge.bf16.partialorder %v153, 0
  %vm395 = vcmp.ge.bf16.partialorder %v154, 0
  %vm396 = vcmp.ge.bf16.partialorder %v155, 0
  %vm397 = vcmp.ge.bf16.partialorder %v156, 0
  %vm398 = vcmp.ge.bf16.partialorder %v157, 0
  %vm399 = vcmp.ge.bf16.partialorder %v158, 0
  %vm400 = vcmp.ge.bf16.partialorder %v159, 0
  %vm401 = vcmp.ge.bf16.partialorder %v160, 0
  %vm402 = vcmp.ge.bf16.partialorder %v161, 0
  %vm403 = vcmp.ge.bf16.partialorder %v162, 0
  %vm404 = vcmp.ge.bf16.partialorder %v163, 0
  %vm405 = vcmp.ge.bf16.partialorder %v164, 0
  %vm406 = vcmp.ge.bf16.partialorder %v165, 0
  %vm407 = vcmp.ge.bf16.partialorder %v166, 0
  %vm408 = vcmp.ge.bf16.partialorder %v167, 0
  %vm409 = vcmp.ge.bf16.partialorder %v168, 0
  %vm410 = vcmp.ge.bf16.partialorder %v169, 0
  %vm411 = vcmp.ge.bf16.partialorder %v170, 0
  %vm412 = vcmp.ge.bf16.partialorder %v171, 0
  %vm413 = vcmp.ge.bf16.partialorder %v172, 0
  %vm414 = vcmp.ge.bf16.partialorder %v173, 0
  %vm415 = vcmp.ge.bf16.partialorder %v174, 0
  %vm416 = vcmp.ge.bf16.partialorder %v175, 0
  %vm417 = vcmp.ge.bf16.partialorder %v176, 0
  %vm418 = vcmp.ge.bf16.partialorder %v177, 0
  %vm419 = vcmp.ge.bf16.partialorder %v178, 0
  %vm420 = vcmp.ge.bf16.partialorder %v179, 0
  %vm421 = vcmp.ge.bf16.partialorder %v180, 0
  %vm422 = vcmp.ge.bf16.partialorder %v181, 0
  %vm423 = vcmp.ge.bf16.partialorder %v182, 0
  %vm424 = vcmp.ge.bf16.partialorder %v183, 0
  %vm425 = vcmp.ge.bf16.partialorder %v184, 0
  %vm426 = vcmp.ge.bf16.partialorder %v185, 0
  %vm427 = vcmp.ge.bf16.partialorder %v186, 0
  %vm428 = vcmp.ge.bf16.partialorder %v187, 0
  %vm429 = vcmp.ge.bf16.partialorder %v188, 0
  %vm430 = vcmp.ge.bf16.partialorder %v189, 0
  %vm431 = vcmp.ge.bf16.partialorder %v190, 0
  %vm432 = vcmp.ge.bf16.partialorder %v191, 0
  %vm433 = vcmp.ge.bf16.partialorder %v192, 0
  %vm434 = vcmp.ge.bf16.partialorder %v193, 0
  %vm435 = vcmp.ge.bf16.partialorder %v194, 0
  %vm436 = vcmp.ge.bf16.partialorder %v195, 0
  %vm437 = vcmp.ge.bf16.partialorder %v196, 0
  %vm438 = vcmp.ge.bf16.partialorder %v197, 0
  %vm439 = vcmp.ge.bf16.partialorder %v198, 0
  %vm440 = vcmp.ge.bf16.partialorder %v199, 0
  %vm441 = vcmp.ge.bf16.partialorder %v200, 0
  %vm442 = vcmp.ge.bf16.partialorder %v201, 0
  %vm443 = vcmp.ge.bf16.partialorder %v202, 0
  %vm444 = vcmp.ge.bf16.partialorder %v203, 0
  %vm445 = vcmp.ge.bf16.partialorder %v204, 0
  %vm446 = vcmp.ge.bf16.partialorder %v205, 0
  %vm447 = vcmp.ge.bf16.partialorder %v206, 0
  %vm448 = vcmp.ge.bf16.partialorder %v207, 0
  %vm449 = vcmp.ge.bf16.partialorder %v208, 0
  %vm450 = vcmp.ge.bf16.partialorder %v209, 0
  %vm451 = vcmp.ge.bf16.partialorder %v210, 0
  %vm452 = vcmp.ge.bf16.partialorder %v211, 0
  %vm453 = vcmp.ge.bf16.partialorder %v212, 0
  %vm454 = vcmp.ge.bf16.partialorder %v213, 0
  %vm455 = vcmp.ge.bf16.partialorder %v214, 0
  %vm456 = vcmp.ge.bf16.partialorder %v215, 0
  %vm457 = vcmp.ge.bf16.partialorder %v216, 0
  %vm458 = vcmp.ge.bf16.partialorder %v217, 0
  %vm459 = vcmp.ge.bf16.partialorder %v218, 0
  %vm460 = vcmp.ge.bf16.partialorder %v219, 0
  %vm461 = vcmp.ge.bf16.partialorder %v220, 0
  %vm462 = vcmp.ge.bf16.partialorder %v221, 0
  %vm463 = vcmp.ge.bf16.partialorder %v222, 0
  %vm464 = vcmp.ge.bf16.partialorder %v223, 0
  %vm465 = vcmp.ge.bf16.partialorder %v224, 0
  %vm466 = vcmp.ge.bf16.partialorder %v225, 0
  %vm467 = vcmp.ge.bf16.partialorder %v226, 0
  %vm468 = vcmp.ge.bf16.partialorder %v227, 0
  %vm469 = vcmp.ge.bf16.partialorder %v228, 0
  %vm470 = vcmp.ge.bf16.partialorder %v229, 0
  %vm471 = vcmp.ge.bf16.partialorder %v230, 0
  %vm472 = vcmp.ge.bf16.partialorder %v231, 0
  %vm473 = vcmp.ge.bf16.partialorder %v232, 0
  %vm474 = vcmp.ge.bf16.partialorder %v233, 0
  %vm475 = vcmp.ge.bf16.partialorder %v234, 0
  %vm476 = vcmp.ge.bf16.partialorder %v235, 0
  %vm477 = vcmp.ge.bf16.partialorder %v236, 0
  %vm478 = vcmp.ge.bf16.partialorder %v237, 0
  %vm479 = vcmp.ge.bf16.partialorder %v238, 0
  %vm480 = vcmp.ge.bf16.partialorder %v239, 0
  %vm481 = vcmp.ge.bf16.partialorder %v240, 0
  %vm482 = vcmp.ge.bf16.partialorder %v241, 0
  %vm483 = vcmp.ge.bf16.partialorder %v242, 0
  %vm484 = vcmp.ge.bf16.partialorder %v243, 0
  %vm485 = vcmp.ge.bf16.partialorder %v244, 0
  %vm486 = vcmp.ge.bf16.partialorder %v245, 0
  %vm487 = vcmp.ge.bf16.partialorder %v246, 0
  %vm488 = vcmp.ge.bf16.partialorder %v247, 0
  %vm489 = vcmp.ge.bf16.partialorder %v248, 0
  %vm490 = vcmp.ge.bf16.partialorder %v249, 0
  %vm491 = vcmp.ge.bf16.partialorder %v250, 0
  %vm492 = vcmp.ge.bf16.partialorder %v251, 0
  %vm493 = vcmp.ge.bf16.partialorder %v252, 0
  %vm494 = vcmp.ge.bf16.partialorder %v253, 0
  %vm495 = vcmp.ge.bf16.partialorder %v254, 0
  %vm496 = vcmp.ge.bf16.partialorder %v255, 0
  %vm497 = vcmp.ge.bf16.partialorder %v256, 0
  %vm498 = vcmp.ge.bf16.partialorder %v257, 0
  %vm499 = vcmp.ge.bf16.partialorder %v258, 0
  %vm500 = vcmp.ge.bf16.partialorder %v259, 0
  %vm501 = vcmp.ge.bf16.partialorder %v260, 0
  %vm502 = vcmp.ge.bf16.partialorder %v261, 0
  %vm503 = vcmp.ge.bf16.partialorder %v262, 0
  %vm504 = vcmp.ge.bf16.partialorder %v263, 0
  %vm505 = vcmp.ge.bf16.partialorder %v264, 0
  %v506 = vmul.bf16 %v24, 1009007652
  %v507 = vmul.bf16 %v25, 1009007652
  %v508 = vmul.bf16 %v26, 1009007652
  %v509 = vmul.bf16 %v27, 1009007652
  %v510 = vmul.bf16 %v28, 1009007652
  %v511 = vmul.bf16 %v29, 1009007652
  %v512 = vmul.bf16 %v30, 1009007652
  %v513 = vmul.bf16 %v31, 1009007652
  %v514 = vmul.bf16 %v32, 1009007652
  %v515 = vmul.bf16 %v33, 1009007652
  %v516 = vmul.bf16 %v34, 1009007652
  %v517 = vmul.bf16 %v35, 1009007652
  %v518 = vmul.bf16 %v36, 1009007652
  %v519 = vmul.bf16 %v37, 1009007652
  %v520 = vmul.bf16 %v38, 1009007652
  %v521 = vmul.bf16 %v39, 1009007652
  %v522 = vmul.bf16 %v40, 1009007652
  %v523 = vmul.bf16 %v41, 1009007652
  %v524 = vmul.bf16 %v42, 1009007652
  %v525 = vmul.bf16 %v43, 1009007652
  %v526 = vmul.bf16 %v44, 1009007652
  %v527 = vmul.bf16 %v45, 1009007652
  %v528 = vmul.bf16 %v46, 1009007652
  %v529 = vmul.bf16 %v47, 1009007652
  %v530 = vmul.bf16 %v48, 1009007652
  %v531 = vmul.bf16 %v49, 1009007652
  %v532 = vmul.bf16 %v50, 1009007652
  %v533 = vmul.bf16 %v51, 1009007652
  %v534 = vmul.bf16 %v52, 1009007652
  %v535 = vmul.bf16 %v53, 1009007652
  %v536 = vmul.bf16 %v54, 1009007652
  %v537 = vmul.bf16 %v55, 1009007652
  %v538 = vmul.bf16 %v56, 1009007652
  %v539 = vmul.bf16 %v57, 1009007652
  %v540 = vmul.bf16 %v58, 1009007652
  %v541 = vmul.bf16 %v59, 1009007652
  %v542 = vmul.bf16 %v60, 1009007652
  %v543 = vmul.bf16 %v61, 1009007652
  %v544 = vmul.bf16 %v62, 1009007652
  %v545 = vmul.bf16 %v63, 1009007652
  %v546 = vmul.bf16 %v64, 1009007652
  %v547 = vmul.bf16 %v65, 1009007652
  %v548 = vmul.bf16 %v66, 1009007652
  %v549 = vmul.bf16 %v67, 1009007652
  %v550 = vmul.bf16 %v68, 1009007652
  %v551 = vmul.bf16 %v69, 1009007652
  %v552 = vmul.bf16 %v70, 1009007652
  %v553 = vmul.bf16 %v71, 1009007652
  %v554 = vmul.bf16 %v72, 1009007652
  %v555 = vmul.bf16 %v73, 1009007652
  %v556 = vmul.bf16 %v74, 1009007652
  %v557 = vmul.bf16 %v75, 1009007652
  %v558 = vmul.bf16 %v76, 1009007652
  %v559 = vmul.bf16 %v77, 1009007652
  %v560 = vmul.bf16 %v78, 1009007652
  %v561 = vmul.bf16 %v79, 1009007652
  %v562 = vmul.bf16 %v80, 1009007652
  %v563 = vmul.bf16 %v81, 1009007652
  %v564 = vmul.bf16 %v82, 1009007652
  %v565 = vmul.bf16 %v83, 1009007652
  %v566 = vmul.bf16 %v84, 1009007652
  %v567 = vmul.bf16 %v85, 1009007652
  %v568 = vmul.bf16 %v86, 1009007652
  %v569 = vmul.bf16 %v87, 1009007652
  %v570 = vmul.bf16 %v88, 1009007652
  %v571 = vmul.bf16 %v89, 1009007652
  %v572 = vmul.bf16 %v90, 1009007652
  %v573 = vmul.bf16 %v91, 1009007652
  %v574 = vmul.bf16 %v92, 1009007652
  %v575 = vmul.bf16 %v93, 1009007652
  %v576 = vmul.bf16 %v94, 1009007652
  %v577 = vmul.bf16 %v95, 1009007652
  %v578 = vmul.bf16 %v96, 1009007652
  %v579 = vmul.bf16 %v97, 1009007652
  %v580 = vmul.bf16 %v98, 1009007652
  %v581 = vmul.bf16 %v99, 1009007652
  %v582 = vmul.bf16 %v100, 1009007652
  %v583 = vmul.bf16 %v101, 1009007652
  %v584 = vmul.bf16 %v102, 1009007652
  %v585 = vmul.bf16 %v103, 1009007652
  %v586 = vmul.bf16 %v104, 1009007652
  %v587 = vmul.bf16 %v105, 1009007652
  %v588 = vmul.bf16 %v106, 1009007652
  %v589 = vmul.bf16 %v107, 1009007652
  %v590 = vmul.bf16 %v108, 1009007652
  %v591 = vmul.bf16 %v109, 1009007652
  %v592 = vmul.bf16 %v110, 1009007652
  %v593 = vmul.bf16 %v111, 1009007652
  %v594 = vmul.bf16 %v112, 1009007652
  %v595 = vmul.bf16 %v113, 1009007652
  %v596 = vmul.bf16 %v114, 1009007652
  %v597 = vmul.bf16 %v115, 1009007652
  %v598 = vmul.bf16 %v116, 1009007652
  %v599 = vmul.bf16 %v117, 1009007652
  %v600 = vmul.bf16 %v118, 1009007652
  %v601 = vmul.bf16 %v119, 1009007652
  %v602 = vmul.bf16 %v120, 1009007652
  %v603 = vmul.bf16 %v121, 1009007652
  %v604 = vmul.bf16 %v122, 1009007652
  %v605 = vmul.bf16 %v123, 1009007652
  %v606 = vmul.bf16 %v124, 1009007652
  %v607 = vmul.bf16 %v125, 1009007652
  %v608 = vmul.bf16 %v126, 1009007652
  %v609 = vmul.bf16 %v127, 1009007652
  %v610 = vmul.bf16 %v128, 1009007652
  %v611 = vmul.bf16 %v129, 1009007652
  %v612 = vmul.bf16 %v130, 1009007652
  %v613 = vmul.bf16 %v131, 1009007652
  %v614 = vmul.bf16 %v132, 1009007652
  %v615 = vmul.bf16 %v133, 1009007652
  %v616 = vmul.bf16 %v134, 1009007652
  %v617 = vmul.bf16 %v135, 1009007652
  %v618 = vmul.bf16 %v136, 1009007652
  %v619 = vmul.bf16 %v137, 1009007652
  %v620 = vmul.bf16 %v138, 1009007652
  %v621 = vmul.bf16 %v139, 1009007652
  %v622 = vmul.bf16 %v140, 1009007652
  %v623 = vmul.bf16 %v141, 1009007652
  %v624 = vmul.bf16 %v142, 1009007652
  %v625 = vmul.bf16 %v143, 1009007652
  %v626 = vmul.bf16 %v144, 1009007652
  %v627 = vmul.bf16 %v145, 1009007652
  %v628 = vmul.bf16 %v146, 1009007652
  %v629 = vmul.bf16 %v147, 1009007652
  %v630 = vmul.bf16 %v148, 1009007652
  %v631 = vmul.bf16 %v149, 1009007652
  %v632 = vmul.bf16 %v150, 1009007652
  %v633 = vmul.bf16 %v151, 1009007652
  %v634 = vmul.bf16 %v152, 1009007652
  %v635 = vmul.bf16 %v153, 1009007652
  %v636 = vmul.bf16 %v154, 1009007652
  %v637 = vmul.bf16 %v155, 1009007652
  %v638 = vmul.bf16 %v156, 1009007652
  %v639 = vmul.bf16 %v157, 1009007652
  %v640 = vmul.bf16 %v158, 1009007652
  %v641 = vmul.bf16 %v159, 1009007652
  %v642 = vmul.bf16 %v160, 1009007652
  %v643 = vmul.bf16 %v161, 1009007652
  %v644 = vmul.bf16 %v162, 1009007652
  %v645 = vmul.bf16 %v163, 1009007652
  %v646 = vmul.bf16 %v164, 1009007652
  %v647 = vmul.bf16 %v165, 1009007652
  %v648 = vmul.bf16 %v166, 1009007652
  %v649 = vmul.bf16 %v167, 1009007652
  %v650 = vmul.bf16 %v168, 1009007652
  %v651 = vmul.bf16 %v169, 1009007652
  %v652 = vmul.bf16 %v170, 1009007652
  %v653 = vmul.bf16 %v171, 1009007652
  %v654 = vmul.bf16 %v172, 1009007652
  %v655 = vmul.bf16 %v173, 1009007652
  %v656 = vmul.bf16 %v174, 1009007652
  %v657 = vmul.bf16 %v175, 1009007652
  %v658 = vmul.bf16 %v176, 1009007652
  %v659 = vmul.bf16 %v177, 1009007652
  %v660 = vmul.bf16 %v178, 1009007652
  %v661 = vmul.bf16 %v179, 1009007652
  %v662 = vmul.bf16 %v180, 1009007652
  %v663 = vmul.bf16 %v181, 1009007652
  %v664 = vmul.bf16 %v182, 1009007652
  %v665 = vmul.bf16 %v183, 1009007652
  %v666 = vmul.bf16 %v184, 1009007652
  %v667 = vmul.bf16 %v185, 1009007652
  %v668 = vmul.bf16 %v186, 1009007652
  %v669 = vmul.bf16 %v187, 1009007652
  %v670 = vmul.bf16 %v188, 1009007652
  %v671 = vmul.bf16 %v189, 1009007652
  %v672 = vmul.bf16 %v190, 1009007652
  %v673 = vmul.bf16 %v191, 1009007652
  %v674 = vmul.bf16 %v192, 1009007652
  %v675 = vmul.bf16 %v193, 1009007652
  %v676 = vmul.bf16 %v194, 1009007652
  %v677 = vmul.bf16 %v195, 1009007652
  %v678 = vmul.bf16 %v196, 1009007652
  %v679 = vmul.bf16 %v197, 1009007652
  %v680 = vmul.bf16 %v198, 1009007652
  %v681 = vmul.bf16 %v199, 1009007652
  %v682 = vmul.bf16 %v200, 1009007652
  %v683 = vmul.bf16 %v201, 1009007652
  %v684 = vmul.bf16 %v202, 1009007652
  %v685 = vmul.bf16 %v203, 1009007652
  %v686 = vmul.bf16 %v204, 1009007652
  %v687 = vmul.bf16 %v205, 1009007652
  %v688 = vmul.bf16 %v206, 1009007652
  %v689 = vmul.bf16 %v207, 1009007652
  %v690 = vmul.bf16 %v208, 1009007652
  %v691 = vmul.bf16 %v209, 1009007652
  %v692 = vmul.bf16 %v210, 1009007652
  %v693 = vmul.bf16 %v211, 1009007652
  %v694 = vmul.bf16 %v212, 1009007652
  %v695 = vmul.bf16 %v213, 1009007652
  %v696 = vmul.bf16 %v214, 1009007652
  %v697 = vmul.bf16 %v215, 1009007652
  %v698 = vmul.bf16 %v216, 1009007652
  %v699 = vmul.bf16 %v217, 1009007652
  %v700 = vmul.bf16 %v218, 1009007652
  %v701 = vmul.bf16 %v219, 1009007652
  %v702 = vmul.bf16 %v220, 1009007652
  %v703 = vmul.bf16 %v221, 1009007652
  %v704 = vmul.bf16 %v222, 1009007652
  %v705 = vmul.bf16 %v223, 1009007652
  %v706 = vmul.bf16 %v224, 1009007652
  %v707 = vmul.bf16 %v225, 1009007652
  %v708 = vmul.bf16 %v226, 1009007652
  %v709 = vmul.bf16 %v227, 1009007652
  %v710 = vmul.bf16 %v228, 1009007652
  %v711 = vmul.bf16 %v229, 1009007652
  %v712 = vmul.bf16 %v230, 1009007652
  %v713 = vmul.bf16 %v231, 1009007652
  %v714 = vmul.bf16 %v232, 1009007652
  %v715 = vmul.bf16 %v233, 1009007652
  %v716 = vmul.bf16 %v234, 1009007652
  %v717 = vmul.bf16 %v235, 1009007652
  %v718 = vmul.bf16 %v236, 1009007652
  %v719 = vmul.bf16 %v237, 1009007652
  %v720 = vmul.bf16 %v238, 1009007652
  %v721 = vmul.bf16 %v239, 1009007652
  %v722 = vmul.bf16 %v240, 1009007652
  %v723 = vmul.bf16 %v241, 1009007652
  %v724 = vmul.bf16 %v242, 1009007652
  %v725 = vmul.bf16 %v243, 1009007652
  %v726 = vmul.bf16 %v244, 1009007652
  %v727 = vmul.bf16 %v245, 1009007652
  %v728 = vmul.bf16 %v246, 1009007652
  %v729 = vmul.bf16 %v247, 1009007652
  %v730 = vmul.bf16 %v248, 1009007652
  %v731 = vmul.bf16 %v249, 1009007652
  %v732 = vmul.bf16 %v250, 1009007652
  %v733 = vmul.bf16 %v251, 1009007652
  %v734 = vmul.bf16 %v252, 1009007652
  %v735 = vmul.bf16 %v253, 1009007652
  %v736 = vmul.bf16 %v254, 1009007652
  %v737 = vmul.bf16 %v255, 1009007652
  %v738 = vmul.bf16 %v256, 1009007652
  %v739 = vmul.bf16 %v257, 1009007652
  %v740 = vmul.bf16 %v258, 1009007652
  %v741 = vmul.bf16 %v259, 1009007652
  %v742 = vmul.bf16 %v260, 1009007652
  %v743 = vmul.bf16 %v261, 1009007652
  %v744 = vmul.bf16 %v262, 1009007652
  %v745 = vmul.bf16 %v263, 1009007652
  %v746 = vmul.bf16 %v264, 1009007652
  %v747 = vsel %vm265, %v24, %v506
  %v748 = vsel %vm266, %v25, %v507
  %v749 = vsel %vm267, %v26, %v508
  %v750 = vsel %vm268, %v27, %v509
  %v751 = vsel %vm269, %v28, %v510
  %v752 = vsel %vm270, %v29, %v511
  %v753 = vsel %vm271, %v30, %v512
  %v754 = vsel %vm272, %v31, %v513
  %v755 = vsel %vm273, %v32, %v514
  %v756 = vsel %vm274, %v33, %v515
  %v757 = vsel %vm275, %v34, %v516
  %v758 = vsel %vm276, %v35, %v517
  %v759 = vsel %vm277, %v36, %v518
  %v760 = vsel %vm278, %v37, %v519
  %v761 = vsel %vm279, %v38, %v520
  %v762 = vsel %vm280, %v39, %v521
  %v763 = vsel %vm281, %v40, %v522
  %v764 = vsel %vm282, %v41, %v523
  %v765 = vsel %vm283, %v42, %v524
  %v766 = vsel %vm284, %v43, %v525
  %v767 = vsel %vm285, %v44, %v526
  %v768 = vsel %vm286, %v45, %v527
  %v769 = vsel %vm287, %v46, %v528
  %v770 = vsel %vm288, %v47, %v529
  %v771 = vsel %vm289, %v48, %v530
  %v772 = vsel %vm290, %v49, %v531
  %v773 = vsel %vm291, %v50, %v532
  %v774 = vsel %vm292, %v51, %v533
  %v775 = vsel %vm293, %v52, %v534
  %v776 = vsel %vm294, %v53, %v535
  %v777 = vsel %vm295, %v54, %v536
  %v778 = vsel %vm296, %v55, %v537
  %v779 = vsel %vm297, %v56, %v538
  %v780 = vsel %vm298, %v57, %v539
  %v781 = vsel %vm299, %v58, %v540
  %v782 = vsel %vm300, %v59, %v541
  %v783 = vsel %vm301, %v60, %v542
  %v784 = vsel %vm302, %v61, %v543
  %v785 = vsel %vm303, %v62, %v544
  %v786 = vsel %vm304, %v63, %v545
  %v787 = vsel %vm305, %v64, %v546
  %v788 = vsel %vm306, %v65, %v547
  %v789 = vsel %vm307, %v66, %v548
  %v790 = vsel %vm308, %v67, %v549
  %v791 = vsel %vm309, %v68, %v550
  %v792 = vsel %vm310, %v69, %v551
  %v793 = vsel %vm311, %v70, %v552
  %v794 = vsel %vm312, %v71, %v553
  %v795 = vsel %vm313, %v72, %v554
  %v796 = vsel %vm314, %v73, %v555
  %v797 = vsel %vm315, %v74, %v556
  %v798 = vsel %vm316, %v75, %v557
  %v799 = vsel %vm317, %v76, %v558
  %v800 = vsel %vm318, %v77, %v559
  %v801 = vsel %vm319, %v78, %v560
  %v802 = vsel %vm320, %v79, %v561
  %v803 = vsel %vm321, %v80, %v562
  %v804 = vsel %vm322, %v81, %v563
  %v805 = vsel %vm323, %v82, %v564
  %v806 = vsel %vm324, %v83, %v565
  %v807 = vsel %vm325, %v84, %v566
  %v808 = vsel %vm326, %v85, %v567
  %v809 = vsel %vm327, %v86, %v568
  %v810 = vsel %vm328, %v87, %v569
  %v811 = vsel %vm329, %v88, %v570
  %v812 = vsel %vm330, %v89, %v571
  %v813 = vsel %vm331, %v90, %v572
  %v814 = vsel %vm332, %v91, %v573
  %v815 = vsel %vm333, %v92, %v574
  %v816 = vsel %vm334, %v93, %v575
  %v817 = vsel %vm335, %v94, %v576
  %v818 = vsel %vm336, %v95, %v577
  %v819 = vsel %vm337, %v96, %v578
  %v820 = vsel %vm338, %v97, %v579
  %v821 = vsel %vm339, %v98, %v580
  %v822 = vsel %vm340, %v99, %v581
  %v823 = vsel %vm341, %v100, %v582
  %v824 = vsel %vm342, %v101, %v583
  %v825 = vsel %vm343, %v102, %v584
  %v826 = vsel %vm344, %v103, %v585
  %v827 = vsel %vm345, %v104, %v586
  %v828 = vsel %vm346, %v105, %v587
  %v829 = vsel %vm347, %v106, %v588
  %v830 = vsel %vm348, %v107, %v589
  %v831 = vsel %vm349, %v108, %v590
  %v832 = vsel %vm350, %v109, %v591
  %v833 = vsel %vm351, %v110, %v592
  %v834 = vsel %vm352, %v111, %v593
  %v835 = vsel %vm353, %v112, %v594
  %v836 = vsel %vm354, %v113, %v595
  %v837 = vsel %vm355, %v114, %v596
  %v838 = vsel %vm356, %v115, %v597
  %v839 = vsel %vm357, %v116, %v598
  %v840 = vsel %vm358, %v117, %v599
  %v841 = vsel %vm359, %v118, %v600
  %v842 = vsel %vm360, %v119, %v601
  %v843 = vsel %vm361, %v120, %v602
  %v844 = vsel %vm362, %v121, %v603
  %v845 = vsel %vm363, %v122, %v604
  %v846 = vsel %vm364, %v123, %v605
  %v847 = vsel %vm365, %v124, %v606
  %v848 = vsel %vm366, %v125, %v607
  %v849 = vsel %vm367, %v126, %v608
  %v850 = vsel %vm368, %v127, %v609
  %v851 = vsel %vm369, %v128, %v610
  %v852 = vsel %vm370, %v129, %v611
  %v853 = vsel %vm371, %v130, %v612
  %v854 = vsel %vm372, %v131, %v613
  %v855 = vsel %vm373, %v132, %v614
  %v856 = vsel %vm374, %v133, %v615
  %v857 = vsel %vm375, %v134, %v616
  %v858 = vsel %vm376, %v135, %v617
  %v859 = vsel %vm377, %v136, %v618
  %v860 = vsel %vm378, %v137, %v619
  %v861 = vsel %vm379, %v138, %v620
  %v862 = vsel %vm380, %v139, %v621
  %v863 = vsel %vm381, %v140, %v622
  %v864 = vsel %vm382, %v141, %v623
  %v865 = vsel %vm383, %v142, %v624
  %v866 = vsel %vm384, %v143, %v625
  %v867 = vsel %vm385, %v144, %v626
  %v868 = vsel %vm386, %v145, %v627
  %v869 = vsel %vm387, %v146, %v628
  %v870 = vsel %vm388, %v147, %v629
  %v871 = vsel %vm389, %v148, %v630
  %v872 = vsel %vm390, %v149, %v631
  %v873 = vsel %vm391, %v150, %v632
  %v874 = vsel %vm392, %v151, %v633
  %v875 = vsel %vm393, %v152, %v634
  %v876 = vsel %vm394, %v153, %v635
  %v877 = vsel %vm395, %v154, %v636
  %v878 = vsel %vm396, %v155, %v637
  %v879 = vsel %vm397, %v156, %v638
  %v880 = vsel %vm398, %v157, %v639
  %v881 = vsel %vm399, %v158, %v640
  %v882 = vsel %vm400, %v159, %v641
  %v883 = vsel %vm401, %v160, %v642
  %v884 = vsel %vm402, %v161, %v643
  %v885 = vsel %vm403, %v162, %v644
  %v886 = vsel %vm404, %v163, %v645
  %v887 = vsel %vm405, %v164, %v646
  %v888 = vsel %vm406, %v165, %v647
  %v889 = vsel %vm407, %v166, %v648
  %v890 = vsel %vm408, %v167, %v649
  %v891 = vsel %vm409, %v168, %v650
  %v892 = vsel %vm410, %v169, %v651
  %v893 = vsel %vm411, %v170, %v652
  %v894 = vsel %vm412, %v171, %v653
  %v895 = vsel %vm413, %v172, %v654
  %v896 = vsel %vm414, %v173, %v655
  %v897 = vsel %vm415, %v174, %v656
  %v898 = vsel %vm416, %v175, %v657
  %v899 = vsel %vm417, %v176, %v658
  %v900 = vsel %vm418, %v177, %v659
  %v901 = vsel %vm419, %v178, %v660
  %v902 = vsel %vm420, %v179, %v661
  %v903 = vsel %vm421, %v180, %v662
  %v904 = vsel %vm422, %v181, %v663
  %v905 = vsel %vm423, %v182, %v664
  %v906 = vsel %vm424, %v183, %v665
  %v907 = vsel %vm425, %v184, %v666
  %v908 = vsel %vm426, %v185, %v667
  %v909 = vsel %vm427, %v186, %v668
  %v910 = vsel %vm428, %v187, %v669
  %v911 = vsel %vm429, %v188, %v670
  %v912 = vsel %vm430, %v189, %v671
  %v913 = vsel %vm431, %v190, %v672
  %v914 = vsel %vm432, %v191, %v673
  %v915 = vsel %vm433, %v192, %v674
  %v916 = vsel %vm434, %v193, %v675
  %v917 = vsel %vm435, %v194, %v676
  %v918 = vsel %vm436, %v195, %v677
  %v919 = vsel %vm437, %v196, %v678
  %v920 = vsel %vm438, %v197, %v679
  %v921 = vsel %vm439, %v198, %v680
  %v922 = vsel %vm440, %v199, %v681
  %v923 = vsel %vm441, %v200, %v682
  %v924 = vsel %vm442, %v201, %v683
  %v925 = vsel %vm443, %v202, %v684
  %v926 = vsel %vm444, %v203, %v685
  %v927 = vsel %vm445, %v204, %v686
  %v928 = vsel %vm446, %v205, %v687
  %v929 = vsel %vm447, %v206, %v688
  %v930 = vsel %vm448, %v207, %v689
  %v931 = vsel %vm449, %v208, %v690
  %v932 = vsel %vm450, %v209, %v691
  %v933 = vsel %vm451, %v210, %v692
  %v934 = vsel %vm452, %v211, %v693
  %v935 = vsel %vm453, %v212, %v694
  %v936 = vsel %vm454, %v213, %v695
  %v937 = vsel %vm455, %v214, %v696
  %v938 = vsel %vm456, %v215, %v697
  %v939 = vsel %vm457, %v216, %v698
  %v940 = vsel %vm458, %v217, %v699
  %v941 = vsel %vm459, %v218, %v700
  %v942 = vsel %vm460, %v219, %v701
  %v943 = vsel %vm461, %v220, %v702
  %v944 = vsel %vm462, %v221, %v703
  %v945 = vsel %vm463, %v222, %v704
  %v946 = vsel %vm464, %v223, %v705
  %v947 = vsel %vm465, %v224, %v706
  %v948 = vsel %vm466, %v225, %v707
  %v949 = vsel %vm467, %v226, %v708
  %v950 = vsel %vm468, %v227, %v709
  %v951 = vsel %vm469, %v228, %v710
  %v952 = vsel %vm470, %v229, %v711
  %v953 = vsel %vm471, %v230, %v712
  %v954 = vsel %vm472, %v231, %v713
  %v955 = vsel %vm473, %v232, %v714
  %v956 = vsel %vm474, %v233, %v715
  %v957 = vsel %vm475, %v234, %v716
  %v958 = vsel %vm476, %v235, %v717
  %v959 = vsel %vm477, %v236, %v718
  %v960 = vsel %vm478, %v237, %v719
  %v961 = vsel %vm479, %v238, %v720
  %v962 = vsel %vm480, %v239, %v721
  %v963 = vsel %vm481, %v240, %v722
  %v964 = vsel %vm482, %v241, %v723
  %v965 = vsel %vm483, %v242, %v724
  %v966 = vsel %vm484, %v243, %v725
  %v967 = vsel %vm485, %v244, %v726
  %v968 = vsel %vm486, %v245, %v727
  %v969 = vsel %vm487, %v246, %v728
  %v970 = vsel %vm488, %v247, %v729
  %v971 = vsel %vm489, %v248, %v730
  %v972 = vsel %vm490, %v249, %v731
  %v973 = vsel %vm491, %v250, %v732
  %v974 = vsel %vm492, %v251, %v733
  %v975 = vsel %vm493, %v252, %v734
  %v976 = vsel %vm494, %v253, %v735
  %v977 = vsel %vm495, %v254, %v736
  %v978 = vsel %vm496, %v255, %v737
  %v979 = vsel %vm497, %v256, %v738
  %v980 = vsel %vm498, %v257, %v739
  %v981 = vsel %vm499, %v258, %v740
  %v982 = vsel %vm500, %v259, %v741
  %v983 = vsel %vm501, %v260, %v742
  %v984 = vsel %vm502, %v261, %v743
  %v985 = vsel %vm503, %v262, %v744
  %v986 = vsel %vm504, %v263, %v745
  %v987 = vsel %vm505, %v264, %v746
  %v988 = vld [vmem:[%s1] sm:$0xf]
  %v989 = vld [vmem:[%s1 + $0x4] sm:$0xf]
  %v990 = vld [vmem:[%s1 + $0x8] sm:$0xf]
  %v991 = vld [vmem:[%s1 + $0xc] sm:$0xf]
  %v992 = vld [vmem:[%s1 + $0x10] sm:$0xf]
  %v993 = vld [vmem:[%s1 + $0x14] sm:$0xf]
  %v994 = vld [vmem:[%s1 + $0x18] sm:$0xf]
  %v995 = vld [vmem:[%s1 + $0x1c] sm:$0xf]
  %v996 = vld [vmem:[%s1 + $0x20] sm:$0xf]
  %v997 = vld [vmem:[%s1 + $0x24] sm:$0xf]
  %v998 = vld [vmem:[%s1 + $0x28] sm:$0xf]
  %v999 = vld [vmem:[%s1 + $0x2c] sm:$0xf]
  %v1000 = vld [vmem:[%s1 + $0x30] sm:$0xf]
  %v1001 = vld [vmem:[%s1 + $0x34] sm:$0xf]
  %v1002 = vld [vmem:[%s1 + $0x38] sm:$0xf]
  %v1003 = vld [vmem:[%s1 + $0x3c] sm:$0xf]
  %v1004 = vld [vmem:[%s1 + $0x40] sm:$0xf]
  %v1005 = vld [vmem:[%s1 + $0x44] sm:$0xf]
  %v1006 = vld [vmem:[%s2] sm:$0x1]
  %v1008 = vlaneseq
  %v1009 = vshrl.u32 %v1008, 7
  %v1010 = vsub.s32 0, %v1009
  %v1011 = vrot.slane %v1006, %v1010
  %v1254 = vunpack.c.l.b16 %v747
  %v1255 = vunpack.c.h.b16 %v747
  %v1256 = vunpack.c.l.b16 %v748
  %v1257 = vunpack.c.h.b16 %v748
  %v1258 = vunpack.c.l.b16 %v749
  %v1259 = vunpack.c.h.b16 %v749
  %v1260 = vunpack.c.l.b16 %v750
  %v1261 = vunpack.c.h.b16 %v750
  %v1262 = vunpack.c.l.b16 %v751
  %v1263 = vunpack.c.h.b16 %v751
  %v1264 = vunpack.c.l.b16 %v752
  %v1265 = vunpack.c.h.b16 %v752
  %v1266 = vunpack.c.l.b16 %v753
  %v1267 = vunpack.c.h.b16 %v753
  %v1268 = vunpack.c.l.b16 %v754
  %v1269 = vunpack.c.h.b16 %v754
  %v1270 = vunpack.c.l.b16 %v755
  %v1271 = vunpack.c.h.b16 %v755
  %v1272 = vunpack.c.l.b16 %v756
  %v1273 = vunpack.c.h.b16 %v756
  %v1274 = vunpack.c.l.b16 %v757
  %v1275 = vunpack.c.h.b16 %v757
  %v1276 = vunpack.c.l.b16 %v758
  %v1277 = vunpack.c.h.b16 %v758
  %v1278 = vunpack.c.l.b16 %v759
  %v1279 = vunpack.c.h.b16 %v759
  %v1280 = vunpack.c.l.b16 %v760
  %v1281 = vunpack.c.h.b16 %v760
  %v1282 = vunpack.c.l.b16 %v761
  %v1283 = vunpack.c.h.b16 %v761
  %v1284 = vunpack.c.l.b16 %v762
  %v1285 = vunpack.c.h.b16 %v762
  %v1286 = vunpack.c.l.b16 %v763
  %v1287 = vunpack.c.h.b16 %v763
  %v1288 = vunpack.c.l.b16 %v764
  %v1289 = vunpack.c.h.b16 %v764
  %v1290 = vunpack.c.l.b16 %v765
  %v1291 = vunpack.c.h.b16 %v765
  %v1292 = vunpack.c.l.b16 %v766
  %v1293 = vunpack.c.h.b16 %v766
  %v1294 = vunpack.c.l.b16 %v767
  %v1295 = vunpack.c.h.b16 %v767
  %v1296 = vunpack.c.l.b16 %v768
  %v1297 = vunpack.c.h.b16 %v768
  %v1298 = vunpack.c.l.b16 %v769
  %v1299 = vunpack.c.h.b16 %v769
  %v1300 = vunpack.c.l.b16 %v770
  %v1301 = vunpack.c.h.b16 %v770
  %v1302 = vunpack.c.l.b16 %v771
  %v1303 = vunpack.c.h.b16 %v771
  %v1304 = vunpack.c.l.b16 %v772
  %v1305 = vunpack.c.h.b16 %v772
  %v1306 = vunpack.c.l.b16 %v773
  %v1307 = vunpack.c.h.b16 %v773
  %v1308 = vunpack.c.l.b16 %v774
  %v1309 = vunpack.c.h.b16 %v774
  %v1310 = vunpack.c.l.b16 %v775
  %v1311 = vunpack.c.h.b16 %v775
  %v1312 = vunpack.c.l.b16 %v776
  %v1313 = vunpack.c.h.b16 %v776
  %v1314 = vunpack.c.l.b16 %v777
  %v1315 = vunpack.c.h.b16 %v777
  %v1316 = vunpack.c.l.b16 %v778
  %v1317 = vunpack.c.h.b16 %v778
  %v1318 = vunpack.c.l.b16 %v779
  %v1319 = vunpack.c.h.b16 %v779
  %v1320 = vunpack.c.l.b16 %v780
  %v1321 = vunpack.c.h.b16 %v780
  %v1322 = vunpack.c.l.b16 %v781
  %v1323 = vunpack.c.h.b16 %v781
  %v1324 = vunpack.c.l.b16 %v782
  %v1325 = vunpack.c.h.b16 %v782
  %v1326 = vunpack.c.l.b16 %v783
  %v1327 = vunpack.c.h.b16 %v783
  %v1328 = vunpack.c.l.b16 %v784
  %v1329 = vunpack.c.h.b16 %v784
  %v1330 = vunpack.c.l.b16 %v785
  %v1331 = vunpack.c.h.b16 %v785
  %v1332 = vunpack.c.l.b16 %v786
  %v1333 = vunpack.c.h.b16 %v786
  %v1334 = vunpack.c.l.b16 %v787
  %v1335 = vunpack.c.h.b16 %v787
  %v1336 = vunpack.c.l.b16 %v788
  %v1337 = vunpack.c.h.b16 %v788
  %v1338 = vunpack.c.l.b16 %v789
  %v1339 = vunpack.c.h.b16 %v789
  %v1340 = vunpack.c.l.b16 %v790
  %v1341 = vunpack.c.h.b16 %v790
  %v1342 = vunpack.c.l.b16 %v791
  %v1343 = vunpack.c.h.b16 %v791
  %v1344 = vunpack.c.l.b16 %v792
  %v1345 = vunpack.c.h.b16 %v792
  %v1346 = vunpack.c.l.b16 %v793
  %v1347 = vunpack.c.h.b16 %v793
  %v1348 = vunpack.c.l.b16 %v794
  %v1349 = vunpack.c.h.b16 %v794
  %v1350 = vunpack.c.l.b16 %v795
  %v1351 = vunpack.c.h.b16 %v795
  %v1352 = vunpack.c.l.b16 %v796
  %v1353 = vunpack.c.h.b16 %v796
  %v1354 = vunpack.c.l.b16 %v797
  %v1355 = vunpack.c.h.b16 %v797
  %v1356 = vunpack.c.l.b16 %v798
  %v1357 = vunpack.c.h.b16 %v798
  %v1358 = vunpack.c.l.b16 %v799
  %v1359 = vunpack.c.h.b16 %v799
  %v1360 = vunpack.c.l.b16 %v800
  %v1361 = vunpack.c.h.b16 %v800
  %v1362 = vunpack.c.l.b16 %v801
  %v1363 = vunpack.c.h.b16 %v801
  %v1364 = vunpack.c.l.b16 %v802
  %v1365 = vunpack.c.h.b16 %v802
  %v1366 = vunpack.c.l.b16 %v803
  %v1367 = vunpack.c.h.b16 %v803
  %v1368 = vunpack.c.l.b16 %v804
  %v1369 = vunpack.c.h.b16 %v804
  %v1370 = vunpack.c.l.b16 %v805
  %v1371 = vunpack.c.h.b16 %v805
  %v1372 = vunpack.c.l.b16 %v806
  %v1373 = vunpack.c.h.b16 %v806
  %v1374 = vunpack.c.l.b16 %v807
  %v1375 = vunpack.c.h.b16 %v807
  %v1376 = vunpack.c.l.b16 %v808
  %v1377 = vunpack.c.h.b16 %v808
  %v1378 = vunpack.c.l.b16 %v809
  %v1379 = vunpack.c.h.b16 %v809
  %v1380 = vunpack.c.l.b16 %v810
  %v1381 = vunpack.c.h.b16 %v810
  %v1382 = vunpack.c.l.b16 %v811
  %v1383 = vunpack.c.h.b16 %v811
  %v1384 = vunpack.c.l.b16 %v812
  %v1385 = vunpack.c.h.b16 %v812
  %v1386 = vunpack.c.l.b16 %v813
  %v1387 = vunpack.c.h.b16 %v813
  %v1388 = vunpack.c.l.b16 %v814
  %v1389 = vunpack.c.h.b16 %v814
  %v1390 = vunpack.c.l.b16 %v815
  %v1391 = vunpack.c.h.b16 %v815
  %v1392 = vunpack.c.l.b16 %v816
  %v1393 = vunpack.c.h.b16 %v816
  %v1394 = vunpack.c.l.b16 %v817
  %v1395 = vunpack.c.h.b16 %v817
  %v1396 = vunpack.c.l.b16 %v818
  %v1397 = vunpack.c.h.b16 %v818
  %v1398 = vunpack.c.l.b16 %v819
  %v1399 = vunpack.c.h.b16 %v819
  %v1400 = vunpack.c.l.b16 %v820
  %v1401 = vunpack.c.h.b16 %v820
  %v1402 = vunpack.c.l.b16 %v821
  %v1403 = vunpack.c.h.b16 %v821
  %v1404 = vunpack.c.l.b16 %v822
  %v1405 = vunpack.c.h.b16 %v822
  %v1406 = vunpack.c.l.b16 %v823
  %v1407 = vunpack.c.h.b16 %v823
  %v1408 = vunpack.c.l.b16 %v824
  %v1409 = vunpack.c.h.b16 %v824
  %v1410 = vunpack.c.l.b16 %v825
  %v1411 = vunpack.c.h.b16 %v825
  %v1412 = vunpack.c.l.b16 %v826
  %v1413 = vunpack.c.h.b16 %v826
  %v1414 = vunpack.c.l.b16 %v827
  %v1415 = vunpack.c.h.b16 %v827
  %v1416 = vunpack.c.l.b16 %v828
  %v1417 = vunpack.c.h.b16 %v828
  %v1418 = vunpack.c.l.b16 %v829
  %v1419 = vunpack.c.h.b16 %v829
  %v1420 = vunpack.c.l.b16 %v830
  %v1421 = vunpack.c.h.b16 %v830
  %v1422 = vunpack.c.l.b16 %v831
  %v1423 = vunpack.c.h.b16 %v831
  %v1424 = vunpack.c.l.b16 %v832
  %v1425 = vunpack.c.h.b16 %v832
  %v1426 = vunpack.c.l.b16 %v833
  %v1427 = vunpack.c.h.b16 %v833
  %v1428 = vunpack.c.l.b16 %v834
  %v1429 = vunpack.c.h.b16 %v834
  %v1430 = vunpack.c.l.b16 %v835
  %v1431 = vunpack.c.h.b16 %v835
  %v1432 = vunpack.c.l.b16 %v836
  %v1433 = vunpack.c.h.b16 %v836
  %v1434 = vunpack.c.l.b16 %v837
  %v1435 = vunpack.c.h.b16 %v837
  %v1436 = vunpack.c.l.b16 %v838
  %v1437 = vunpack.c.h.b16 %v838
  %v1438 = vunpack.c.l.b16 %v839
  %v1439 = vunpack.c.h.b16 %v839
  %v1440 = vunpack.c.l.b16 %v840
  %v1441 = vunpack.c.h.b16 %v840
  %v1442 = vunpack.c.l.b16 %v841
  %v1443 = vunpack.c.h.b16 %v841
  %v1444 = vunpack.c.l.b16 %v842
  %v1445 = vunpack.c.h.b16 %v842
  %v1446 = vunpack.c.l.b16 %v843
  %v1447 = vunpack.c.h.b16 %v843
  %v1448 = vunpack.c.l.b16 %v844
  %v1449 = vunpack.c.h.b16 %v844
  %v1450 = vunpack.c.l.b16 %v845
  %v1451 = vunpack.c.h.b16 %v845
  %v1452 = vunpack.c.l.b16 %v846
  %v1453 = vunpack.c.h.b16 %v846
  %v1454 = vunpack.c.l.b16 %v847
  %v1455 = vunpack.c.h.b16 %v847
  %v1456 = vunpack.c.l.b16 %v848
  %v1457 = vunpack.c.h.b16 %v848
  %v1458 = vunpack.c.l.b16 %v849
  %v1459 = vunpack.c.h.b16 %v849
  %v1460 = vunpack.c.l.b16 %v850
  %v1461 = vunpack.c.h.b16 %v850
  %v1462 = vunpack.c.l.b16 %v851
  %v1463 = vunpack.c.h.b16 %v851
  %v1464 = vunpack.c.l.b16 %v852
  %v1465 = vunpack.c.h.b16 %v852
  %v1466 = vunpack.c.l.b16 %v853
  %v1467 = vunpack.c.h.b16 %v853
  %v1468 = vunpack.c.l.b16 %v854
  %v1469 = vunpack.c.h.b16 %v854
  %v1470 = vunpack.c.l.b16 %v855
  %v1471 = vunpack.c.h.b16 %v855
  %v1472 = vunpack.c.l.b16 %v856
  %v1473 = vunpack.c.h.b16 %v856
  %v1474 = vunpack.c.l.b16 %v857
  %v1475 = vunpack.c.h.b16 %v857
  %v1476 = vunpack.c.l.b16 %v858
  %v1477 = vunpack.c.h.b16 %v858
  %v1478 = vunpack.c.l.b16 %v859
  %v1479 = vunpack.c.h.b16 %v859
  %v1480 = vunpack.c.l.b16 %v860
  %v1481 = vunpack.c.h.b16 %v860
  %v1482 = vunpack.c.l.b16 %v861
  %v1483 = vunpack.c.h.b16 %v861
  %v1484 = vunpack.c.l.b16 %v862
  %v1485 = vunpack.c.h.b16 %v862
  %v1486 = vunpack.c.l.b16 %v863
  %v1487 = vunpack.c.h.b16 %v863
  %v1488 = vunpack.c.l.b16 %v864
  %v1489 = vunpack.c.h.b16 %v864
  %v1490 = vunpack.c.l.b16 %v865
  %v1491 = vunpack.c.h.b16 %v865
  %v1492 = vunpack.c.l.b16 %v866
  %v1493 = vunpack.c.h.b16 %v866
  %v1494 = vunpack.c.l.b16 %v867
  %v1495 = vunpack.c.h.b16 %v867
  %v1496 = vunpack.c.l.b16 %v868
  %v1497 = vunpack.c.h.b16 %v868
  %v1498 = vunpack.c.l.b16 %v869
  %v1499 = vunpack.c.h.b16 %v869
  %v1500 = vunpack.c.l.b16 %v870
  %v1501 = vunpack.c.h.b16 %v870
  %v1502 = vunpack.c.l.b16 %v871
  %v1503 = vunpack.c.h.b16 %v871
  %v1504 = vunpack.c.l.b16 %v872
  %v1505 = vunpack.c.h.b16 %v872
  %v1506 = vunpack.c.l.b16 %v873
  %v1507 = vunpack.c.h.b16 %v873
  %v1508 = vunpack.c.l.b16 %v874
  %v1509 = vunpack.c.h.b16 %v874
  %v1510 = vunpack.c.l.b16 %v875
  %v1511 = vunpack.c.h.b16 %v875
  %v1512 = vunpack.c.l.b16 %v876
  %v1513 = vunpack.c.h.b16 %v876
  %v1514 = vunpack.c.l.b16 %v877
  %v1515 = vunpack.c.h.b16 %v877
  %v1516 = vunpack.c.l.b16 %v878
  %v1517 = vunpack.c.h.b16 %v878
  %v1518 = vunpack.c.l.b16 %v879
  %v1519 = vunpack.c.h.b16 %v879
  %v1520 = vunpack.c.l.b16 %v880
  %v1521 = vunpack.c.h.b16 %v880
  %v1522 = vunpack.c.l.b16 %v881
  %v1523 = vunpack.c.h.b16 %v881
  %v1524 = vunpack.c.l.b16 %v882
  %v1525 = vunpack.c.h.b16 %v882
  %v1526 = vunpack.c.l.b16 %v883
  %v1527 = vunpack.c.h.b16 %v883
  %v1528 = vunpack.c.l.b16 %v884
  %v1529 = vunpack.c.h.b16 %v884
  %v1530 = vunpack.c.l.b16 %v885
  %v1531 = vunpack.c.h.b16 %v885
  %v1532 = vunpack.c.l.b16 %v886
  %v1533 = vunpack.c.h.b16 %v886
  %v1534 = vunpack.c.l.b16 %v887
  %v1535 = vunpack.c.h.b16 %v887
  %v1536 = vunpack.c.l.b16 %v888
  %v1537 = vunpack.c.h.b16 %v888
  %v1538 = vunpack.c.l.b16 %v889
  %v1539 = vunpack.c.h.b16 %v889
  %v1540 = vunpack.c.l.b16 %v890
  %v1541 = vunpack.c.h.b16 %v890
  %v1542 = vunpack.c.l.b16 %v891
  %v1543 = vunpack.c.h.b16 %v891
  %v1544 = vunpack.c.l.b16 %v892
  %v1545 = vunpack.c.h.b16 %v892
  %v1546 = vunpack.c.l.b16 %v893
  %v1547 = vunpack.c.h.b16 %v893
  %v1548 = vunpack.c.l.b16 %v894
  %v1549 = vunpack.c.h.b16 %v894
  %v1550 = vunpack.c.l.b16 %v895
  %v1551 = vunpack.c.h.b16 %v895
  %v1552 = vunpack.c.l.b16 %v896
  %v1553 = vunpack.c.h.b16 %v896
  %v1554 = vunpack.c.l.b16 %v897
  %v1555 = vunpack.c.h.b16 %v897
  %v1556 = vunpack.c.l.b16 %v898
  %v1557 = vunpack.c.h.b16 %v898
  %v1558 = vunpack.c.l.b16 %v899
  %v1559 = vunpack.c.h.b16 %v899
  %v1560 = vunpack.c.l.b16 %v900
  %v1561 = vunpack.c.h.b16 %v900
  %v1562 = vunpack.c.l.b16 %v901
  %v1563 = vunpack.c.h.b16 %v901
  %v1564 = vunpack.c.l.b16 %v902
  %v1565 = vunpack.c.h.b16 %v902
  %v1566 = vunpack.c.l.b16 %v903
  %v1567 = vunpack.c.h.b16 %v903
  %v1568 = vunpack.c.l.b16 %v904
  %v1569 = vunpack.c.h.b16 %v904
  %v1570 = vunpack.c.l.b16 %v905
  %v1571 = vunpack.c.h.b16 %v905
  %v1572 = vunpack.c.l.b16 %v906
  %v1573 = vunpack.c.h.b16 %v906
  %v1574 = vunpack.c.l.b16 %v907
  %v1575 = vunpack.c.h.b16 %v907
  %v1576 = vunpack.c.l.b16 %v908
  %v1577 = vunpack.c.h.b16 %v908
  %v1578 = vunpack.c.l.b16 %v909
  %v1579 = vunpack.c.h.b16 %v909
  %v1580 = vunpack.c.l.b16 %v910
  %v1581 = vunpack.c.h.b16 %v910
  %v1582 = vunpack.c.l.b16 %v911
  %v1583 = vunpack.c.h.b16 %v911
  %v1584 = vunpack.c.l.b16 %v912
  %v1585 = vunpack.c.h.b16 %v912
  %v1586 = vunpack.c.l.b16 %v913
  %v1587 = vunpack.c.h.b16 %v913
  %v1588 = vunpack.c.l.b16 %v914
  %v1589 = vunpack.c.h.b16 %v914
  %v1590 = vunpack.c.l.b16 %v915
  %v1591 = vunpack.c.h.b16 %v915
  %v1592 = vunpack.c.l.b16 %v916
  %v1593 = vunpack.c.h.b16 %v916
  %v1594 = vunpack.c.l.b16 %v917
  %v1595 = vunpack.c.h.b16 %v917
  %v1596 = vunpack.c.l.b16 %v918
  %v1597 = vunpack.c.h.b16 %v918
  %v1598 = vunpack.c.l.b16 %v919
  %v1599 = vunpack.c.h.b16 %v919
  %v1600 = vunpack.c.l.b16 %v920
  %v1601 = vunpack.c.h.b16 %v920
  %v1602 = vunpack.c.l.b16 %v921
  %v1603 = vunpack.c.h.b16 %v921
  %v1604 = vunpack.c.l.b16 %v922
  %v1605 = vunpack.c.h.b16 %v922
  %v1606 = vunpack.c.l.b16 %v923
  %v1607 = vunpack.c.h.b16 %v923
  %v1608 = vunpack.c.l.b16 %v924
  %v1609 = vunpack.c.h.b16 %v924
  %v1610 = vunpack.c.l.b16 %v925
  %v1611 = vunpack.c.h.b16 %v925
  %v1612 = vunpack.c.l.b16 %v926
  %v1613 = vunpack.c.h.b16 %v926
  %v1614 = vunpack.c.l.b16 %v927
  %v1615 = vunpack.c.h.b16 %v927
  %v1616 = vunpack.c.l.b16 %v928
  %v1617 = vunpack.c.h.b16 %v928
  %v1618 = vunpack.c.l.b16 %v929
  %v1619 = vunpack.c.h.b16 %v929
  %v1620 = vunpack.c.l.b16 %v930
  %v1621 = vunpack.c.h.b16 %v930
  %v1622 = vunpack.c.l.b16 %v931
  %v1623 = vunpack.c.h.b16 %v931
  %v1624 = vunpack.c.l.b16 %v932
  %v1625 = vunpack.c.h.b16 %v932
  %v1626 = vunpack.c.l.b16 %v933
  %v1627 = vunpack.c.h.b16 %v933
  %v1628 = vunpack.c.l.b16 %v934
  %v1629 = vunpack.c.h.b16 %v934
  %v1630 = vunpack.c.l.b16 %v935
  %v1631 = vunpack.c.h.b16 %v935
  %v1632 = vunpack.c.l.b16 %v936
  %v1633 = vunpack.c.h.b16 %v936
  %v1634 = vunpack.c.l.b16 %v937
  %v1635 = vunpack.c.h.b16 %v937
  %v1636 = vunpack.c.l.b16 %v938
  %v1637 = vunpack.c.h.b16 %v938
  %v1638 = vunpack.c.l.b16 %v939
  %v1639 = vunpack.c.h.b16 %v939
  %v1640 = vunpack.c.l.b16 %v940
  %v1641 = vunpack.c.h.b16 %v940
  %v1642 = vunpack.c.l.b16 %v941
  %v1643 = vunpack.c.h.b16 %v941
  %v1644 = vunpack.c.l.b16 %v942
  %v1645 = vunpack.c.h.b16 %v942
  %v1646 = vunpack.c.l.b16 %v943
  %v1647 = vunpack.c.h.b16 %v943
  %v1648 = vunpack.c.l.b16 %v944
  %v1649 = vunpack.c.h.b16 %v944
  %v1650 = vunpack.c.l.b16 %v945
  %v1651 = vunpack.c.h.b16 %v945
  %v1652 = vunpack.c.l.b16 %v946
  %v1653 = vunpack.c.h.b16 %v946
  %v1654 = vunpack.c.l.b16 %v947
  %v1655 = vunpack.c.h.b16 %v947
  %v1656 = vunpack.c.l.b16 %v948
  %v1657 = vunpack.c.h.b16 %v948
  %v1658 = vunpack.c.l.b16 %v949
  %v1659 = vunpack.c.h.b16 %v949
  %v1660 = vunpack.c.l.b16 %v950
  %v1661 = vunpack.c.h.b16 %v950
  %v1662 = vunpack.c.l.b16 %v951
  %v1663 = vunpack.c.h.b16 %v951
  %v1664 = vunpack.c.l.b16 %v952
  %v1665 = vunpack.c.h.b16 %v952
  %v1666 = vunpack.c.l.b16 %v953
  %v1667 = vunpack.c.h.b16 %v953
  %v1668 = vunpack.c.l.b16 %v954
  %v1669 = vunpack.c.h.b16 %v954
  %v1670 = vunpack.c.l.b16 %v955
  %v1671 = vunpack.c.h.b16 %v955
  %v1672 = vunpack.c.l.b16 %v956
  %v1673 = vunpack.c.h.b16 %v956
  %v1674 = vunpack.c.l.b16 %v957
  %v1675 = vunpack.c.h.b16 %v957
  %v1676 = vunpack.c.l.b16 %v958
  %v1677 = vunpack.c.h.b16 %v958
  %v1678 = vunpack.c.l.b16 %v959
  %v1679 = vunpack.c.h.b16 %v959
  %v1680 = vunpack.c.l.b16 %v960
  %v1681 = vunpack.c.h.b16 %v960
  %v1682 = vunpack.c.l.b16 %v961
  %v1683 = vunpack.c.h.b16 %v961
  %v1684 = vunpack.c.l.b16 %v962
  %v1685 = vunpack.c.h.b16 %v962
  %v1686 = vunpack.c.l.b16 %v963
  %v1687 = vunpack.c.h.b16 %v963
  %v1688 = vunpack.c.l.b16 %v964
  %v1689 = vunpack.c.h.b16 %v964
  %v1690 = vunpack.c.l.b16 %v965
  %v1691 = vunpack.c.h.b16 %v965
  %v1692 = vunpack.c.l.b16 %v966
  %v1693 = vunpack.c.h.b16 %v966
  %v1694 = vunpack.c.l.b16 %v967
  %v1695 = vunpack.c.h.b16 %v967
  %v1696 = vunpack.c.l.b16 %v968
  %v1697 = vunpack.c.h.b16 %v968
  %v1698 = vunpack.c.l.b16 %v969
  %v1699 = vunpack.c.h.b16 %v969
  %v1700 = vunpack.c.l.b16 %v970
  %v1701 = vunpack.c.h.b16 %v970
  %v1702 = vunpack.c.l.b16 %v971
  %v1703 = vunpack.c.h.b16 %v971
  %v1704 = vunpack.c.l.b16 %v972
  %v1705 = vunpack.c.h.b16 %v972
  %v1706 = vunpack.c.l.b16 %v973
  %v1707 = vunpack.c.h.b16 %v973
  %v1708 = vunpack.c.l.b16 %v974
  %v1709 = vunpack.c.h.b16 %v974
  %v1710 = vunpack.c.l.b16 %v975
  %v1711 = vunpack.c.h.b16 %v975
  %v1712 = vunpack.c.l.b16 %v976
  %v1713 = vunpack.c.h.b16 %v976
  %v1714 = vunpack.c.l.b16 %v977
  %v1715 = vunpack.c.h.b16 %v977
  %v1716 = vunpack.c.l.b16 %v978
  %v1717 = vunpack.c.h.b16 %v978
  %v1718 = vunpack.c.l.b16 %v979
  %v1719 = vunpack.c.h.b16 %v979
  %v1720 = vunpack.c.l.b16 %v980
  %v1721 = vunpack.c.h.b16 %v980
  %v1722 = vunpack.c.l.b16 %v981
  %v1723 = vunpack.c.h.b16 %v981
  %v1724 = vunpack.c.l.b16 %v982
  %v1725 = vunpack.c.h.b16 %v982
  %v1726 = vunpack.c.l.b16 %v983
  %v1727 = vunpack.c.h.b16 %v983
  %v1728 = vunpack.c.l.b16 %v984
  %v1729 = vunpack.c.h.b16 %v984
  %v1730 = vunpack.c.l.b16 %v985
  %v1731 = vunpack.c.h.b16 %v985
  %v1732 = vunpack.c.l.b16 %v986
  %v1733 = vunpack.c.h.b16 %v986
  %v1734 = vunpack.c.l.b16 %v987
  %v1735 = vunpack.c.h.b16 %v987
  %v1736 = vpack.c.b16 %v1256, %v1254
  %v1737 = vpack.c.b16 %v1257, %v1255
  %v1738 = vpack.c.b16 %v1260, %v1258
  %v1739 = vpack.c.b16 %v1261, %v1259
  %v1740 = vpack.c.b16 %v1264, %v1262
  %v1741 = vpack.c.b16 %v1265, %v1263
  %v1742 = vpack.c.b16 %v1268, %v1266
  %v1743 = vpack.c.b16 %v1269, %v1267
  %v1744 = vpack.c.b16 %v1272, %v1270
  %v1745 = vpack.c.b16 %v1273, %v1271
  %v1746 = vpack.c.b16 %v1276, %v1274
  %v1747 = vpack.c.b16 %v1277, %v1275
  %v1748 = vpack.c.b16 %v1280, %v1278
  %v1749 = vpack.c.b16 %v1281, %v1279
  %v1750 = vpack.c.b16 %v1284, %v1282
  %v1751 = vpack.c.b16 %v1285, %v1283
  %v1752 = vpack.c.b16 %v1288, %v1286
  %v1753 = vpack.c.b16 %v1289, %v1287
  %v1754 = vpack.c.b16 %v1292, %v1290
  %v1755 = vpack.c.b16 %v1293, %v1291
  %v1756 = vpack.c.b16 %v1296, %v1294
  %v1757 = vpack.c.b16 %v1297, %v1295
  %v1758 = vpack.c.b16 %v1300, %v1298
  %v1759 = vpack.c.b16 %v1301, %v1299
  %v1760 = vpack.c.b16 %v1304, %v1302
  %v1761 = vpack.c.b16 %v1305, %v1303
  %v1762 = vpack.c.b16 %v1308, %v1306
  %v1763 = vpack.c.b16 %v1309, %v1307
  %v1764 = vpack.c.b16 %v1312, %v1310
  %v1765 = vpack.c.b16 %v1313, %v1311
  %v1766 = vpack.c.b16 %v1316, %v1314
  %v1767 = vpack.c.b16 %v1317, %v1315
  %v1768 = vpack.c.b16 %v1320, %v1318
  %v1769 = vpack.c.b16 %v1321, %v1319
  %v1770 = vpack.c.b16 %v1324, %v1322
  %v1771 = vpack.c.b16 %v1325, %v1323
  %v1772 = vpack.c.b16 %v1328, %v1326
  %v1773 = vpack.c.b16 %v1329, %v1327
  %v1774 = vpack.c.b16 %v1332, %v1330
  %v1775 = vpack.c.b16 %v1333, %v1331
  %v1776 = vpack.c.b16 %v1336, %v1334
  %v1777 = vpack.c.b16 %v1337, %v1335
  %v1778 = vpack.c.b16 %v1340, %v1338
  %v1779 = vpack.c.b16 %v1341, %v1339
  %v1780 = vpack.c.b16 %v1344, %v1342
  %v1781 = vpack.c.b16 %v1345, %v1343
  %v1782 = vpack.c.b16 %v1348, %v1346
  %v1783 = vpack.c.b16 %v1349, %v1347
  %v1784 = vpack.c.b16 %v1352, %v1350
  %v1785 = vpack.c.b16 %v1353, %v1351
  %v1786 = vpack.c.b16 %v1356, %v1354
  %v1787 = vpack.c.b16 %v1357, %v1355
  %v1788 = vpack.c.b16 %v1360, %v1358
  %v1789 = vpack.c.b16 %v1361, %v1359
  %v1790 = vpack.c.b16 %v1364, %v1362
  %v1791 = vpack.c.b16 %v1365, %v1363
  %v1792 = vpack.c.b16 %v1368, %v1366
  %v1793 = vpack.c.b16 %v1369, %v1367
  %v1794 = vpack.c.b16 %v1372, %v1370
  %v1795 = vpack.c.b16 %v1373, %v1371
  %v1796 = vpack.c.b16 %v1376, %v1374
  %v1797 = vpack.c.b16 %v1377, %v1375
  %v1798 = vpack.c.b16 %v1380, %v1378
  %v1799 = vpack.c.b16 %v1381, %v1379
  %v1800 = vpack.c.b16 %v1384, %v1382
  %v1801 = vpack.c.b16 %v1385, %v1383
  %v1802 = vpack.c.b16 %v1388, %v1386
  %v1803 = vpack.c.b16 %v1389, %v1387
  %v1804 = vpack.c.b16 %v1392, %v1390
  %v1805 = vpack.c.b16 %v1393, %v1391
  %v1806 = vpack.c.b16 %v1396, %v1394
  %v1807 = vpack.c.b16 %v1397, %v1395
  %v1808 = vpack.c.b16 %v1400, %v1398
  %v1809 = vpack.c.b16 %v1401, %v1399
  %v1810 = vpack.c.b16 %v1404, %v1402
  %v1811 = vpack.c.b16 %v1405, %v1403
  %v1812 = vpack.c.b16 %v1408, %v1406
  %v1813 = vpack.c.b16 %v1409, %v1407
  %v1814 = vpack.c.b16 %v1412, %v1410
  %v1815 = vpack.c.b16 %v1413, %v1411
  %v1816 = vpack.c.b16 %v1416, %v1414
  %v1817 = vpack.c.b16 %v1417, %v1415
  %v1818 = vpack.c.b16 %v1420, %v1418
  %v1819 = vpack.c.b16 %v1421, %v1419
  %v1820 = vpack.c.b16 %v1424, %v1422
  %v1821 = vpack.c.b16 %v1425, %v1423
  %v1822 = vpack.c.b16 %v1428, %v1426
  %v1823 = vpack.c.b16 %v1429, %v1427
  %v1824 = vpack.c.b16 %v1432, %v1430
  %v1825 = vpack.c.b16 %v1433, %v1431
  %v1826 = vpack.c.b16 %v1436, %v1434
  %v1827 = vpack.c.b16 %v1437, %v1435
  %v1828 = vpack.c.b16 %v1440, %v1438
  %v1829 = vpack.c.b16 %v1441, %v1439
  %v1830 = vpack.c.b16 %v1444, %v1442
  %v1831 = vpack.c.b16 %v1445, %v1443
  %v1832 = vpack.c.b16 %v1448, %v1446
  %v1833 = vpack.c.b16 %v1449, %v1447
  %v1834 = vpack.c.b16 %v1452, %v1450
  %v1835 = vpack.c.b16 %v1453, %v1451
  %v1836 = vpack.c.b16 %v1456, %v1454
  %v1837 = vpack.c.b16 %v1457, %v1455
  %v1838 = vpack.c.b16 %v1460, %v1458
  %v1839 = vpack.c.b16 %v1461, %v1459
  %v1840 = vpack.c.b16 %v1464, %v1462
  %v1841 = vpack.c.b16 %v1465, %v1463
  %v1842 = vpack.c.b16 %v1468, %v1466
  %v1843 = vpack.c.b16 %v1469, %v1467
  %v1844 = vpack.c.b16 %v1472, %v1470
  %v1845 = vpack.c.b16 %v1473, %v1471
  %v1846 = vpack.c.b16 %v1476, %v1474
  %v1847 = vpack.c.b16 %v1477, %v1475
  %v1848 = vpack.c.b16 %v1480, %v1478
  %v1849 = vpack.c.b16 %v1481, %v1479
  %v1850 = vpack.c.b16 %v1484, %v1482
  %v1851 = vpack.c.b16 %v1485, %v1483
  %v1852 = vpack.c.b16 %v1488, %v1486
  %v1853 = vpack.c.b16 %v1489, %v1487
  %v1854 = vpack.c.b16 %v1492, %v1490
  %v1855 = vpack.c.b16 %v1493, %v1491
  %v1856 = vpack.c.b16 %v1496, %v1494
  %v1857 = vpack.c.b16 %v1497, %v1495
  %v1858 = vpack.c.b16 %v1500, %v1498
  %v1859 = vpack.c.b16 %v1501, %v1499
  %v1860 = vpack.c.b16 %v1504, %v1502
  %v1861 = vpack.c.b16 %v1505, %v1503
  %v1862 = vpack.c.b16 %v1508, %v1506
  %v1863 = vpack.c.b16 %v1509, %v1507
  %v1864 = vpack.c.b16 %v1512, %v1510
  %v1865 = vpack.c.b16 %v1513, %v1511
  %v1866 = vpack.c.b16 %v1516, %v1514
  %v1867 = vpack.c.b16 %v1517, %v1515
  %v1868 = vpack.c.b16 %v1520, %v1518
  %v1869 = vpack.c.b16 %v1521, %v1519
  %v1870 = vpack.c.b16 %v1524, %v1522
  %v1871 = vpack.c.b16 %v1525, %v1523
  %v1872 = vpack.c.b16 %v1528, %v1526
  %v1873 = vpack.c.b16 %v1529, %v1527
  %v1874 = vpack.c.b16 %v1532, %v1530
  %v1875 = vpack.c.b16 %v1533, %v1531
  %v1876 = vpack.c.b16 %v1536, %v1534
  %v1877 = vpack.c.b16 %v1537, %v1535
  %v1878 = vpack.c.b16 %v1540, %v1538
  %v1879 = vpack.c.b16 %v1541, %v1539
  %v1880 = vpack.c.b16 %v1544, %v1542
  %v1881 = vpack.c.b16 %v1545, %v1543
  %v1882 = vpack.c.b16 %v1548, %v1546
  %v1883 = vpack.c.b16 %v1549, %v1547
  %v1884 = vpack.c.b16 %v1552, %v1550
  %v1885 = vpack.c.b16 %v1553, %v1551
  %v1886 = vpack.c.b16 %v1556, %v1554
  %v1887 = vpack.c.b16 %v1557, %v1555
  %v1888 = vpack.c.b16 %v1560, %v1558
  %v1889 = vpack.c.b16 %v1561, %v1559
  %v1890 = vpack.c.b16 %v1564, %v1562
  %v1891 = vpack.c.b16 %v1565, %v1563
  %v1892 = vpack.c.b16 %v1568, %v1566
  %v1893 = vpack.c.b16 %v1569, %v1567
  %v1894 = vpack.c.b16 %v1572, %v1570
  %v1895 = vpack.c.b16 %v1573, %v1571
  %v1896 = vpack.c.b16 %v1576, %v1574
  %v1897 = vpack.c.b16 %v1577, %v1575
  %v1898 = vpack.c.b16 %v1580, %v1578
  %v1899 = vpack.c.b16 %v1581, %v1579
  %v1900 = vpack.c.b16 %v1584, %v1582
  %v1901 = vpack.c.b16 %v1585, %v1583
  %v1902 = vpack.c.b16 %v1588, %v1586
  %v1903 = vpack.c.b16 %v1589, %v1587
  %v1904 = vpack.c.b16 %v1592, %v1590
  %v1905 = vpack.c.b16 %v1593, %v1591
  %v1906 = vpack.c.b16 %v1596, %v1594
  %v1907 = vpack.c.b16 %v1597, %v1595
  %v1908 = vpack.c.b16 %v1600, %v1598
  %v1909 = vpack.c.b16 %v1601, %v1599
  %v1910 = vpack.c.b16 %v1604, %v1602
  %v1911 = vpack.c.b16 %v1605, %v1603
  %v1912 = vpack.c.b16 %v1608, %v1606
  %v1913 = vpack.c.b16 %v1609, %v1607
  %v1914 = vpack.c.b16 %v1612, %v1610
  %v1915 = vpack.c.b16 %v1613, %v1611
  %v1916 = vpack.c.b16 %v1616, %v1614
  %v1917 = vpack.c.b16 %v1617, %v1615
  %v1918 = vpack.c.b16 %v1620, %v1618
  %v1919 = vpack.c.b16 %v1621, %v1619
  %v1920 = vpack.c.b16 %v1624, %v1622
  %v1921 = vpack.c.b16 %v1625, %v1623
  %v1922 = vpack.c.b16 %v1628, %v1626
  %v1923 = vpack.c.b16 %v1629, %v1627
  %v1924 = vpack.c.b16 %v1632, %v1630
  %v1925 = vpack.c.b16 %v1633, %v1631
  %v1926 = vpack.c.b16 %v1636, %v1634
  %v1927 = vpack.c.b16 %v1637, %v1635
  %v1928 = vpack.c.b16 %v1640, %v1638
  %v1929 = vpack.c.b16 %v1641, %v1639
  %v1930 = vpack.c.b16 %v1644, %v1642
  %v1931 = vpack.c.b16 %v1645, %v1643
  %v1932 = vpack.c.b16 %v1648, %v1646
  %v1933 = vpack.c.b16 %v1649, %v1647
  %v1934 = vpack.c.b16 %v1652, %v1650
  %v1935 = vpack.c.b16 %v1653, %v1651
  %v1936 = vpack.c.b16 %v1656, %v1654
  %v1937 = vpack.c.b16 %v1657, %v1655
  %v1938 = vpack.c.b16 %v1660, %v1658
  %v1939 = vpack.c.b16 %v1661, %v1659
  %v1940 = vpack.c.b16 %v1664, %v1662
  %v1941 = vpack.c.b16 %v1665, %v1663
  %v1942 = vpack.c.b16 %v1668, %v1666
  %v1943 = vpack.c.b16 %v1669, %v1667
  %v1944 = vpack.c.b16 %v1672, %v1670
  %v1945 = vpack.c.b16 %v1673, %v1671
  %v1946 = vpack.c.b16 %v1676, %v1674
  %v1947 = vpack.c.b16 %v1677, %v1675
  %v1948 = vpack.c.b16 %v1680, %v1678
  %v1949 = vpack.c.b16 %v1681, %v1679
  %v1950 = vpack.c.b16 %v1684, %v1682
  %v1951 = vpack.c.b16 %v1685, %v1683
  %v1952 = vpack.c.b16 %v1688, %v1686
  %v1953 = vpack.c.b16 %v1689, %v1687
  %v1954 = vpack.c.b16 %v1692, %v1690
  %v1955 = vpack.c.b16 %v1693, %v1691
  %v1956 = vpack.c.b16 %v1696, %v1694
  %v1957 = vpack.c.b16 %v1697, %v1695
  %v1958 = vpack.c.b16 %v1700, %v1698
  %v1959 = vpack.c.b16 %v1701, %v1699
  %v1960 = vpack.c.b16 %v1704, %v1702
  %v1961 = vpack.c.b16 %v1705, %v1703
  %v1962 = vpack.c.b16 %v1708, %v1706
  %v1963 = vpack.c.b16 %v1709, %v1707
  %v1964 = vpack.c.b16 %v1712, %v1710
  %v1965 = vpack.c.b16 %v1713, %v1711
  %v1966 = vpack.c.b16 %v1716, %v1714
  %v1967 = vpack.c.b16 %v1717, %v1715
  %v1968 = vpack.c.b16 %v1720, %v1718
  %v1969 = vpack.c.b16 %v1721, %v1719
  %v1970 = vpack.c.b16 %v1724, %v1722
  %v1971 = vpack.c.b16 %v1725, %v1723
  %v1972 = vpack.c.b16 %v1728, %v1726
  %v1973 = vpack.c.b16 %v1729, %v1727
  %v1974 = vpack.c.b16 %v1732, %v1730
  %v1975 = vpack.c.b16 %v1733, %v1731
  %v1976 = vpack.c.b16 %v1734, %v1734
  %v1977 = vpack.c.b16 %v1735, %v1735
  %v2117 = vunpack.c.l.b16 %v988
  %v2118 = vunpack.c.l.b16 %v989
  %v2119 = vunpack.c.l.b16 %v990
  %v2120 = vunpack.c.l.b16 %v991
  %v2121 = vunpack.c.l.b16 %v992
  %v2122 = vunpack.c.l.b16 %v993
  %v2123 = vunpack.c.l.b16 %v994
  %v2124 = vunpack.c.l.b16 %v995
  %v2125 = vunpack.c.l.b16 %v996
  %v2126 = vunpack.c.l.b16 %v997
  %v2127 = vunpack.c.l.b16 %v998
  %v2128 = vunpack.c.l.b16 %v999
  %v2129 = vunpack.c.l.b16 %v1000
  %v2130 = vunpack.c.l.b16 %v1001
  %v2131 = vunpack.c.l.b16 %v1002
  %v2132 = vunpack.c.l.b16 %v1003
  %v2133 = vunpack.c.l.b16 %v1004
  %v2134 = vunpack.c.l.b16 %v1005
  %v2135 = vpack.c.b16 %v2118, %v2117
  %v2136 = vpack.c.b16 %v2120, %v2119
  %v2137 = vpack.c.b16 %v2122, %v2121
  %v2138 = vpack.c.b16 %v2124, %v2123
  %v2139 = vpack.c.b16 %v2126, %v2125
  %v2140 = vpack.c.b16 %v2128, %v2127
  %v2141 = vpack.c.b16 %v2130, %v2129
  %v2142 = vpack.c.b16 %v2132, %v2131
  %v2143 = vpack.c.b16 %v2134, %v2133
  %vm2153 = vcmask 130048
  %v2155 = vsel %vm2153, %v1737, 0
  %v2158 = vsel %vm2153, %v1739, 0
  %v2161 = vsel %vm2153, %v1741, 0
  %v2164 = vsel %vm2153, %v1743, 0
  %v2167 = vsel %vm2153, %v1745, 0
  %v2170 = vsel %vm2153, %v1747, 0
  %v2173 = vsel %vm2153, %v1749, 0
  %v2176 = vsel %vm2153, %v1751, 0
  %v2179 = vsel %vm2153, %v1753, 0
  %v2182 = vsel %vm2153, %v1755, 0
  %v2185 = vsel %vm2153, %v1757, 0
  %v2188 = vsel %vm2153, %v1759, 0
  %v2191 = vsel %vm2153, %v1761, 0
  %v2194 = vsel %vm2153, %v1763, 0
  %v2197 = vsel %vm2153, %v1765, 0
  %v2200 = vsel %vm2153, %v1767, 0
  %v2203 = vsel %vm2153, %v1769, 0
  %v2206 = vsel %vm2153, %v1771, 0
  %v2209 = vsel %vm2153, %v1773, 0
  %v2212 = vsel %vm2153, %v1775, 0
  %v2215 = vsel %vm2153, %v1777, 0
  %v2218 = vsel %vm2153, %v1779, 0
  %v2221 = vsel %vm2153, %v1781, 0
  %v2224 = vsel %vm2153, %v1783, 0
  %v2227 = vsel %vm2153, %v1785, 0
  %v2230 = vsel %vm2153, %v1787, 0
  %v2233 = vsel %vm2153, %v1789, 0
  %v2236 = vsel %vm2153, %v1791, 0
  %v2239 = vsel %vm2153, %v1793, 0
  %v2242 = vsel %vm2153, %v1795, 0
  %v2245 = vsel %vm2153, %v1797, 0
  %v2248 = vsel %vm2153, %v1799, 0
  %v2251 = vsel %vm2153, %v1801, 0
  %v2254 = vsel %vm2153, %v1803, 0
  %v2257 = vsel %vm2153, %v1805, 0
  %v2260 = vsel %vm2153, %v1807, 0
  %v2263 = vsel %vm2153, %v1809, 0
  %v2266 = vsel %vm2153, %v1811, 0
  %v2269 = vsel %vm2153, %v1813, 0
  %v2272 = vsel %vm2153, %v1815, 0
  %v2275 = vsel %vm2153, %v1817, 0
  %v2278 = vsel %vm2153, %v1819, 0
  %v2281 = vsel %vm2153, %v1821, 0
  %v2284 = vsel %vm2153, %v1823, 0
  %v2287 = vsel %vm2153, %v1825, 0
  %v2290 = vsel %vm2153, %v1827, 0
  %v2293 = vsel %vm2153, %v1829, 0
  %v2296 = vsel %vm2153, %v1831, 0
  %v2299 = vsel %vm2153, %v1833, 0
  %v2302 = vsel %vm2153, %v1835, 0
  %v2305 = vsel %vm2153, %v1837, 0
  %v2308 = vsel %vm2153, %v1839, 0
  %v2311 = vsel %vm2153, %v1841, 0
  %v2314 = vsel %vm2153, %v1843, 0
  %v2317 = vsel %vm2153, %v1845, 0
  %v2320 = vsel %vm2153, %v1847, 0
  %v2323 = vsel %vm2153, %v1849, 0
  %v2326 = vsel %vm2153, %v1851, 0
  %v2329 = vsel %vm2153, %v1853, 0
  %v2332 = vsel %vm2153, %v1855, 0
  %v2335 = vsel %vm2153, %v1857, 0
  %v2338 = vsel %vm2153, %v1859, 0
  %v2341 = vsel %vm2153, %v1861, 0
  %v2344 = vsel %vm2153, %v1863, 0
  %v2347 = vsel %vm2153, %v1865, 0
  %v2350 = vsel %vm2153, %v1867, 0
  %v2353 = vsel %vm2153, %v1869, 0
  %v2356 = vsel %vm2153, %v1871, 0
  %v2359 = vsel %vm2153, %v1873, 0
  %v2362 = vsel %vm2153, %v1875, 0
  %v2365 = vsel %vm2153, %v1877, 0
  %v2368 = vsel %vm2153, %v1879, 0
  %v2371 = vsel %vm2153, %v1881, 0
  %v2374 = vsel %vm2153, %v1883, 0
  %v2377 = vsel %vm2153, %v1885, 0
  %v2380 = vsel %vm2153, %v1887, 0
  %v2383 = vsel %vm2153, %v1889, 0
  %v2386 = vsel %vm2153, %v1891, 0
  %v2389 = vsel %vm2153, %v1893, 0
  %v2392 = vsel %vm2153, %v1895, 0
  %v2395 = vsel %vm2153, %v1897, 0
  %v2398 = vsel %vm2153, %v1899, 0
  %v2401 = vsel %vm2153, %v1901, 0
  %v2404 = vsel %vm2153, %v1903, 0
  %v2407 = vsel %vm2153, %v1905, 0
  %v2410 = vsel %vm2153, %v1907, 0
  %v2413 = vsel %vm2153, %v1909, 0
  %v2416 = vsel %vm2153, %v1911, 0
  %v2419 = vsel %vm2153, %v1913, 0
  %v2422 = vsel %vm2153, %v1915, 0
  %v2425 = vsel %vm2153, %v1917, 0
  %v2428 = vsel %vm2153, %v1919, 0
  %v2431 = vsel %vm2153, %v1921, 0
  %v2434 = vsel %vm2153, %v1923, 0
  %v2437 = vsel %vm2153, %v1925, 0
  %v2440 = vsel %vm2153, %v1927, 0
  %v2443 = vsel %vm2153, %v1929, 0
  %v2446 = vsel %vm2153, %v1931, 0
  %v2449 = vsel %vm2153, %v1933, 0
  %v2452 = vsel %vm2153, %v1935, 0
  %v2455 = vsel %vm2153, %v1937, 0
  %v2458 = vsel %vm2153, %v1939, 0
  %v2461 = vsel %vm2153, %v1941, 0
  %v2464 = vsel %vm2153, %v1943, 0
  %v2467 = vsel %vm2153, %v1945, 0
  %v2470 = vsel %vm2153, %v1947, 0
  %v2473 = vsel %vm2153, %v1949, 0
  %v2476 = vsel %vm2153, %v1951, 0
  %v2479 = vsel %vm2153, %v1953, 0
  %v2482 = vsel %vm2153, %v1955, 0
  %v2485 = vsel %vm2153, %v1957, 0
  %v2488 = vsel %vm2153, %v1959, 0
  %v2491 = vsel %vm2153, %v1961, 0
  %v2494 = vsel %vm2153, %v1963, 0
  %v2497 = vsel %vm2153, %v1965, 0
  %v2500 = vsel %vm2153, %v1967, 0
  %v2503 = vsel %vm2153, %v1969, 0
  %v2506 = vsel %vm2153, %v1971, 0
  %v2509 = vsel %vm2153, %v1973, 0
  %v2512 = vsel %vm2153, %v1975, 0
  %v2515 = vsel %vm2153, %v1977, 0
  %2517 = vmatprep.subr.bf16.mxu0 0
  %2518 = vmatpush1.bf16.msra.mxu0 %v2142
  %2519 = vmatprep.subr.bf16.mxu0 0
  %2520 = vmatpush1.bf16.msra.mxu0 %v2141
  %2521 = vmatprep.subr.bf16.mxu0 0
  %2522 = vmatpush1.bf16.msra.mxu0 %v2140
  %2523 = vmatprep.subr.bf16.mxu0 0
  %2524 = vmatpush1.bf16.msra.mxu0 %v2139
  %2525 = vmatprep.subr.bf16.mxu0 0
  %2526 = vmatpush1.bf16.msra.mxu0 %v2138
  %2527 = vmatprep.subr.bf16.mxu0 0
  %2528 = vmatpush1.bf16.msra.mxu0 %v2137
  %2529 = vmatprep.subr.bf16.mxu0 0
  %2530 = vmatpush1.bf16.msra.mxu0 %v2136
  %2531 = vmatprep.subr.bf16.mxu0 0
  %2532 = vmatpush1.bf16.msra.mxu0 %v2135
  %2533 = vmatprep.subr.bf16.mxu0 0
  %2534 = vmatpush2.bf16.msra.mxu0 0
  %2535 = vmatprep.subr.bf16.mxu0 0
  %2536 = vmatpush2.bf16.msra.mxu0 0
  %2537 = vmatprep.subr.bf16.mxu0 0
  %2538 = vmatpush2.bf16.msra.mxu0 0
  %2539 = vmatprep.subr.bf16.mxu0 0
  %2540 = vmatpush2.bf16.msra.mxu0 0
  %2541 = vmatprep.subr.bf16.mxu0 0
  %2542 = vmatpush2.bf16.msra.mxu0 0
  %2543 = vmatprep.subr.bf16.mxu0 0
  %2544 = vmatpush2.bf16.msra.mxu0 0
  %2545 = vmatprep.subr.bf16.mxu0 0
  %2546 = vmatpush2.bf16.msra.mxu0 0
  %2547 = vmatprep.subr.bf16.mxu0 0
  %2548 = vmatpush2.bf16.msra.mxu0 %v2143
  %2549 = vmatprep.mubr.bf16.mxu0 %v2155
  %2550 = vmatmul.mubr.bf16.gmra.mxu0 %v1736
  %v2551 = vpop.f32.mrf.mxu0
  %v2552 = vadd.f32 %v1011, %v2551
  %v2553 = vpop.f32.mrf.mxu0
  %v2554 = vpop.f32.mrf.mxu0
  %v2555 = vadd.f32 %v1011, %v2554
  %v2556 = vpop.f32.mrf.mxu0
  %2557 = vmatprep.mubr.bf16.mxu0 %v2158
  %2558 = vmatmul.mubr.bf16.gmra.mxu0 %v1738
  %v2559 = vpop.f32.mrf.mxu0
  %v2560 = vadd.f32 %v1011, %v2559
  %v2561 = vpop.f32.mrf.mxu0
  %v2562 = vpop.f32.mrf.mxu0
  %v2563 = vadd.f32 %v1011, %v2562
  %v2564 = vpop.f32.mrf.mxu0
  %2565 = vmatprep.mubr.bf16.mxu0 %v2161
  %2566 = vmatmul.mubr.bf16.gmra.mxu0 %v1740
  %v2567 = vpop.f32.mrf.mxu0
  %v2568 = vadd.f32 %v1011, %v2567
  %v2569 = vpop.f32.mrf.mxu0
  %v2570 = vpop.f32.mrf.mxu0
  %v2571 = vadd.f32 %v1011, %v2570
  %v2572 = vpop.f32.mrf.mxu0
  %2573 = vmatprep.mubr.bf16.mxu0 %v2164
  %2574 = vmatmul.mubr.bf16.gmra.mxu0 %v1742
  %v2575 = vpop.f32.mrf.mxu0
  %v2576 = vadd.f32 %v1011, %v2575
  %v2577 = vpop.f32.mrf.mxu0
  %v2578 = vpop.f32.mrf.mxu0
  %v2579 = vadd.f32 %v1011, %v2578
  %v2580 = vpop.f32.mrf.mxu0
  %2581 = vmatprep.mubr.bf16.mxu0 %v2167
  %2582 = vmatmul.mubr.bf16.gmra.mxu0 %v1744
  %v2583 = vpop.f32.mrf.mxu0
  %v2584 = vadd.f32 %v1011, %v2583
  %v2585 = vpop.f32.mrf.mxu0
  %v2586 = vpop.f32.mrf.mxu0
  %v2587 = vadd.f32 %v1011, %v2586
  %v2588 = vpop.f32.mrf.mxu0
  %2589 = vmatprep.mubr.bf16.mxu0 %v2170
  %2590 = vmatmul.mubr.bf16.gmra.mxu0 %v1746
  %v2591 = vpop.f32.mrf.mxu0
  %v2592 = vadd.f32 %v1011, %v2591
  %v2593 = vpop.f32.mrf.mxu0
  %v2594 = vpop.f32.mrf.mxu0
  %v2595 = vadd.f32 %v1011, %v2594
  %v2596 = vpop.f32.mrf.mxu0
  %2597 = vmatprep.mubr.bf16.mxu0 %v2173
  %2598 = vmatmul.mubr.bf16.gmra.mxu0 %v1748
  %v2599 = vpop.f32.mrf.mxu0
  %v2600 = vadd.f32 %v1011, %v2599
  %v2601 = vpop.f32.mrf.mxu0
  %v2602 = vpop.f32.mrf.mxu0
  %v2603 = vadd.f32 %v1011, %v2602
  %v2604 = vpop.f32.mrf.mxu0
  %2605 = vmatprep.mubr.bf16.mxu0 %v2176
  %2606 = vmatmul.mubr.bf16.gmra.mxu0 %v1750
  %v2607 = vpop.f32.mrf.mxu0
  %v2608 = vadd.f32 %v1011, %v2607
  %v2609 = vpop.f32.mrf.mxu0
  %v2610 = vpop.f32.mrf.mxu0
  %v2611 = vadd.f32 %v1011, %v2610
  %v2612 = vpop.f32.mrf.mxu0
  %2613 = vmatprep.mubr.bf16.mxu0 %v2179
  %2614 = vmatmul.mubr.bf16.gmra.mxu0 %v1752
  %v2615 = vpop.f32.mrf.mxu0
  %v2616 = vadd.f32 %v1011, %v2615
  %v2617 = vpop.f32.mrf.mxu0
  %v2618 = vpop.f32.mrf.mxu0
  %v2619 = vadd.f32 %v1011, %v2618
  %v2620 = vpop.f32.mrf.mxu0
  %2621 = vmatprep.mubr.bf16.mxu0 %v2182
  %2622 = vmatmul.mubr.bf16.gmra.mxu0 %v1754
  %v2623 = vpop.f32.mrf.mxu0
  %v2624 = vadd.f32 %v1011, %v2623
  %v2625 = vpop.f32.mrf.mxu0
  %v2626 = vpop.f32.mrf.mxu0
  %v2627 = vadd.f32 %v1011, %v2626
  %v2628 = vpop.f32.mrf.mxu0
  %2629 = vmatprep.mubr.bf16.mxu0 %v2185
  %2630 = vmatmul.mubr.bf16.gmra.mxu0 %v1756
  %v2631 = vpop.f32.mrf.mxu0
  %v2632 = vadd.f32 %v1011, %v2631
  %v2633 = vpop.f32.mrf.mxu0
  %v2634 = vpop.f32.mrf.mxu0
  %v2635 = vadd.f32 %v1011, %v2634
  %v2636 = vpop.f32.mrf.mxu0
  %2637 = vmatprep.mubr.bf16.mxu0 %v2188
  %2638 = vmatmul.mubr.bf16.gmra.mxu0 %v1758
  %v2639 = vpop.f32.mrf.mxu0
  %v2640 = vadd.f32 %v1011, %v2639
  %v2641 = vpop.f32.mrf.mxu0
  %v2642 = vpop.f32.mrf.mxu0
  %v2643 = vadd.f32 %v1011, %v2642
  %v2644 = vpop.f32.mrf.mxu0
  %2645 = vmatprep.mubr.bf16.mxu0 %v2191
  %2646 = vmatmul.mubr.bf16.gmra.mxu0 %v1760
  %v2647 = vpop.f32.mrf.mxu0
  %v2648 = vadd.f32 %v1011, %v2647
  %v2649 = vpop.f32.mrf.mxu0
  %v2650 = vpop.f32.mrf.mxu0
  %v2651 = vadd.f32 %v1011, %v2650
  %v2652 = vpop.f32.mrf.mxu0
  %2653 = vmatprep.mubr.bf16.mxu0 %v2194
  %2654 = vmatmul.mubr.bf16.gmra.mxu0 %v1762
  %v2655 = vpop.f32.mrf.mxu0
  %v2656 = vadd.f32 %v1011, %v2655
  %v2657 = vpop.f32.mrf.mxu0
  %v2658 = vpop.f32.mrf.mxu0
  %v2659 = vadd.f32 %v1011, %v2658
  %v2660 = vpop.f32.mrf.mxu0
  %2661 = vmatprep.mubr.bf16.mxu0 %v2197
  %2662 = vmatmul.mubr.bf16.gmra.mxu0 %v1764
  %v2663 = vpop.f32.mrf.mxu0
  %v2664 = vadd.f32 %v1011, %v2663
  %v2665 = vpop.f32.mrf.mxu0
  %v2666 = vpop.f32.mrf.mxu0
  %v2667 = vadd.f32 %v1011, %v2666
  %v2668 = vpop.f32.mrf.mxu0
  %2669 = vmatprep.mubr.bf16.mxu0 %v2200
  %2670 = vmatmul.mubr.bf16.gmra.mxu0 %v1766
  %v2671 = vpop.f32.mrf.mxu0
  %v2672 = vadd.f32 %v1011, %v2671
  %v2673 = vpop.f32.mrf.mxu0
  %v2674 = vpop.f32.mrf.mxu0
  %v2675 = vadd.f32 %v1011, %v2674
  %v2676 = vpop.f32.mrf.mxu0
  %2677 = vmatprep.mubr.bf16.mxu0 %v2203
  %2678 = vmatmul.mubr.bf16.gmra.mxu0 %v1768
  %v2679 = vpop.f32.mrf.mxu0
  %v2680 = vadd.f32 %v1011, %v2679
  %v2681 = vpop.f32.mrf.mxu0
  %v2682 = vpop.f32.mrf.mxu0
  %v2683 = vadd.f32 %v1011, %v2682
  %v2684 = vpop.f32.mrf.mxu0
  %2685 = vmatprep.mubr.bf16.mxu0 %v2206
  %2686 = vmatmul.mubr.bf16.gmra.mxu0 %v1770
  %v2687 = vpop.f32.mrf.mxu0
  %v2688 = vadd.f32 %v1011, %v2687
  %v2689 = vpop.f32.mrf.mxu0
  %v2690 = vpop.f32.mrf.mxu0
  %v2691 = vadd.f32 %v1011, %v2690
  %v2692 = vpop.f32.mrf.mxu0
  %2693 = vmatprep.mubr.bf16.mxu0 %v2209
  %2694 = vmatmul.mubr.bf16.gmra.mxu0 %v1772
  %v2695 = vpop.f32.mrf.mxu0
  %v2696 = vadd.f32 %v1011, %v2695
  %v2697 = vpop.f32.mrf.mxu0
  %v2698 = vpop.f32.mrf.mxu0
  %v2699 = vadd.f32 %v1011, %v2698
  %v2700 = vpop.f32.mrf.mxu0
  %2701 = vmatprep.mubr.bf16.mxu0 %v2212
  %2702 = vmatmul.mubr.bf16.gmra.mxu0 %v1774
  %v2703 = vpop.f32.mrf.mxu0
  %v2704 = vadd.f32 %v1011, %v2703
  %v2705 = vpop.f32.mrf.mxu0
  %v2706 = vpop.f32.mrf.mxu0
  %v2707 = vadd.f32 %v1011, %v2706
  %v2708 = vpop.f32.mrf.mxu0
  %2709 = vmatprep.mubr.bf16.mxu0 %v2215
  %2710 = vmatmul.mubr.bf16.gmra.mxu0 %v1776
  %v2711 = vpop.f32.mrf.mxu0
  %v2712 = vadd.f32 %v1011, %v2711
  %v2713 = vpop.f32.mrf.mxu0
  %v2714 = vpop.f32.mrf.mxu0
  %v2715 = vadd.f32 %v1011, %v2714
  %v2716 = vpop.f32.mrf.mxu0
  %2717 = vmatprep.mubr.bf16.mxu0 %v2218
  %2718 = vmatmul.mubr.bf16.gmra.mxu0 %v1778
  %v2719 = vpop.f32.mrf.mxu0
  %v2720 = vadd.f32 %v1011, %v2719
  %v2721 = vpop.f32.mrf.mxu0
  %v2722 = vpop.f32.mrf.mxu0
  %v2723 = vadd.f32 %v1011, %v2722
  %v2724 = vpop.f32.mrf.mxu0
  %2725 = vmatprep.mubr.bf16.mxu0 %v2221
  %2726 = vmatmul.mubr.bf16.gmra.mxu0 %v1780
  %v2727 = vpop.f32.mrf.mxu0
  %v2728 = vadd.f32 %v1011, %v2727
  %v2729 = vpop.f32.mrf.mxu0
  %v2730 = vpop.f32.mrf.mxu0
  %v2731 = vadd.f32 %v1011, %v2730
  %v2732 = vpop.f32.mrf.mxu0
  %2733 = vmatprep.mubr.bf16.mxu0 %v2224
  %2734 = vmatmul.mubr.bf16.gmra.mxu0 %v1782
  %v2735 = vpop.f32.mrf.mxu0
  %v2736 = vadd.f32 %v1011, %v2735
  %v2737 = vpop.f32.mrf.mxu0
  %v2738 = vpop.f32.mrf.mxu0
  %v2739 = vadd.f32 %v1011, %v2738
  %v2740 = vpop.f32.mrf.mxu0
  %2741 = vmatprep.mubr.bf16.mxu0 %v2227
  %2742 = vmatmul.mubr.bf16.gmra.mxu0 %v1784
  %v2743 = vpop.f32.mrf.mxu0
  %v2744 = vadd.f32 %v1011, %v2743
  %v2745 = vpop.f32.mrf.mxu0
  %v2746 = vpop.f32.mrf.mxu0
  %v2747 = vadd.f32 %v1011, %v2746
  %v2748 = vpop.f32.mrf.mxu0
  %2749 = vmatprep.mubr.bf16.mxu0 %v2230
  %2750 = vmatmul.mubr.bf16.gmra.mxu0 %v1786
  %v2751 = vpop.f32.mrf.mxu0
  %v2752 = vadd.f32 %v1011, %v2751
  %v2753 = vpop.f32.mrf.mxu0
  %v2754 = vpop.f32.mrf.mxu0
  %v2755 = vadd.f32 %v1011, %v2754
  %v2756 = vpop.f32.mrf.mxu0
  %2757 = vmatprep.mubr.bf16.mxu0 %v2233
  %2758 = vmatmul.mubr.bf16.gmra.mxu0 %v1788
  %v2759 = vpop.f32.mrf.mxu0
  %v2760 = vadd.f32 %v1011, %v2759
  %v2761 = vpop.f32.mrf.mxu0
  %v2762 = vpop.f32.mrf.mxu0
  %v2763 = vadd.f32 %v1011, %v2762
  %v2764 = vpop.f32.mrf.mxu0
  %2765 = vmatprep.mubr.bf16.mxu0 %v2236
  %2766 = vmatmul.mubr.bf16.gmra.mxu0 %v1790
  %v2767 = vpop.f32.mrf.mxu0
  %v2768 = vadd.f32 %v1011, %v2767
  %v2769 = vpop.f32.mrf.mxu0
  %v2770 = vpop.f32.mrf.mxu0
  %v2771 = vadd.f32 %v1011, %v2770
  %v2772 = vpop.f32.mrf.mxu0
  %2773 = vmatprep.mubr.bf16.mxu0 %v2239
  %2774 = vmatmul.mubr.bf16.gmra.mxu0 %v1792
  %v2775 = vpop.f32.mrf.mxu0
  %v2776 = vadd.f32 %v1011, %v2775
  %v2777 = vpop.f32.mrf.mxu0
  %v2778 = vpop.f32.mrf.mxu0
  %v2779 = vadd.f32 %v1011, %v2778
  %v2780 = vpop.f32.mrf.mxu0
  %2781 = vmatprep.mubr.bf16.mxu0 %v2242
  %2782 = vmatmul.mubr.bf16.gmra.mxu0 %v1794
  %v2783 = vpop.f32.mrf.mxu0
  %v2784 = vadd.f32 %v1011, %v2783
  %v2785 = vpop.f32.mrf.mxu0
  %v2786 = vpop.f32.mrf.mxu0
  %v2787 = vadd.f32 %v1011, %v2786
  %v2788 = vpop.f32.mrf.mxu0
  %2789 = vmatprep.mubr.bf16.mxu0 %v2245
  %2790 = vmatmul.mubr.bf16.gmra.mxu0 %v1796
  %v2791 = vpop.f32.mrf.mxu0
  %v2792 = vadd.f32 %v1011, %v2791
  %v2793 = vpop.f32.mrf.mxu0
  %v2794 = vpop.f32.mrf.mxu0
  %v2795 = vadd.f32 %v1011, %v2794
  %v2796 = vpop.f32.mrf.mxu0
  %2797 = vmatprep.mubr.bf16.mxu0 %v2248
  %2798 = vmatmul.mubr.bf16.gmra.mxu0 %v1798
  %v2799 = vpop.f32.mrf.mxu0
  %v2800 = vadd.f32 %v1011, %v2799
  %v2801 = vpop.f32.mrf.mxu0
  %v2802 = vpop.f32.mrf.mxu0
  %v2803 = vadd.f32 %v1011, %v2802
  %v2804 = vpop.f32.mrf.mxu0
  %2805 = vmatprep.mubr.bf16.mxu0 %v2251
  %2806 = vmatmul.mubr.bf16.gmra.mxu0 %v1800
  %v2807 = vpop.f32.mrf.mxu0
  %v2808 = vadd.f32 %v1011, %v2807
  %v2809 = vpop.f32.mrf.mxu0
  %v2810 = vpop.f32.mrf.mxu0
  %v2811 = vadd.f32 %v1011, %v2810
  %v2812 = vpop.f32.mrf.mxu0
  %2813 = vmatprep.mubr.bf16.mxu0 %v2254
  %2814 = vmatmul.mubr.bf16.gmra.mxu0 %v1802
  %v2815 = vpop.f32.mrf.mxu0
  %v2816 = vadd.f32 %v1011, %v2815
  %v2817 = vpop.f32.mrf.mxu0
  %v2818 = vpop.f32.mrf.mxu0
  %v2819 = vadd.f32 %v1011, %v2818
  %v2820 = vpop.f32.mrf.mxu0
  %2821 = vmatprep.mubr.bf16.mxu0 %v2257
  %2822 = vmatmul.mubr.bf16.gmra.mxu0 %v1804
  %v2823 = vpop.f32.mrf.mxu0
  %v2824 = vadd.f32 %v1011, %v2823
  %v2825 = vpop.f32.mrf.mxu0
  %v2826 = vpop.f32.mrf.mxu0
  %v2827 = vadd.f32 %v1011, %v2826
  %v2828 = vpop.f32.mrf.mxu0
  %2829 = vmatprep.mubr.bf16.mxu0 %v2260
  %2830 = vmatmul.mubr.bf16.gmra.mxu0 %v1806
  %v2831 = vpop.f32.mrf.mxu0
  %v2832 = vadd.f32 %v1011, %v2831
  %v2833 = vpop.f32.mrf.mxu0
  %v2834 = vpop.f32.mrf.mxu0
  %v2835 = vadd.f32 %v1011, %v2834
  %v2836 = vpop.f32.mrf.mxu0
  %2837 = vmatprep.mubr.bf16.mxu0 %v2263
  %2838 = vmatmul.mubr.bf16.gmra.mxu0 %v1808
  %v2839 = vpop.f32.mrf.mxu0
  %v2840 = vadd.f32 %v1011, %v2839
  %v2841 = vpop.f32.mrf.mxu0
  %v2842 = vpop.f32.mrf.mxu0
  %v2843 = vadd.f32 %v1011, %v2842
  %v2844 = vpop.f32.mrf.mxu0
  %2845 = vmatprep.mubr.bf16.mxu0 %v2266
  %2846 = vmatmul.mubr.bf16.gmra.mxu0 %v1810
  %v2847 = vpop.f32.mrf.mxu0
  %v2848 = vadd.f32 %v1011, %v2847
  %v2849 = vpop.f32.mrf.mxu0
  %v2850 = vpop.f32.mrf.mxu0
  %v2851 = vadd.f32 %v1011, %v2850
  %v2852 = vpop.f32.mrf.mxu0
  %2853 = vmatprep.mubr.bf16.mxu0 %v2269
  %2854 = vmatmul.mubr.bf16.gmra.mxu0 %v1812
  %v2855 = vpop.f32.mrf.mxu0
  %v2856 = vadd.f32 %v1011, %v2855
  %v2857 = vpop.f32.mrf.mxu0
  %v2858 = vpop.f32.mrf.mxu0
  %v2859 = vadd.f32 %v1011, %v2858
  %v2860 = vpop.f32.mrf.mxu0
  %2861 = vmatprep.mubr.bf16.mxu0 %v2272
  %2862 = vmatmul.mubr.bf16.gmra.mxu0 %v1814
  %v2863 = vpop.f32.mrf.mxu0
  %v2864 = vadd.f32 %v1011, %v2863
  %v2865 = vpop.f32.mrf.mxu0
  %v2866 = vpop.f32.mrf.mxu0
  %v2867 = vadd.f32 %v1011, %v2866
  %v2868 = vpop.f32.mrf.mxu0
  %2869 = vmatprep.mubr.bf16.mxu0 %v2275
  %2870 = vmatmul.mubr.bf16.gmra.mxu0 %v1816
  %v2871 = vpop.f32.mrf.mxu0
  %v2872 = vadd.f32 %v1011, %v2871
  %v2873 = vpop.f32.mrf.mxu0
  %v2874 = vpop.f32.mrf.mxu0
  %v2875 = vadd.f32 %v1011, %v2874
  %v2876 = vpop.f32.mrf.mxu0
  %2877 = vmatprep.mubr.bf16.mxu0 %v2278
  %2878 = vmatmul.mubr.bf16.gmra.mxu0 %v1818
  %v2879 = vpop.f32.mrf.mxu0
  %v2880 = vadd.f32 %v1011, %v2879
  %v2881 = vpop.f32.mrf.mxu0
  %v2882 = vpop.f32.mrf.mxu0
  %v2883 = vadd.f32 %v1011, %v2882
  %v2884 = vpop.f32.mrf.mxu0
  %2885 = vmatprep.mubr.bf16.mxu0 %v2281
  %2886 = vmatmul.mubr.bf16.gmra.mxu0 %v1820
  %v2887 = vpop.f32.mrf.mxu0
  %v2888 = vadd.f32 %v1011, %v2887
  %v2889 = vpop.f32.mrf.mxu0
  %v2890 = vpop.f32.mrf.mxu0
  %v2891 = vadd.f32 %v1011, %v2890
  %v2892 = vpop.f32.mrf.mxu0
  %2893 = vmatprep.mubr.bf16.mxu0 %v2284
  %2894 = vmatmul.mubr.bf16.gmra.mxu0 %v1822
  %v2895 = vpop.f32.mrf.mxu0
  %v2896 = vadd.f32 %v1011, %v2895
  %v2897 = vpop.f32.mrf.mxu0
  %v2898 = vpop.f32.mrf.mxu0
  %v2899 = vadd.f32 %v1011, %v2898
  %v2900 = vpop.f32.mrf.mxu0
  %2901 = vmatprep.mubr.bf16.mxu0 %v2287
  %2902 = vmatmul.mubr.bf16.gmra.mxu0 %v1824
  %v2903 = vpop.f32.mrf.mxu0
  %v2904 = vadd.f32 %v1011, %v2903
  %v2905 = vpop.f32.mrf.mxu0
  %v2906 = vpop.f32.mrf.mxu0
  %v2907 = vadd.f32 %v1011, %v2906
  %v2908 = vpop.f32.mrf.mxu0
  %2909 = vmatprep.mubr.bf16.mxu0 %v2290
  %2910 = vmatmul.mubr.bf16.gmra.mxu0 %v1826
  %v2911 = vpop.f32.mrf.mxu0
  %v2912 = vadd.f32 %v1011, %v2911
  %v2913 = vpop.f32.mrf.mxu0
  %v2914 = vpop.f32.mrf.mxu0
  %v2915 = vadd.f32 %v1011, %v2914
  %v2916 = vpop.f32.mrf.mxu0
  %2917 = vmatprep.mubr.bf16.mxu0 %v2293
  %2918 = vmatmul.mubr.bf16.gmra.mxu0 %v1828
  %v2919 = vpop.f32.mrf.mxu0
  %v2920 = vadd.f32 %v1011, %v2919
  %v2921 = vpop.f32.mrf.mxu0
  %v2922 = vpop.f32.mrf.mxu0
  %v2923 = vadd.f32 %v1011, %v2922
  %v2924 = vpop.f32.mrf.mxu0
  %2925 = vmatprep.mubr.bf16.mxu0 %v2296
  %2926 = vmatmul.mubr.bf16.gmra.mxu0 %v1830
  %v2927 = vpop.f32.mrf.mxu0
  %v2928 = vadd.f32 %v1011, %v2927
  %v2929 = vpop.f32.mrf.mxu0
  %v2930 = vpop.f32.mrf.mxu0
  %v2931 = vadd.f32 %v1011, %v2930
  %v2932 = vpop.f32.mrf.mxu0
  %2933 = vmatprep.mubr.bf16.mxu0 %v2299
  %2934 = vmatmul.mubr.bf16.gmra.mxu0 %v1832
  %v2935 = vpop.f32.mrf.mxu0
  %v2936 = vadd.f32 %v1011, %v2935
  %v2937 = vpop.f32.mrf.mxu0
  %v2938 = vpop.f32.mrf.mxu0
  %v2939 = vadd.f32 %v1011, %v2938
  %v2940 = vpop.f32.mrf.mxu0
  %2941 = vmatprep.mubr.bf16.mxu0 %v2302
  %2942 = vmatmul.mubr.bf16.gmra.mxu0 %v1834
  %v2943 = vpop.f32.mrf.mxu0
  %v2944 = vadd.f32 %v1011, %v2943
  %v2945 = vpop.f32.mrf.mxu0
  %v2946 = vpop.f32.mrf.mxu0
  %v2947 = vadd.f32 %v1011, %v2946
  %v2948 = vpop.f32.mrf.mxu0
  %2949 = vmatprep.mubr.bf16.mxu0 %v2305
  %2950 = vmatmul.mubr.bf16.gmra.mxu0 %v1836
  %v2951 = vpop.f32.mrf.mxu0
  %v2952 = vadd.f32 %v1011, %v2951
  %v2953 = vpop.f32.mrf.mxu0
  %v2954 = vpop.f32.mrf.mxu0
  %v2955 = vadd.f32 %v1011, %v2954
  %v2956 = vpop.f32.mrf.mxu0
  %2957 = vmatprep.mubr.bf16.mxu0 %v2308
  %2958 = vmatmul.mubr.bf16.gmra.mxu0 %v1838
  %v2959 = vpop.f32.mrf.mxu0
  %v2960 = vadd.f32 %v1011, %v2959
  %v2961 = vpop.f32.mrf.mxu0
  %v2962 = vpop.f32.mrf.mxu0
  %v2963 = vadd.f32 %v1011, %v2962
  %v2964 = vpop.f32.mrf.mxu0
  %2965 = vmatprep.mubr.bf16.mxu0 %v2311
  %2966 = vmatmul.mubr.bf16.gmra.mxu0 %v1840
  %v2967 = vpop.f32.mrf.mxu0
  %v2968 = vadd.f32 %v1011, %v2967
  %v2969 = vpop.f32.mrf.mxu0
  %v2970 = vpop.f32.mrf.mxu0
  %v2971 = vadd.f32 %v1011, %v2970
  %v2972 = vpop.f32.mrf.mxu0
  %2973 = vmatprep.mubr.bf16.mxu0 %v2314
  %2974 = vmatmul.mubr.bf16.gmra.mxu0 %v1842
  %v2975 = vpop.f32.mrf.mxu0
  %v2976 = vadd.f32 %v1011, %v2975
  %v2977 = vpop.f32.mrf.mxu0
  %v2978 = vpop.f32.mrf.mxu0
  %v2979 = vadd.f32 %v1011, %v2978
  %v2980 = vpop.f32.mrf.mxu0
  %2981 = vmatprep.mubr.bf16.mxu0 %v2317
  %2982 = vmatmul.mubr.bf16.gmra.mxu0 %v1844
  %v2983 = vpop.f32.mrf.mxu0
  %v2984 = vadd.f32 %v1011, %v2983
  %v2985 = vpop.f32.mrf.mxu0
  %v2986 = vpop.f32.mrf.mxu0
  %v2987 = vadd.f32 %v1011, %v2986
  %v2988 = vpop.f32.mrf.mxu0
  %2989 = vmatprep.mubr.bf16.mxu0 %v2320
  %2990 = vmatmul.mubr.bf16.gmra.mxu0 %v1846
  %v2991 = vpop.f32.mrf.mxu0
  %v2992 = vadd.f32 %v1011, %v2991
  %v2993 = vpop.f32.mrf.mxu0
  %v2994 = vpop.f32.mrf.mxu0
  %v2995 = vadd.f32 %v1011, %v2994
  %v2996 = vpop.f32.mrf.mxu0
  %2997 = vmatprep.mubr.bf16.mxu0 %v2323
  %2998 = vmatmul.mubr.bf16.gmra.mxu0 %v1848
  %v2999 = vpop.f32.mrf.mxu0
  %v3000 = vadd.f32 %v1011, %v2999
  %v3001 = vpop.f32.mrf.mxu0
  %v3002 = vpop.f32.mrf.mxu0
  %v3003 = vadd.f32 %v1011, %v3002
  %v3004 = vpop.f32.mrf.mxu0
  %3005 = vmatprep.mubr.bf16.mxu0 %v2326
  %3006 = vmatmul.mubr.bf16.gmra.mxu0 %v1850
  %v3007 = vpop.f32.mrf.mxu0
  %v3008 = vadd.f32 %v1011, %v3007
  %v3009 = vpop.f32.mrf.mxu0
  %v3010 = vpop.f32.mrf.mxu0
  %v3011 = vadd.f32 %v1011, %v3010
  %v3012 = vpop.f32.mrf.mxu0
  %3013 = vmatprep.mubr.bf16.mxu0 %v2329
  %3014 = vmatmul.mubr.bf16.gmra.mxu0 %v1852
  %v3015 = vpop.f32.mrf.mxu0
  %v3016 = vadd.f32 %v1011, %v3015
  %v3017 = vpop.f32.mrf.mxu0
  %v3018 = vpop.f32.mrf.mxu0
  %v3019 = vadd.f32 %v1011, %v3018
  %v3020 = vpop.f32.mrf.mxu0
  %3021 = vmatprep.mubr.bf16.mxu0 %v2332
  %3022 = vmatmul.mubr.bf16.gmra.mxu0 %v1854
  %v3023 = vpop.f32.mrf.mxu0
  %v3024 = vadd.f32 %v1011, %v3023
  %v3025 = vpop.f32.mrf.mxu0
  %v3026 = vpop.f32.mrf.mxu0
  %v3027 = vadd.f32 %v1011, %v3026
  %v3028 = vpop.f32.mrf.mxu0
  %3029 = vmatprep.mubr.bf16.mxu0 %v2335
  %3030 = vmatmul.mubr.bf16.gmra.mxu0 %v1856
  %v3031 = vpop.f32.mrf.mxu0
  %v3032 = vadd.f32 %v1011, %v3031
  %v3033 = vpop.f32.mrf.mxu0
  %v3034 = vpop.f32.mrf.mxu0
  %v3035 = vadd.f32 %v1011, %v3034
  %v3036 = vpop.f32.mrf.mxu0
  %3037 = vmatprep.mubr.bf16.mxu0 %v2338
  %3038 = vmatmul.mubr.bf16.gmra.mxu0 %v1858
  %v3039 = vpop.f32.mrf.mxu0
  %v3040 = vadd.f32 %v1011, %v3039
  %v3041 = vpop.f32.mrf.mxu0
  %v3042 = vpop.f32.mrf.mxu0
  %v3043 = vadd.f32 %v1011, %v3042
  %v3044 = vpop.f32.mrf.mxu0
  %3045 = vmatprep.mubr.bf16.mxu0 %v2341
  %3046 = vmatmul.mubr.bf16.gmra.mxu0 %v1860
  %v3047 = vpop.f32.mrf.mxu0
  %v3048 = vadd.f32 %v1011, %v3047
  %v3049 = vpop.f32.mrf.mxu0
  %v3050 = vpop.f32.mrf.mxu0
  %v3051 = vadd.f32 %v1011, %v3050
  %v3052 = vpop.f32.mrf.mxu0
  %3053 = vmatprep.mubr.bf16.mxu0 %v2344
  %3054 = vmatmul.mubr.bf16.gmra.mxu0 %v1862
  %v3055 = vpop.f32.mrf.mxu0
  %v3056 = vadd.f32 %v1011, %v3055
  %v3057 = vpop.f32.mrf.mxu0
  %v3058 = vpop.f32.mrf.mxu0
  %v3059 = vadd.f32 %v1011, %v3058
  %v3060 = vpop.f32.mrf.mxu0
  %3061 = vmatprep.mubr.bf16.mxu0 %v2347
  %3062 = vmatmul.mubr.bf16.gmra.mxu0 %v1864
  %v3063 = vpop.f32.mrf.mxu0
  %v3064 = vadd.f32 %v1011, %v3063
  %v3065 = vpop.f32.mrf.mxu0
  %v3066 = vpop.f32.mrf.mxu0
  %v3067 = vadd.f32 %v1011, %v3066
  %v3068 = vpop.f32.mrf.mxu0
  %3069 = vmatprep.mubr.bf16.mxu0 %v2350
  %3070 = vmatmul.mubr.bf16.gmra.mxu0 %v1866
  %v3071 = vpop.f32.mrf.mxu0
  %v3072 = vadd.f32 %v1011, %v3071
  %v3073 = vpop.f32.mrf.mxu0
  %v3074 = vpop.f32.mrf.mxu0
  %v3075 = vadd.f32 %v1011, %v3074
  %v3076 = vpop.f32.mrf.mxu0
  %3077 = vmatprep.mubr.bf16.mxu0 %v2353
  %3078 = vmatmul.mubr.bf16.gmra.mxu0 %v1868
  %v3079 = vpop.f32.mrf.mxu0
  %v3080 = vadd.f32 %v1011, %v3079
  %v3081 = vpop.f32.mrf.mxu0
  %v3082 = vpop.f32.mrf.mxu0
  %v3083 = vadd.f32 %v1011, %v3082
  %v3084 = vpop.f32.mrf.mxu0
  %3085 = vmatprep.mubr.bf16.mxu0 %v2356
  %3086 = vmatmul.mubr.bf16.gmra.mxu0 %v1870
  %v3087 = vpop.f32.mrf.mxu0
  %v3088 = vadd.f32 %v1011, %v3087
  %v3089 = vpop.f32.mrf.mxu0
  %v3090 = vpop.f32.mrf.mxu0
  %v3091 = vadd.f32 %v1011, %v3090
  %v3092 = vpop.f32.mrf.mxu0
  %3093 = vmatprep.mubr.bf16.mxu0 %v2359
  %3094 = vmatmul.mubr.bf16.gmra.mxu0 %v1872
  %v3095 = vpop.f32.mrf.mxu0
  %v3096 = vadd.f32 %v1011, %v3095
  %v3097 = vpop.f32.mrf.mxu0
  %v3098 = vpop.f32.mrf.mxu0
  %v3099 = vadd.f32 %v1011, %v3098
  %v3100 = vpop.f32.mrf.mxu0
  %3101 = vmatprep.mubr.bf16.mxu0 %v2362
  %3102 = vmatmul.mubr.bf16.gmra.mxu0 %v1874
  %v3103 = vpop.f32.mrf.mxu0
  %v3104 = vadd.f32 %v1011, %v3103
  %v3105 = vpop.f32.mrf.mxu0
  %v3106 = vpop.f32.mrf.mxu0
  %v3107 = vadd.f32 %v1011, %v3106
  %v3108 = vpop.f32.mrf.mxu0
  %3109 = vmatprep.mubr.bf16.mxu0 %v2365
  %3110 = vmatmul.mubr.bf16.gmra.mxu0 %v1876
  %v3111 = vpop.f32.mrf.mxu0
  %v3112 = vadd.f32 %v1011, %v3111
  %v3113 = vpop.f32.mrf.mxu0
  %v3114 = vpop.f32.mrf.mxu0
  %v3115 = vadd.f32 %v1011, %v3114
  %v3116 = vpop.f32.mrf.mxu0
  %3117 = vmatprep.mubr.bf16.mxu0 %v2368
  %3118 = vmatmul.mubr.bf16.gmra.mxu0 %v1878
  %v3119 = vpop.f32.mrf.mxu0
  %v3120 = vadd.f32 %v1011, %v3119
  %v3121 = vpop.f32.mrf.mxu0
  %v3122 = vpop.f32.mrf.mxu0
  %v3123 = vadd.f32 %v1011, %v3122
  %v3124 = vpop.f32.mrf.mxu0
  %3125 = vmatprep.mubr.bf16.mxu0 %v2371
  %3126 = vmatmul.mubr.bf16.gmra.mxu0 %v1880
  %v3127 = vpop.f32.mrf.mxu0
  %v3128 = vadd.f32 %v1011, %v3127
  %v3129 = vpop.f32.mrf.mxu0
  %v3130 = vpop.f32.mrf.mxu0
  %v3131 = vadd.f32 %v1011, %v3130
  %v3132 = vpop.f32.mrf.mxu0
  %3133 = vmatprep.mubr.bf16.mxu0 %v2374
  %3134 = vmatmul.mubr.bf16.gmra.mxu0 %v1882
  %v3135 = vpop.f32.mrf.mxu0
  %v3136 = vadd.f32 %v1011, %v3135
  %v3137 = vpop.f32.mrf.mxu0
  %v3138 = vpop.f32.mrf.mxu0
  %v3139 = vadd.f32 %v1011, %v3138
  %v3140 = vpop.f32.mrf.mxu0
  %3141 = vmatprep.mubr.bf16.mxu0 %v2377
  %3142 = vmatmul.mubr.bf16.gmra.mxu0 %v1884
  %v3143 = vpop.f32.mrf.mxu0
  %v3144 = vadd.f32 %v1011, %v3143
  %v3145 = vpop.f32.mrf.mxu0
  %v3146 = vpop.f32.mrf.mxu0
  %v3147 = vadd.f32 %v1011, %v3146
  %v3148 = vpop.f32.mrf.mxu0
  %3149 = vmatprep.mubr.bf16.mxu0 %v2380
  %3150 = vmatmul.mubr.bf16.gmra.mxu0 %v1886
  %v3151 = vpop.f32.mrf.mxu0
  %v3152 = vadd.f32 %v1011, %v3151
  %v3153 = vpop.f32.mrf.mxu0
  %v3154 = vpop.f32.mrf.mxu0
  %v3155 = vadd.f32 %v1011, %v3154
  %v3156 = vpop.f32.mrf.mxu0
  %3157 = vmatprep.mubr.bf16.mxu0 %v2383
  %3158 = vmatmul.mubr.bf16.gmra.mxu0 %v1888
  %v3159 = vpop.f32.mrf.mxu0
  %v3160 = vadd.f32 %v1011, %v3159
  %v3161 = vpop.f32.mrf.mxu0
  %v3162 = vpop.f32.mrf.mxu0
  %v3163 = vadd.f32 %v1011, %v3162
  %v3164 = vpop.f32.mrf.mxu0
  %3165 = vmatprep.mubr.bf16.mxu0 %v2386
  %3166 = vmatmul.mubr.bf16.gmra.mxu0 %v1890
  %v3167 = vpop.f32.mrf.mxu0
  %v3168 = vadd.f32 %v1011, %v3167
  %v3169 = vpop.f32.mrf.mxu0
  %v3170 = vpop.f32.mrf.mxu0
  %v3171 = vadd.f32 %v1011, %v3170
  %v3172 = vpop.f32.mrf.mxu0
  %3173 = vmatprep.mubr.bf16.mxu0 %v2389
  %3174 = vmatmul.mubr.bf16.gmra.mxu0 %v1892
  %v3175 = vpop.f32.mrf.mxu0
  %v3176 = vadd.f32 %v1011, %v3175
  %v3177 = vpop.f32.mrf.mxu0
  %v3178 = vpop.f32.mrf.mxu0
  %v3179 = vadd.f32 %v1011, %v3178
  %v3180 = vpop.f32.mrf.mxu0
  %3181 = vmatprep.mubr.bf16.mxu0 %v2392
  %3182 = vmatmul.mubr.bf16.gmra.mxu0 %v1894
  %v3183 = vpop.f32.mrf.mxu0
  %v3184 = vadd.f32 %v1011, %v3183
  %v3185 = vpop.f32.mrf.mxu0
  %v3186 = vpop.f32.mrf.mxu0
  %v3187 = vadd.f32 %v1011, %v3186
  %v3188 = vpop.f32.mrf.mxu0
  %3189 = vmatprep.mubr.bf16.mxu0 %v2395
  %3190 = vmatmul.mubr.bf16.gmra.mxu0 %v1896
  %v3191 = vpop.f32.mrf.mxu0
  %v3192 = vadd.f32 %v1011, %v3191
  %v3193 = vpop.f32.mrf.mxu0
  %v3194 = vpop.f32.mrf.mxu0
  %v3195 = vadd.f32 %v1011, %v3194
  %v3196 = vpop.f32.mrf.mxu0
  %3197 = vmatprep.mubr.bf16.mxu0 %v2398
  %3198 = vmatmul.mubr.bf16.gmra.mxu0 %v1898
  %v3199 = vpop.f32.mrf.mxu0
  %v3200 = vadd.f32 %v1011, %v3199
  %v3201 = vpop.f32.mrf.mxu0
  %v3202 = vpop.f32.mrf.mxu0
  %v3203 = vadd.f32 %v1011, %v3202
  %v3204 = vpop.f32.mrf.mxu0
  %3205 = vmatprep.mubr.bf16.mxu0 %v2401
  %3206 = vmatmul.mubr.bf16.gmra.mxu0 %v1900
  %v3207 = vpop.f32.mrf.mxu0
  %v3208 = vadd.f32 %v1011, %v3207
  %v3209 = vpop.f32.mrf.mxu0
  %v3210 = vpop.f32.mrf.mxu0
  %v3211 = vadd.f32 %v1011, %v3210
  %v3212 = vpop.f32.mrf.mxu0
  %3213 = vmatprep.mubr.bf16.mxu0 %v2404
  %3214 = vmatmul.mubr.bf16.gmra.mxu0 %v1902
  %v3215 = vpop.f32.mrf.mxu0
  %v3216 = vadd.f32 %v1011, %v3215
  %v3217 = vpop.f32.mrf.mxu0
  %v3218 = vpop.f32.mrf.mxu0
  %v3219 = vadd.f32 %v1011, %v3218
  %v3220 = vpop.f32.mrf.mxu0
  %3221 = vmatprep.mubr.bf16.mxu0 %v2407
  %3222 = vmatmul.mubr.bf16.gmra.mxu0 %v1904
  %v3223 = vpop.f32.mrf.mxu0
  %v3224 = vadd.f32 %v1011, %v3223
  %v3225 = vpop.f32.mrf.mxu0
  %v3226 = vpop.f32.mrf.mxu0
  %v3227 = vadd.f32 %v1011, %v3226
  %v3228 = vpop.f32.mrf.mxu0
  %3229 = vmatprep.mubr.bf16.mxu0 %v2410
  %3230 = vmatmul.mubr.bf16.gmra.mxu0 %v1906
  %v3231 = vpop.f32.mrf.mxu0
  %v3232 = vadd.f32 %v1011, %v3231
  %v3233 = vpop.f32.mrf.mxu0
  %v3234 = vpop.f32.mrf.mxu0
  %v3235 = vadd.f32 %v1011, %v3234
  %v3236 = vpop.f32.mrf.mxu0
  %3237 = vmatprep.mubr.bf16.mxu0 %v2413
  %3238 = vmatmul.mubr.bf16.gmra.mxu0 %v1908
  %v3239 = vpop.f32.mrf.mxu0
  %v3240 = vadd.f32 %v1011, %v3239
  %v3241 = vpop.f32.mrf.mxu0
  %v3242 = vpop.f32.mrf.mxu0
  %v3243 = vadd.f32 %v1011, %v3242
  %v3244 = vpop.f32.mrf.mxu0
  %3245 = vmatprep.mubr.bf16.mxu0 %v2416
  %3246 = vmatmul.mubr.bf16.gmra.mxu0 %v1910
  %v3247 = vpop.f32.mrf.mxu0
  %v3248 = vadd.f32 %v1011, %v3247
  %v3249 = vpop.f32.mrf.mxu0
  %v3250 = vpop.f32.mrf.mxu0
  %v3251 = vadd.f32 %v1011, %v3250
  %v3252 = vpop.f32.mrf.mxu0
  %3253 = vmatprep.mubr.bf16.mxu0 %v2419
  %3254 = vmatmul.mubr.bf16.gmra.mxu0 %v1912
  %v3255 = vpop.f32.mrf.mxu0
  %v3256 = vadd.f32 %v1011, %v3255
  %v3257 = vpop.f32.mrf.mxu0
  %v3258 = vpop.f32.mrf.mxu0
  %v3259 = vadd.f32 %v1011, %v3258
  %v3260 = vpop.f32.mrf.mxu0
  %3261 = vmatprep.mubr.bf16.mxu0 %v2422
  %3262 = vmatmul.mubr.bf16.gmra.mxu0 %v1914
  %v3263 = vpop.f32.mrf.mxu0
  %v3264 = vadd.f32 %v1011, %v3263
  %v3265 = vpop.f32.mrf.mxu0
  %v3266 = vpop.f32.mrf.mxu0
  %v3267 = vadd.f32 %v1011, %v3266
  %v3268 = vpop.f32.mrf.mxu0
  %3269 = vmatprep.mubr.bf16.mxu0 %v2425
  %3270 = vmatmul.mubr.bf16.gmra.mxu0 %v1916
  %v3271 = vpop.f32.mrf.mxu0
  %v3272 = vadd.f32 %v1011, %v3271
  %v3273 = vpop.f32.mrf.mxu0
  %v3274 = vpop.f32.mrf.mxu0
  %v3275 = vadd.f32 %v1011, %v3274
  %v3276 = vpop.f32.mrf.mxu0
  %3277 = vmatprep.mubr.bf16.mxu0 %v2428
  %3278 = vmatmul.mubr.bf16.gmra.mxu0 %v1918
  %v3279 = vpop.f32.mrf.mxu0
  %v3280 = vadd.f32 %v1011, %v3279
  %v3281 = vpop.f32.mrf.mxu0
  %v3282 = vpop.f32.mrf.mxu0
  %v3283 = vadd.f32 %v1011, %v3282
  %v3284 = vpop.f32.mrf.mxu0
  %3285 = vmatprep.mubr.bf16.mxu0 %v2431
  %3286 = vmatmul.mubr.bf16.gmra.mxu0 %v1920
  %v3287 = vpop.f32.mrf.mxu0
  %v3288 = vadd.f32 %v1011, %v3287
  %v3289 = vpop.f32.mrf.mxu0
  %v3290 = vpop.f32.mrf.mxu0
  %v3291 = vadd.f32 %v1011, %v3290
  %v3292 = vpop.f32.mrf.mxu0
  %3293 = vmatprep.mubr.bf16.mxu0 %v2434
  %3294 = vmatmul.mubr.bf16.gmra.mxu0 %v1922
  %v3295 = vpop.f32.mrf.mxu0
  %v3296 = vadd.f32 %v1011, %v3295
  %v3297 = vpop.f32.mrf.mxu0
  %v3298 = vpop.f32.mrf.mxu0
  %v3299 = vadd.f32 %v1011, %v3298
  %v3300 = vpop.f32.mrf.mxu0
  %3301 = vmatprep.mubr.bf16.mxu0 %v2437
  %3302 = vmatmul.mubr.bf16.gmra.mxu0 %v1924
  %v3303 = vpop.f32.mrf.mxu0
  %v3304 = vadd.f32 %v1011, %v3303
  %v3305 = vpop.f32.mrf.mxu0
  %v3306 = vpop.f32.mrf.mxu0
  %v3307 = vadd.f32 %v1011, %v3306
  %v3308 = vpop.f32.mrf.mxu0
  %3309 = vmatprep.mubr.bf16.mxu0 %v2440
  %3310 = vmatmul.mubr.bf16.gmra.mxu0 %v1926
  %v3311 = vpop.f32.mrf.mxu0
  %v3312 = vadd.f32 %v1011, %v3311
  %v3313 = vpop.f32.mrf.mxu0
  %v3314 = vpop.f32.mrf.mxu0
  %v3315 = vadd.f32 %v1011, %v3314
  %v3316 = vpop.f32.mrf.mxu0
  %3317 = vmatprep.mubr.bf16.mxu0 %v2443
  %3318 = vmatmul.mubr.bf16.gmra.mxu0 %v1928
  %v3319 = vpop.f32.mrf.mxu0
  %v3320 = vadd.f32 %v1011, %v3319
  %v3321 = vpop.f32.mrf.mxu0
  %v3322 = vpop.f32.mrf.mxu0
  %v3323 = vadd.f32 %v1011, %v3322
  %v3324 = vpop.f32.mrf.mxu0
  %3325 = vmatprep.mubr.bf16.mxu0 %v2446
  %3326 = vmatmul.mubr.bf16.gmra.mxu0 %v1930
  %v3327 = vpop.f32.mrf.mxu0
  %v3328 = vadd.f32 %v1011, %v3327
  %v3329 = vpop.f32.mrf.mxu0
  %v3330 = vpop.f32.mrf.mxu0
  %v3331 = vadd.f32 %v1011, %v3330
  %v3332 = vpop.f32.mrf.mxu0
  %3333 = vmatprep.mubr.bf16.mxu0 %v2449
  %3334 = vmatmul.mubr.bf16.gmra.mxu0 %v1932
  %v3335 = vpop.f32.mrf.mxu0
  %v3336 = vadd.f32 %v1011, %v3335
  %v3337 = vpop.f32.mrf.mxu0
  %v3338 = vpop.f32.mrf.mxu0
  %v3339 = vadd.f32 %v1011, %v3338
  %v3340 = vpop.f32.mrf.mxu0
  %3341 = vmatprep.mubr.bf16.mxu0 %v2452
  %3342 = vmatmul.mubr.bf16.gmra.mxu0 %v1934
  %v3343 = vpop.f32.mrf.mxu0
  %v3344 = vadd.f32 %v1011, %v3343
  %v3345 = vpop.f32.mrf.mxu0
  %v3346 = vpop.f32.mrf.mxu0
  %v3347 = vadd.f32 %v1011, %v3346
  %v3348 = vpop.f32.mrf.mxu0
  %3349 = vmatprep.mubr.bf16.mxu0 %v2455
  %3350 = vmatmul.mubr.bf16.gmra.mxu0 %v1936
  %v3351 = vpop.f32.mrf.mxu0
  %v3352 = vadd.f32 %v1011, %v3351
  %v3353 = vpop.f32.mrf.mxu0
  %v3354 = vpop.f32.mrf.mxu0
  %v3355 = vadd.f32 %v1011, %v3354
  %v3356 = vpop.f32.mrf.mxu0
  %3357 = vmatprep.mubr.bf16.mxu0 %v2458
  %3358 = vmatmul.mubr.bf16.gmra.mxu0 %v1938
  %v3359 = vpop.f32.mrf.mxu0
  %v3360 = vadd.f32 %v1011, %v3359
  %v3361 = vpop.f32.mrf.mxu0
  %v3362 = vpop.f32.mrf.mxu0
  %v3363 = vadd.f32 %v1011, %v3362
  %v3364 = vpop.f32.mrf.mxu0
  %3365 = vmatprep.mubr.bf16.mxu0 %v2461
  %3366 = vmatmul.mubr.bf16.gmra.mxu0 %v1940
  %v3367 = vpop.f32.mrf.mxu0
  %v3368 = vadd.f32 %v1011, %v3367
  %v3369 = vpop.f32.mrf.mxu0
  %v3370 = vpop.f32.mrf.mxu0
  %v3371 = vadd.f32 %v1011, %v3370
  %v3372 = vpop.f32.mrf.mxu0
  %3373 = vmatprep.mubr.bf16.mxu0 %v2464
  %3374 = vmatmul.mubr.bf16.gmra.mxu0 %v1942
  %v3375 = vpop.f32.mrf.mxu0
  %v3376 = vadd.f32 %v1011, %v3375
  %v3377 = vpop.f32.mrf.mxu0
  %v3378 = vpop.f32.mrf.mxu0
  %v3379 = vadd.f32 %v1011, %v3378
  %v3380 = vpop.f32.mrf.mxu0
  %3381 = vmatprep.mubr.bf16.mxu0 %v2467
  %3382 = vmatmul.mubr.bf16.gmra.mxu0 %v1944
  %v3383 = vpop.f32.mrf.mxu0
  %v3384 = vadd.f32 %v1011, %v3383
  %v3385 = vpop.f32.mrf.mxu0
  %v3386 = vpop.f32.mrf.mxu0
  %v3387 = vadd.f32 %v1011, %v3386
  %v3388 = vpop.f32.mrf.mxu0
  %3389 = vmatprep.mubr.bf16.mxu0 %v2470
  %3390 = vmatmul.mubr.bf16.gmra.mxu0 %v1946
  %v3391 = vpop.f32.mrf.mxu0
  %v3392 = vadd.f32 %v1011, %v3391
  %v3393 = vpop.f32.mrf.mxu0
  %v3394 = vpop.f32.mrf.mxu0
  %v3395 = vadd.f32 %v1011, %v3394
  %v3396 = vpop.f32.mrf.mxu0
  %3397 = vmatprep.mubr.bf16.mxu0 %v2473
  %3398 = vmatmul.mubr.bf16.gmra.mxu0 %v1948
  %v3399 = vpop.f32.mrf.mxu0
  %v3400 = vadd.f32 %v1011, %v3399
  %v3401 = vpop.f32.mrf.mxu0
  %v3402 = vpop.f32.mrf.mxu0
  %v3403 = vadd.f32 %v1011, %v3402
  %v3404 = vpop.f32.mrf.mxu0
  %3405 = vmatprep.mubr.bf16.mxu0 %v2476
  %3406 = vmatmul.mubr.bf16.gmra.mxu0 %v1950
  %v3407 = vpop.f32.mrf.mxu0
  %v3408 = vadd.f32 %v1011, %v3407
  %v3409 = vpop.f32.mrf.mxu0
  %v3410 = vpop.f32.mrf.mxu0
  %v3411 = vadd.f32 %v1011, %v3410
  %v3412 = vpop.f32.mrf.mxu0
  %3413 = vmatprep.mubr.bf16.mxu0 %v2479
  %3414 = vmatmul.mubr.bf16.gmra.mxu0 %v1952
  %v3415 = vpop.f32.mrf.mxu0
  %v3416 = vadd.f32 %v1011, %v3415
  %v3417 = vpop.f32.mrf.mxu0
  %v3418 = vpop.f32.mrf.mxu0
  %v3419 = vadd.f32 %v1011, %v3418
  %v3420 = vpop.f32.mrf.mxu0
  %3421 = vmatprep.mubr.bf16.mxu0 %v2482
  %3422 = vmatmul.mubr.bf16.gmra.mxu0 %v1954
  %v3423 = vpop.f32.mrf.mxu0
  %v3424 = vadd.f32 %v1011, %v3423
  %v3425 = vpop.f32.mrf.mxu0
  %v3426 = vpop.f32.mrf.mxu0
  %v3427 = vadd.f32 %v1011, %v3426
  %v3428 = vpop.f32.mrf.mxu0
  %3429 = vmatprep.mubr.bf16.mxu0 %v2485
  %3430 = vmatmul.mubr.bf16.gmra.mxu0 %v1956
  %v3431 = vpop.f32.mrf.mxu0
  %v3432 = vadd.f32 %v1011, %v3431
  %v3433 = vpop.f32.mrf.mxu0
  %v3434 = vpop.f32.mrf.mxu0
  %v3435 = vadd.f32 %v1011, %v3434
  %v3436 = vpop.f32.mrf.mxu0
  %3437 = vmatprep.mubr.bf16.mxu0 %v2488
  %3438 = vmatmul.mubr.bf16.gmra.mxu0 %v1958
  %v3439 = vpop.f32.mrf.mxu0
  %v3440 = vadd.f32 %v1011, %v3439
  %v3441 = vpop.f32.mrf.mxu0
  %v3442 = vpop.f32.mrf.mxu0
  %v3443 = vadd.f32 %v1011, %v3442
  %v3444 = vpop.f32.mrf.mxu0
  %3445 = vmatprep.mubr.bf16.mxu0 %v2491
  %3446 = vmatmul.mubr.bf16.gmra.mxu0 %v1960
  %v3447 = vpop.f32.mrf.mxu0
  %v3448 = vadd.f32 %v1011, %v3447
  %v3449 = vpop.f32.mrf.mxu0
  %v3450 = vpop.f32.mrf.mxu0
  %v3451 = vadd.f32 %v1011, %v3450
  %v3452 = vpop.f32.mrf.mxu0
  %3453 = vmatprep.mubr.bf16.mxu0 %v2494
  %3454 = vmatmul.mubr.bf16.gmra.mxu0 %v1962
  %v3455 = vpop.f32.mrf.mxu0
  %v3456 = vadd.f32 %v1011, %v3455
  %v3457 = vpop.f32.mrf.mxu0
  %v3458 = vpop.f32.mrf.mxu0
  %v3459 = vadd.f32 %v1011, %v3458
  %v3460 = vpop.f32.mrf.mxu0
  %3461 = vmatprep.mubr.bf16.mxu0 %v2497
  %3462 = vmatmul.mubr.bf16.gmra.mxu0 %v1964
  %v3463 = vpop.f32.mrf.mxu0
  %v3464 = vadd.f32 %v1011, %v3463
  %v3465 = vpop.f32.mrf.mxu0
  %v3466 = vpop.f32.mrf.mxu0
  %v3467 = vadd.f32 %v1011, %v3466
  %v3468 = vpop.f32.mrf.mxu0
  %3469 = vmatprep.mubr.bf16.mxu0 %v2500
  %3470 = vmatmul.mubr.bf16.gmra.mxu0 %v1966
  %v3471 = vpop.f32.mrf.mxu0
  %v3472 = vadd.f32 %v1011, %v3471
  %v3473 = vpop.f32.mrf.mxu0
  %v3474 = vpop.f32.mrf.mxu0
  %v3475 = vadd.f32 %v1011, %v3474
  %v3476 = vpop.f32.mrf.mxu0
  %3477 = vmatprep.mubr.bf16.mxu0 %v2503
  %3478 = vmatmul.mubr.bf16.gmra.mxu0 %v1968
  %v3479 = vpop.f32.mrf.mxu0
  %v3480 = vadd.f32 %v1011, %v3479
  %v3481 = vpop.f32.mrf.mxu0
  %v3482 = vpop.f32.mrf.mxu0
  %v3483 = vadd.f32 %v1011, %v3482
  %v3484 = vpop.f32.mrf.mxu0
  %3485 = vmatprep.mubr.bf16.mxu0 %v2506
  %3486 = vmatmul.mubr.bf16.gmra.mxu0 %v1970
  %v3487 = vpop.f32.mrf.mxu0
  %v3488 = vadd.f32 %v1011, %v3487
  %v3489 = vpop.f32.mrf.mxu0
  %v3490 = vpop.f32.mrf.mxu0
  %v3491 = vadd.f32 %v1011, %v3490
  %v3492 = vpop.f32.mrf.mxu0
  %3493 = vmatprep.mubr.bf16.mxu0 %v2509
  %3494 = vmatmul.mubr.bf16.gmra.mxu0 %v1972
  %v3495 = vpop.f32.mrf.mxu0
  %v3496 = vadd.f32 %v1011, %v3495
  %v3497 = vpop.f32.mrf.mxu0
  %v3498 = vpop.f32.mrf.mxu0
  %v3499 = vadd.f32 %v1011, %v3498
  %v3500 = vpop.f32.mrf.mxu0
  %3501 = vmatprep.mubr.bf16.mxu0 %v2512
  %3502 = vmatmul.mubr.bf16.gmra.mxu0 %v1974
  %v3503 = vpop.f32.mrf.mxu0
  %v3504 = vadd.f32 %v1011, %v3503
  %v3505 = vpop.f32.mrf.mxu0
  %v3506 = vpop.f32.mrf.mxu0
  %v3507 = vadd.f32 %v1011, %v3506
  %v3508 = vpop.f32.mrf.mxu0
  %3509 = vmatprep.mubr.bf16.mxu0 %v2515
  %3510 = vmatmul.mubr.bf16.gmra.mxu0 %v1976
  %v3511 = vpop.f32.mrf.mxu0
  %v3512 = vadd.f32 %v1011, %v3511
  %v3513 = vpop.f32.mrf.mxu0
  %v3514 = vpop.f32.mrf.mxu0
  %v3515 = vpop.f32.mrf.mxu0
  %3516 = vdwg.mxu0
  %vm3517 = vcmask 64512
  %v3518 = vsel %vm3517, %v2552, 0.0
  %v3519 = vsel %vm3517, %v2555, 0.0
  %v3520 = vadd.f32 %v3518, %v3519
  %v3521 = vsel %vm3517, %v2560, 0.0
  %v3522 = vadd.f32 %v3520, %v3521
  %v3523 = vsel %vm3517, %v2563, 0.0
  %v3524 = vadd.f32 %v3522, %v3523
  %v3525 = vsel %vm3517, %v2568, 0.0
  %v3526 = vadd.f32 %v3524, %v3525
  %v3527 = vsel %vm3517, %v2571, 0.0
  %v3528 = vadd.f32 %v3526, %v3527
  %v3529 = vsel %vm3517, %v2576, 0.0
  %v3530 = vadd.f32 %v3528, %v3529
  %v3531 = vsel %vm3517, %v2579, 0.0
  %v3532 = vadd.f32 %v3530, %v3531
  %v3533 = vsel %vm3517, %v2584, 0.0
  %v3534 = vadd.f32 %v3532, %v3533
  %v3535 = vsel %vm3517, %v2587, 0.0
  %v3536 = vadd.f32 %v3534, %v3535
  %v3537 = vsel %vm3517, %v2592, 0.0
  %v3538 = vadd.f32 %v3536, %v3537
  %v3539 = vsel %vm3517, %v2595, 0.0
  %v3540 = vadd.f32 %v3538, %v3539
  %v3541 = vsel %vm3517, %v2600, 0.0
  %v3542 = vadd.f32 %v3540, %v3541
  %v3543 = vsel %vm3517, %v2603, 0.0
  %v3544 = vadd.f32 %v3542, %v3543
  %v3545 = vsel %vm3517, %v2608, 0.0
  %v3546 = vadd.f32 %v3544, %v3545
  %v3547 = vsel %vm3517, %v2611, 0.0
  %v3548 = vadd.f32 %v3546, %v3547
  %v3549 = vsel %vm3517, %v2616, 0.0
  %v3550 = vadd.f32 %v3548, %v3549
  %v3551 = vsel %vm3517, %v2619, 0.0
  %v3552 = vadd.f32 %v3550, %v3551
  %v3553 = vsel %vm3517, %v2624, 0.0
  %v3554 = vadd.f32 %v3552, %v3553
  %v3555 = vsel %vm3517, %v2627, 0.0
  %v3556 = vadd.f32 %v3554, %v3555
  %v3557 = vsel %vm3517, %v2632, 0.0
  %v3558 = vadd.f32 %v3556, %v3557
  %v3559 = vsel %vm3517, %v2635, 0.0
  %v3560 = vadd.f32 %v3558, %v3559
  %v3561 = vsel %vm3517, %v2640, 0.0
  %v3562 = vadd.f32 %v3560, %v3561
  %v3563 = vsel %vm3517, %v2643, 0.0
  %v3564 = vadd.f32 %v3562, %v3563
  %v3565 = vsel %vm3517, %v2648, 0.0
  %v3566 = vadd.f32 %v3564, %v3565
  %v3567 = vsel %vm3517, %v2651, 0.0
  %v3568 = vadd.f32 %v3566, %v3567
  %v3569 = vsel %vm3517, %v2656, 0.0
  %v3570 = vadd.f32 %v3568, %v3569
  %v3571 = vsel %vm3517, %v2659, 0.0
  %v3572 = vadd.f32 %v3570, %v3571
  %v3573 = vsel %vm3517, %v2664, 0.0
  %v3574 = vadd.f32 %v3572, %v3573
  %v3575 = vsel %vm3517, %v2667, 0.0
  %v3576 = vadd.f32 %v3574, %v3575
  %v3577 = vsel %vm3517, %v2672, 0.0
  %v3578 = vadd.f32 %v3576, %v3577
  %v3579 = vsel %vm3517, %v2675, 0.0
  %v3580 = vadd.f32 %v3578, %v3579
  %v3581 = vsel %vm3517, %v2680, 0.0
  %v3582 = vadd.f32 %v3580, %v3581
  %v3583 = vsel %vm3517, %v2683, 0.0
  %v3584 = vadd.f32 %v3582, %v3583
  %v3585 = vsel %vm3517, %v2688, 0.0
  %v3586 = vadd.f32 %v3584, %v3585
  %v3587 = vsel %vm3517, %v2691, 0.0
  %v3588 = vadd.f32 %v3586, %v3587
  %v3589 = vsel %vm3517, %v2696, 0.0
  %v3590 = vadd.f32 %v3588, %v3589
  %v3591 = vsel %vm3517, %v2699, 0.0
  %v3592 = vadd.f32 %v3590, %v3591
  %v3593 = vsel %vm3517, %v2704, 0.0
  %v3594 = vadd.f32 %v3592, %v3593
  %v3595 = vsel %vm3517, %v2707, 0.0
  %v3596 = vadd.f32 %v3594, %v3595
  %v3597 = vsel %vm3517, %v2712, 0.0
  %v3598 = vadd.f32 %v3596, %v3597
  %v3599 = vsel %vm3517, %v2715, 0.0
  %v3600 = vadd.f32 %v3598, %v3599
  %v3601 = vsel %vm3517, %v2720, 0.0
  %v3602 = vadd.f32 %v3600, %v3601
  %v3603 = vsel %vm3517, %v2723, 0.0
  %v3604 = vadd.f32 %v3602, %v3603
  %v3605 = vsel %vm3517, %v2728, 0.0
  %v3606 = vadd.f32 %v3604, %v3605
  %v3607 = vsel %vm3517, %v2731, 0.0
  %v3608 = vadd.f32 %v3606, %v3607
  %v3609 = vsel %vm3517, %v2736, 0.0
  %v3610 = vadd.f32 %v3608, %v3609
  %v3611 = vsel %vm3517, %v2739, 0.0
  %v3612 = vadd.f32 %v3610, %v3611
  %v3613 = vsel %vm3517, %v2744, 0.0
  %v3614 = vadd.f32 %v3612, %v3613
  %v3615 = vsel %vm3517, %v2747, 0.0
  %v3616 = vadd.f32 %v3614, %v3615
  %v3617 = vsel %vm3517, %v2752, 0.0
  %v3618 = vadd.f32 %v3616, %v3617
  %v3619 = vsel %vm3517, %v2755, 0.0
  %v3620 = vadd.f32 %v3618, %v3619
  %v3621 = vsel %vm3517, %v2760, 0.0
  %v3622 = vadd.f32 %v3620, %v3621
  %v3623 = vsel %vm3517, %v2763, 0.0
  %v3624 = vadd.f32 %v3622, %v3623
  %v3625 = vsel %vm3517, %v2768, 0.0
  %v3626 = vadd.f32 %v3624, %v3625
  %v3627 = vsel %vm3517, %v2771, 0.0
  %v3628 = vadd.f32 %v3626, %v3627
  %v3629 = vsel %vm3517, %v2776, 0.0
  %v3630 = vadd.f32 %v3628, %v3629
  %v3631 = vsel %vm3517, %v2779, 0.0
  %v3632 = vadd.f32 %v3630, %v3631
  %v3633 = vsel %vm3517, %v2784, 0.0
  %v3634 = vadd.f32 %v3632, %v3633
  %v3635 = vsel %vm3517, %v2787, 0.0
  %v3636 = vadd.f32 %v3634, %v3635
  %v3637 = vsel %vm3517, %v2792, 0.0
  %v3638 = vadd.f32 %v3636, %v3637
  %v3639 = vsel %vm3517, %v2795, 0.0
  %v3640 = vadd.f32 %v3638, %v3639
  %v3641 = vsel %vm3517, %v2800, 0.0
  %v3642 = vadd.f32 %v3640, %v3641
  %v3643 = vsel %vm3517, %v2803, 0.0
  %v3644 = vadd.f32 %v3642, %v3643
  %v3645 = vsel %vm3517, %v2808, 0.0
  %v3646 = vadd.f32 %v3644, %v3645
  %v3647 = vsel %vm3517, %v2811, 0.0
  %v3648 = vadd.f32 %v3646, %v3647
  %v3649 = vsel %vm3517, %v2816, 0.0
  %v3650 = vadd.f32 %v3648, %v3649
  %v3651 = vsel %vm3517, %v2819, 0.0
  %v3652 = vadd.f32 %v3650, %v3651
  %v3653 = vsel %vm3517, %v2824, 0.0
  %v3654 = vadd.f32 %v3652, %v3653
  %v3655 = vsel %vm3517, %v2827, 0.0
  %v3656 = vadd.f32 %v3654, %v3655
  %v3657 = vsel %vm3517, %v2832, 0.0
  %v3658 = vadd.f32 %v3656, %v3657
  %v3659 = vsel %vm3517, %v2835, 0.0
  %v3660 = vadd.f32 %v3658, %v3659
  %v3661 = vsel %vm3517, %v2840, 0.0
  %v3662 = vadd.f32 %v3660, %v3661
  %v3663 = vsel %vm3517, %v2843, 0.0
  %v3664 = vadd.f32 %v3662, %v3663
  %v3665 = vsel %vm3517, %v2848, 0.0
  %v3666 = vadd.f32 %v3664, %v3665
  %v3667 = vsel %vm3517, %v2851, 0.0
  %v3668 = vadd.f32 %v3666, %v3667
  %v3669 = vsel %vm3517, %v2856, 0.0
  %v3670 = vadd.f32 %v3668, %v3669
  %v3671 = vsel %vm3517, %v2859, 0.0
  %v3672 = vadd.f32 %v3670, %v3671
  %v3673 = vsel %vm3517, %v2864, 0.0
  %v3674 = vadd.f32 %v3672, %v3673
  %v3675 = vsel %vm3517, %v2867, 0.0
  %v3676 = vadd.f32 %v3674, %v3675
  %v3677 = vsel %vm3517, %v2872, 0.0
  %v3678 = vadd.f32 %v3676, %v3677
  %v3679 = vsel %vm3517, %v2875, 0.0
  %v3680 = vadd.f32 %v3678, %v3679
  %v3681 = vsel %vm3517, %v2880, 0.0
  %v3682 = vadd.f32 %v3680, %v3681
  %v3683 = vsel %vm3517, %v2883, 0.0
  %v3684 = vadd.f32 %v3682, %v3683
  %v3685 = vsel %vm3517, %v2888, 0.0
  %v3686 = vadd.f32 %v3684, %v3685
  %v3687 = vsel %vm3517, %v2891, 0.0
  %v3688 = vadd.f32 %v3686, %v3687
  %v3689 = vsel %vm3517, %v2896, 0.0
  %v3690 = vadd.f32 %v3688, %v3689
  %v3691 = vsel %vm3517, %v2899, 0.0
  %v3692 = vadd.f32 %v3690, %v3691
  %v3693 = vsel %vm3517, %v2904, 0.0
  %v3694 = vadd.f32 %v3692, %v3693
  %v3695 = vsel %vm3517, %v2907, 0.0
  %v3696 = vadd.f32 %v3694, %v3695
  %v3697 = vsel %vm3517, %v2912, 0.0
  %v3698 = vadd.f32 %v3696, %v3697
  %v3699 = vsel %vm3517, %v2915, 0.0
  %v3700 = vadd.f32 %v3698, %v3699
  %v3701 = vsel %vm3517, %v2920, 0.0
  %v3702 = vadd.f32 %v3700, %v3701
  %v3703 = vsel %vm3517, %v2923, 0.0
  %v3704 = vadd.f32 %v3702, %v3703
  %v3705 = vsel %vm3517, %v2928, 0.0
  %v3706 = vadd.f32 %v3704, %v3705
  %v3707 = vsel %vm3517, %v2931, 0.0
  %v3708 = vadd.f32 %v3706, %v3707
  %v3709 = vsel %vm3517, %v2936, 0.0
  %v3710 = vadd.f32 %v3708, %v3709
  %v3711 = vsel %vm3517, %v2939, 0.0
  %v3712 = vadd.f32 %v3710, %v3711
  %v3713 = vsel %vm3517, %v2944, 0.0
  %v3714 = vadd.f32 %v3712, %v3713
  %v3715 = vsel %vm3517, %v2947, 0.0
  %v3716 = vadd.f32 %v3714, %v3715
  %v3717 = vsel %vm3517, %v2952, 0.0
  %v3718 = vadd.f32 %v3716, %v3717
  %v3719 = vsel %vm3517, %v2955, 0.0
  %v3720 = vadd.f32 %v3718, %v3719
  %v3721 = vsel %vm3517, %v2960, 0.0
  %v3722 = vadd.f32 %v3720, %v3721
  %v3723 = vsel %vm3517, %v2963, 0.0
  %v3724 = vadd.f32 %v3722, %v3723
  %v3725 = vsel %vm3517, %v2968, 0.0
  %v3726 = vadd.f32 %v3724, %v3725
  %v3727 = vsel %vm3517, %v2971, 0.0
  %v3728 = vadd.f32 %v3726, %v3727
  %v3729 = vsel %vm3517, %v2976, 0.0
  %v3730 = vadd.f32 %v3728, %v3729
  %v3731 = vsel %vm3517, %v2979, 0.0
  %v3732 = vadd.f32 %v3730, %v3731
  %v3733 = vsel %vm3517, %v2984, 0.0
  %v3734 = vadd.f32 %v3732, %v3733
  %v3735 = vsel %vm3517, %v2987, 0.0
  %v3736 = vadd.f32 %v3734, %v3735
  %v3737 = vsel %vm3517, %v2992, 0.0
  %v3738 = vadd.f32 %v3736, %v3737
  %v3739 = vsel %vm3517, %v2995, 0.0
  %v3740 = vadd.f32 %v3738, %v3739
  %v3741 = vsel %vm3517, %v3000, 0.0
  %v3742 = vadd.f32 %v3740, %v3741
  %v3743 = vsel %vm3517, %v3003, 0.0
  %v3744 = vadd.f32 %v3742, %v3743
  %v3745 = vsel %vm3517, %v3008, 0.0
  %v3746 = vadd.f32 %v3744, %v3745
  %v3747 = vsel %vm3517, %v3011, 0.0
  %v3748 = vadd.f32 %v3746, %v3747
  %v3749 = vsel %vm3517, %v3016, 0.0
  %v3750 = vadd.f32 %v3748, %v3749
  %v3751 = vsel %vm3517, %v3019, 0.0
  %v3752 = vadd.f32 %v3750, %v3751
  %v3753 = vsel %vm3517, %v3024, 0.0
  %v3754 = vadd.f32 %v3752, %v3753
  %v3755 = vsel %vm3517, %v3027, 0.0
  %v3756 = vadd.f32 %v3754, %v3755
  %v3757 = vsel %vm3517, %v3032, 0.0
  %v3758 = vadd.f32 %v3756, %v3757
  %v3759 = vsel %vm3517, %v3035, 0.0
  %v3760 = vadd.f32 %v3758, %v3759
  %v3761 = vsel %vm3517, %v3040, 0.0
  %v3762 = vadd.f32 %v3760, %v3761
  %v3763 = vsel %vm3517, %v3043, 0.0
  %v3764 = vadd.f32 %v3762, %v3763
  %v3765 = vsel %vm3517, %v3048, 0.0
  %v3766 = vadd.f32 %v3764, %v3765
  %v3767 = vsel %vm3517, %v3051, 0.0
  %v3768 = vadd.f32 %v3766, %v3767
  %v3769 = vsel %vm3517, %v3056, 0.0
  %v3770 = vadd.f32 %v3768, %v3769
  %v3771 = vsel %vm3517, %v3059, 0.0
  %v3772 = vadd.f32 %v3770, %v3771
  %v3773 = vsel %vm3517, %v3064, 0.0
  %v3774 = vadd.f32 %v3772, %v3773
  %v3775 = vsel %vm3517, %v3067, 0.0
  %v3776 = vadd.f32 %v3774, %v3775
  %v3777 = vsel %vm3517, %v3072, 0.0
  %v3778 = vadd.f32 %v3776, %v3777
  %v3779 = vsel %vm3517, %v3075, 0.0
  %v3780 = vadd.f32 %v3778, %v3779
  %v3781 = vsel %vm3517, %v3080, 0.0
  %v3782 = vadd.f32 %v3780, %v3781
  %v3783 = vsel %vm3517, %v3083, 0.0
  %v3784 = vadd.f32 %v3782, %v3783
  %v3785 = vsel %vm3517, %v3088, 0.0
  %v3786 = vadd.f32 %v3784, %v3785
  %v3787 = vsel %vm3517, %v3091, 0.0
  %v3788 = vadd.f32 %v3786, %v3787
  %v3789 = vsel %vm3517, %v3096, 0.0
  %v3790 = vadd.f32 %v3788, %v3789
  %v3791 = vsel %vm3517, %v3099, 0.0
  %v3792 = vadd.f32 %v3790, %v3791
  %v3793 = vsel %vm3517, %v3104, 0.0
  %v3794 = vadd.f32 %v3792, %v3793
  %v3795 = vsel %vm3517, %v3107, 0.0
  %v3796 = vadd.f32 %v3794, %v3795
  %v3797 = vsel %vm3517, %v3112, 0.0
  %v3798 = vadd.f32 %v3796, %v3797
  %v3799 = vsel %vm3517, %v3115, 0.0
  %v3800 = vadd.f32 %v3798, %v3799
  %v3801 = vsel %vm3517, %v3120, 0.0
  %v3802 = vadd.f32 %v3800, %v3801
  %v3803 = vsel %vm3517, %v3123, 0.0
  %v3804 = vadd.f32 %v3802, %v3803
  %v3805 = vsel %vm3517, %v3128, 0.0
  %v3806 = vadd.f32 %v3804, %v3805
  %v3807 = vsel %vm3517, %v3131, 0.0
  %v3808 = vadd.f32 %v3806, %v3807
  %v3809 = vsel %vm3517, %v3136, 0.0
  %v3810 = vadd.f32 %v3808, %v3809
  %v3811 = vsel %vm3517, %v3139, 0.0
  %v3812 = vadd.f32 %v3810, %v3811
  %v3813 = vsel %vm3517, %v3144, 0.0
  %v3814 = vadd.f32 %v3812, %v3813
  %v3815 = vsel %vm3517, %v3147, 0.0
  %v3816 = vadd.f32 %v3814, %v3815
  %v3817 = vsel %vm3517, %v3152, 0.0
  %v3818 = vadd.f32 %v3816, %v3817
  %v3819 = vsel %vm3517, %v3155, 0.0
  %v3820 = vadd.f32 %v3818, %v3819
  %v3821 = vsel %vm3517, %v3160, 0.0
  %v3822 = vadd.f32 %v3820, %v3821
  %v3823 = vsel %vm3517, %v3163, 0.0
  %v3824 = vadd.f32 %v3822, %v3823
  %v3825 = vsel %vm3517, %v3168, 0.0
  %v3826 = vadd.f32 %v3824, %v3825
  %v3827 = vsel %vm3517, %v3171, 0.0
  %v3828 = vadd.f32 %v3826, %v3827
  %v3829 = vsel %vm3517, %v3176, 0.0
  %v3830 = vadd.f32 %v3828, %v3829
  %v3831 = vsel %vm3517, %v3179, 0.0
  %v3832 = vadd.f32 %v3830, %v3831
  %v3833 = vsel %vm3517, %v3184, 0.0
  %v3834 = vadd.f32 %v3832, %v3833
  %v3835 = vsel %vm3517, %v3187, 0.0
  %v3836 = vadd.f32 %v3834, %v3835
  %v3837 = vsel %vm3517, %v3192, 0.0
  %v3838 = vadd.f32 %v3836, %v3837
  %v3839 = vsel %vm3517, %v3195, 0.0
  %v3840 = vadd.f32 %v3838, %v3839
  %v3841 = vsel %vm3517, %v3200, 0.0
  %v3842 = vadd.f32 %v3840, %v3841
  %v3843 = vsel %vm3517, %v3203, 0.0
  %v3844 = vadd.f32 %v3842, %v3843
  %v3845 = vsel %vm3517, %v3208, 0.0
  %v3846 = vadd.f32 %v3844, %v3845
  %v3847 = vsel %vm3517, %v3211, 0.0
  %v3848 = vadd.f32 %v3846, %v3847
  %v3849 = vsel %vm3517, %v3216, 0.0
  %v3850 = vadd.f32 %v3848, %v3849
  %v3851 = vsel %vm3517, %v3219, 0.0
  %v3852 = vadd.f32 %v3850, %v3851
  %v3853 = vsel %vm3517, %v3224, 0.0
  %v3854 = vadd.f32 %v3852, %v3853
  %v3855 = vsel %vm3517, %v3227, 0.0
  %v3856 = vadd.f32 %v3854, %v3855
  %v3857 = vsel %vm3517, %v3232, 0.0
  %v3858 = vadd.f32 %v3856, %v3857
  %v3859 = vsel %vm3517, %v3235, 0.0
  %v3860 = vadd.f32 %v3858, %v3859
  %v3861 = vsel %vm3517, %v3240, 0.0
  %v3862 = vadd.f32 %v3860, %v3861
  %v3863 = vsel %vm3517, %v3243, 0.0
  %v3864 = vadd.f32 %v3862, %v3863
  %v3865 = vsel %vm3517, %v3248, 0.0
  %v3866 = vadd.f32 %v3864, %v3865
  %v3867 = vsel %vm3517, %v3251, 0.0
  %v3868 = vadd.f32 %v3866, %v3867
  %v3869 = vsel %vm3517, %v3256, 0.0
  %v3870 = vadd.f32 %v3868, %v3869
  %v3871 = vsel %vm3517, %v3259, 0.0
  %v3872 = vadd.f32 %v3870, %v3871
  %v3873 = vsel %vm3517, %v3264, 0.0
  %v3874 = vadd.f32 %v3872, %v3873
  %v3875 = vsel %vm3517, %v3267, 0.0
  %v3876 = vadd.f32 %v3874, %v3875
  %v3877 = vsel %vm3517, %v3272, 0.0
  %v3878 = vadd.f32 %v3876, %v3877
  %v3879 = vsel %vm3517, %v3275, 0.0
  %v3880 = vadd.f32 %v3878, %v3879
  %v3881 = vsel %vm3517, %v3280, 0.0
  %v3882 = vadd.f32 %v3880, %v3881
  %v3883 = vsel %vm3517, %v3283, 0.0
  %v3884 = vadd.f32 %v3882, %v3883
  %v3885 = vsel %vm3517, %v3288, 0.0
  %v3886 = vadd.f32 %v3884, %v3885
  %v3887 = vsel %vm3517, %v3291, 0.0
  %v3888 = vadd.f32 %v3886, %v3887
  %v3889 = vsel %vm3517, %v3296, 0.0
  %v3890 = vadd.f32 %v3888, %v3889
  %v3891 = vsel %vm3517, %v3299, 0.0
  %v3892 = vadd.f32 %v3890, %v3891
  %v3893 = vsel %vm3517, %v3304, 0.0
  %v3894 = vadd.f32 %v3892, %v3893
  %v3895 = vsel %vm3517, %v3307, 0.0
  %v3896 = vadd.f32 %v3894, %v3895
  %v3897 = vsel %vm3517, %v3312, 0.0
  %v3898 = vadd.f32 %v3896, %v3897
  %v3899 = vsel %vm3517, %v3315, 0.0
  %v3900 = vadd.f32 %v3898, %v3899
  %v3901 = vsel %vm3517, %v3320, 0.0
  %v3902 = vadd.f32 %v3900, %v3901
  %v3903 = vsel %vm3517, %v3323, 0.0
  %v3904 = vadd.f32 %v3902, %v3903
  %v3905 = vsel %vm3517, %v3328, 0.0
  %v3906 = vadd.f32 %v3904, %v3905
  %v3907 = vsel %vm3517, %v3331, 0.0
  %v3908 = vadd.f32 %v3906, %v3907
  %v3909 = vsel %vm3517, %v3336, 0.0
  %v3910 = vadd.f32 %v3908, %v3909
  %v3911 = vsel %vm3517, %v3339, 0.0
  %v3912 = vadd.f32 %v3910, %v3911
  %v3913 = vsel %vm3517, %v3344, 0.0
  %v3914 = vadd.f32 %v3912, %v3913
  %v3915 = vsel %vm3517, %v3347, 0.0
  %v3916 = vadd.f32 %v3914, %v3915
  %v3917 = vsel %vm3517, %v3352, 0.0
  %v3918 = vadd.f32 %v3916, %v3917
  %v3919 = vsel %vm3517, %v3355, 0.0
  %v3920 = vadd.f32 %v3918, %v3919
  %v3921 = vsel %vm3517, %v3360, 0.0
  %v3922 = vadd.f32 %v3920, %v3921
  %v3923 = vsel %vm3517, %v3363, 0.0
  %v3924 = vadd.f32 %v3922, %v3923
  %v3925 = vsel %vm3517, %v3368, 0.0
  %v3926 = vadd.f32 %v3924, %v3925
  %v3927 = vsel %vm3517, %v3371, 0.0
  %v3928 = vadd.f32 %v3926, %v3927
  %v3929 = vsel %vm3517, %v3376, 0.0
  %v3930 = vadd.f32 %v3928, %v3929
  %v3931 = vsel %vm3517, %v3379, 0.0
  %v3932 = vadd.f32 %v3930, %v3931
  %v3933 = vsel %vm3517, %v3384, 0.0
  %v3934 = vadd.f32 %v3932, %v3933
  %v3935 = vsel %vm3517, %v3387, 0.0
  %v3936 = vadd.f32 %v3934, %v3935
  %v3937 = vsel %vm3517, %v3392, 0.0
  %v3938 = vadd.f32 %v3936, %v3937
  %v3939 = vsel %vm3517, %v3395, 0.0
  %v3940 = vadd.f32 %v3938, %v3939
  %v3941 = vsel %vm3517, %v3400, 0.0
  %v3942 = vadd.f32 %v3940, %v3941
  %v3943 = vsel %vm3517, %v3403, 0.0
  %v3944 = vadd.f32 %v3942, %v3943
  %v3945 = vsel %vm3517, %v3408, 0.0
  %v3946 = vadd.f32 %v3944, %v3945
  %v3947 = vsel %vm3517, %v3411, 0.0
  %v3948 = vadd.f32 %v3946, %v3947
  %v3949 = vsel %vm3517, %v3416, 0.0
  %v3950 = vadd.f32 %v3948, %v3949
  %v3951 = vsel %vm3517, %v3419, 0.0
  %v3952 = vadd.f32 %v3950, %v3951
  %v3953 = vsel %vm3517, %v3424, 0.0
  %v3954 = vadd.f32 %v3952, %v3953
  %v3955 = vsel %vm3517, %v3427, 0.0
  %v3956 = vadd.f32 %v3954, %v3955
  %v3957 = vsel %vm3517, %v3432, 0.0
  %v3958 = vadd.f32 %v3956, %v3957
  %v3959 = vsel %vm3517, %v3435, 0.0
  %v3960 = vadd.f32 %v3958, %v3959
  %v3961 = vsel %vm3517, %v3440, 0.0
  %v3962 = vadd.f32 %v3960, %v3961
  %v3963 = vsel %vm3517, %v3443, 0.0
  %v3964 = vadd.f32 %v3962, %v3963
  %v3965 = vsel %vm3517, %v3448, 0.0
  %v3966 = vadd.f32 %v3964, %v3965
  %v3967 = vsel %vm3517, %v3451, 0.0
  %v3968 = vadd.f32 %v3966, %v3967
  %v3969 = vsel %vm3517, %v3456, 0.0
  %v3970 = vadd.f32 %v3968, %v3969
  %v3971 = vsel %vm3517, %v3459, 0.0
  %v3972 = vadd.f32 %v3970, %v3971
  %v3973 = vsel %vm3517, %v3464, 0.0
  %v3974 = vadd.f32 %v3972, %v3973
  %v3975 = vsel %vm3517, %v3467, 0.0
  %v3976 = vadd.f32 %v3974, %v3975
  %v3977 = vsel %vm3517, %v3472, 0.0
  %v3978 = vadd.f32 %v3976, %v3977
  %v3979 = vsel %vm3517, %v3475, 0.0
  %v3980 = vadd.f32 %v3978, %v3979
  %v3981 = vsel %vm3517, %v3480, 0.0
  %v3982 = vadd.f32 %v3980, %v3981
  %v3983 = vsel %vm3517, %v3483, 0.0
  %v3984 = vadd.f32 %v3982, %v3983
  %v3985 = vsel %vm3517, %v3488, 0.0
  %v3986 = vadd.f32 %v3984, %v3985
  %v3987 = vsel %vm3517, %v3491, 0.0
  %v3988 = vadd.f32 %v3986, %v3987
  %v3989 = vsel %vm3517, %v3496, 0.0
  %v3990 = vadd.f32 %v3988, %v3989
  %v3991 = vsel %vm3517, %v3499, 0.0
  %v3992 = vadd.f32 %v3990, %v3991
  %v3993 = vsel %vm3517, %v3504, 0.0
  %v3994 = vadd.f32 %v3992, %v3993
  %v3995 = vsel %vm3517, %v3507, 0.0
  %v3996 = vadd.f32 %v3994, %v3995
  %vm3997 = vcmask 58368
  %v3998 = vsel %vm3997, %v3512, 0.0
  %v3999 = vadd.f32 %v3996, %v3998
  %v4000 = vrot.slane %v3999, 4
  %v4001 = vadd.f32 %v3999, %v4000
  %v4002 = vrot.slane %v4001, 2
  %v4003 = vadd.f32 %v4001, %v4002
  %v4004 = vrot.slane %v4003, 1
  %v4005 = vadd.f32 %v4003, %v4004
  %v4006 = vmul.f32 %v2552, %v2552
  %v4007 = vmul.f32 %v2555, %v2555
  %v4008 = vmul.f32 %v2560, %v2560
  %v4009 = vmul.f32 %v2563, %v2563
  %v4010 = vmul.f32 %v2568, %v2568
  %v4011 = vmul.f32 %v2571, %v2571
  %v4012 = vmul.f32 %v2576, %v2576
  %v4013 = vmul.f32 %v2579, %v2579
  %v4014 = vmul.f32 %v2584, %v2584
  %v4015 = vmul.f32 %v2587, %v2587
  %v4016 = vmul.f32 %v2592, %v2592
  %v4017 = vmul.f32 %v2595, %v2595
  %v4018 = vmul.f32 %v2600, %v2600
  %v4019 = vmul.f32 %v2603, %v2603
  %v4020 = vmul.f32 %v2608, %v2608
  %v4021 = vmul.f32 %v2611, %v2611
  %v4022 = vmul.f32 %v2616, %v2616
  %v4023 = vmul.f32 %v2619, %v2619
  %v4024 = vmul.f32 %v2624, %v2624
  %v4025 = vmul.f32 %v2627, %v2627
  %v4026 = vmul.f32 %v2632, %v2632
  %v4027 = vmul.f32 %v2635, %v2635
  %v4028 = vmul.f32 %v2640, %v2640
  %v4029 = vmul.f32 %v2643, %v2643
  %v4030 = vmul.f32 %v2648, %v2648
  %v4031 = vmul.f32 %v2651, %v2651
  %v4032 = vmul.f32 %v2656, %v2656
  %v4033 = vmul.f32 %v2659, %v2659
  %v4034 = vmul.f32 %v2664, %v2664
  %v4035 = vmul.f32 %v2667, %v2667
  %v4036 = vmul.f32 %v2672, %v2672
  %v4037 = vmul.f32 %v2675, %v2675
  %v4038 = vmul.f32 %v2680, %v2680
  %v4039 = vmul.f32 %v2683, %v2683
  %v4040 = vmul.f32 %v2688, %v2688
  %v4041 = vmul.f32 %v2691, %v2691
  %v4042 = vmul.f32 %v2696, %v2696
  %v4043 = vmul.f32 %v2699, %v2699
  %v4044 = vmul.f32 %v2704, %v2704
  %v4045 = vmul.f32 %v2707, %v2707
  %v4046 = vmul.f32 %v2712, %v2712
  %v4047 = vmul.f32 %v2715, %v2715
  %v4048 = vmul.f32 %v2720, %v2720
  %v4049 = vmul.f32 %v2723, %v2723
  %v4050 = vmul.f32 %v2728, %v2728
  %v4051 = vmul.f32 %v2731, %v2731
  %v4052 = vmul.f32 %v2736, %v2736
  %v4053 = vmul.f32 %v2739, %v2739
  %v4054 = vmul.f32 %v2744, %v2744
  %v4055 = vmul.f32 %v2747, %v2747
  %v4056 = vmul.f32 %v2752, %v2752
  %v4057 = vmul.f32 %v2755, %v2755
  %v4058 = vmul.f32 %v2760, %v2760
  %v4059 = vmul.f32 %v2763, %v2763
  %v4060 = vmul.f32 %v2768, %v2768
  %v4061 = vmul.f32 %v2771, %v2771
  %v4062 = vmul.f32 %v2776, %v2776
  %v4063 = vmul.f32 %v2779, %v2779
  %v4064 = vmul.f32 %v2784, %v2784
  %v4065 = vmul.f32 %v2787, %v2787
  %v4066 = vmul.f32 %v2792, %v2792
  %v4067 = vmul.f32 %v2795, %v2795
  %v4068 = vmul.f32 %v2800, %v2800
  %v4069 = vmul.f32 %v2803, %v2803
  %v4070 = vmul.f32 %v2808, %v2808
  %v4071 = vmul.f32 %v2811, %v2811
  %v4072 = vmul.f32 %v2816, %v2816
  %v4073 = vmul.f32 %v2819, %v2819
  %v4074 = vmul.f32 %v2824, %v2824
  %v4075 = vmul.f32 %v2827, %v2827
  %v4076 = vmul.f32 %v2832, %v2832
  %v4077 = vmul.f32 %v2835, %v2835
  %v4078 = vmul.f32 %v2840, %v2840
  %v4079 = vmul.f32 %v2843, %v2843
  %v4080 = vmul.f32 %v2848, %v2848
  %v4081 = vmul.f32 %v2851, %v2851
  %v4082 = vmul.f32 %v2856, %v2856
  %v4083 = vmul.f32 %v2859, %v2859
  %v4084 = vmul.f32 %v2864, %v2864
  %v4085 = vmul.f32 %v2867, %v2867
  %v4086 = vmul.f32 %v2872, %v2872
  %v4087 = vmul.f32 %v2875, %v2875
  %v4088 = vmul.f32 %v2880, %v2880
  %v4089 = vmul.f32 %v2883, %v2883
  %v4090 = vmul.f32 %v2888, %v2888
  %v4091 = vmul.f32 %v2891, %v2891
  %v4092 = vmul.f32 %v2896, %v2896
  %v4093 = vmul.f32 %v2899, %v2899
  %v4094 = vmul.f32 %v2904, %v2904
  %v4095 = vmul.f32 %v2907, %v2907
  %v4096 = vmul.f32 %v2912, %v2912
  %v4097 = vmul.f32 %v2915, %v2915
  %v4098 = vmul.f32 %v2920, %v2920
  %v4099 = vmul.f32 %v2923, %v2923
  %v4100 = vmul.f32 %v2928, %v2928
  %v4101 = vmul.f32 %v2931, %v2931
  %v4102 = vmul.f32 %v2936, %v2936
  %v4103 = vmul.f32 %v2939, %v2939
  %v4104 = vmul.f32 %v2944, %v2944
  %v4105 = vmul.f32 %v2947, %v2947
  %v4106 = vmul.f32 %v2952, %v2952
  %v4107 = vmul.f32 %v2955, %v2955
  %v4108 = vmul.f32 %v2960, %v2960
  %v4109 = vmul.f32 %v2963, %v2963
  %v4110 = vmul.f32 %v2968, %v2968
  %v4111 = vmul.f32 %v2971, %v2971
  %v4112 = vmul.f32 %v2976, %v2976
  %v4113 = vmul.f32 %v2979, %v2979
  %v4114 = vmul.f32 %v2984, %v2984
  %v4115 = vmul.f32 %v2987, %v2987
  %v4116 = vmul.f32 %v2992, %v2992
  %v4117 = vmul.f32 %v2995, %v2995
  %v4118 = vmul.f32 %v3000, %v3000
  %v4119 = vmul.f32 %v3003, %v3003
  %v4120 = vmul.f32 %v3008, %v3008
  %v4121 = vmul.f32 %v3011, %v3011
  %v4122 = vmul.f32 %v3016, %v3016
  %v4123 = vmul.f32 %v3019, %v3019
  %v4124 = vmul.f32 %v3024, %v3024
  %v4125 = vmul.f32 %v3027, %v3027
  %v4126 = vmul.f32 %v3032, %v3032
  %v4127 = vmul.f32 %v3035, %v3035
  %v4128 = vmul.f32 %v3040, %v3040
  %v4129 = vmul.f32 %v3043, %v3043
  %v4130 = vmul.f32 %v3048, %v3048
  %v4131 = vmul.f32 %v3051, %v3051
  %v4132 = vmul.f32 %v3056, %v3056
  %v4133 = vmul.f32 %v3059, %v3059
  %v4134 = vmul.f32 %v3064, %v3064
  %v4135 = vmul.f32 %v3067, %v3067
  %v4136 = vmul.f32 %v3072, %v3072
  %v4137 = vmul.f32 %v3075, %v3075
  %v4138 = vmul.f32 %v3080, %v3080
  %v4139 = vmul.f32 %v3083, %v3083
  %v4140 = vmul.f32 %v3088, %v3088
  %v4141 = vmul.f32 %v3091, %v3091
  %v4142 = vmul.f32 %v3096, %v3096
  %v4143 = vmul.f32 %v3099, %v3099
  %v4144 = vmul.f32 %v3104, %v3104
  %v4145 = vmul.f32 %v3107, %v3107
  %v4146 = vmul.f32 %v3112, %v3112
  %v4147 = vmul.f32 %v3115, %v3115
  %v4148 = vmul.f32 %v3120, %v3120
  %v4149 = vmul.f32 %v3123, %v3123
  %v4150 = vmul.f32 %v3128, %v3128
  %v4151 = vmul.f32 %v3131, %v3131
  %v4152 = vmul.f32 %v3136, %v3136
  %v4153 = vmul.f32 %v3139, %v3139
  %v4154 = vmul.f32 %v3144, %v3144
  %v4155 = vmul.f32 %v3147, %v3147
  %v4156 = vmul.f32 %v3152, %v3152
  %v4157 = vmul.f32 %v3155, %v3155
  %v4158 = vmul.f32 %v3160, %v3160
  %v4159 = vmul.f32 %v3163, %v3163
  %v4160 = vmul.f32 %v3168, %v3168
  %v4161 = vmul.f32 %v3171, %v3171
  %v4162 = vmul.f32 %v3176, %v3176
  %v4163 = vmul.f32 %v3179, %v3179
  %v4164 = vmul.f32 %v3184, %v3184
  %v4165 = vmul.f32 %v3187, %v3187
  %v4166 = vmul.f32 %v3192, %v3192
  %v4167 = vmul.f32 %v3195, %v3195
  %v4168 = vmul.f32 %v3200, %v3200
  %v4169 = vmul.f32 %v3203, %v3203
  %v4170 = vmul.f32 %v3208, %v3208
  %v4171 = vmul.f32 %v3211, %v3211
  %v4172 = vmul.f32 %v3216, %v3216
  %v4173 = vmul.f32 %v3219, %v3219
  %v4174 = vmul.f32 %v3224, %v3224
  %v4175 = vmul.f32 %v3227, %v3227
  %v4176 = vmul.f32 %v3232, %v3232
  %v4177 = vmul.f32 %v3235, %v3235
  %v4178 = vmul.f32 %v3240, %v3240
  %v4179 = vmul.f32 %v3243, %v3243
  %v4180 = vmul.f32 %v3248, %v3248
  %v4181 = vmul.f32 %v3251, %v3251
  %v4182 = vmul.f32 %v3256, %v3256
  %v4183 = vmul.f32 %v3259, %v3259
  %v4184 = vmul.f32 %v3264, %v3264
  %v4185 = vmul.f32 %v3267, %v3267
  %v4186 = vmul.f32 %v3272, %v3272
  %v4187 = vmul.f32 %v3275, %v3275
  %v4188 = vmul.f32 %v3280, %v3280
  %v4189 = vmul.f32 %v3283, %v3283
  %v4190 = vmul.f32 %v3288, %v3288
  %v4191 = vmul.f32 %v3291, %v3291
  %v4192 = vmul.f32 %v3296, %v3296
  %v4193 = vmul.f32 %v3299, %v3299
  %v4194 = vmul.f32 %v3304, %v3304
  %v4195 = vmul.f32 %v3307, %v3307
  %v4196 = vmul.f32 %v3312, %v3312
  %v4197 = vmul.f32 %v3315, %v3315
  %v4198 = vmul.f32 %v3320, %v3320
  %v4199 = vmul.f32 %v3323, %v3323
  %v4200 = vmul.f32 %v3328, %v3328
  %v4201 = vmul.f32 %v3331, %v3331
  %v4202 = vmul.f32 %v3336, %v3336
  %v4203 = vmul.f32 %v3339, %v3339
  %v4204 = vmul.f32 %v3344, %v3344
  %v4205 = vmul.f32 %v3347, %v3347
  %v4206 = vmul.f32 %v3352, %v3352
  %v4207 = vmul.f32 %v3355, %v3355
  %v4208 = vmul.f32 %v3360, %v3360
  %v4209 = vmul.f32 %v3363, %v3363
  %v4210 = vmul.f32 %v3368, %v3368
  %v4211 = vmul.f32 %v3371, %v3371
  %v4212 = vmul.f32 %v3376, %v3376
  %v4213 = vmul.f32 %v3379, %v3379
  %v4214 = vmul.f32 %v3384, %v3384
  %v4215 = vmul.f32 %v3387, %v3387
  %v4216 = vmul.f32 %v3392, %v3392
  %v4217 = vmul.f32 %v3395, %v3395
  %v4218 = vmul.f32 %v3400, %v3400
  %v4219 = vmul.f32 %v3403, %v3403
  %v4220 = vmul.f32 %v3408, %v3408
  %v4221 = vmul.f32 %v3411, %v3411
  %v4222 = vmul.f32 %v3416, %v3416
  %v4223 = vmul.f32 %v3419, %v3419
  %v4224 = vmul.f32 %v3424, %v3424
  %v4225 = vmul.f32 %v3427, %v3427
  %v4226 = vmul.f32 %v3432, %v3432
  %v4227 = vmul.f32 %v3435, %v3435
  %v4228 = vmul.f32 %v3440, %v3440
  %v4229 = vmul.f32 %v3443, %v3443
  %v4230 = vmul.f32 %v3448, %v3448
  %v4231 = vmul.f32 %v3451, %v3451
  %v4232 = vmul.f32 %v3456, %v3456
  %v4233 = vmul.f32 %v3459, %v3459
  %v4234 = vmul.f32 %v3464, %v3464
  %v4235 = vmul.f32 %v3467, %v3467
  %v4236 = vmul.f32 %v3472, %v3472
  %v4237 = vmul.f32 %v3475, %v3475
  %v4238 = vmul.f32 %v3480, %v3480
  %v4239 = vmul.f32 %v3483, %v3483
  %v4240 = vmul.f32 %v3488, %v3488
  %v4241 = vmul.f32 %v3491, %v3491
  %v4242 = vmul.f32 %v3496, %v3496
  %v4243 = vmul.f32 %v3499, %v3499
  %v4244 = vmul.f32 %v3504, %v3504
  %v4245 = vmul.f32 %v3507, %v3507
  %v4246 = vmul.f32 %v3512, %v3512
  %v4247 = vsel %vm3517, %v4006, 0.0
  %v4248 = vsel %vm3517, %v4007, 0.0
  %v4249 = vadd.f32 %v4247, %v4248
  %v4250 = vsel %vm3517, %v4008, 0.0
  %v4251 = vadd.f32 %v4249, %v4250
  %v4252 = vsel %vm3517, %v4009, 0.0
  %v4253 = vadd.f32 %v4251, %v4252
  %v4254 = vsel %vm3517, %v4010, 0.0
  %v4255 = vadd.f32 %v4253, %v4254
  %v4256 = vsel %vm3517, %v4011, 0.0
  %v4257 = vadd.f32 %v4255, %v4256
  %v4258 = vsel %vm3517, %v4012, 0.0
  %v4259 = vadd.f32 %v4257, %v4258
  %v4260 = vsel %vm3517, %v4013, 0.0
  %v4261 = vadd.f32 %v4259, %v4260
  %v4262 = vsel %vm3517, %v4014, 0.0
  %v4263 = vadd.f32 %v4261, %v4262
  %v4264 = vsel %vm3517, %v4015, 0.0
  %v4265 = vadd.f32 %v4263, %v4264
  %v4266 = vsel %vm3517, %v4016, 0.0
  %v4267 = vadd.f32 %v4265, %v4266
  %v4268 = vsel %vm3517, %v4017, 0.0
  %v4269 = vadd.f32 %v4267, %v4268
  %v4270 = vsel %vm3517, %v4018, 0.0
  %v4271 = vadd.f32 %v4269, %v4270
  %v4272 = vsel %vm3517, %v4019, 0.0
  %v4273 = vadd.f32 %v4271, %v4272
  %v4274 = vsel %vm3517, %v4020, 0.0
  %v4275 = vadd.f32 %v4273, %v4274
  %v4276 = vsel %vm3517, %v4021, 0.0
  %v4277 = vadd.f32 %v4275, %v4276
  %v4278 = vsel %vm3517, %v4022, 0.0
  %v4279 = vadd.f32 %v4277, %v4278
  %v4280 = vsel %vm3517, %v4023, 0.0
  %v4281 = vadd.f32 %v4279, %v4280
  %v4282 = vsel %vm3517, %v4024, 0.0
  %v4283 = vadd.f32 %v4281, %v4282
  %v4284 = vsel %vm3517, %v4025, 0.0
  %v4285 = vadd.f32 %v4283, %v4284
  %v4286 = vsel %vm3517, %v4026, 0.0
  %v4287 = vadd.f32 %v4285, %v4286
  %v4288 = vsel %vm3517, %v4027, 0.0
  %v4289 = vadd.f32 %v4287, %v4288
  %v4290 = vsel %vm3517, %v4028, 0.0
  %v4291 = vadd.f32 %v4289, %v4290
  %v4292 = vsel %vm3517, %v4029, 0.0
  %v4293 = vadd.f32 %v4291, %v4292
  %v4294 = vsel %vm3517, %v4030, 0.0
  %v4295 = vadd.f32 %v4293, %v4294
  %v4296 = vsel %vm3517, %v4031, 0.0
  %v4297 = vadd.f32 %v4295, %v4296
  %v4298 = vsel %vm3517, %v4032, 0.0
  %v4299 = vadd.f32 %v4297, %v4298
  %v4300 = vsel %vm3517, %v4033, 0.0
  %v4301 = vadd.f32 %v4299, %v4300
  %v4302 = vsel %vm3517, %v4034, 0.0
  %v4303 = vadd.f32 %v4301, %v4302
  %v4304 = vsel %vm3517, %v4035, 0.0
  %v4305 = vadd.f32 %v4303, %v4304
  %v4306 = vsel %vm3517, %v4036, 0.0
  %v4307 = vadd.f32 %v4305, %v4306
  %v4308 = vsel %vm3517, %v4037, 0.0
  %v4309 = vadd.f32 %v4307, %v4308
  %v4310 = vsel %vm3517, %v4038, 0.0
  %v4311 = vadd.f32 %v4309, %v4310
  %v4312 = vsel %vm3517, %v4039, 0.0
  %v4313 = vadd.f32 %v4311, %v4312
  %v4314 = vsel %vm3517, %v4040, 0.0
  %v4315 = vadd.f32 %v4313, %v4314
  %v4316 = vsel %vm3517, %v4041, 0.0
  %v4317 = vadd.f32 %v4315, %v4316
  %v4318 = vsel %vm3517, %v4042, 0.0
  %v4319 = vadd.f32 %v4317, %v4318
  %v4320 = vsel %vm3517, %v4043, 0.0
  %v4321 = vadd.f32 %v4319, %v4320
  %v4322 = vsel %vm3517, %v4044, 0.0
  %v4323 = vadd.f32 %v4321, %v4322
  %v4324 = vsel %vm3517, %v4045, 0.0
  %v4325 = vadd.f32 %v4323, %v4324
  %v4326 = vsel %vm3517, %v4046, 0.0
  %v4327 = vadd.f32 %v4325, %v4326
  %v4328 = vsel %vm3517, %v4047, 0.0
  %v4329 = vadd.f32 %v4327, %v4328
  %v4330 = vsel %vm3517, %v4048, 0.0
  %v4331 = vadd.f32 %v4329, %v4330
  %v4332 = vsel %vm3517, %v4049, 0.0
  %v4333 = vadd.f32 %v4331, %v4332
  %v4334 = vsel %vm3517, %v4050, 0.0
  %v4335 = vadd.f32 %v4333, %v4334
  %v4336 = vsel %vm3517, %v4051, 0.0
  %v4337 = vadd.f32 %v4335, %v4336
  %v4338 = vsel %vm3517, %v4052, 0.0
  %v4339 = vadd.f32 %v4337, %v4338
  %v4340 = vsel %vm3517, %v4053, 0.0
  %v4341 = vadd.f32 %v4339, %v4340
  %v4342 = vsel %vm3517, %v4054, 0.0
  %v4343 = vadd.f32 %v4341, %v4342
  %v4344 = vsel %vm3517, %v4055, 0.0
  %v4345 = vadd.f32 %v4343, %v4344
  %v4346 = vsel %vm3517, %v4056, 0.0
  %v4347 = vadd.f32 %v4345, %v4346
  %v4348 = vsel %vm3517, %v4057, 0.0
  %v4349 = vadd.f32 %v4347, %v4348
  %v4350 = vsel %vm3517, %v4058, 0.0
  %v4351 = vadd.f32 %v4349, %v4350
  %v4352 = vsel %vm3517, %v4059, 0.0
  %v4353 = vadd.f32 %v4351, %v4352
  %v4354 = vsel %vm3517, %v4060, 0.0
  %v4355 = vadd.f32 %v4353, %v4354
  %v4356 = vsel %vm3517, %v4061, 0.0
  %v4357 = vadd.f32 %v4355, %v4356
  %v4358 = vsel %vm3517, %v4062, 0.0
  %v4359 = vadd.f32 %v4357, %v4358
  %v4360 = vsel %vm3517, %v4063, 0.0
  %v4361 = vadd.f32 %v4359, %v4360
  %v4362 = vsel %vm3517, %v4064, 0.0
  %v4363 = vadd.f32 %v4361, %v4362
  %v4364 = vsel %vm3517, %v4065, 0.0
  %v4365 = vadd.f32 %v4363, %v4364
  %v4366 = vsel %vm3517, %v4066, 0.0
  %v4367 = vadd.f32 %v4365, %v4366
  %v4368 = vsel %vm3517, %v4067, 0.0
  %v4369 = vadd.f32 %v4367, %v4368
  %v4370 = vsel %vm3517, %v4068, 0.0
  %v4371 = vadd.f32 %v4369, %v4370
  %v4372 = vsel %vm3517, %v4069, 0.0
  %v4373 = vadd.f32 %v4371, %v4372
  %v4374 = vsel %vm3517, %v4070, 0.0
  %v4375 = vadd.f32 %v4373, %v4374
  %v4376 = vsel %vm3517, %v4071, 0.0
  %v4377 = vadd.f32 %v4375, %v4376
  %v4378 = vsel %vm3517, %v4072, 0.0
  %v4379 = vadd.f32 %v4377, %v4378
  %v4380 = vsel %vm3517, %v4073, 0.0
  %v4381 = vadd.f32 %v4379, %v4380
  %v4382 = vsel %vm3517, %v4074, 0.0
  %v4383 = vadd.f32 %v4381, %v4382
  %v4384 = vsel %vm3517, %v4075, 0.0
  %v4385 = vadd.f32 %v4383, %v4384
  %v4386 = vsel %vm3517, %v4076, 0.0
  %v4387 = vadd.f32 %v4385, %v4386
  %v4388 = vsel %vm3517, %v4077, 0.0
  %v4389 = vadd.f32 %v4387, %v4388
  %v4390 = vsel %vm3517, %v4078, 0.0
  %v4391 = vadd.f32 %v4389, %v4390
  %v4392 = vsel %vm3517, %v4079, 0.0
  %v4393 = vadd.f32 %v4391, %v4392
  %v4394 = vsel %vm3517, %v4080, 0.0
  %v4395 = vadd.f32 %v4393, %v4394
  %v4396 = vsel %vm3517, %v4081, 0.0
  %v4397 = vadd.f32 %v4395, %v4396
  %v4398 = vsel %vm3517, %v4082, 0.0
  %v4399 = vadd.f32 %v4397, %v4398
  %v4400 = vsel %vm3517, %v4083, 0.0
  %v4401 = vadd.f32 %v4399, %v4400
  %v4402 = vsel %vm3517, %v4084, 0.0
  %v4403 = vadd.f32 %v4401, %v4402
  %v4404 = vsel %vm3517, %v4085, 0.0
  %v4405 = vadd.f32 %v4403, %v4404
  %v4406 = vsel %vm3517, %v4086, 0.0
  %v4407 = vadd.f32 %v4405, %v4406
  %v4408 = vsel %vm3517, %v4087, 0.0
  %v4409 = vadd.f32 %v4407, %v4408
  %v4410 = vsel %vm3517, %v4088, 0.0
  %v4411 = vadd.f32 %v4409, %v4410
  %v4412 = vsel %vm3517, %v4089, 0.0
  %v4413 = vadd.f32 %v4411, %v4412
  %v4414 = vsel %vm3517, %v4090, 0.0
  %v4415 = vadd.f32 %v4413, %v4414
  %v4416 = vsel %vm3517, %v4091, 0.0
  %v4417 = vadd.f32 %v4415, %v4416
  %v4418 = vsel %vm3517, %v4092, 0.0
  %v4419 = vadd.f32 %v4417, %v4418
  %v4420 = vsel %vm3517, %v4093, 0.0
  %v4421 = vadd.f32 %v4419, %v4420
  %v4422 = vsel %vm3517, %v4094, 0.0
  %v4423 = vadd.f32 %v4421, %v4422
  %v4424 = vsel %vm3517, %v4095, 0.0
  %v4425 = vadd.f32 %v4423, %v4424
  %v4426 = vsel %vm3517, %v4096, 0.0
  %v4427 = vadd.f32 %v4425, %v4426
  %v4428 = vsel %vm3517, %v4097, 0.0
  %v4429 = vadd.f32 %v4427, %v4428
  %v4430 = vsel %vm3517, %v4098, 0.0
  %v4431 = vadd.f32 %v4429, %v4430
  %v4432 = vsel %vm3517, %v4099, 0.0
  %v4433 = vadd.f32 %v4431, %v4432
  %v4434 = vsel %vm3517, %v4100, 0.0
  %v4435 = vadd.f32 %v4433, %v4434
  %v4436 = vsel %vm3517, %v4101, 0.0
  %v4437 = vadd.f32 %v4435, %v4436
  %v4438 = vsel %vm3517, %v4102, 0.0
  %v4439 = vadd.f32 %v4437, %v4438
  %v4440 = vsel %vm3517, %v4103, 0.0
  %v4441 = vadd.f32 %v4439, %v4440
  %v4442 = vsel %vm3517, %v4104, 0.0
  %v4443 = vadd.f32 %v4441, %v4442
  %v4444 = vsel %vm3517, %v4105, 0.0
  %v4445 = vadd.f32 %v4443, %v4444
  %v4446 = vsel %vm3517, %v4106, 0.0
  %v4447 = vadd.f32 %v4445, %v4446
  %v4448 = vsel %vm3517, %v4107, 0.0
  %v4449 = vadd.f32 %v4447, %v4448
  %v4450 = vsel %vm3517, %v4108, 0.0
  %v4451 = vadd.f32 %v4449, %v4450
  %v4452 = vsel %vm3517, %v4109, 0.0
  %v4453 = vadd.f32 %v4451, %v4452
  %v4454 = vsel %vm3517, %v4110, 0.0
  %v4455 = vadd.f32 %v4453, %v4454
  %v4456 = vsel %vm3517, %v4111, 0.0
  %v4457 = vadd.f32 %v4455, %v4456
  %v4458 = vsel %vm3517, %v4112, 0.0
  %v4459 = vadd.f32 %v4457, %v4458
  %v4460 = vsel %vm3517, %v4113, 0.0
  %v4461 = vadd.f32 %v4459, %v4460
  %v4462 = vsel %vm3517, %v4114, 0.0
  %v4463 = vadd.f32 %v4461, %v4462
  %v4464 = vsel %vm3517, %v4115, 0.0
  %v4465 = vadd.f32 %v4463, %v4464
  %v4466 = vsel %vm3517, %v4116, 0.0
  %v4467 = vadd.f32 %v4465, %v4466
  %v4468 = vsel %vm3517, %v4117, 0.0
  %v4469 = vadd.f32 %v4467, %v4468
  %v4470 = vsel %vm3517, %v4118, 0.0
  %v4471 = vadd.f32 %v4469, %v4470
  %v4472 = vsel %vm3517, %v4119, 0.0
  %v4473 = vadd.f32 %v4471, %v4472
  %v4474 = vsel %vm3517, %v4120, 0.0
  %v4475 = vadd.f32 %v4473, %v4474
  %v4476 = vsel %vm3517, %v4121, 0.0
  %v4477 = vadd.f32 %v4475, %v4476
  %v4478 = vsel %vm3517, %v4122, 0.0
  %v4479 = vadd.f32 %v4477, %v4478
  %v4480 = vsel %vm3517, %v4123, 0.0
  %v4481 = vadd.f32 %v4479, %v4480
  %v4482 = vsel %vm3517, %v4124, 0.0
  %v4483 = vadd.f32 %v4481, %v4482
  %v4484 = vsel %vm3517, %v4125, 0.0
  %v4485 = vadd.f32 %v4483, %v4484
  %v4486 = vsel %vm3517, %v4126, 0.0
  %v4487 = vadd.f32 %v4485, %v4486
  %v4488 = vsel %vm3517, %v4127, 0.0
  %v4489 = vadd.f32 %v4487, %v4488
  %v4490 = vsel %vm3517, %v4128, 0.0
  %v4491 = vadd.f32 %v4489, %v4490
  %v4492 = vsel %vm3517, %v4129, 0.0
  %v4493 = vadd.f32 %v4491, %v4492
  %v4494 = vsel %vm3517, %v4130, 0.0
  %v4495 = vadd.f32 %v4493, %v4494
  %v4496 = vsel %vm3517, %v4131, 0.0
  %v4497 = vadd.f32 %v4495, %v4496
  %v4498 = vsel %vm3517, %v4132, 0.0
  %v4499 = vadd.f32 %v4497, %v4498
  %v4500 = vsel %vm3517, %v4133, 0.0
  %v4501 = vadd.f32 %v4499, %v4500
  %v4502 = vsel %vm3517, %v4134, 0.0
  %v4503 = vadd.f32 %v4501, %v4502
  %v4504 = vsel %vm3517, %v4135, 0.0
  %v4505 = vadd.f32 %v4503, %v4504
  %v4506 = vsel %vm3517, %v4136, 0.0
  %v4507 = vadd.f32 %v4505, %v4506
  %v4508 = vsel %vm3517, %v4137, 0.0
  %v4509 = vadd.f32 %v4507, %v4508
  %v4510 = vsel %vm3517, %v4138, 0.0
  %v4511 = vadd.f32 %v4509, %v4510
  %v4512 = vsel %vm3517, %v4139, 0.0
  %v4513 = vadd.f32 %v4511, %v4512
  %v4514 = vsel %vm3517, %v4140, 0.0
  %v4515 = vadd.f32 %v4513, %v4514
  %v4516 = vsel %vm3517, %v4141, 0.0
  %v4517 = vadd.f32 %v4515, %v4516
  %v4518 = vsel %vm3517, %v4142, 0.0
  %v4519 = vadd.f32 %v4517, %v4518
  %v4520 = vsel %vm3517, %v4143, 0.0
  %v4521 = vadd.f32 %v4519, %v4520
  %v4522 = vsel %vm3517, %v4144, 0.0
  %v4523 = vadd.f32 %v4521, %v4522
  %v4524 = vsel %vm3517, %v4145, 0.0
  %v4525 = vadd.f32 %v4523, %v4524
  %v4526 = vsel %vm3517, %v4146, 0.0
  %v4527 = vadd.f32 %v4525, %v4526
  %v4528 = vsel %vm3517, %v4147, 0.0
  %v4529 = vadd.f32 %v4527, %v4528
  %v4530 = vsel %vm3517, %v4148, 0.0
  %v4531 = vadd.f32 %v4529, %v4530
  %v4532 = vsel %vm3517, %v4149, 0.0
  %v4533 = vadd.f32 %v4531, %v4532
  %v4534 = vsel %vm3517, %v4150, 0.0
  %v4535 = vadd.f32 %v4533, %v4534
  %v4536 = vsel %vm3517, %v4151, 0.0
  %v4537 = vadd.f32 %v4535, %v4536
  %v4538 = vsel %vm3517, %v4152, 0.0
  %v4539 = vadd.f32 %v4537, %v4538
  %v4540 = vsel %vm3517, %v4153, 0.0
  %v4541 = vadd.f32 %v4539, %v4540
  %v4542 = vsel %vm3517, %v4154, 0.0
  %v4543 = vadd.f32 %v4541, %v4542
  %v4544 = vsel %vm3517, %v4155, 0.0
  %v4545 = vadd.f32 %v4543, %v4544
  %v4546 = vsel %vm3517, %v4156, 0.0
  %v4547 = vadd.f32 %v4545, %v4546
  %v4548 = vsel %vm3517, %v4157, 0.0
  %v4549 = vadd.f32 %v4547, %v4548
  %v4550 = vsel %vm3517, %v4158, 0.0
  %v4551 = vadd.f32 %v4549, %v4550
  %v4552 = vsel %vm3517, %v4159, 0.0
  %v4553 = vadd.f32 %v4551, %v4552
  %v4554 = vsel %vm3517, %v4160, 0.0
  %v4555 = vadd.f32 %v4553, %v4554
  %v4556 = vsel %vm3517, %v4161, 0.0
  %v4557 = vadd.f32 %v4555, %v4556
  %v4558 = vsel %vm3517, %v4162, 0.0
  %v4559 = vadd.f32 %v4557, %v4558
  %v4560 = vsel %vm3517, %v4163, 0.0
  %v4561 = vadd.f32 %v4559, %v4560
  %v4562 = vsel %vm3517, %v4164, 0.0
  %v4563 = vadd.f32 %v4561, %v4562
  %v4564 = vsel %vm3517, %v4165, 0.0
  %v4565 = vadd.f32 %v4563, %v4564
  %v4566 = vsel %vm3517, %v4166, 0.0
  %v4567 = vadd.f32 %v4565, %v4566
  %v4568 = vsel %vm3517, %v4167, 0.0
  %v4569 = vadd.f32 %v4567, %v4568
  %v4570 = vsel %vm3517, %v4168, 0.0
  %v4571 = vadd.f32 %v4569, %v4570
  %v4572 = vsel %vm3517, %v4169, 0.0
  %v4573 = vadd.f32 %v4571, %v4572
  %v4574 = vsel %vm3517, %v4170, 0.0
  %v4575 = vadd.f32 %v4573, %v4574
  %v4576 = vsel %vm3517, %v4171, 0.0
  %v4577 = vadd.f32 %v4575, %v4576
  %v4578 = vsel %vm3517, %v4172, 0.0
  %v4579 = vadd.f32 %v4577, %v4578
  %v4580 = vsel %vm3517, %v4173, 0.0
  %v4581 = vadd.f32 %v4579, %v4580
  %v4582 = vsel %vm3517, %v4174, 0.0
  %v4583 = vadd.f32 %v4581, %v4582
  %v4584 = vsel %vm3517, %v4175, 0.0
  %v4585 = vadd.f32 %v4583, %v4584
  %v4586 = vsel %vm3517, %v4176, 0.0
  %v4587 = vadd.f32 %v4585, %v4586
  %v4588 = vsel %vm3517, %v4177, 0.0
  %v4589 = vadd.f32 %v4587, %v4588
  %v4590 = vsel %vm3517, %v4178, 0.0
  %v4591 = vadd.f32 %v4589, %v4590
  %v4592 = vsel %vm3517, %v4179, 0.0
  %v4593 = vadd.f32 %v4591, %v4592
  %v4594 = vsel %vm3517, %v4180, 0.0
  %v4595 = vadd.f32 %v4593, %v4594
  %v4596 = vsel %vm3517, %v4181, 0.0
  %v4597 = vadd.f32 %v4595, %v4596
  %v4598 = vsel %vm3517, %v4182, 0.0
  %v4599 = vadd.f32 %v4597, %v4598
  %v4600 = vsel %vm3517, %v4183, 0.0
  %v4601 = vadd.f32 %v4599, %v4600
  %v4602 = vsel %vm3517, %v4184, 0.0
  %v4603 = vadd.f32 %v4601, %v4602
  %v4604 = vsel %vm3517, %v4185, 0.0
  %v4605 = vadd.f32 %v4603, %v4604
  %v4606 = vsel %vm3517, %v4186, 0.0
  %v4607 = vadd.f32 %v4605, %v4606
  %v4608 = vsel %vm3517, %v4187, 0.0
  %v4609 = vadd.f32 %v4607, %v4608
  %v4610 = vsel %vm3517, %v4188, 0.0
  %v4611 = vadd.f32 %v4609, %v4610
  %v4612 = vsel %vm3517, %v4189, 0.0
  %v4613 = vadd.f32 %v4611, %v4612
  %v4614 = vsel %vm3517, %v4190, 0.0
  %v4615 = vadd.f32 %v4613, %v4614
  %v4616 = vsel %vm3517, %v4191, 0.0
  %v4617 = vadd.f32 %v4615, %v4616
  %v4618 = vsel %vm3517, %v4192, 0.0
  %v4619 = vadd.f32 %v4617, %v4618
  %v4620 = vsel %vm3517, %v4193, 0.0
  %v4621 = vadd.f32 %v4619, %v4620
  %v4622 = vsel %vm3517, %v4194, 0.0
  %v4623 = vadd.f32 %v4621, %v4622
  %v4624 = vsel %vm3517, %v4195, 0.0
  %v4625 = vadd.f32 %v4623, %v4624
  %v4626 = vsel %vm3517, %v4196, 0.0
  %v4627 = vadd.f32 %v4625, %v4626
  %v4628 = vsel %vm3517, %v4197, 0.0
  %v4629 = vadd.f32 %v4627, %v4628
  %v4630 = vsel %vm3517, %v4198, 0.0
  %v4631 = vadd.f32 %v4629, %v4630
  %v4632 = vsel %vm3517, %v4199, 0.0
  %v4633 = vadd.f32 %v4631, %v4632
  %v4634 = vsel %vm3517, %v4200, 0.0
  %v4635 = vadd.f32 %v4633, %v4634
  %v4636 = vsel %vm3517, %v4201, 0.0
  %v4637 = vadd.f32 %v4635, %v4636
  %v4638 = vsel %vm3517, %v4202, 0.0
  %v4639 = vadd.f32 %v4637, %v4638
  %v4640 = vsel %vm3517, %v4203, 0.0
  %v4641 = vadd.f32 %v4639, %v4640
  %v4642 = vsel %vm3517, %v4204, 0.0
  %v4643 = vadd.f32 %v4641, %v4642
  %v4644 = vsel %vm3517, %v4205, 0.0
  %v4645 = vadd.f32 %v4643, %v4644
  %v4646 = vsel %vm3517, %v4206, 0.0
  %v4647 = vadd.f32 %v4645, %v4646
  %v4648 = vsel %vm3517, %v4207, 0.0
  %v4649 = vadd.f32 %v4647, %v4648
  %v4650 = vsel %vm3517, %v4208, 0.0
  %v4651 = vadd.f32 %v4649, %v4650
  %v4652 = vsel %vm3517, %v4209, 0.0
  %v4653 = vadd.f32 %v4651, %v4652
  %v4654 = vsel %vm3517, %v4210, 0.0
  %v4655 = vadd.f32 %v4653, %v4654
  %v4656 = vsel %vm3517, %v4211, 0.0
  %v4657 = vadd.f32 %v4655, %v4656
  %v4658 = vsel %vm3517, %v4212, 0.0
  %v4659 = vadd.f32 %v4657, %v4658
  %v4660 = vsel %vm3517, %v4213, 0.0
  %v4661 = vadd.f32 %v4659, %v4660
  %v4662 = vsel %vm3517, %v4214, 0.0
  %v4663 = vadd.f32 %v4661, %v4662
  %v4664 = vsel %vm3517, %v4215, 0.0
  %v4665 = vadd.f32 %v4663, %v4664
  %v4666 = vsel %vm3517, %v4216, 0.0
  %v4667 = vadd.f32 %v4665, %v4666
  %v4668 = vsel %vm3517, %v4217, 0.0
  %v4669 = vadd.f32 %v4667, %v4668
  %v4670 = vsel %vm3517, %v4218, 0.0
  %v4671 = vadd.f32 %v4669, %v4670
  %v4672 = vsel %vm3517, %v4219, 0.0
  %v4673 = vadd.f32 %v4671, %v4672
  %v4674 = vsel %vm3517, %v4220, 0.0
  %v4675 = vadd.f32 %v4673, %v4674
  %v4676 = vsel %vm3517, %v4221, 0.0
  %v4677 = vadd.f32 %v4675, %v4676
  %v4678 = vsel %vm3517, %v4222, 0.0
  %v4679 = vadd.f32 %v4677, %v4678
  %v4680 = vsel %vm3517, %v4223, 0.0
  %v4681 = vadd.f32 %v4679, %v4680
  %v4682 = vsel %vm3517, %v4224, 0.0
  %v4683 = vadd.f32 %v4681, %v4682
  %v4684 = vsel %vm3517, %v4225, 0.0
  %v4685 = vadd.f32 %v4683, %v4684
  %v4686 = vsel %vm3517, %v4226, 0.0
  %v4687 = vadd.f32 %v4685, %v4686
  %v4688 = vsel %vm3517, %v4227, 0.0
  %v4689 = vadd.f32 %v4687, %v4688
  %v4690 = vsel %vm3517, %v4228, 0.0
  %v4691 = vadd.f32 %v4689, %v4690
  %v4692 = vsel %vm3517, %v4229, 0.0
  %v4693 = vadd.f32 %v4691, %v4692
  %v4694 = vsel %vm3517, %v4230, 0.0
  %v4695 = vadd.f32 %v4693, %v4694
  %v4696 = vsel %vm3517, %v4231, 0.0
  %v4697 = vadd.f32 %v4695, %v4696
  %v4698 = vsel %vm3517, %v4232, 0.0
  %v4699 = vadd.f32 %v4697, %v4698
  %v4700 = vsel %vm3517, %v4233, 0.0
  %v4701 = vadd.f32 %v4699, %v4700
  %v4702 = vsel %vm3517, %v4234, 0.0
  %v4703 = vadd.f32 %v4701, %v4702
  %v4704 = vsel %vm3517, %v4235, 0.0
  %v4705 = vadd.f32 %v4703, %v4704
  %v4706 = vsel %vm3517, %v4236, 0.0
  %v4707 = vadd.f32 %v4705, %v4706
  %v4708 = vsel %vm3517, %v4237, 0.0
  %v4709 = vadd.f32 %v4707, %v4708
  %v4710 = vsel %vm3517, %v4238, 0.0
  %v4711 = vadd.f32 %v4709, %v4710
  %v4712 = vsel %vm3517, %v4239, 0.0
  %v4713 = vadd.f32 %v4711, %v4712
  %v4714 = vsel %vm3517, %v4240, 0.0
  %v4715 = vadd.f32 %v4713, %v4714
  %v4716 = vsel %vm3517, %v4241, 0.0
  %v4717 = vadd.f32 %v4715, %v4716
  %v4718 = vsel %vm3517, %v4242, 0.0
  %v4719 = vadd.f32 %v4717, %v4718
  %v4720 = vsel %vm3517, %v4243, 0.0
  %v4721 = vadd.f32 %v4719, %v4720
  %v4722 = vsel %vm3517, %v4244, 0.0
  %v4723 = vadd.f32 %v4721, %v4722
  %v4724 = vsel %vm3517, %v4245, 0.0
  %v4725 = vadd.f32 %v4723, %v4724
  %v4726 = vsel %vm3997, %v4246, 0.0
  %v4727 = vadd.f32 %v4725, %v4726
  %v4728 = vrot.slane %v4727, 4
  %v4729 = vadd.f32 %v4727, %v4728
  %v4730 = vrot.slane %v4729, 2
  %v4731 = vadd.f32 %v4729, %v4730
  %v4732 = vrot.slane %v4731, 1
  %v4733 = vadd.f32 %v4731, %v4732
  %v4734 = vmul.f32 %v4005, 0.00048828125
  %v4735 = vmul.f32 %v4733, 0.00048828125
  %v4736 = vmul.f32 %v4734, %v4734
  %v4737 = vsub.f32 %v4735, %v4736
  %v4738 = vmax.f32 %v4737, 0.0
  %v4739 = vadd.f32 %v4738, 1e-05
  %v4740 = vrsqrt.pop %v4739
  %v4741 = vld [vmem:[%s3] sm:$0x1]
  %v4742 = vmul.f32 %v4740, %v4741
  %v4743 = vld [vmem:[%s4] sm:$0x1]
  %v4744 = vmul.f32 %v4734, %v4742
  %v4745 = vsub.f32 %v4743, %v4744
  %v4746 = vlaneseq
  %v4747 = vshrl.u32 %v4746, 7
  %v4748 = vsub.s32 0, %v4747
  %v4749 = vrot.slane %v4742, %v4748
  %v4750 = vmul.f32 %v2552, %v4749
  %v4751 = vmul.f32 %v2555, %v4749
  %v4752 = vmul.f32 %v2560, %v4749
  %v4753 = vmul.f32 %v2563, %v4749
  %v4754 = vmul.f32 %v2568, %v4749
  %v4755 = vmul.f32 %v2571, %v4749
  %v4756 = vmul.f32 %v2576, %v4749
  %v4757 = vmul.f32 %v2579, %v4749
  %v4758 = vmul.f32 %v2584, %v4749
  %v4759 = vmul.f32 %v2587, %v4749
  %v4760 = vmul.f32 %v2592, %v4749
  %v4761 = vmul.f32 %v2595, %v4749
  %v4762 = vmul.f32 %v2600, %v4749
  %v4763 = vmul.f32 %v2603, %v4749
  %v4764 = vmul.f32 %v2608, %v4749
  %v4765 = vmul.f32 %v2611, %v4749
  %v4766 = vmul.f32 %v2616, %v4749
  %v4767 = vmul.f32 %v2619, %v4749
  %v4768 = vmul.f32 %v2624, %v4749
  %v4769 = vmul.f32 %v2627, %v4749
  %v4770 = vmul.f32 %v2632, %v4749
  %v4771 = vmul.f32 %v2635, %v4749
  %v4772 = vmul.f32 %v2640, %v4749
  %v4773 = vmul.f32 %v2643, %v4749
  %v4774 = vmul.f32 %v2648, %v4749
  %v4775 = vmul.f32 %v2651, %v4749
  %v4776 = vmul.f32 %v2656, %v4749
  %v4777 = vmul.f32 %v2659, %v4749
  %v4778 = vmul.f32 %v2664, %v4749
  %v4779 = vmul.f32 %v2667, %v4749
  %v4780 = vmul.f32 %v2672, %v4749
  %v4781 = vmul.f32 %v2675, %v4749
  %v4782 = vmul.f32 %v2680, %v4749
  %v4783 = vmul.f32 %v2683, %v4749
  %v4784 = vmul.f32 %v2688, %v4749
  %v4785 = vmul.f32 %v2691, %v4749
  %v4786 = vmul.f32 %v2696, %v4749
  %v4787 = vmul.f32 %v2699, %v4749
  %v4788 = vmul.f32 %v2704, %v4749
  %v4789 = vmul.f32 %v2707, %v4749
  %v4790 = vmul.f32 %v2712, %v4749
  %v4791 = vmul.f32 %v2715, %v4749
  %v4792 = vmul.f32 %v2720, %v4749
  %v4793 = vmul.f32 %v2723, %v4749
  %v4794 = vmul.f32 %v2728, %v4749
  %v4795 = vmul.f32 %v2731, %v4749
  %v4796 = vmul.f32 %v2736, %v4749
  %v4797 = vmul.f32 %v2739, %v4749
  %v4798 = vmul.f32 %v2744, %v4749
  %v4799 = vmul.f32 %v2747, %v4749
  %v4800 = vmul.f32 %v2752, %v4749
  %v4801 = vmul.f32 %v2755, %v4749
  %v4802 = vmul.f32 %v2760, %v4749
  %v4803 = vmul.f32 %v2763, %v4749
  %v4804 = vmul.f32 %v2768, %v4749
  %v4805 = vmul.f32 %v2771, %v4749
  %v4806 = vmul.f32 %v2776, %v4749
  %v4807 = vmul.f32 %v2779, %v4749
  %v4808 = vmul.f32 %v2784, %v4749
  %v4809 = vmul.f32 %v2787, %v4749
  %v4810 = vmul.f32 %v2792, %v4749
  %v4811 = vmul.f32 %v2795, %v4749
  %v4812 = vmul.f32 %v2800, %v4749
  %v4813 = vmul.f32 %v2803, %v4749
  %v4814 = vmul.f32 %v2808, %v4749
  %v4815 = vmul.f32 %v2811, %v4749
  %v4816 = vmul.f32 %v2816, %v4749
  %v4817 = vmul.f32 %v2819, %v4749
  %v4818 = vmul.f32 %v2824, %v4749
  %v4819 = vmul.f32 %v2827, %v4749
  %v4820 = vmul.f32 %v2832, %v4749
  %v4821 = vmul.f32 %v2835, %v4749
  %v4822 = vmul.f32 %v2840, %v4749
  %v4823 = vmul.f32 %v2843, %v4749
  %v4824 = vmul.f32 %v2848, %v4749
  %v4825 = vmul.f32 %v2851, %v4749
  %v4826 = vmul.f32 %v2856, %v4749
  %v4827 = vmul.f32 %v2859, %v4749
  %v4828 = vmul.f32 %v2864, %v4749
  %v4829 = vmul.f32 %v2867, %v4749
  %v4830 = vmul.f32 %v2872, %v4749
  %v4831 = vmul.f32 %v2875, %v4749
  %v4832 = vmul.f32 %v2880, %v4749
  %v4833 = vmul.f32 %v2883, %v4749
  %v4834 = vmul.f32 %v2888, %v4749
  %v4835 = vmul.f32 %v2891, %v4749
  %v4836 = vmul.f32 %v2896, %v4749
  %v4837 = vmul.f32 %v2899, %v4749
  %v4838 = vmul.f32 %v2904, %v4749
  %v4839 = vmul.f32 %v2907, %v4749
  %v4840 = vmul.f32 %v2912, %v4749
  %v4841 = vmul.f32 %v2915, %v4749
  %v4842 = vmul.f32 %v2920, %v4749
  %v4843 = vmul.f32 %v2923, %v4749
  %v4844 = vmul.f32 %v2928, %v4749
  %v4845 = vmul.f32 %v2931, %v4749
  %v4846 = vmul.f32 %v2936, %v4749
  %v4847 = vmul.f32 %v2939, %v4749
  %v4848 = vmul.f32 %v2944, %v4749
  %v4849 = vmul.f32 %v2947, %v4749
  %v4850 = vmul.f32 %v2952, %v4749
  %v4851 = vmul.f32 %v2955, %v4749
  %v4852 = vmul.f32 %v2960, %v4749
  %v4853 = vmul.f32 %v2963, %v4749
  %v4854 = vmul.f32 %v2968, %v4749
  %v4855 = vmul.f32 %v2971, %v4749
  %v4856 = vmul.f32 %v2976, %v4749
  %v4857 = vmul.f32 %v2979, %v4749
  %v4858 = vmul.f32 %v2984, %v4749
  %v4859 = vmul.f32 %v2987, %v4749
  %v4860 = vmul.f32 %v2992, %v4749
  %v4861 = vmul.f32 %v2995, %v4749
  %v4862 = vmul.f32 %v3000, %v4749
  %v4863 = vmul.f32 %v3003, %v4749
  %v4864 = vmul.f32 %v3008, %v4749
  %v4865 = vmul.f32 %v3011, %v4749
  %v4866 = vmul.f32 %v3016, %v4749
  %v4867 = vmul.f32 %v3019, %v4749
  %v4868 = vmul.f32 %v3024, %v4749
  %v4869 = vmul.f32 %v3027, %v4749
  %v4870 = vmul.f32 %v3032, %v4749
  %v4871 = vmul.f32 %v3035, %v4749
  %v4872 = vmul.f32 %v3040, %v4749
  %v4873 = vmul.f32 %v3043, %v4749
  %v4874 = vmul.f32 %v3048, %v4749
  %v4875 = vmul.f32 %v3051, %v4749
  %v4876 = vmul.f32 %v3056, %v4749
  %v4877 = vmul.f32 %v3059, %v4749
  %v4878 = vmul.f32 %v3064, %v4749
  %v4879 = vmul.f32 %v3067, %v4749
  %v4880 = vmul.f32 %v3072, %v4749
  %v4881 = vmul.f32 %v3075, %v4749
  %v4882 = vmul.f32 %v3080, %v4749
  %v4883 = vmul.f32 %v3083, %v4749
  %v4884 = vmul.f32 %v3088, %v4749
  %v4885 = vmul.f32 %v3091, %v4749
  %v4886 = vmul.f32 %v3096, %v4749
  %v4887 = vmul.f32 %v3099, %v4749
  %v4888 = vmul.f32 %v3104, %v4749
  %v4889 = vmul.f32 %v3107, %v4749
  %v4890 = vmul.f32 %v3112, %v4749
  %v4891 = vmul.f32 %v3115, %v4749
  %v4892 = vmul.f32 %v3120, %v4749
  %v4893 = vmul.f32 %v3123, %v4749
  %v4894 = vmul.f32 %v3128, %v4749
  %v4895 = vmul.f32 %v3131, %v4749
  %v4896 = vmul.f32 %v3136, %v4749
  %v4897 = vmul.f32 %v3139, %v4749
  %v4898 = vmul.f32 %v3144, %v4749
  %v4899 = vmul.f32 %v3147, %v4749
  %v4900 = vmul.f32 %v3152, %v4749
  %v4901 = vmul.f32 %v3155, %v4749
  %v4902 = vmul.f32 %v3160, %v4749
  %v4903 = vmul.f32 %v3163, %v4749
  %v4904 = vmul.f32 %v3168, %v4749
  %v4905 = vmul.f32 %v3171, %v4749
  %v4906 = vmul.f32 %v3176, %v4749
  %v4907 = vmul.f32 %v3179, %v4749
  %v4908 = vmul.f32 %v3184, %v4749
  %v4909 = vmul.f32 %v3187, %v4749
  %v4910 = vmul.f32 %v3192, %v4749
  %v4911 = vmul.f32 %v3195, %v4749
  %v4912 = vmul.f32 %v3200, %v4749
  %v4913 = vmul.f32 %v3203, %v4749
  %v4914 = vmul.f32 %v3208, %v4749
  %v4915 = vmul.f32 %v3211, %v4749
  %v4916 = vmul.f32 %v3216, %v4749
  %v4917 = vmul.f32 %v3219, %v4749
  %v4918 = vmul.f32 %v3224, %v4749
  %v4919 = vmul.f32 %v3227, %v4749
  %v4920 = vmul.f32 %v3232, %v4749
  %v4921 = vmul.f32 %v3235, %v4749
  %v4922 = vmul.f32 %v3240, %v4749
  %v4923 = vmul.f32 %v3243, %v4749
  %v4924 = vmul.f32 %v3248, %v4749
  %v4925 = vmul.f32 %v3251, %v4749
  %v4926 = vmul.f32 %v3256, %v4749
  %v4927 = vmul.f32 %v3259, %v4749
  %v4928 = vmul.f32 %v3264, %v4749
  %v4929 = vmul.f32 %v3267, %v4749
  %v4930 = vmul.f32 %v3272, %v4749
  %v4931 = vmul.f32 %v3275, %v4749
  %v4932 = vmul.f32 %v3280, %v4749
  %v4933 = vmul.f32 %v3283, %v4749
  %v4934 = vmul.f32 %v3288, %v4749
  %v4935 = vmul.f32 %v3291, %v4749
  %v4936 = vmul.f32 %v3296, %v4749
  %v4937 = vmul.f32 %v3299, %v4749
  %v4938 = vmul.f32 %v3304, %v4749
  %v4939 = vmul.f32 %v3307, %v4749
  %v4940 = vmul.f32 %v3312, %v4749
  %v4941 = vmul.f32 %v3315, %v4749
  %v4942 = vmul.f32 %v3320, %v4749
  %v4943 = vmul.f32 %v3323, %v4749
  %v4944 = vmul.f32 %v3328, %v4749
  %v4945 = vmul.f32 %v3331, %v4749
  %v4946 = vmul.f32 %v3336, %v4749
  %v4947 = vmul.f32 %v3339, %v4749
  %v4948 = vmul.f32 %v3344, %v4749
  %v4949 = vmul.f32 %v3347, %v4749
  %v4950 = vmul.f32 %v3352, %v4749
  %v4951 = vmul.f32 %v3355, %v4749
  %v4952 = vmul.f32 %v3360, %v4749
  %v4953 = vmul.f32 %v3363, %v4749
  %v4954 = vmul.f32 %v3368, %v4749
  %v4955 = vmul.f32 %v3371, %v4749
  %v4956 = vmul.f32 %v3376, %v4749
  %v4957 = vmul.f32 %v3379, %v4749
  %v4958 = vmul.f32 %v3384, %v4749
  %v4959 = vmul.f32 %v3387, %v4749
  %v4960 = vmul.f32 %v3392, %v4749
  %v4961 = vmul.f32 %v3395, %v4749
  %v4962 = vmul.f32 %v3400, %v4749
  %v4963 = vmul.f32 %v3403, %v4749
  %v4964 = vmul.f32 %v3408, %v4749
  %v4965 = vmul.f32 %v3411, %v4749
  %v4966 = vmul.f32 %v3416, %v4749
  %v4967 = vmul.f32 %v3419, %v4749
  %v4968 = vmul.f32 %v3424, %v4749
  %v4969 = vmul.f32 %v3427, %v4749
  %v4970 = vmul.f32 %v3432, %v4749
  %v4971 = vmul.f32 %v3435, %v4749
  %v4972 = vmul.f32 %v3440, %v4749
  %v4973 = vmul.f32 %v3443, %v4749
  %v4974 = vmul.f32 %v3448, %v4749
  %v4975 = vmul.f32 %v3451, %v4749
  %v4976 = vmul.f32 %v3456, %v4749
  %v4977 = vmul.f32 %v3459, %v4749
  %v4978 = vmul.f32 %v3464, %v4749
  %v4979 = vmul.f32 %v3467, %v4749
  %v4980 = vmul.f32 %v3472, %v4749
  %v4981 = vmul.f32 %v3475, %v4749
  %v4982 = vmul.f32 %v3480, %v4749
  %v4983 = vmul.f32 %v3483, %v4749
  %v4984 = vmul.f32 %v3488, %v4749
  %v4985 = vmul.f32 %v3491, %v4749
  %v4986 = vmul.f32 %v3496, %v4749
  %v4987 = vmul.f32 %v3499, %v4749
  %v4988 = vmul.f32 %v3504, %v4749
  %v4989 = vmul.f32 %v3507, %v4749
  %v4990 = vmul.f32 %v3512, %v4749
  %v4992 = vlaneseq
  %v4993 = vshrl.u32 %v4992, 7
  %v4994 = vsub.s32 0, %v4993
  %v4995 = vrot.slane %v4745, %v4994
  %v4997 = vadd.f32 %v4750, %v4995
  %v4998 = vadd.f32 %v4751, %v4995
  %v4999 = vadd.f32 %v4752, %v4995
  %v5000 = vadd.f32 %v4753, %v4995
  %v5001 = vadd.f32 %v4754, %v4995
  %v5002 = vadd.f32 %v4755, %v4995
  %v5003 = vadd.f32 %v4756, %v4995
  %v5004 = vadd.f32 %v4757, %v4995
  %v5005 = vadd.f32 %v4758, %v4995
  %v5006 = vadd.f32 %v4759, %v4995
  %v5007 = vadd.f32 %v4760, %v4995
  %v5008 = vadd.f32 %v4761, %v4995
  %v5009 = vadd.f32 %v4762, %v4995
  %v5010 = vadd.f32 %v4763, %v4995
  %v5011 = vadd.f32 %v4764, %v4995
  %v5012 = vadd.f32 %v4765, %v4995
  %v5013 = vadd.f32 %v4766, %v4995
  %v5014 = vadd.f32 %v4767, %v4995
  %v5015 = vadd.f32 %v4768, %v4995
  %v5016 = vadd.f32 %v4769, %v4995
  %v5017 = vadd.f32 %v4770, %v4995
  %v5018 = vadd.f32 %v4771, %v4995
  %v5019 = vadd.f32 %v4772, %v4995
  %v5020 = vadd.f32 %v4773, %v4995
  %v5021 = vadd.f32 %v4774, %v4995
  %v5022 = vadd.f32 %v4775, %v4995
  %v5023 = vadd.f32 %v4776, %v4995
  %v5024 = vadd.f32 %v4777, %v4995
  %v5025 = vadd.f32 %v4778, %v4995
  %v5026 = vadd.f32 %v4779, %v4995
  %v5027 = vadd.f32 %v4780, %v4995
  %v5028 = vadd.f32 %v4781, %v4995
  %v5029 = vadd.f32 %v4782, %v4995
  %v5030 = vadd.f32 %v4783, %v4995
  %v5031 = vadd.f32 %v4784, %v4995
  %v5032 = vadd.f32 %v4785, %v4995
  %v5033 = vadd.f32 %v4786, %v4995
  %v5034 = vadd.f32 %v4787, %v4995
  %v5035 = vadd.f32 %v4788, %v4995
  %v5036 = vadd.f32 %v4789, %v4995
  %v5037 = vadd.f32 %v4790, %v4995
  %v5038 = vadd.f32 %v4791, %v4995
  %v5039 = vadd.f32 %v4792, %v4995
  %v5040 = vadd.f32 %v4793, %v4995
  %v5041 = vadd.f32 %v4794, %v4995
  %v5042 = vadd.f32 %v4795, %v4995
  %v5043 = vadd.f32 %v4796, %v4995
  %v5044 = vadd.f32 %v4797, %v4995
  %v5045 = vadd.f32 %v4798, %v4995
  %v5046 = vadd.f32 %v4799, %v4995
  %v5047 = vadd.f32 %v4800, %v4995
  %v5048 = vadd.f32 %v4801, %v4995
  %v5049 = vadd.f32 %v4802, %v4995
  %v5050 = vadd.f32 %v4803, %v4995
  %v5051 = vadd.f32 %v4804, %v4995
  %v5052 = vadd.f32 %v4805, %v4995
  %v5053 = vadd.f32 %v4806, %v4995
  %v5054 = vadd.f32 %v4807, %v4995
  %v5055 = vadd.f32 %v4808, %v4995
  %v5056 = vadd.f32 %v4809, %v4995
  %v5057 = vadd.f32 %v4810, %v4995
  %v5058 = vadd.f32 %v4811, %v4995
  %v5059 = vadd.f32 %v4812, %v4995
  %v5060 = vadd.f32 %v4813, %v4995
  %v5061 = vadd.f32 %v4814, %v4995
  %v5062 = vadd.f32 %v4815, %v4995
  %v5063 = vadd.f32 %v4816, %v4995
  %v5064 = vadd.f32 %v4817, %v4995
  %v5065 = vadd.f32 %v4818, %v4995
  %v5066 = vadd.f32 %v4819, %v4995
  %v5067 = vadd.f32 %v4820, %v4995
  %v5068 = vadd.f32 %v4821, %v4995
  %v5069 = vadd.f32 %v4822, %v4995
  %v5070 = vadd.f32 %v4823, %v4995
  %v5071 = vadd.f32 %v4824, %v4995
  %v5072 = vadd.f32 %v4825, %v4995
  %v5073 = vadd.f32 %v4826, %v4995
  %v5074 = vadd.f32 %v4827, %v4995
  %v5075 = vadd.f32 %v4828, %v4995
  %v5076 = vadd.f32 %v4829, %v4995
  %v5077 = vadd.f32 %v4830, %v4995
  %v5078 = vadd.f32 %v4831, %v4995
  %v5079 = vadd.f32 %v4832, %v4995
  %v5080 = vadd.f32 %v4833, %v4995
  %v5081 = vadd.f32 %v4834, %v4995
  %v5082 = vadd.f32 %v4835, %v4995
  %v5083 = vadd.f32 %v4836, %v4995
  %v5084 = vadd.f32 %v4837, %v4995
  %v5085 = vadd.f32 %v4838, %v4995
  %v5086 = vadd.f32 %v4839, %v4995
  %v5087 = vadd.f32 %v4840, %v4995
  %v5088 = vadd.f32 %v4841, %v4995
  %v5089 = vadd.f32 %v4842, %v4995
  %v5090 = vadd.f32 %v4843, %v4995
  %v5091 = vadd.f32 %v4844, %v4995
  %v5092 = vadd.f32 %v4845, %v4995
  %v5093 = vadd.f32 %v4846, %v4995
  %v5094 = vadd.f32 %v4847, %v4995
  %v5095 = vadd.f32 %v4848, %v4995
  %v5096 = vadd.f32 %v4849, %v4995
  %v5097 = vadd.f32 %v4850, %v4995
  %v5098 = vadd.f32 %v4851, %v4995
  %v5099 = vadd.f32 %v4852, %v4995
  %v5100 = vadd.f32 %v4853, %v4995
  %v5101 = vadd.f32 %v4854, %v4995
  %v5102 = vadd.f32 %v4855, %v4995
  %v5103 = vadd.f32 %v4856, %v4995
  %v5104 = vadd.f32 %v4857, %v4995
  %v5105 = vadd.f32 %v4858, %v4995
  %v5106 = vadd.f32 %v4859, %v4995
  %v5107 = vadd.f32 %v4860, %v4995
  %v5108 = vadd.f32 %v4861, %v4995
  %v5109 = vadd.f32 %v4862, %v4995
  %v5110 = vadd.f32 %v4863, %v4995
  %v5111 = vadd.f32 %v4864, %v4995
  %v5112 = vadd.f32 %v4865, %v4995
  %v5113 = vadd.f32 %v4866, %v4995
  %v5114 = vadd.f32 %v4867, %v4995
  %v5115 = vadd.f32 %v4868, %v4995
  %v5116 = vadd.f32 %v4869, %v4995
  %v5117 = vadd.f32 %v4870, %v4995
  %v5118 = vadd.f32 %v4871, %v4995
  %v5119 = vadd.f32 %v4872, %v4995
  %v5120 = vadd.f32 %v4873, %v4995
  %v5121 = vadd.f32 %v4874, %v4995
  %v5122 = vadd.f32 %v4875, %v4995
  %v5123 = vadd.f32 %v4876, %v4995
  %v5124 = vadd.f32 %v4877, %v4995
  %v5125 = vadd.f32 %v4878, %v4995
  %v5126 = vadd.f32 %v4879, %v4995
  %v5127 = vadd.f32 %v4880, %v4995
  %v5128 = vadd.f32 %v4881, %v4995
  %v5129 = vadd.f32 %v4882, %v4995
  %v5130 = vadd.f32 %v4883, %v4995
  %v5131 = vadd.f32 %v4884, %v4995
  %v5132 = vadd.f32 %v4885, %v4995
  %v5133 = vadd.f32 %v4886, %v4995
  %v5134 = vadd.f32 %v4887, %v4995
  %v5135 = vadd.f32 %v4888, %v4995
  %v5136 = vadd.f32 %v4889, %v4995
  %v5137 = vadd.f32 %v4890, %v4995
  %v5138 = vadd.f32 %v4891, %v4995
  %v5139 = vadd.f32 %v4892, %v4995
  %v5140 = vadd.f32 %v4893, %v4995
  %v5141 = vadd.f32 %v4894, %v4995
  %v5142 = vadd.f32 %v4895, %v4995
  %v5143 = vadd.f32 %v4896, %v4995
  %v5144 = vadd.f32 %v4897, %v4995
  %v5145 = vadd.f32 %v4898, %v4995
  %v5146 = vadd.f32 %v4899, %v4995
  %v5147 = vadd.f32 %v4900, %v4995
  %v5148 = vadd.f32 %v4901, %v4995
  %v5149 = vadd.f32 %v4902, %v4995
  %v5150 = vadd.f32 %v4903, %v4995
  %v5151 = vadd.f32 %v4904, %v4995
  %v5152 = vadd.f32 %v4905, %v4995
  %v5153 = vadd.f32 %v4906, %v4995
  %v5154 = vadd.f32 %v4907, %v4995
  %v5155 = vadd.f32 %v4908, %v4995
  %v5156 = vadd.f32 %v4909, %v4995
  %v5157 = vadd.f32 %v4910, %v4995
  %v5158 = vadd.f32 %v4911, %v4995
  %v5159 = vadd.f32 %v4912, %v4995
  %v5160 = vadd.f32 %v4913, %v4995
  %v5161 = vadd.f32 %v4914, %v4995
  %v5162 = vadd.f32 %v4915, %v4995
  %v5163 = vadd.f32 %v4916, %v4995
  %v5164 = vadd.f32 %v4917, %v4995
  %v5165 = vadd.f32 %v4918, %v4995
  %v5166 = vadd.f32 %v4919, %v4995
  %v5167 = vadd.f32 %v4920, %v4995
  %v5168 = vadd.f32 %v4921, %v4995
  %v5169 = vadd.f32 %v4922, %v4995
  %v5170 = vadd.f32 %v4923, %v4995
  %v5171 = vadd.f32 %v4924, %v4995
  %v5172 = vadd.f32 %v4925, %v4995
  %v5173 = vadd.f32 %v4926, %v4995
  %v5174 = vadd.f32 %v4927, %v4995
  %v5175 = vadd.f32 %v4928, %v4995
  %v5176 = vadd.f32 %v4929, %v4995
  %v5177 = vadd.f32 %v4930, %v4995
  %v5178 = vadd.f32 %v4931, %v4995
  %v5179 = vadd.f32 %v4932, %v4995
  %v5180 = vadd.f32 %v4933, %v4995
  %v5181 = vadd.f32 %v4934, %v4995
  %v5182 = vadd.f32 %v4935, %v4995
  %v5183 = vadd.f32 %v4936, %v4995
  %v5184 = vadd.f32 %v4937, %v4995
  %v5185 = vadd.f32 %v4938, %v4995
  %v5186 = vadd.f32 %v4939, %v4995
  %v5187 = vadd.f32 %v4940, %v4995
  %v5188 = vadd.f32 %v4941, %v4995
  %v5189 = vadd.f32 %v4942, %v4995
  %v5190 = vadd.f32 %v4943, %v4995
  %v5191 = vadd.f32 %v4944, %v4995
  %v5192 = vadd.f32 %v4945, %v4995
  %v5193 = vadd.f32 %v4946, %v4995
  %v5194 = vadd.f32 %v4947, %v4995
  %v5195 = vadd.f32 %v4948, %v4995
  %v5196 = vadd.f32 %v4949, %v4995
  %v5197 = vadd.f32 %v4950, %v4995
  %v5198 = vadd.f32 %v4951, %v4995
  %v5199 = vadd.f32 %v4952, %v4995
  %v5200 = vadd.f32 %v4953, %v4995
  %v5201 = vadd.f32 %v4954, %v4995
  %v5202 = vadd.f32 %v4955, %v4995
  %v5203 = vadd.f32 %v4956, %v4995
  %v5204 = vadd.f32 %v4957, %v4995
  %v5205 = vadd.f32 %v4958, %v4995
  %v5206 = vadd.f32 %v4959, %v4995
  %v5207 = vadd.f32 %v4960, %v4995
  %v5208 = vadd.f32 %v4961, %v4995
  %v5209 = vadd.f32 %v4962, %v4995
  %v5210 = vadd.f32 %v4963, %v4995
  %v5211 = vadd.f32 %v4964, %v4995
  %v5212 = vadd.f32 %v4965, %v4995
  %v5213 = vadd.f32 %v4966, %v4995
  %v5214 = vadd.f32 %v4967, %v4995
  %v5215 = vadd.f32 %v4968, %v4995
  %v5216 = vadd.f32 %v4969, %v4995
  %v5217 = vadd.f32 %v4970, %v4995
  %v5218 = vadd.f32 %v4971, %v4995
  %v5219 = vadd.f32 %v4972, %v4995
  %v5220 = vadd.f32 %v4973, %v4995
  %v5221 = vadd.f32 %v4974, %v4995
  %v5222 = vadd.f32 %v4975, %v4995
  %v5223 = vadd.f32 %v4976, %v4995
  %v5224 = vadd.f32 %v4977, %v4995
  %v5225 = vadd.f32 %v4978, %v4995
  %v5226 = vadd.f32 %v4979, %v4995
  %v5227 = vadd.f32 %v4980, %v4995
  %v5228 = vadd.f32 %v4981, %v4995
  %v5229 = vadd.f32 %v4982, %v4995
  %v5230 = vadd.f32 %v4983, %v4995
  %v5231 = vadd.f32 %v4984, %v4995
  %v5232 = vadd.f32 %v4985, %v4995
  %v5233 = vadd.f32 %v4986, %v4995
  %v5234 = vadd.f32 %v4987, %v4995
  %v5235 = vadd.f32 %v4988, %v4995
  %v5236 = vadd.f32 %v4989, %v4995
  %v5237 = vadd.f32 %v4990, %v4995
  %5238 = vst.msk [vmem:[%s5] sm:$0xff] %vm3517, %v4997
  %5239 = vst.msk [vmem:[%s5 + $0x8] sm:$0xff] %vm3517, %v4998
  %5240 = vst.msk [vmem:[%s5 + $0x10] sm:$0xff] %vm3517, %v4999
  %5241 = vst.msk [vmem:[%s5 + $0x18] sm:$0xff] %vm3517, %v5000
  %5242 = vst.msk [vmem:[%s5 + $0x20] sm:$0xff] %vm3517, %v5001
  %5243 = vst.msk [vmem:[%s5 + $0x28] sm:$0xff] %vm3517, %v5002
  %5244 = vst.msk [vmem:[%s5 + $0x30] sm:$0xff] %vm3517, %v5003
  %5245 = vst.msk [vmem:[%s5 + $0x38] sm:$0xff] %vm3517, %v5004
  %5246 = vst.msk [vmem:[%s5 + $0x40] sm:$0xff] %vm3517, %v5005
  %5247 = vst.msk [vmem:[%s5 + $0x48] sm:$0xff] %vm3517, %v5006
  %5248 = vst.msk [vmem:[%s5 + $0x50] sm:$0xff] %vm3517, %v5007
  %5249 = vst.msk [vmem:[%s5 + $0x58] sm:$0xff] %vm3517, %v5008
  %5250 = vst.msk [vmem:[%s5 + $0x60] sm:$0xff] %vm3517, %v5009
  %5251 = vst.msk [vmem:[%s5 + $0x68] sm:$0xff] %vm3517, %v5010
  %5252 = vst.msk [vmem:[%s5 + $0x70] sm:$0xff] %vm3517, %v5011
  %5253 = vst.msk [vmem:[%s5 + $0x78] sm:$0xff] %vm3517, %v5012
  %5254 = vst.msk [vmem:[%s5 + $0x80] sm:$0xff] %vm3517, %v5013
  %5255 = vst.msk [vmem:[%s5 + $0x88] sm:$0xff] %vm3517, %v5014
  %5256 = vst.msk [vmem:[%s5 + $0x90] sm:$0xff] %vm3517, %v5015
  %5257 = vst.msk [vmem:[%s5 + $0x98] sm:$0xff] %vm3517, %v5016
  %5258 = vst.msk [vmem:[%s5 + $0xa0] sm:$0xff] %vm3517, %v5017
  %5259 = vst.msk [vmem:[%s5 + $0xa8] sm:$0xff] %vm3517, %v5018
  %5260 = vst.msk [vmem:[%s5 + $0xb0] sm:$0xff] %vm3517, %v5019
  %5261 = vst.msk [vmem:[%s5 + $0xb8] sm:$0xff] %vm3517, %v5020
  %5262 = vst.msk [vmem:[%s5 + $0xc0] sm:$0xff] %vm3517, %v5021
  %5263 = vst.msk [vmem:[%s5 + $0xc8] sm:$0xff] %vm3517, %v5022
  %5264 = vst.msk [vmem:[%s5 + $0xd0] sm:$0xff] %vm3517, %v5023
  %5265 = vst.msk [vmem:[%s5 + $0xd8] sm:$0xff] %vm3517, %v5024
  %5266 = vst.msk [vmem:[%s5 + $0xe0] sm:$0xff] %vm3517, %v5025
  %5267 = vst.msk [vmem:[%s5 + $0xe8] sm:$0xff] %vm3517, %v5026
  %5268 = vst.msk [vmem:[%s5 + $0xf0] sm:$0xff] %vm3517, %v5027
  %5269 = vst.msk [vmem:[%s5 + $0xf8] sm:$0xff] %vm3517, %v5028
  %5270 = vst.msk [vmem:[%s5 + $0x100] sm:$0xff] %vm3517, %v5029
  %5271 = vst.msk [vmem:[%s5 + $0x108] sm:$0xff] %vm3517, %v5030
  %5272 = vst.msk [vmem:[%s5 + $0x110] sm:$0xff] %vm3517, %v5031
  %5273 = vst.msk [vmem:[%s5 + $0x118] sm:$0xff] %vm3517, %v5032
  %5274 = vst.msk [vmem:[%s5 + $0x120] sm:$0xff] %vm3517, %v5033
  %5275 = vst.msk [vmem:[%s5 + $0x128] sm:$0xff] %vm3517, %v5034
  %5276 = vst.msk [vmem:[%s5 + $0x130] sm:$0xff] %vm3517, %v5035
  %5277 = vst.msk [vmem:[%s5 + $0x138] sm:$0xff] %vm3517, %v5036
  %5278 = vst.msk [vmem:[%s5 + $0x140] sm:$0xff] %vm3517, %v5037
  %5279 = vst.msk [vmem:[%s5 + $0x148] sm:$0xff] %vm3517, %v5038
  %5280 = vst.msk [vmem:[%s5 + $0x150] sm:$0xff] %vm3517, %v5039
  %5281 = vst.msk [vmem:[%s5 + $0x158] sm:$0xff] %vm3517, %v5040
  %5282 = vst.msk [vmem:[%s5 + $0x160] sm:$0xff] %vm3517, %v5041
  %5283 = vst.msk [vmem:[%s5 + $0x168] sm:$0xff] %vm3517, %v5042
  %5284 = vst.msk [vmem:[%s5 + $0x170] sm:$0xff] %vm3517, %v5043
  %5285 = vst.msk [vmem:[%s5 + $0x178] sm:$0xff] %vm3517, %v5044
  %5286 = vst.msk [vmem:[%s5 + $0x180] sm:$0xff] %vm3517, %v5045
  %5287 = vst.msk [vmem:[%s5 + $0x188] sm:$0xff] %vm3517, %v5046
  %5288 = vst.msk [vmem:[%s5 + $0x190] sm:$0xff] %vm3517, %v5047
  %5289 = vst.msk [vmem:[%s5 + $0x198] sm:$0xff] %vm3517, %v5048
  %5290 = vst.msk [vmem:[%s5 + $0x1a0] sm:$0xff] %vm3517, %v5049
  %5291 = vst.msk [vmem:[%s5 + $0x1a8] sm:$0xff] %vm3517, %v5050
  %5292 = vst.msk [vmem:[%s5 + $0x1b0] sm:$0xff] %vm3517, %v5051
  %5293 = vst.msk [vmem:[%s5 + $0x1b8] sm:$0xff] %vm3517, %v5052
  %5294 = vst.msk [vmem:[%s5 + $0x1c0] sm:$0xff] %vm3517, %v5053
  %5295 = vst.msk [vmem:[%s5 + $0x1c8] sm:$0xff] %vm3517, %v5054
  %5296 = vst.msk [vmem:[%s5 + $0x1d0] sm:$0xff] %vm3517, %v5055
  %5297 = vst.msk [vmem:[%s5 + $0x1d8] sm:$0xff] %vm3517, %v5056
  %5298 = vst.msk [vmem:[%s5 + $0x1e0] sm:$0xff] %vm3517, %v5057
  %5299 = vst.msk [vmem:[%s5 + $0x1e8] sm:$0xff] %vm3517, %v5058
  %5300 = vst.msk [vmem:[%s5 + $0x1f0] sm:$0xff] %vm3517, %v5059
  %5301 = vst.msk [vmem:[%s5 + $0x1f8] sm:$0xff] %vm3517, %v5060
  %5302 = vst.msk [vmem:[%s5 + $0x200] sm:$0xff] %vm3517, %v5061
  %5303 = vst.msk [vmem:[%s5 + $0x208] sm:$0xff] %vm3517, %v5062
  %5304 = vst.msk [vmem:[%s5 + $0x210] sm:$0xff] %vm3517, %v5063
  %5305 = vst.msk [vmem:[%s5 + $0x218] sm:$0xff] %vm3517, %v5064
  %5306 = vst.msk [vmem:[%s5 + $0x220] sm:$0xff] %vm3517, %v5065
  %5307 = vst.msk [vmem:[%s5 + $0x228] sm:$0xff] %vm3517, %v5066
  %5308 = vst.msk [vmem:[%s5 + $0x230] sm:$0xff] %vm3517, %v5067
  %5309 = vst.msk [vmem:[%s5 + $0x238] sm:$0xff] %vm3517, %v5068
  %5310 = vst.msk [vmem:[%s5 + $0x240] sm:$0xff] %vm3517, %v5069
  %5311 = vst.msk [vmem:[%s5 + $0x248] sm:$0xff] %vm3517, %v5070
  %5312 = vst.msk [vmem:[%s5 + $0x250] sm:$0xff] %vm3517, %v5071
  %5313 = vst.msk [vmem:[%s5 + $0x258] sm:$0xff] %vm3517, %v5072
  %5314 = vst.msk [vmem:[%s5 + $0x260] sm:$0xff] %vm3517, %v5073
  %5315 = vst.msk [vmem:[%s5 + $0x268] sm:$0xff] %vm3517, %v5074
  %5316 = vst.msk [vmem:[%s5 + $0x270] sm:$0xff] %vm3517, %v5075
  %5317 = vst.msk [vmem:[%s5 + $0x278] sm:$0xff] %vm3517, %v5076
  %5318 = vst.msk [vmem:[%s5 + $0x280] sm:$0xff] %vm3517, %v5077
  %5319 = vst.msk [vmem:[%s5 + $0x288] sm:$0xff] %vm3517, %v5078
  %5320 = vst.msk [vmem:[%s5 + $0x290] sm:$0xff] %vm3517, %v5079
  %5321 = vst.msk [vmem:[%s5 + $0x298] sm:$0xff] %vm3517, %v5080
  %5322 = vst.msk [vmem:[%s5 + $0x2a0] sm:$0xff] %vm3517, %v5081
  %5323 = vst.msk [vmem:[%s5 + $0x2a8] sm:$0xff] %vm3517, %v5082
  %5324 = vst.msk [vmem:[%s5 + $0x2b0] sm:$0xff] %vm3517, %v5083
  %5325 = vst.msk [vmem:[%s5 + $0x2b8] sm:$0xff] %vm3517, %v5084
  %5326 = vst.msk [vmem:[%s5 + $0x2c0] sm:$0xff] %vm3517, %v5085
  %5327 = vst.msk [vmem:[%s5 + $0x2c8] sm:$0xff] %vm3517, %v5086
  %5328 = vst.msk [vmem:[%s5 + $0x2d0] sm:$0xff] %vm3517, %v5087
  %5329 = vst.msk [vmem:[%s5 + $0x2d8] sm:$0xff] %vm3517, %v5088
  %5330 = vst.msk [vmem:[%s5 + $0x2e0] sm:$0xff] %vm3517, %v5089
  %5331 = vst.msk [vmem:[%s5 + $0x2e8] sm:$0xff] %vm3517, %v5090
  %5332 = vst.msk [vmem:[%s5 + $0x2f0] sm:$0xff] %vm3517, %v5091
  %5333 = vst.msk [vmem:[%s5 + $0x2f8] sm:$0xff] %vm3517, %v5092
  %5334 = vst.msk [vmem:[%s5 + $0x300] sm:$0xff] %vm3517, %v5093
  %5335 = vst.msk [vmem:[%s5 + $0x308] sm:$0xff] %vm3517, %v5094
  %5336 = vst.msk [vmem:[%s5 + $0x310] sm:$0xff] %vm3517, %v5095
  %5337 = vst.msk [vmem:[%s5 + $0x318] sm:$0xff] %vm3517, %v5096
  %5338 = vst.msk [vmem:[%s5 + $0x320] sm:$0xff] %vm3517, %v5097
  %5339 = vst.msk [vmem:[%s5 + $0x328] sm:$0xff] %vm3517, %v5098
  %5340 = vst.msk [vmem:[%s5 + $0x330] sm:$0xff] %vm3517, %v5099
  %5341 = vst.msk [vmem:[%s5 + $0x338] sm:$0xff] %vm3517, %v5100
  %5342 = vst.msk [vmem:[%s5 + $0x340] sm:$0xff] %vm3517, %v5101
  %5343 = vst.msk [vmem:[%s5 + $0x348] sm:$0xff] %vm3517, %v5102
  %5344 = vst.msk [vmem:[%s5 + $0x350] sm:$0xff] %vm3517, %v5103
  %5345 = vst.msk [vmem:[%s5 + $0x358] sm:$0xff] %vm3517, %v5104
  %5346 = vst.msk [vmem:[%s5 + $0x360] sm:$0xff] %vm3517, %v5105
  %5347 = vst.msk [vmem:[%s5 + $0x368] sm:$0xff] %vm3517, %v5106
  %5348 = vst.msk [vmem:[%s5 + $0x370] sm:$0xff] %vm3517, %v5107
  %5349 = vst.msk [vmem:[%s5 + $0x378] sm:$0xff] %vm3517, %v5108
  %5350 = vst.msk [vmem:[%s5 + $0x380] sm:$0xff] %vm3517, %v5109
  %5351 = vst.msk [vmem:[%s5 + $0x388] sm:$0xff] %vm3517, %v5110
  %5352 = vst.msk [vmem:[%s5 + $0x390] sm:$0xff] %vm3517, %v5111
  %5353 = vst.msk [vmem:[%s5 + $0x398] sm:$0xff] %vm3517, %v5112
  %5354 = vst.msk [vmem:[%s5 + $0x3a0] sm:$0xff] %vm3517, %v5113
  %5355 = vst.msk [vmem:[%s5 + $0x3a8] sm:$0xff] %vm3517, %v5114
  %5356 = vst.msk [vmem:[%s5 + $0x3b0] sm:$0xff] %vm3517, %v5115
  %5357 = vst.msk [vmem:[%s5 + $0x3b8] sm:$0xff] %vm3517, %v5116
  %5358 = vst.msk [vmem:[%s5 + $0x3c0] sm:$0xff] %vm3517, %v5117
  %5359 = vst.msk [vmem:[%s5 + $0x3c8] sm:$0xff] %vm3517, %v5118
  %5360 = vst.msk [vmem:[%s5 + $0x3d0] sm:$0xff] %vm3517, %v5119
  %5361 = vst.msk [vmem:[%s5 + $0x3d8] sm:$0xff] %vm3517, %v5120
  %5362 = vst.msk [vmem:[%s5 + $0x3e0] sm:$0xff] %vm3517, %v5121
  %5363 = vst.msk [vmem:[%s5 + $0x3e8] sm:$0xff] %vm3517, %v5122
  %5364 = vst.msk [vmem:[%s5 + $0x3f0] sm:$0xff] %vm3517, %v5123
  %5365 = vst.msk [vmem:[%s5 + $0x3f8] sm:$0xff] %vm3517, %v5124
  %5366 = vst.msk [vmem:[%s5 + $0x400] sm:$0xff] %vm3517, %v5125
  %5367 = vst.msk [vmem:[%s5 + $0x408] sm:$0xff] %vm3517, %v5126
  %5368 = vst.msk [vmem:[%s5 + $0x410] sm:$0xff] %vm3517, %v5127
  %5369 = vst.msk [vmem:[%s5 + $0x418] sm:$0xff] %vm3517, %v5128
  %5370 = vst.msk [vmem:[%s5 + $0x420] sm:$0xff] %vm3517, %v5129
  %5371 = vst.msk [vmem:[%s5 + $0x428] sm:$0xff] %vm3517, %v5130
  %5372 = vst.msk [vmem:[%s5 + $0x430] sm:$0xff] %vm3517, %v5131
  %5373 = vst.msk [vmem:[%s5 + $0x438] sm:$0xff] %vm3517, %v5132
  %5374 = vst.msk [vmem:[%s5 + $0x440] sm:$0xff] %vm3517, %v5133
  %5375 = vst.msk [vmem:[%s5 + $0x448] sm:$0xff] %vm3517, %v5134
  %5376 = vst.msk [vmem:[%s5 + $0x450] sm:$0xff] %vm3517, %v5135
  %5377 = vst.msk [vmem:[%s5 + $0x458] sm:$0xff] %vm3517, %v5136
  %5378 = vst.msk [vmem:[%s5 + $0x460] sm:$0xff] %vm3517, %v5137
  %5379 = vst.msk [vmem:[%s5 + $0x468] sm:$0xff] %vm3517, %v5138
  %5380 = vst.msk [vmem:[%s5 + $0x470] sm:$0xff] %vm3517, %v5139
  %5381 = vst.msk [vmem:[%s5 + $0x478] sm:$0xff] %vm3517, %v5140
  %5382 = vst.msk [vmem:[%s5 + $0x480] sm:$0xff] %vm3517, %v5141
  %5383 = vst.msk [vmem:[%s5 + $0x488] sm:$0xff] %vm3517, %v5142
  %5384 = vst.msk [vmem:[%s5 + $0x490] sm:$0xff] %vm3517, %v5143
  %5385 = vst.msk [vmem:[%s5 + $0x498] sm:$0xff] %vm3517, %v5144
  %5386 = vst.msk [vmem:[%s5 + $0x4a0] sm:$0xff] %vm3517, %v5145
  %5387 = vst.msk [vmem:[%s5 + $0x4a8] sm:$0xff] %vm3517, %v5146
  %5388 = vst.msk [vmem:[%s5 + $0x4b0] sm:$0xff] %vm3517, %v5147
  %5389 = vst.msk [vmem:[%s5 + $0x4b8] sm:$0xff] %vm3517, %v5148
  %5390 = vst.msk [vmem:[%s5 + $0x4c0] sm:$0xff] %vm3517, %v5149
  %5391 = vst.msk [vmem:[%s5 + $0x4c8] sm:$0xff] %vm3517, %v5150
  %5392 = vst.msk [vmem:[%s5 + $0x4d0] sm:$0xff] %vm3517, %v5151
  %5393 = vst.msk [vmem:[%s5 + $0x4d8] sm:$0xff] %vm3517, %v5152
  %5394 = vst.msk [vmem:[%s5 + $0x4e0] sm:$0xff] %vm3517, %v5153
  %5395 = vst.msk [vmem:[%s5 + $0x4e8] sm:$0xff] %vm3517, %v5154
  %5396 = vst.msk [vmem:[%s5 + $0x4f0] sm:$0xff] %vm3517, %v5155
  %5397 = vst.msk [vmem:[%s5 + $0x4f8] sm:$0xff] %vm3517, %v5156
  %5398 = vst.msk [vmem:[%s5 + $0x500] sm:$0xff] %vm3517, %v5157
  %5399 = vst.msk [vmem:[%s5 + $0x508] sm:$0xff] %vm3517, %v5158
  %5400 = vst.msk [vmem:[%s5 + $0x510] sm:$0xff] %vm3517, %v5159
  %5401 = vst.msk [vmem:[%s5 + $0x518] sm:$0xff] %vm3517, %v5160
  %5402 = vst.msk [vmem:[%s5 + $0x520] sm:$0xff] %vm3517, %v5161
  %5403 = vst.msk [vmem:[%s5 + $0x528] sm:$0xff] %vm3517, %v5162
  %5404 = vst.msk [vmem:[%s5 + $0x530] sm:$0xff] %vm3517, %v5163
  %5405 = vst.msk [vmem:[%s5 + $0x538] sm:$0xff] %vm3517, %v5164
  %5406 = vst.msk [vmem:[%s5 + $0x540] sm:$0xff] %vm3517, %v5165
  %5407 = vst.msk [vmem:[%s5 + $0x548] sm:$0xff] %vm3517, %v5166
  %5408 = vst.msk [vmem:[%s5 + $0x550] sm:$0xff] %vm3517, %v5167
  %5409 = vst.msk [vmem:[%s5 + $0x558] sm:$0xff] %vm3517, %v5168
  %5410 = vst.msk [vmem:[%s5 + $0x560] sm:$0xff] %vm3517, %v5169
  %5411 = vst.msk [vmem:[%s5 + $0x568] sm:$0xff] %vm3517, %v5170
  %5412 = vst.msk [vmem:[%s5 + $0x570] sm:$0xff] %vm3517, %v5171
  %5413 = vst.msk [vmem:[%s5 + $0x578] sm:$0xff] %vm3517, %v5172
  %5414 = vst.msk [vmem:[%s5 + $0x580] sm:$0xff] %vm3517, %v5173
  %5415 = vst.msk [vmem:[%s5 + $0x588] sm:$0xff] %vm3517, %v5174
  %5416 = vst.msk [vmem:[%s5 + $0x590] sm:$0xff] %vm3517, %v5175
  %5417 = vst.msk [vmem:[%s5 + $0x598] sm:$0xff] %vm3517, %v5176
  %5418 = vst.msk [vmem:[%s5 + $0x5a0] sm:$0xff] %vm3517, %v5177
  %5419 = vst.msk [vmem:[%s5 + $0x5a8] sm:$0xff] %vm3517, %v5178
  %5420 = vst.msk [vmem:[%s5 + $0x5b0] sm:$0xff] %vm3517, %v5179
  %5421 = vst.msk [vmem:[%s5 + $0x5b8] sm:$0xff] %vm3517, %v5180
  %5422 = vst.msk [vmem:[%s5 + $0x5c0] sm:$0xff] %vm3517, %v5181
  %5423 = vst.msk [vmem:[%s5 + $0x5c8] sm:$0xff] %vm3517, %v5182
  %5424 = vst.msk [vmem:[%s5 + $0x5d0] sm:$0xff] %vm3517, %v5183
  %5425 = vst.msk [vmem:[%s5 + $0x5d8] sm:$0xff] %vm3517, %v5184
  %5426 = vst.msk [vmem:[%s5 + $0x5e0] sm:$0xff] %vm3517, %v5185
  %5427 = vst.msk [vmem:[%s5 + $0x5e8] sm:$0xff] %vm3517, %v5186
  %5428 = vst.msk [vmem:[%s5 + $0x5f0] sm:$0xff] %vm3517, %v5187
  %5429 = vst.msk [vmem:[%s5 + $0x5f8] sm:$0xff] %vm3517, %v5188
  %5430 = vst.msk [vmem:[%s5 + $0x600] sm:$0xff] %vm3517, %v5189
  %5431 = vst.msk [vmem:[%s5 + $0x608] sm:$0xff] %vm3517, %v5190
  %5432 = vst.msk [vmem:[%s5 + $0x610] sm:$0xff] %vm3517, %v5191
  %5433 = vst.msk [vmem:[%s5 + $0x618] sm:$0xff] %vm3517, %v5192
  %5434 = vst.msk [vmem:[%s5 + $0x620] sm:$0xff] %vm3517, %v5193
  %5435 = vst.msk [vmem:[%s5 + $0x628] sm:$0xff] %vm3517, %v5194
  %5436 = vst.msk [vmem:[%s5 + $0x630] sm:$0xff] %vm3517, %v5195
  %5437 = vst.msk [vmem:[%s5 + $0x638] sm:$0xff] %vm3517, %v5196
  %5438 = vst.msk [vmem:[%s5 + $0x640] sm:$0xff] %vm3517, %v5197
  %5439 = vst.msk [vmem:[%s5 + $0x648] sm:$0xff] %vm3517, %v5198
  %5440 = vst.msk [vmem:[%s5 + $0x650] sm:$0xff] %vm3517, %v5199
  %5441 = vst.msk [vmem:[%s5 + $0x658] sm:$0xff] %vm3517, %v5200
  %5442 = vst.msk [vmem:[%s5 + $0x660] sm:$0xff] %vm3517, %v5201
  %5443 = vst.msk [vmem:[%s5 + $0x668] sm:$0xff] %vm3517, %v5202
  %5444 = vst.msk [vmem:[%s5 + $0x670] sm:$0xff] %vm3517, %v5203
  %5445 = vst.msk [vmem:[%s5 + $0x678] sm:$0xff] %vm3517, %v5204
  %5446 = vst.msk [vmem:[%s5 + $0x680] sm:$0xff] %vm3517, %v5205
  %5447 = vst.msk [vmem:[%s5 + $0x688] sm:$0xff] %vm3517, %v5206
  %5448 = vst.msk [vmem:[%s5 + $0x690] sm:$0xff] %vm3517, %v5207
  %5449 = vst.msk [vmem:[%s5 + $0x698] sm:$0xff] %vm3517, %v5208
  %5450 = vst.msk [vmem:[%s5 + $0x6a0] sm:$0xff] %vm3517, %v5209
  %5451 = vst.msk [vmem:[%s5 + $0x6a8] sm:$0xff] %vm3517, %v5210
  %5452 = vst.msk [vmem:[%s5 + $0x6b0] sm:$0xff] %vm3517, %v5211
  %5453 = vst.msk [vmem:[%s5 + $0x6b8] sm:$0xff] %vm3517, %v5212
  %5454 = vst.msk [vmem:[%s5 + $0x6c0] sm:$0xff] %vm3517, %v5213
  %5455 = vst.msk [vmem:[%s5 + $0x6c8] sm:$0xff] %vm3517, %v5214
  %5456 = vst.msk [vmem:[%s5 + $0x6d0] sm:$0xff] %vm3517, %v5215
  %5457 = vst.msk [vmem:[%s5 + $0x6d8] sm:$0xff] %vm3517, %v5216
  %5458 = vst.msk [vmem:[%s5 + $0x6e0] sm:$0xff] %vm3517, %v5217
  %5459 = vst.msk [vmem:[%s5 + $0x6e8] sm:$0xff] %vm3517, %v5218
  %5460 = vst.msk [vmem:[%s5 + $0x6f0] sm:$0xff] %vm3517, %v5219
  %5461 = vst.msk [vmem:[%s5 + $0x6f8] sm:$0xff] %vm3517, %v5220
  %5462 = vst.msk [vmem:[%s5 + $0x700] sm:$0xff] %vm3517, %v5221
  %5463 = vst.msk [vmem:[%s5 + $0x708] sm:$0xff] %vm3517, %v5222
  %5464 = vst.msk [vmem:[%s5 + $0x710] sm:$0xff] %vm3517, %v5223
  %5465 = vst.msk [vmem:[%s5 + $0x718] sm:$0xff] %vm3517, %v5224
  %5466 = vst.msk [vmem:[%s5 + $0x720] sm:$0xff] %vm3517, %v5225
  %5467 = vst.msk [vmem:[%s5 + $0x728] sm:$0xff] %vm3517, %v5226
  %5468 = vst.msk [vmem:[%s5 + $0x730] sm:$0xff] %vm3517, %v5227
  %5469 = vst.msk [vmem:[%s5 + $0x738] sm:$0xff] %vm3517, %v5228
  %5470 = vst.msk [vmem:[%s5 + $0x740] sm:$0xff] %vm3517, %v5229
  %5471 = vst.msk [vmem:[%s5 + $0x748] sm:$0xff] %vm3517, %v5230
  %5472 = vst.msk [vmem:[%s5 + $0x750] sm:$0xff] %vm3517, %v5231
  %5473 = vst.msk [vmem:[%s5 + $0x758] sm:$0xff] %vm3517, %v5232
  %5474 = vst.msk [vmem:[%s5 + $0x760] sm:$0xff] %vm3517, %v5233
  %5475 = vst.msk [vmem:[%s5 + $0x768] sm:$0xff] %vm3517, %v5234
  %5476 = vst.msk [vmem:[%s5 + $0x770] sm:$0xff] %vm3517, %v5235
  %5477 = vst.msk [vmem:[%s5 + $0x778] sm:$0xff] %vm3517, %v5236
  %5478 = vst.msk [vmem:[%s5 + $0x780] sm:$0x3] %vm3997, %v5237
  %vm5479 = vcmask 57344
  %5480 = vst.msk [vmem:[%s6] sm:$0x1] %vm5479, %v4745
  // Predicated region
  $region22: #{dvae_encoder_forward.4} parent=0 // pred_check
    _
  $region23: #{dvae_encoder_forward.4} parent=0 // pred_check_branch
    %5482 = sbr.rel (0) target = $region25
  $region24: #{dvae_encoder_forward.4} parent=0 // pred_region
    _
  $region25: #{dvae_encoder_forward.4} parent=0 // pred_fallthru
    _
  // Predicated region
  $region26: #{dvae_encoder_forward.4} parent=0 // pred_check
    _
  $region27: #{dvae_encoder_forward.4} parent=0 // pred_check_branch
    %5484 = sbr.rel (0) target = $region29
  $region28: #{dvae_encoder_forward.4} parent=0 // pred_region
    _
  $region29: #{dvae_encoder_forward.4} parent=0 // pred_fallthru
    _
  // Predicated region
  $region30: #{dvae_encoder_forward.4} parent=0 // pred_check
    _
  $region31: #{dvae_encoder_forward.4} parent=0 // pred_check_branch
    %5486 = sbr.rel (0) target = $region33
  $region32: #{dvae_encoder_forward.4} parent=0 // pred_region
    _
  $region33: #{dvae_encoder_forward.4} parent=0 // pred_fallthru
    _
  // Predicated region
  $region34: #{dvae_encoder_forward.4} parent=0 // pred_check
    _
  $region35: #{dvae_encoder_forward.4} parent=0 // pred_check_branch
    %5488 = sbr.rel (0) target = $region37
  $region36: #{dvae_encoder_forward.4} parent=0 // pred_region
    _
  $region37: #{dvae_encoder_forward.4} parent=0 // pred_fallthru
    _

// kernel: dvae_encoder_forward.5
$region0: #{dvae_encoder_forward.5}
  #allocation0 [shape = 'u32[]', space=smem, size = 0x4, offset = 0x4, fixed_abs, tag = 'smem constant byte address 0x4 - core index']
  #allocation1 [shape = 'u32[144,128]{1,0:T(1,128)}', space=vmem, size = 0x12000, scoped, tag = 'internal scratch']
  %s0 = inlined_call_operand.vmem [shape: bf16[450,200], index: 0, kind: input, shape index: {}]
  %s1 = inlined_call_operand.vmem [shape: bf16[200,16], index: 1, kind: input, shape index: {}]
  %s2 = inlined_call_operand.vmem [shape: f32[1,16], index: 2, kind: input, shape index: {}]
  %s3 = inlined_call_operand.vmem [shape: f32[1,16], index: 3, kind: input, shape index: {}]
  %s4 = inlined_call_operand.vmem [shape: f32[1,16], index: 4, kind: input, shape index: {}]
  %s5 = inlined_call_operand.vmem [shape: f32[450,16], index: 5, kind: output, shape index: {0}]
  %s6 = inlined_call_operand.vmem [shape: f32[1,16], index: 6, kind: output, shape index: {1}]
  %7 = xla_tuple %s5, %s6
  %s8 = sld [smem:[#allocation0]]
  $region38: #{dvae_encoder_forward.5} parent=0
    _
  %s10 = ssub.s32 1, %s8
  %s11 = scalar_select 0, %s10, %s8
  // Predicated region
  $region2: #{dvae_encoder_forward.5} parent=0 // pred_check
    _
  $region3: #{dvae_encoder_forward.5} parent=0 // pred_check_branch
    %13 = sbr.rel (0) target = $region5
  $region4: #{dvae_encoder_forward.5} parent=0 // pred_region
    _
  $region5: #{dvae_encoder_forward.5} parent=0 // pred_fallthru
    _
  // Predicated region
  $region6: #{dvae_encoder_forward.5} parent=0 // pred_check
    _
  $region7: #{dvae_encoder_forward.5} parent=0 // pred_check_branch
    %15 = sbr.rel (0) target = $region9
  $region8: #{dvae_encoder_forward.5} parent=0 // pred_region
    _
  $region9: #{dvae_encoder_forward.5} parent=0 // pred_fallthru
    _
  // Predicated region
  $region10: #{dvae_encoder_forward.5} parent=0 // pred_check
    _
  $region11: #{dvae_encoder_forward.5} parent=0 // pred_check_branch
    %17 = sbr.rel (0) target = $region13
  $region12: #{dvae_encoder_forward.5} parent=0 // pred_region
    _
  $region13: #{dvae_encoder_forward.5} parent=0 // pred_fallthru
    _
  // Predicated region
  $region14: #{dvae_encoder_forward.5} parent=0 // pred_check
    _
  $region15: #{dvae_encoder_forward.5} parent=0 // pred_check_branch
    %19 = sbr.rel (0) target = $region17
  $region16: #{dvae_encoder_forward.5} parent=0 // pred_region
    _
  $region17: #{dvae_encoder_forward.5} parent=0 // pred_fallthru
    _
  // Predicated region
  $region18: #{dvae_encoder_forward.5} parent=0 // pred_check
    _
  $region19: #{dvae_encoder_forward.5} parent=0 // pred_check_branch
    %21 = sbr.rel (0) target = $region21
  $region20: #{dvae_encoder_forward.5} parent=0 // pred_region
    _
  $region21: #{dvae_encoder_forward.5} parent=0 // pred_fallthru
    _
  %v24 = vld [vmem:[%s0] sm:$0xff]
  %v25 = vld [vmem:[%s0 + $0x8] sm:$0xff]
  %v26 = vld [vmem:[%s0 + $0x10] sm:$0xff]
  %v27 = vld [vmem:[%s0 + $0x18] sm:$0xff]
  %v28 = vld [vmem:[%s0 + $0x20] sm:$0xff]
  %v29 = vld [vmem:[%s0 + $0x28] sm:$0xff]
  %v30 = vld [vmem:[%s0 + $0x30] sm:$0xff]
  %v31 = vld [vmem:[%s0 + $0x38] sm:$0xff]
  %v32 = vld [vmem:[%s0 + $0x40] sm:$0xff]
  %v33 = vld [vmem:[%s0 + $0x48] sm:$0xff]
  %v34 = vld [vmem:[%s0 + $0x50] sm:$0xff]
  %v35 = vld [vmem:[%s0 + $0x58] sm:$0xff]
  %v36 = vld [vmem:[%s0 + $0x60] sm:$0xff]
  %v37 = vld [vmem:[%s0 + $0x68] sm:$0xff]
  %v38 = vld [vmem:[%s0 + $0x70] sm:$0xff]
  %v39 = vld [vmem:[%s0 + $0x78] sm:$0xff]
  %v40 = vld [vmem:[%s0 + $0x80] sm:$0xff]
  %v41 = vld [vmem:[%s0 + $0x88] sm:$0xff]
  %v42 = vld [vmem:[%s0 + $0x90] sm:$0xff]
  %v43 = vld [vmem:[%s0 + $0x98] sm:$0xff]
  %v44 = vld [vmem:[%s0 + $0xa0] sm:$0xff]
  %v45 = vld [vmem:[%s0 + $0xa8] sm:$0xff]
  %v46 = vld [vmem:[%s0 + $0xb0] sm:$0xff]
  %v47 = vld [vmem:[%s0 + $0xb8] sm:$0xff]
  %v48 = vld [vmem:[%s0 + $0xc0] sm:$0xff]
  %v49 = vld [vmem:[%s0 + $0xc8] sm:$0xff]
  %v50 = vld [vmem:[%s0 + $0xd0] sm:$0xff]
  %v51 = vld [vmem:[%s0 + $0xd8] sm:$0xff]
  %v52 = vld [vmem:[%s0 + $0xe0] sm:$0xff]
  %v53 = vld [vmem:[%s0 + $0xe8] sm:$0xff]
  %v54 = vld [vmem:[%s0 + $0xf0] sm:$0xff]
  %v55 = vld [vmem:[%s0 + $0xf8] sm:$0xff]
  %v56 = vld [vmem:[%s0 + $0x100] sm:$0xff]
  %v57 = vld [vmem:[%s0 + $0x108] sm:$0xff]
  %v58 = vld [vmem:[%s0 + $0x110] sm:$0xff]
  %v59 = vld [vmem:[%s0 + $0x118] sm:$0xff]
  %v60 = vld [vmem:[%s0 + $0x120] sm:$0xff]
  %v61 = vld [vmem:[%s0 + $0x128] sm:$0xff]
  %v62 = vld [vmem:[%s0 + $0x130] sm:$0xff]
  %v63 = vld [vmem:[%s0 + $0x138] sm:$0xff]
  %v64 = vld [vmem:[%s0 + $0x140] sm:$0xff]
  %v65 = vld [vmem:[%s0 + $0x148] sm:$0xff]
  %v66 = vld [vmem:[%s0 + $0x150] sm:$0xff]
  %v67 = vld [vmem:[%s0 + $0x158] sm:$0xff]
  %v68 = vld [vmem:[%s0 + $0x160] sm:$0xff]
  %v69 = vld [vmem:[%s0 + $0x168] sm:$0xff]
  %v70 = vld [vmem:[%s0 + $0x170] sm:$0xff]
  %v71 = vld [vmem:[%s0 + $0x178] sm:$0xff]
  %v72 = vld [vmem:[%s0 + $0x180] sm:$0xff]
  %v73 = vld [vmem:[%s0 + $0x188] sm:$0xff]
  %v74 = vld [vmem:[%s0 + $0x190] sm:$0xff]
  %v75 = vld [vmem:[%s0 + $0x198] sm:$0xff]
  %v76 = vld [vmem:[%s0 + $0x1a0] sm:$0xff]
  %v77 = vld [vmem:[%s0 + $0x1a8] sm:$0xff]
  %v78 = vld [vmem:[%s0 + $0x1b0] sm:$0xff]
  %v79 = vld [vmem:[%s0 + $0x1b8] sm:$0xff]
  %v80 = vld [vmem:[%s0 + $0x1c0] sm:$0x11]
  %vm81 = vcmp.ge.bf16.partialorder %v24, 0
  %vm82 = vcmp.ge.bf16.partialorder %v25, 0
  %vm83 = vcmp.ge.bf16.partialorder %v26, 0
  %vm84 = vcmp.ge.bf16.partialorder %v27, 0
  %vm85 = vcmp.ge.bf16.partialorder %v28, 0
  %vm86 = vcmp.ge.bf16.partialorder %v29, 0
  %vm87 = vcmp.ge.bf16.partialorder %v30, 0
  %vm88 = vcmp.ge.bf16.partialorder %v31, 0
  %vm89 = vcmp.ge.bf16.partialorder %v32, 0
  %vm90 = vcmp.ge.bf16.partialorder %v33, 0
  %vm91 = vcmp.ge.bf16.partialorder %v34, 0
  %vm92 = vcmp.ge.bf16.partialorder %v35, 0
  %vm93 = vcmp.ge.bf16.partialorder %v36, 0
  %vm94 = vcmp.ge.bf16.partialorder %v37, 0
  %vm95 = vcmp.ge.bf16.partialorder %v38, 0
  %vm96 = vcmp.ge.bf16.partialorder %v39, 0
  %vm97 = vcmp.ge.bf16.partialorder %v40, 0
  %vm98 = vcmp.ge.bf16.partialorder %v41, 0
  %vm99 = vcmp.ge.bf16.partialorder %v42, 0
  %vm100 = vcmp.ge.bf16.partialorder %v43, 0
  %vm101 = vcmp.ge.bf16.partialorder %v44, 0
  %vm102 = vcmp.ge.bf16.partialorder %v45, 0
  %vm103 = vcmp.ge.bf16.partialorder %v46, 0
  %vm104 = vcmp.ge.bf16.partialorder %v47, 0
  %vm105 = vcmp.ge.bf16.partialorder %v48, 0
  %vm106 = vcmp.ge.bf16.partialorder %v49, 0
  %vm107 = vcmp.ge.bf16.partialorder %v50, 0
  %vm108 = vcmp.ge.bf16.partialorder %v51, 0
  %vm109 = vcmp.ge.bf16.partialorder %v52, 0
  %vm110 = vcmp.ge.bf16.partialorder %v53, 0
  %vm111 = vcmp.ge.bf16.partialorder %v54, 0
  %vm112 = vcmp.ge.bf16.partialorder %v55, 0
  %vm113 = vcmp.ge.bf16.partialorder %v56, 0
  %vm114 = vcmp.ge.bf16.partialorder %v57, 0
  %vm115 = vcmp.ge.bf16.partialorder %v58, 0
  %vm116 = vcmp.ge.bf16.partialorder %v59, 0
  %vm117 = vcmp.ge.bf16.partialorder %v60, 0
  %vm118 = vcmp.ge.bf16.partialorder %v61, 0
  %vm119 = vcmp.ge.bf16.partialorder %v62, 0
  %vm120 = vcmp.ge.bf16.partialorder %v63, 0
  %vm121 = vcmp.ge.bf16.partialorder %v64, 0
  %vm122 = vcmp.ge.bf16.partialorder %v65, 0
  %vm123 = vcmp.ge.bf16.partialorder %v66, 0
  %vm124 = vcmp.ge.bf16.partialorder %v67, 0
  %vm125 = vcmp.ge.bf16.partialorder %v68, 0
  %vm126 = vcmp.ge.bf16.partialorder %v69, 0
  %vm127 = vcmp.ge.bf16.partialorder %v70, 0
  %vm128 = vcmp.ge.bf16.partialorder %v71, 0
  %vm129 = vcmp.ge.bf16.partialorder %v72, 0
  %vm130 = vcmp.ge.bf16.partialorder %v73, 0
  %vm131 = vcmp.ge.bf16.partialorder %v74, 0
  %vm132 = vcmp.ge.bf16.partialorder %v75, 0
  %vm133 = vcmp.ge.bf16.partialorder %v76, 0
  %vm134 = vcmp.ge.bf16.partialorder %v77, 0
  %vm135 = vcmp.ge.bf16.partialorder %v78, 0
  %vm136 = vcmp.ge.bf16.partialorder %v79, 0
  %vm137 = vcmp.ge.bf16.partialorder %v80, 0
  %v138 = vmul.bf16 %v24, 1009007652
  %v139 = vmul.bf16 %v25, 1009007652
  %v140 = vmul.bf16 %v26, 1009007652
  %v141 = vmul.bf16 %v27, 1009007652
  %v142 = vmul.bf16 %v28, 1009007652
  %v143 = vmul.bf16 %v29, 1009007652
  %v144 = vmul.bf16 %v30, 1009007652
  %v145 = vmul.bf16 %v31, 1009007652
  %v146 = vmul.bf16 %v32, 1009007652
  %v147 = vmul.bf16 %v33, 1009007652
  %v148 = vmul.bf16 %v34, 1009007652
  %v149 = vmul.bf16 %v35, 1009007652
  %v150 = vmul.bf16 %v36, 1009007652
  %v151 = vmul.bf16 %v37, 1009007652
  %v152 = vmul.bf16 %v38, 1009007652
  %v153 = vmul.bf16 %v39, 1009007652
  %v154 = vmul.bf16 %v40, 1009007652
  %v155 = vmul.bf16 %v41, 1009007652
  %v156 = vmul.bf16 %v42, 1009007652
  %v157 = vmul.bf16 %v43, 1009007652
  %v158 = vmul.bf16 %v44, 1009007652
  %v159 = vmul.bf16 %v45, 1009007652
  %v160 = vmul.bf16 %v46, 1009007652
  %v161 = vmul.bf16 %v47, 1009007652
  %v162 = vmul.bf16 %v48, 1009007652
  %v163 = vmul.bf16 %v49, 1009007652
  %v164 = vmul.bf16 %v50, 1009007652
  %v165 = vmul.bf16 %v51, 1009007652
  %v166 = vmul.bf16 %v52, 1009007652
  %v167 = vmul.bf16 %v53, 1009007652
  %v168 = vmul.bf16 %v54, 1009007652
  %v169 = vmul.bf16 %v55, 1009007652
  %v170 = vmul.bf16 %v56, 1009007652
  %v171 = vmul.bf16 %v57, 1009007652
  %v172 = vmul.bf16 %v58, 1009007652
  %v173 = vmul.bf16 %v59, 1009007652
  %v174 = vmul.bf16 %v60, 1009007652
  %v175 = vmul.bf16 %v61, 1009007652
  %v176 = vmul.bf16 %v62, 1009007652
  %v177 = vmul.bf16 %v63, 1009007652
  %v178 = vmul.bf16 %v64, 1009007652
  %v179 = vmul.bf16 %v65, 1009007652
  %v180 = vmul.bf16 %v66, 1009007652
  %v181 = vmul.bf16 %v67, 1009007652
  %v182 = vmul.bf16 %v68, 1009007652
  %v183 = vmul.bf16 %v69, 1009007652
  %v184 = vmul.bf16 %v70, 1009007652
  %v185 = vmul.bf16 %v71, 1009007652
  %v186 = vmul.bf16 %v72, 1009007652
  %v187 = vmul.bf16 %v73, 1009007652
  %v188 = vmul.bf16 %v74, 1009007652
  %v189 = vmul.bf16 %v75, 1009007652
  %v190 = vmul.bf16 %v76, 1009007652
  %v191 = vmul.bf16 %v77, 1009007652
  %v192 = vmul.bf16 %v78, 1009007652
  %v193 = vmul.bf16 %v79, 1009007652
  %v194 = vmul.bf16 %v80, 1009007652
  %v195 = vsel %vm81, %v24, %v138
  %v196 = vsel %vm82, %v25, %v139
  %v197 = vsel %vm83, %v26, %v140
  %v198 = vsel %vm84, %v27, %v141
  %v199 = vsel %vm85, %v28, %v142
  %v200 = vsel %vm86, %v29, %v143
  %v201 = vsel %vm87, %v30, %v144
  %v202 = vsel %vm88, %v31, %v145
  %v203 = vsel %vm89, %v32, %v146
  %v204 = vsel %vm90, %v33, %v147
  %v205 = vsel %vm91, %v34, %v148
  %v206 = vsel %vm92, %v35, %v149
  %v207 = vsel %vm93, %v36, %v150
  %v208 = vsel %vm94, %v37, %v151
  %v209 = vsel %vm95, %v38, %v152
  %v210 = vsel %vm96, %v39, %v153
  %v211 = vsel %vm97, %v40, %v154
  %v212 = vsel %vm98, %v41, %v155
  %v213 = vsel %vm99, %v42, %v156
  %v214 = vsel %vm100, %v43, %v157
  %v215 = vsel %vm101, %v44, %v158
  %v216 = vsel %vm102, %v45, %v159
  %v217 = vsel %vm103, %v46, %v160
  %v218 = vsel %vm104, %v47, %v161
  %v219 = vsel %vm105, %v48, %v162
  %v220 = vsel %vm106, %v49, %v163
  %v221 = vsel %vm107, %v50, %v164
  %v222 = vsel %vm108, %v51, %v165
  %v223 = vsel %vm109, %v52, %v166
  %v224 = vsel %vm110, %v53, %v167
  %v225 = vsel %vm111, %v54, %v168
  %v226 = vsel %vm112, %v55, %v169
  %v227 = vsel %vm113, %v56, %v170
  %v228 = vsel %vm114, %v57, %v171
  %v229 = vsel %vm115, %v58, %v172
  %v230 = vsel %vm116, %v59, %v173
  %v231 = vsel %vm117, %v60, %v174
  %v232 = vsel %vm118, %v61, %v175
  %v233 = vsel %vm119, %v62, %v176
  %v234 = vsel %vm120, %v63, %v177
  %v235 = vsel %vm121, %v64, %v178
  %v236 = vsel %vm122, %v65, %v179
  %v237 = vsel %vm123, %v66, %v180
  %v238 = vsel %vm124, %v67, %v181
  %v239 = vsel %vm125, %v68, %v182
  %v240 = vsel %vm126, %v69, %v183
  %v241 = vsel %vm127, %v70, %v184
  %v242 = vsel %vm128, %v71, %v185
  %v243 = vsel %vm129, %v72, %v186
  %v244 = vsel %vm130, %v73, %v187
  %v245 = vsel %vm131, %v74, %v188
  %v246 = vsel %vm132, %v75, %v189
  %v247 = vsel %vm133, %v76, %v190
  %v248 = vsel %vm134, %v77, %v191
  %v249 = vsel %vm135, %v78, %v192
  %v250 = vsel %vm136, %v79, %v193
  %v251 = vsel %vm137, %v80, %v194
  %v252 = vld [vmem:[%s1] sm:$0xf]
  %v253 = vld [vmem:[%s1 + $0x4] sm:$0xf]
  %v254 = vld [vmem:[%s1 + $0x8] sm:$0xf]
  %v255 = vld [vmem:[%s1 + $0xc] sm:$0xf]
  %v256 = vld [vmem:[%s1 + $0x10] sm:$0xf]
  %v257 = vld [vmem:[%s1 + $0x14] sm:$0xf]
  %v258 = vld [vmem:[%s1 + $0x18] sm:$0xf]
  %v259 = vld [vmem:[%s1 + $0x1c] sm:$0xf]
  %v260 = vld [vmem:[%s1 + $0x20] sm:$0xf]
  %v261 = vld [vmem:[%s1 + $0x24] sm:$0xf]
  %v262 = vld [vmem:[%s1 + $0x28] sm:$0xf]
  %v263 = vld [vmem:[%s1 + $0x2c] sm:$0xf]
  %v264 = vld [vmem:[%s1 + $0x30] sm:$0xf]
  %v265 = vld [vmem:[%s1 + $0x34] sm:$0xf]
  %v266 = vld [vmem:[%s1 + $0x38] sm:$0xf]
  %v267 = vld [vmem:[%s1 + $0x3c] sm:$0xf]
  %v268 = vld [vmem:[%s1 + $0x40] sm:$0xf]
  %v269 = vld [vmem:[%s1 + $0x44] sm:$0xf]
  %v270 = vld [vmem:[%s1 + $0x48] sm:$0xf]
  %v271 = vld [vmem:[%s1 + $0x4c] sm:$0xf]
  %v272 = vld [vmem:[%s1 + $0x50] sm:$0xf]
  %v273 = vld [vmem:[%s1 + $0x54] sm:$0xf]
  %v274 = vld [vmem:[%s1 + $0x58] sm:$0xf]
  %v275 = vld [vmem:[%s1 + $0x5c] sm:$0xf]
  %v276 = vld [vmem:[%s1 + $0x60] sm:$0xf]
  %v277 = vld [vmem:[%s2] sm:$0x1]
  %v279 = vlaneseq
  %v280 = vshrl.u32 %v279, 7
  %v281 = vsub.s32 0, %v280
  %v282 = vrot.slane %v277, %v281
  %v341 = vunpack.c.l.b16 %v195
  %v342 = vunpack.c.h.b16 %v195
  %v343 = vunpack.c.l.b16 %v196
  %v344 = vunpack.c.h.b16 %v196
  %v345 = vunpack.c.l.b16 %v197
  %v346 = vunpack.c.h.b16 %v197
  %v347 = vunpack.c.l.b16 %v198
  %v348 = vunpack.c.h.b16 %v198
  %v349 = vunpack.c.l.b16 %v199
  %v350 = vunpack.c.h.b16 %v199
  %v351 = vunpack.c.l.b16 %v200
  %v352 = vunpack.c.h.b16 %v200
  %v353 = vunpack.c.l.b16 %v201
  %v354 = vunpack.c.h.b16 %v201
  %v355 = vunpack.c.l.b16 %v202
  %v356 = vunpack.c.h.b16 %v202
  %v357 = vunpack.c.l.b16 %v203
  %v358 = vunpack.c.h.b16 %v203
  %v359 = vunpack.c.l.b16 %v204
  %v360 = vunpack.c.h.b16 %v204
  %v361 = vunpack.c.l.b16 %v205
  %v362 = vunpack.c.h.b16 %v205
  %v363 = vunpack.c.l.b16 %v206
  %v364 = vunpack.c.h.b16 %v206
  %v365 = vunpack.c.l.b16 %v207
  %v366 = vunpack.c.h.b16 %v207
  %v367 = vunpack.c.l.b16 %v208
  %v368 = vunpack.c.h.b16 %v208
  %v369 = vunpack.c.l.b16 %v209
  %v370 = vunpack.c.h.b16 %v209
  %v371 = vunpack.c.l.b16 %v210
  %v372 = vunpack.c.h.b16 %v210
  %v373 = vunpack.c.l.b16 %v211
  %v374 = vunpack.c.h.b16 %v211
  %v375 = vunpack.c.l.b16 %v212
  %v376 = vunpack.c.h.b16 %v212
  %v377 = vunpack.c.l.b16 %v213
  %v378 = vunpack.c.h.b16 %v213
  %v379 = vunpack.c.l.b16 %v214
  %v380 = vunpack.c.h.b16 %v214
  %v381 = vunpack.c.l.b16 %v215
  %v382 = vunpack.c.h.b16 %v215
  %v383 = vunpack.c.l.b16 %v216
  %v384 = vunpack.c.h.b16 %v216
  %v385 = vunpack.c.l.b16 %v217
  %v386 = vunpack.c.h.b16 %v217
  %v387 = vunpack.c.l.b16 %v218
  %v388 = vunpack.c.h.b16 %v218
  %v389 = vunpack.c.l.b16 %v219
  %v390 = vunpack.c.h.b16 %v219
  %v391 = vunpack.c.l.b16 %v220
  %v392 = vunpack.c.h.b16 %v220
  %v393 = vunpack.c.l.b16 %v221
  %v394 = vunpack.c.h.b16 %v221
  %v395 = vunpack.c.l.b16 %v222
  %v396 = vunpack.c.h.b16 %v222
  %v397 = vunpack.c.l.b16 %v223
  %v398 = vunpack.c.h.b16 %v223
  %v399 = vunpack.c.l.b16 %v224
  %v400 = vunpack.c.h.b16 %v224
  %v401 = vunpack.c.l.b16 %v225
  %v402 = vunpack.c.h.b16 %v225
  %v403 = vunpack.c.l.b16 %v226
  %v404 = vunpack.c.h.b16 %v226
  %v405 = vunpack.c.l.b16 %v227
  %v406 = vunpack.c.h.b16 %v227
  %v407 = vunpack.c.l.b16 %v228
  %v408 = vunpack.c.h.b16 %v228
  %v409 = vunpack.c.l.b16 %v229
  %v410 = vunpack.c.h.b16 %v229
  %v411 = vunpack.c.l.b16 %v230
  %v412 = vunpack.c.h.b16 %v230
  %v413 = vunpack.c.l.b16 %v231
  %v414 = vunpack.c.h.b16 %v231
  %v415 = vunpack.c.l.b16 %v232
  %v416 = vunpack.c.h.b16 %v232
  %v417 = vunpack.c.l.b16 %v233
  %v418 = vunpack.c.h.b16 %v233
  %v419 = vunpack.c.l.b16 %v234
  %v420 = vunpack.c.h.b16 %v234
  %v421 = vunpack.c.l.b16 %v235
  %v422 = vunpack.c.h.b16 %v235
  %v423 = vunpack.c.l.b16 %v236
  %v424 = vunpack.c.h.b16 %v236
  %v425 = vunpack.c.l.b16 %v237
  %v426 = vunpack.c.h.b16 %v237
  %v427 = vunpack.c.l.b16 %v238
  %v428 = vunpack.c.h.b16 %v238
  %v429 = vunpack.c.l.b16 %v239
  %v430 = vunpack.c.h.b16 %v239
  %v431 = vunpack.c.l.b16 %v240
  %v432 = vunpack.c.h.b16 %v240
  %v433 = vunpack.c.l.b16 %v241
  %v434 = vunpack.c.h.b16 %v241
  %v435 = vunpack.c.l.b16 %v242
  %v436 = vunpack.c.h.b16 %v242
  %v437 = vunpack.c.l.b16 %v243
  %v438 = vunpack.c.h.b16 %v243
  %v439 = vunpack.c.l.b16 %v244
  %v440 = vunpack.c.h.b16 %v244
  %v441 = vunpack.c.l.b16 %v245
  %v442 = vunpack.c.h.b16 %v245
  %v443 = vunpack.c.l.b16 %v246
  %v444 = vunpack.c.h.b16 %v246
  %v445 = vunpack.c.l.b16 %v247
  %v446 = vunpack.c.h.b16 %v247
  %v447 = vunpack.c.l.b16 %v248
  %v448 = vunpack.c.h.b16 %v248
  %v449 = vunpack.c.l.b16 %v249
  %v450 = vunpack.c.h.b16 %v249
  %v451 = vunpack.c.l.b16 %v250
  %v452 = vunpack.c.h.b16 %v250
  %v453 = vunpack.c.l.b16 %v251
  %v454 = vunpack.c.h.b16 %v251
  %v455 = vpack.c.b16 %v343, %v341
  %v456 = vpack.c.b16 %v344, %v342
  %v457 = vpack.c.b16 %v347, %v345
  %v458 = vpack.c.b16 %v348, %v346
  %v459 = vpack.c.b16 %v351, %v349
  %v460 = vpack.c.b16 %v352, %v350
  %v461 = vpack.c.b16 %v355, %v353
  %v462 = vpack.c.b16 %v356, %v354
  %v463 = vpack.c.b16 %v359, %v357
  %v464 = vpack.c.b16 %v360, %v358
  %v465 = vpack.c.b16 %v363, %v361
  %v466 = vpack.c.b16 %v364, %v362
  %v467 = vpack.c.b16 %v367, %v365
  %v468 = vpack.c.b16 %v368, %v366
  %v469 = vpack.c.b16 %v371, %v369
  %v470 = vpack.c.b16 %v372, %v370
  %v471 = vpack.c.b16 %v375, %v373
  %v472 = vpack.c.b16 %v376, %v374
  %v473 = vpack.c.b16 %v379, %v377
  %v474 = vpack.c.b16 %v380, %v378
  %v475 = vpack.c.b16 %v383, %v381
  %v476 = vpack.c.b16 %v384, %v382
  %v477 = vpack.c.b16 %v387, %v385
  %v478 = vpack.c.b16 %v388, %v386
  %v479 = vpack.c.b16 %v391, %v389
  %v480 = vpack.c.b16 %v392, %v390
  %v481 = vpack.c.b16 %v395, %v393
  %v482 = vpack.c.b16 %v396, %v394
  %v483 = vpack.c.b16 %v399, %v397
  %v484 = vpack.c.b16 %v400, %v398
  %v485 = vpack.c.b16 %v403, %v401
  %v486 = vpack.c.b16 %v404, %v402
  %v487 = vpack.c.b16 %v407, %v405
  %v488 = vpack.c.b16 %v408, %v406
  %v489 = vpack.c.b16 %v411, %v409
  %v490 = vpack.c.b16 %v412, %v410
  %v491 = vpack.c.b16 %v415, %v413
  %v492 = vpack.c.b16 %v416, %v414
  %v493 = vpack.c.b16 %v419, %v417
  %v494 = vpack.c.b16 %v420, %v418
  %v495 = vpack.c.b16 %v423, %v421
  %v496 = vpack.c.b16 %v424, %v422
  %v497 = vpack.c.b16 %v427, %v425
  %v498 = vpack.c.b16 %v428, %v426
  %v499 = vpack.c.b16 %v431, %v429
  %v500 = vpack.c.b16 %v432, %v430
  %v501 = vpack.c.b16 %v435, %v433
  %v502 = vpack.c.b16 %v436, %v434
  %v503 = vpack.c.b16 %v439, %v437
  %v504 = vpack.c.b16 %v440, %v438
  %v505 = vpack.c.b16 %v443, %v441
  %v506 = vpack.c.b16 %v444, %v442
  %v507 = vpack.c.b16 %v447, %v445
  %v508 = vpack.c.b16 %v448, %v446
  %v509 = vpack.c.b16 %v451, %v449
  %v510 = vpack.c.b16 %v452, %v450
  %v511 = vpack.c.b16 %v453, %v453
  %v512 = vpack.c.b16 %v454, %v454
  %v567 = vunpack.c.l.b16 %v252
  %v568 = vunpack.c.l.b16 %v253
  %v569 = vunpack.c.l.b16 %v254
  %v570 = vunpack.c.l.b16 %v255
  %v571 = vunpack.c.l.b16 %v256
  %v572 = vunpack.c.l.b16 %v257
  %v573 = vunpack.c.l.b16 %v258
  %v574 = vunpack.c.l.b16 %v259
  %v575 = vunpack.c.l.b16 %v260
  %v576 = vunpack.c.l.b16 %v261
  %v577 = vunpack.c.l.b16 %v262
  %v578 = vunpack.c.l.b16 %v263
  %v579 = vunpack.c.l.b16 %v264
  %v580 = vunpack.c.l.b16 %v265
  %v581 = vunpack.c.l.b16 %v266
  %v582 = vunpack.c.l.b16 %v267
  %v583 = vunpack.c.l.b16 %v268
  %v584 = vunpack.c.l.b16 %v269
  %v585 = vunpack.c.l.b16 %v270
  %v586 = vunpack.c.l.b16 %v271
  %v587 = vunpack.c.l.b16 %v272
  %v588 = vunpack.c.l.b16 %v273
  %v589 = vunpack.c.l.b16 %v274
  %v590 = vunpack.c.l.b16 %v275
  %v591 = vunpack.c.l.b16 %v276
  %v592 = vpack.c.b16 %v568, %v567
  %v593 = vpack.c.b16 %v570, %v569
  %v594 = vpack.c.b16 %v572, %v571
  %v595 = vpack.c.b16 %v574, %v573
  %v596 = vpack.c.b16 %v576, %v575
  %v597 = vpack.c.b16 %v578, %v577
  %v598 = vpack.c.b16 %v580, %v579
  %v599 = vpack.c.b16 %v582, %v581
  %v600 = vpack.c.b16 %v584, %v583
  %v601 = vpack.c.b16 %v586, %v585
  %v602 = vpack.c.b16 %v588, %v587
  %v603 = vpack.c.b16 %v590, %v589
  %v604 = vpack.c.b16 %v591, %v591
  %vm617 = vcmask 588800
  %v619 = vsel %vm617, %v456, 0
  %v622 = vsel %vm617, %v458, 0
  %v625 = vsel %vm617, %v460, 0
  %v628 = vsel %vm617, %v462, 0
  %v631 = vsel %vm617, %v464, 0
  %v634 = vsel %vm617, %v466, 0
  %v637 = vsel %vm617, %v468, 0
  %v640 = vsel %vm617, %v470, 0
  %v643 = vsel %vm617, %v472, 0
  %v646 = vsel %vm617, %v474, 0
  %v649 = vsel %vm617, %v476, 0
  %v652 = vsel %vm617, %v478, 0
  %v655 = vsel %vm617, %v480, 0
  %v658 = vsel %vm617, %v482, 0
  %v661 = vsel %vm617, %v484, 0
  %v664 = vsel %vm617, %v486, 0
  %v667 = vsel %vm617, %v488, 0
  %v670 = vsel %vm617, %v490, 0
  %v673 = vsel %vm617, %v492, 0
  %v676 = vsel %vm617, %v494, 0
  %v679 = vsel %vm617, %v496, 0
  %v682 = vsel %vm617, %v498, 0
  %v685 = vsel %vm617, %v500, 0
  %v688 = vsel %vm617, %v502, 0
  %v691 = vsel %vm617, %v504, 0
  %v694 = vsel %vm617, %v506, 0
  %v697 = vsel %vm617, %v508, 0
  %v700 = vsel %vm617, %v510, 0
  %v703 = vsel %vm617, %v512, 0
  %vm705 = vcmask 1043456
  %v707 = vsel %vm705, %v604, 0
  %709 = vmatprep.subr.bf16.mxu0 0
  %710 = vmatpush1.bf16.msra.mxu0 %v599
  %711 = vmatprep.subr.bf16.mxu0 0
  %712 = vmatpush1.bf16.msra.mxu0 %v598
  %713 = vmatprep.subr.bf16.mxu0 0
  %714 = vmatpush1.bf16.msra.mxu0 %v597
  %715 = vmatprep.subr.bf16.mxu0 0
  %716 = vmatpush1.bf16.msra.mxu0 %v596
  %717 = vmatprep.subr.bf16.mxu0 0
  %718 = vmatpush1.bf16.msra.mxu0 %v595
  %719 = vmatprep.subr.bf16.mxu0 0
  %720 = vmatpush1.bf16.msra.mxu0 %v594
  %721 = vmatprep.subr.bf16.mxu0 0
  %722 = vmatpush1.bf16.msra.mxu0 %v593
  %723 = vmatprep.subr.bf16.mxu0 0
  %724 = vmatpush1.bf16.msra.mxu0 %v592
  %725 = vmatprep.subr.bf16.mxu0 0
  %726 = vmatpush2.bf16.msra.mxu0 0
  %727 = vmatprep.subr.bf16.mxu0 0
  %728 = vmatpush2.bf16.msra.mxu0 0
  %729 = vmatprep.subr.bf16.mxu0 0
  %730 = vmatpush2.bf16.msra.mxu0 0
  %731 = vmatprep.subr.bf16.mxu0 0
  %732 = vmatpush2.bf16.msra.mxu0 %v707
  %733 = vmatprep.subr.bf16.mxu0 0
  %734 = vmatpush2.bf16.msra.mxu0 %v603
  %735 = vmatprep.subr.bf16.mxu0 0
  %736 = vmatpush2.bf16.msra.mxu0 %v602
  %737 = vmatprep.subr.bf16.mxu0 0
  %738 = vmatpush2.bf16.msra.mxu0 %v601
  %739 = vmatprep.subr.bf16.mxu0 0
  %740 = vmatpush2.bf16.msra.mxu0 %v600
  %741 = vmatprep.mubr.bf16.mxu0 %v619
  %742 = vmatmul.mubr.bf16.gmra.mxu0 %v455
  %v743 = vpop.f32.mrf.mxu0
  %v744 = vadd.f32 %v282, %v743
  %v745 = vpop.f32.mrf.mxu0
  %v746 = vpop.f32.mrf.mxu0
  %v747 = vadd.f32 %v282, %v746
  %v748 = vpop.f32.mrf.mxu0
  %749 = vmatprep.mubr.bf16.mxu0 %v622
  %750 = vmatmul.mubr.bf16.gmra.mxu0 %v457
  %v751 = vpop.f32.mrf.mxu0
  %v752 = vadd.f32 %v282, %v751
  %v753 = vpop.f32.mrf.mxu0
  %v754 = vpop.f32.mrf.mxu0
  %v755 = vadd.f32 %v282, %v754
  %v756 = vpop.f32.mrf.mxu0
  %757 = vmatprep.mubr.bf16.mxu0 %v625
  %758 = vmatmul.mubr.bf16.gmra.mxu0 %v459
  %v759 = vpop.f32.mrf.mxu0
  %v760 = vadd.f32 %v282, %v759
  %v761 = vpop.f32.mrf.mxu0
  %v762 = vpop.f32.mrf.mxu0
  %v763 = vadd.f32 %v282, %v762
  %v764 = vpop.f32.mrf.mxu0
  %765 = vmatprep.mubr.bf16.mxu0 %v628
  %766 = vmatmul.mubr.bf16.gmra.mxu0 %v461
  %v767 = vpop.f32.mrf.mxu0
  %v768 = vadd.f32 %v282, %v767
  %v769 = vpop.f32.mrf.mxu0
  %v770 = vpop.f32.mrf.mxu0
  %v771 = vadd.f32 %v282, %v770
  %v772 = vpop.f32.mrf.mxu0
  %773 = vmatprep.mubr.bf16.mxu0 %v631
  %774 = vmatmul.mubr.bf16.gmra.mxu0 %v463
  %v775 = vpop.f32.mrf.mxu0
  %v776 = vadd.f32 %v282, %v775
  %v777 = vpop.f32.mrf.mxu0
  %v778 = vpop.f32.mrf.mxu0
  %v779 = vadd.f32 %v282, %v778
  %v780 = vpop.f32.mrf.mxu0
  %781 = vmatprep.mubr.bf16.mxu0 %v634
  %782 = vmatmul.mubr.bf16.gmra.mxu0 %v465
  %v783 = vpop.f32.mrf.mxu0
  %v784 = vadd.f32 %v282, %v783
  %v785 = vpop.f32.mrf.mxu0
  %v786 = vpop.f32.mrf.mxu0
  %v787 = vadd.f32 %v282, %v786
  %v788 = vpop.f32.mrf.mxu0
  %789 = vmatprep.mubr.bf16.mxu0 %v637
  %790 = vmatmul.mubr.bf16.gmra.mxu0 %v467
  %v791 = vpop.f32.mrf.mxu0
  %v792 = vadd.f32 %v282, %v791
  %v793 = vpop.f32.mrf.mxu0
  %v794 = vpop.f32.mrf.mxu0
  %v795 = vadd.f32 %v282, %v794
  %v796 = vpop.f32.mrf.mxu0
  %797 = vmatprep.mubr.bf16.mxu0 %v640
  %798 = vmatmul.mubr.bf16.gmra.mxu0 %v469
  %v799 = vpop.f32.mrf.mxu0
  %v800 = vadd.f32 %v282, %v799
  %v801 = vpop.f32.mrf.mxu0
  %v802 = vpop.f32.mrf.mxu0
  %v803 = vadd.f32 %v282, %v802
  %v804 = vpop.f32.mrf.mxu0
  %805 = vmatprep.mubr.bf16.mxu0 %v643
  %806 = vmatmul.mubr.bf16.gmra.mxu0 %v471
  %v807 = vpop.f32.mrf.mxu0
  %v808 = vadd.f32 %v282, %v807
  %v809 = vpop.f32.mrf.mxu0
  %v810 = vpop.f32.mrf.mxu0
  %v811 = vadd.f32 %v282, %v810
  %v812 = vpop.f32.mrf.mxu0
  %813 = vmatprep.mubr.bf16.mxu0 %v646
  %814 = vmatmul.mubr.bf16.gmra.mxu0 %v473
  %v815 = vpop.f32.mrf.mxu0
  %v816 = vadd.f32 %v282, %v815
  %v817 = vpop.f32.mrf.mxu0
  %v818 = vpop.f32.mrf.mxu0
  %v819 = vadd.f32 %v282, %v818
  %v820 = vpop.f32.mrf.mxu0
  %821 = vmatprep.mubr.bf16.mxu0 %v649
  %822 = vmatmul.mubr.bf16.gmra.mxu0 %v475
  %v823 = vpop.f32.mrf.mxu0
  %v824 = vadd.f32 %v282, %v823
  %v825 = vpop.f32.mrf.mxu0
  %v826 = vpop.f32.mrf.mxu0
  %v827 = vadd.f32 %v282, %v826
  %v828 = vpop.f32.mrf.mxu0
  %829 = vmatprep.mubr.bf16.mxu0 %v652
  %830 = vmatmul.mubr.bf16.gmra.mxu0 %v477
  %v831 = vpop.f32.mrf.mxu0
  %v832 = vadd.f32 %v282, %v831
  %v833 = vpop.f32.mrf.mxu0
  %v834 = vpop.f32.mrf.mxu0
  %v835 = vadd.f32 %v282, %v834
  %v836 = vpop.f32.mrf.mxu0
  %837 = vmatprep.mubr.bf16.mxu0 %v655
  %838 = vmatmul.mubr.bf16.gmra.mxu0 %v479
  %v839 = vpop.f32.mrf.mxu0
  %v840 = vadd.f32 %v282, %v839
  %v841 = vpop.f32.mrf.mxu0
  %v842 = vpop.f32.mrf.mxu0
  %v843 = vadd.f32 %v282, %v842
  %v844 = vpop.f32.mrf.mxu0
  %845 = vmatprep.mubr.bf16.mxu0 %v658
  %846 = vmatmul.mubr.bf16.gmra.mxu0 %v481
  %v847 = vpop.f32.mrf.mxu0
  %v848 = vadd.f32 %v282, %v847
  %v849 = vpop.f32.mrf.mxu0
  %v850 = vpop.f32.mrf.mxu0
  %v851 = vadd.f32 %v282, %v850
  %v852 = vpop.f32.mrf.mxu0
  %853 = vmatprep.mubr.bf16.mxu0 %v661
  %854 = vmatmul.mubr.bf16.gmra.mxu0 %v483
  %v855 = vpop.f32.mrf.mxu0
  %v856 = vadd.f32 %v282, %v855
  %v857 = vpop.f32.mrf.mxu0
  %v858 = vpop.f32.mrf.mxu0
  %v859 = vadd.f32 %v282, %v858
  %v860 = vpop.f32.mrf.mxu0
  %861 = vmatprep.mubr.bf16.mxu0 %v664
  %862 = vmatmul.mubr.bf16.gmra.mxu0 %v485
  %v863 = vpop.f32.mrf.mxu0
  %v864 = vadd.f32 %v282, %v863
  %v865 = vpop.f32.mrf.mxu0
  %v866 = vpop.f32.mrf.mxu0
  %v867 = vadd.f32 %v282, %v866
  %v868 = vpop.f32.mrf.mxu0
  %869 = vmatprep.mubr.bf16.mxu0 %v667
  %870 = vmatmul.mubr.bf16.gmra.mxu0 %v487
  %v871 = vpop.f32.mrf.mxu0
  %v872 = vadd.f32 %v282, %v871
  %v873 = vpop.f32.mrf.mxu0
  %v874 = vpop.f32.mrf.mxu0
  %v875 = vadd.f32 %v282, %v874
  %v876 = vpop.f32.mrf.mxu0
  %877 = vmatprep.mubr.bf16.mxu0 %v670
  %878 = vmatmul.mubr.bf16.gmra.mxu0 %v489
  %v879 = vpop.f32.mrf.mxu0
  %v880 = vadd.f32 %v282, %v879
  %v881 = vpop.f32.mrf.mxu0
  %v882 = vpop.f32.mrf.mxu0
  %v883 = vadd.f32 %v282, %v882
  %v884 = vpop.f32.mrf.mxu0
  %885 = vmatprep.mubr.bf16.mxu0 %v673
  %886 = vmatmul.mubr.bf16.gmra.mxu0 %v491
  %v887 = vpop.f32.mrf.mxu0
  %v888 = vadd.f32 %v282, %v887
  %v889 = vpop.f32.mrf.mxu0
  %v890 = vpop.f32.mrf.mxu0
  %v891 = vadd.f32 %v282, %v890
  %v892 = vpop.f32.mrf.mxu0
  %893 = vmatprep.mubr.bf16.mxu0 %v676
  %894 = vmatmul.mubr.bf16.gmra.mxu0 %v493
  %v895 = vpop.f32.mrf.mxu0
  %v896 = vadd.f32 %v282, %v895
  %v897 = vpop.f32.mrf.mxu0
  %v898 = vpop.f32.mrf.mxu0
  %v899 = vadd.f32 %v282, %v898
  %v900 = vpop.f32.mrf.mxu0
  %901 = vmatprep.mubr.bf16.mxu0 %v679
  %902 = vmatmul.mubr.bf16.gmra.mxu0 %v495
  %v903 = vpop.f32.mrf.mxu0
  %v904 = vadd.f32 %v282, %v903
  %v905 = vpop.f32.mrf.mxu0
  %v906 = vpop.f32.mrf.mxu0
  %v907 = vadd.f32 %v282, %v906
  %v908 = vpop.f32.mrf.mxu0
  %909 = vmatprep.mubr.bf16.mxu0 %v682
  %910 = vmatmul.mubr.bf16.gmra.mxu0 %v497
  %v911 = vpop.f32.mrf.mxu0
  %v912 = vadd.f32 %v282, %v911
  %v913 = vpop.f32.mrf.mxu0
  %v914 = vpop.f32.mrf.mxu0
  %v915 = vadd.f32 %v282, %v914
  %v916 = vpop.f32.mrf.mxu0
  %917 = vmatprep.mubr.bf16.mxu0 %v685
  %918 = vmatmul.mubr.bf16.gmra.mxu0 %v499
  %v919 = vpop.f32.mrf.mxu0
  %v920 = vadd.f32 %v282, %v919
  %v921 = vpop.f32.mrf.mxu0
  %v922 = vpop.f32.mrf.mxu0
  %v923 = vadd.f32 %v282, %v922
  %v924 = vpop.f32.mrf.mxu0
  %925 = vmatprep.mubr.bf16.mxu0 %v688
  %926 = vmatmul.mubr.bf16.gmra.mxu0 %v501
  %v927 = vpop.f32.mrf.mxu0
  %v928 = vadd.f32 %v282, %v927
  %v929 = vpop.f32.mrf.mxu0
  %v930 = vpop.f32.mrf.mxu0
  %v931 = vadd.f32 %v282, %v930
  %v932 = vpop.f32.mrf.mxu0
  %933 = vmatprep.mubr.bf16.mxu0 %v691
  %934 = vmatmul.mubr.bf16.gmra.mxu0 %v503
  %v935 = vpop.f32.mrf.mxu0
  %v936 = vadd.f32 %v282, %v935
  %v937 = vpop.f32.mrf.mxu0
  %v938 = vpop.f32.mrf.mxu0
  %v939 = vadd.f32 %v282, %v938
  %v940 = vpop.f32.mrf.mxu0
  %941 = vmatprep.mubr.bf16.mxu0 %v694
  %942 = vmatmul.mubr.bf16.gmra.mxu0 %v505
  %v943 = vpop.f32.mrf.mxu0
  %v944 = vadd.f32 %v282, %v943
  %v945 = vpop.f32.mrf.mxu0
  %v946 = vpop.f32.mrf.mxu0
  %v947 = vadd.f32 %v282, %v946
  %v948 = vpop.f32.mrf.mxu0
  %949 = vmatprep.mubr.bf16.mxu0 %v697
  %950 = vmatmul.mubr.bf16.gmra.mxu0 %v507
  %v951 = vpop.f32.mrf.mxu0
  %v952 = vadd.f32 %v282, %v951
  %v953 = vpop.f32.mrf.mxu0
  %v954 = vpop.f32.mrf.mxu0
  %v955 = vadd.f32 %v282, %v954
  %v956 = vpop.f32.mrf.mxu0
  %957 = vmatprep.mubr.bf16.mxu0 %v700
  %958 = vmatmul.mubr.bf16.gmra.mxu0 %v509
  %v959 = vpop.f32.mrf.mxu0
  %v960 = vadd.f32 %v282, %v959
  %v961 = vpop.f32.mrf.mxu0
  %v962 = vpop.f32.mrf.mxu0
  %v963 = vadd.f32 %v282, %v962
  %v964 = vpop.f32.mrf.mxu0
  %965 = vmatprep.mubr.bf16.mxu0 %v703
  %966 = vmatmul.mubr.bf16.gmra.mxu0 %v511
  %v967 = vpop.f32.mrf.mxu0
  %v968 = vadd.f32 %v282, %v967
  %v969 = vpop.f32.mrf.mxu0
  %v970 = vpop.f32.mrf.mxu0
  %v971 = vpop.f32.mrf.mxu0
  %972 = vdwg.mxu0
  %vm973 = vcmask 130048
  %v974 = vsel %vm973, %v744, 0.0
  %v975 = vsel %vm973, %v747, 0.0
  %v976 = vadd.f32 %v974, %v975
  %v977 = vsel %vm973, %v752, 0.0
  %v978 = vadd.f32 %v976, %v977
  %v979 = vsel %vm973, %v755, 0.0
  %v980 = vadd.f32 %v978, %v979
  %v981 = vsel %vm973, %v760, 0.0
  %v982 = vadd.f32 %v980, %v981
  %v983 = vsel %vm973, %v763, 0.0
  %v984 = vadd.f32 %v982, %v983
  %v985 = vsel %vm973, %v768, 0.0
  %v986 = vadd.f32 %v984, %v985
  %v987 = vsel %vm973, %v771, 0.0
  %v988 = vadd.f32 %v986, %v987
  %v989 = vsel %vm973, %v776, 0.0
  %v990 = vadd.f32 %v988, %v989
  %v991 = vsel %vm973, %v779, 0.0
  %v992 = vadd.f32 %v990, %v991
  %v993 = vsel %vm973, %v784, 0.0
  %v994 = vadd.f32 %v992, %v993
  %v995 = vsel %vm973, %v787, 0.0
  %v996 = vadd.f32 %v994, %v995
  %v997 = vsel %vm973, %v792, 0.0
  %v998 = vadd.f32 %v996, %v997
  %v999 = vsel %vm973, %v795, 0.0
  %v1000 = vadd.f32 %v998, %v999
  %v1001 = vsel %vm973, %v800, 0.0
  %v1002 = vadd.f32 %v1000, %v1001
  %v1003 = vsel %vm973, %v803, 0.0
  %v1004 = vadd.f32 %v1002, %v1003
  %v1005 = vsel %vm973, %v808, 0.0
  %v1006 = vadd.f32 %v1004, %v1005
  %v1007 = vsel %vm973, %v811, 0.0
  %v1008 = vadd.f32 %v1006, %v1007
  %v1009 = vsel %vm973, %v816, 0.0
  %v1010 = vadd.f32 %v1008, %v1009
  %v1011 = vsel %vm973, %v819, 0.0
  %v1012 = vadd.f32 %v1010, %v1011
  %v1013 = vsel %vm973, %v824, 0.0
  %v1014 = vadd.f32 %v1012, %v1013
  %v1015 = vsel %vm973, %v827, 0.0
  %v1016 = vadd.f32 %v1014, %v1015
  %v1017 = vsel %vm973, %v832, 0.0
  %v1018 = vadd.f32 %v1016, %v1017
  %v1019 = vsel %vm973, %v835, 0.0
  %v1020 = vadd.f32 %v1018, %v1019
  %v1021 = vsel %vm973, %v840, 0.0
  %v1022 = vadd.f32 %v1020, %v1021
  %v1023 = vsel %vm973, %v843, 0.0
  %v1024 = vadd.f32 %v1022, %v1023
  %v1025 = vsel %vm973, %v848, 0.0
  %v1026 = vadd.f32 %v1024, %v1025
  %v1027 = vsel %vm973, %v851, 0.0
  %v1028 = vadd.f32 %v1026, %v1027
  %v1029 = vsel %vm973, %v856, 0.0
  %v1030 = vadd.f32 %v1028, %v1029
  %v1031 = vsel %vm973, %v859, 0.0
  %v1032 = vadd.f32 %v1030, %v1031
  %v1033 = vsel %vm973, %v864, 0.0
  %v1034 = vadd.f32 %v1032, %v1033
  %v1035 = vsel %vm973, %v867, 0.0
  %v1036 = vadd.f32 %v1034, %v1035
  %v1037 = vsel %vm973, %v872, 0.0
  %v1038 = vadd.f32 %v1036, %v1037
  %v1039 = vsel %vm973, %v875, 0.0
  %v1040 = vadd.f32 %v1038, %v1039
  %v1041 = vsel %vm973, %v880, 0.0
  %v1042 = vadd.f32 %v1040, %v1041
  %v1043 = vsel %vm973, %v883, 0.0
  %v1044 = vadd.f32 %v1042, %v1043
  %v1045 = vsel %vm973, %v888, 0.0
  %v1046 = vadd.f32 %v1044, %v1045
  %v1047 = vsel %vm973, %v891, 0.0
  %v1048 = vadd.f32 %v1046, %v1047
  %v1049 = vsel %vm973, %v896, 0.0
  %v1050 = vadd.f32 %v1048, %v1049
  %v1051 = vsel %vm973, %v899, 0.0
  %v1052 = vadd.f32 %v1050, %v1051
  %v1053 = vsel %vm973, %v904, 0.0
  %v1054 = vadd.f32 %v1052, %v1053
  %v1055 = vsel %vm973, %v907, 0.0
  %v1056 = vadd.f32 %v1054, %v1055
  %v1057 = vsel %vm973, %v912, 0.0
  %v1058 = vadd.f32 %v1056, %v1057
  %v1059 = vsel %vm973, %v915, 0.0
  %v1060 = vadd.f32 %v1058, %v1059
  %v1061 = vsel %vm973, %v920, 0.0
  %v1062 = vadd.f32 %v1060, %v1061
  %v1063 = vsel %vm973, %v923, 0.0
  %v1064 = vadd.f32 %v1062, %v1063
  %v1065 = vsel %vm973, %v928, 0.0
  %v1066 = vadd.f32 %v1064, %v1065
  %v1067 = vsel %vm973, %v931, 0.0
  %v1068 = vadd.f32 %v1066, %v1067
  %v1069 = vsel %vm973, %v936, 0.0
  %v1070 = vadd.f32 %v1068, %v1069
  %v1071 = vsel %vm973, %v939, 0.0
  %v1072 = vadd.f32 %v1070, %v1071
  %v1073 = vsel %vm973, %v944, 0.0
  %v1074 = vadd.f32 %v1072, %v1073
  %v1075 = vsel %vm973, %v947, 0.0
  %v1076 = vadd.f32 %v1074, %v1075
  %v1077 = vsel %vm973, %v952, 0.0
  %v1078 = vadd.f32 %v1076, %v1077
  %v1079 = vsel %vm973, %v955, 0.0
  %v1080 = vadd.f32 %v1078, %v1079
  %v1081 = vsel %vm973, %v960, 0.0
  %v1082 = vadd.f32 %v1080, %v1081
  %v1083 = vsel %vm973, %v963, 0.0
  %v1084 = vadd.f32 %v1082, %v1083
  %vm1085 = vcmask 123904
  %v1086 = vsel %vm1085, %v968, 0.0
  %v1087 = vadd.f32 %v1084, %v1086
  %v1088 = vrot.slane %v1087, 4
  %v1089 = vadd.f32 %v1087, %v1088
  %v1090 = vrot.slane %v1089, 2
  %v1091 = vadd.f32 %v1089, %v1090
  %v1092 = vrot.slane %v1091, 1
  %v1093 = vadd.f32 %v1091, %v1092
  %v1094 = vmul.f32 %v744, %v744
  %v1095 = vmul.f32 %v747, %v747
  %v1096 = vmul.f32 %v752, %v752
  %v1097 = vmul.f32 %v755, %v755
  %v1098 = vmul.f32 %v760, %v760
  %v1099 = vmul.f32 %v763, %v763
  %v1100 = vmul.f32 %v768, %v768
  %v1101 = vmul.f32 %v771, %v771
  %v1102 = vmul.f32 %v776, %v776
  %v1103 = vmul.f32 %v779, %v779
  %v1104 = vmul.f32 %v784, %v784
  %v1105 = vmul.f32 %v787, %v787
  %v1106 = vmul.f32 %v792, %v792
  %v1107 = vmul.f32 %v795, %v795
  %v1108 = vmul.f32 %v800, %v800
  %v1109 = vmul.f32 %v803, %v803
  %v1110 = vmul.f32 %v808, %v808
  %v1111 = vmul.f32 %v811, %v811
  %v1112 = vmul.f32 %v816, %v816
  %v1113 = vmul.f32 %v819, %v819
  %v1114 = vmul.f32 %v824, %v824
  %v1115 = vmul.f32 %v827, %v827
  %v1116 = vmul.f32 %v832, %v832
  %v1117 = vmul.f32 %v835, %v835
  %v1118 = vmul.f32 %v840, %v840
  %v1119 = vmul.f32 %v843, %v843
  %v1120 = vmul.f32 %v848, %v848
  %v1121 = vmul.f32 %v851, %v851
  %v1122 = vmul.f32 %v856, %v856
  %v1123 = vmul.f32 %v859, %v859
  %v1124 = vmul.f32 %v864, %v864
  %v1125 = vmul.f32 %v867, %v867
  %v1126 = vmul.f32 %v872, %v872
  %v1127 = vmul.f32 %v875, %v875
  %v1128 = vmul.f32 %v880, %v880
  %v1129 = vmul.f32 %v883, %v883
  %v1130 = vmul.f32 %v888, %v888
  %v1131 = vmul.f32 %v891, %v891
  %v1132 = vmul.f32 %v896, %v896
  %v1133 = vmul.f32 %v899, %v899
  %v1134 = vmul.f32 %v904, %v904
  %v1135 = vmul.f32 %v907, %v907
  %v1136 = vmul.f32 %v912, %v912
  %v1137 = vmul.f32 %v915, %v915
  %v1138 = vmul.f32 %v920, %v920
  %v1139 = vmul.f32 %v923, %v923
  %v1140 = vmul.f32 %v928, %v928
  %v1141 = vmul.f32 %v931, %v931
  %v1142 = vmul.f32 %v936, %v936
  %v1143 = vmul.f32 %v939, %v939
  %v1144 = vmul.f32 %v944, %v944
  %v1145 = vmul.f32 %v947, %v947
  %v1146 = vmul.f32 %v952, %v952
  %v1147 = vmul.f32 %v955, %v955
  %v1148 = vmul.f32 %v960, %v960
  %v1149 = vmul.f32 %v963, %v963
  %v1150 = vmul.f32 %v968, %v968
  %v1151 = vsel %vm973, %v1094, 0.0
  %v1152 = vsel %vm973, %v1095, 0.0
  %v1153 = vadd.f32 %v1151, %v1152
  %v1154 = vsel %vm973, %v1096, 0.0
  %v1155 = vadd.f32 %v1153, %v1154
  %v1156 = vsel %vm973, %v1097, 0.0
  %v1157 = vadd.f32 %v1155, %v1156
  %v1158 = vsel %vm973, %v1098, 0.0
  %v1159 = vadd.f32 %v1157, %v1158
  %v1160 = vsel %vm973, %v1099, 0.0
  %v1161 = vadd.f32 %v1159, %v1160
  %v1162 = vsel %vm973, %v1100, 0.0
  %v1163 = vadd.f32 %v1161, %v1162
  %v1164 = vsel %vm973, %v1101, 0.0
  %v1165 = vadd.f32 %v1163, %v1164
  %v1166 = vsel %vm973, %v1102, 0.0
  %v1167 = vadd.f32 %v1165, %v1166
  %v1168 = vsel %vm973, %v1103, 0.0
  %v1169 = vadd.f32 %v1167, %v1168
  %v1170 = vsel %vm973, %v1104, 0.0
  %v1171 = vadd.f32 %v1169, %v1170
  %v1172 = vsel %vm973, %v1105, 0.0
  %v1173 = vadd.f32 %v1171, %v1172
  %v1174 = vsel %vm973, %v1106, 0.0
  %v1175 = vadd.f32 %v1173, %v1174
  %v1176 = vsel %vm973, %v1107, 0.0
  %v1177 = vadd.f32 %v1175, %v1176
  %v1178 = vsel %vm973, %v1108, 0.0
  %v1179 = vadd.f32 %v1177, %v1178
  %v1180 = vsel %vm973, %v1109, 0.0
  %v1181 = vadd.f32 %v1179, %v1180
  %v1182 = vsel %vm973, %v1110, 0.0
  %v1183 = vadd.f32 %v1181, %v1182
  %v1184 = vsel %vm973, %v1111, 0.0
  %v1185 = vadd.f32 %v1183, %v1184
  %v1186 = vsel %vm973, %v1112, 0.0
  %v1187 = vadd.f32 %v1185, %v1186
  %v1188 = vsel %vm973, %v1113, 0.0
  %v1189 = vadd.f32 %v1187, %v1188
  %v1190 = vsel %vm973, %v1114, 0.0
  %v1191 = vadd.f32 %v1189, %v1190
  %v1192 = vsel %vm973, %v1115, 0.0
  %v1193 = vadd.f32 %v1191, %v1192
  %v1194 = vsel %vm973, %v1116, 0.0
  %v1195 = vadd.f32 %v1193, %v1194
  %v1196 = vsel %vm973, %v1117, 0.0
  %v1197 = vadd.f32 %v1195, %v1196
  %v1198 = vsel %vm973, %v1118, 0.0
  %v1199 = vadd.f32 %v1197, %v1198
  %v1200 = vsel %vm973, %v1119, 0.0
  %v1201 = vadd.f32 %v1199, %v1200
  %v1202 = vsel %vm973, %v1120, 0.0
  %v1203 = vadd.f32 %v1201, %v1202
  %v1204 = vsel %vm973, %v1121, 0.0
  %v1205 = vadd.f32 %v1203, %v1204
  %v1206 = vsel %vm973, %v1122, 0.0
  %v1207 = vadd.f32 %v1205, %v1206
  %v1208 = vsel %vm973, %v1123, 0.0
  %v1209 = vadd.f32 %v1207, %v1208
  %v1210 = vsel %vm973, %v1124, 0.0
  %v1211 = vadd.f32 %v1209, %v1210
  %v1212 = vsel %vm973, %v1125, 0.0
  %v1213 = vadd.f32 %v1211, %v1212
  %v1214 = vsel %vm973, %v1126, 0.0
  %v1215 = vadd.f32 %v1213, %v1214
  %v1216 = vsel %vm973, %v1127, 0.0
  %v1217 = vadd.f32 %v1215, %v1216
  %v1218 = vsel %vm973, %v1128, 0.0
  %v1219 = vadd.f32 %v1217, %v1218
  %v1220 = vsel %vm973, %v1129, 0.0
  %v1221 = vadd.f32 %v1219, %v1220
  %v1222 = vsel %vm973, %v1130, 0.0
  %v1223 = vadd.f32 %v1221, %v1222
  %v1224 = vsel %vm973, %v1131, 0.0
  %v1225 = vadd.f32 %v1223, %v1224
  %v1226 = vsel %vm973, %v1132, 0.0
  %v1227 = vadd.f32 %v1225, %v1226
  %v1228 = vsel %vm973, %v1133, 0.0
  %v1229 = vadd.f32 %v1227, %v1228
  %v1230 = vsel %vm973, %v1134, 0.0
  %v1231 = vadd.f32 %v1229, %v1230
  %v1232 = vsel %vm973, %v1135, 0.0
  %v1233 = vadd.f32 %v1231, %v1232
  %v1234 = vsel %vm973, %v1136, 0.0
  %v1235 = vadd.f32 %v1233, %v1234
  %v1236 = vsel %vm973, %v1137, 0.0
  %v1237 = vadd.f32 %v1235, %v1236
  %v1238 = vsel %vm973, %v1138, 0.0
  %v1239 = vadd.f32 %v1237, %v1238
  %v1240 = vsel %vm973, %v1139, 0.0
  %v1241 = vadd.f32 %v1239, %v1240
  %v1242 = vsel %vm973, %v1140, 0.0
  %v1243 = vadd.f32 %v1241, %v1242
  %v1244 = vsel %vm973, %v1141, 0.0
  %v1245 = vadd.f32 %v1243, %v1244
  %v1246 = vsel %vm973, %v1142, 0.0
  %v1247 = vadd.f32 %v1245, %v1246
  %v1248 = vsel %vm973, %v1143, 0.0
  %v1249 = vadd.f32 %v1247, %v1248
  %v1250 = vsel %vm973, %v1144, 0.0
  %v1251 = vadd.f32 %v1249, %v1250
  %v1252 = vsel %vm973, %v1145, 0.0
  %v1253 = vadd.f32 %v1251, %v1252
  %v1254 = vsel %vm973, %v1146, 0.0
  %v1255 = vadd.f32 %v1253, %v1254
  %v1256 = vsel %vm973, %v1147, 0.0
  %v1257 = vadd.f32 %v1255, %v1256
  %v1258 = vsel %vm973, %v1148, 0.0
  %v1259 = vadd.f32 %v1257, %v1258
  %v1260 = vsel %vm973, %v1149, 0.0
  %v1261 = vadd.f32 %v1259, %v1260
  %v1262 = vsel %vm1085, %v1150, 0.0
  %v1263 = vadd.f32 %v1261, %v1262
  %v1264 = vrot.slane %v1263, 4
  %v1265 = vadd.f32 %v1263, %v1264
  %v1266 = vrot.slane %v1265, 2
  %v1267 = vadd.f32 %v1265, %v1266
  %v1268 = vrot.slane %v1267, 1
  %v1269 = vadd.f32 %v1267, %v1268
  %v1270 = vmul.f32 %v1093, 0.001953125
  %v1271 = vmul.f32 %v1269, 0.001953125
  %v1272 = vmul.f32 %v1270, %v1270
  %v1273 = vsub.f32 %v1271, %v1272
  %v1274 = vmax.f32 %v1273, 0.0
  %v1275 = vadd.f32 %v1274, 1e-05
  %v1276 = vrsqrt.pop %v1275
  %v1277 = vld [vmem:[%s3] sm:$0x1]
  %v1278 = vmul.f32 %v1276, %v1277
  %v1279 = vld [vmem:[%s4] sm:$0x1]
  %v1280 = vmul.f32 %v1270, %v1278
  %v1281 = vsub.f32 %v1279, %v1280
  %v1282 = vlaneseq
  %v1283 = vshrl.u32 %v1282, 7
  %v1284 = vsub.s32 0, %v1283
  %v1285 = vrot.slane %v1278, %v1284
  %v1286 = vmul.f32 %v744, %v1285
  %v1287 = vmul.f32 %v747, %v1285
  %v1288 = vmul.f32 %v752, %v1285
  %v1289 = vmul.f32 %v755, %v1285
  %v1290 = vmul.f32 %v760, %v1285
  %v1291 = vmul.f32 %v763, %v1285
  %v1292 = vmul.f32 %v768, %v1285
  %v1293 = vmul.f32 %v771, %v1285
  %v1294 = vmul.f32 %v776, %v1285
  %v1295 = vmul.f32 %v779, %v1285
  %v1296 = vmul.f32 %v784, %v1285
  %v1297 = vmul.f32 %v787, %v1285
  %v1298 = vmul.f32 %v792, %v1285
  %v1299 = vmul.f32 %v795, %v1285
  %v1300 = vmul.f32 %v800, %v1285
  %v1301 = vmul.f32 %v803, %v1285
  %v1302 = vmul.f32 %v808, %v1285
  %v1303 = vmul.f32 %v811, %v1285
  %v1304 = vmul.f32 %v816, %v1285
  %v1305 = vmul.f32 %v819, %v1285
  %v1306 = vmul.f32 %v824, %v1285
  %v1307 = vmul.f32 %v827, %v1285
  %v1308 = vmul.f32 %v832, %v1285
  %v1309 = vmul.f32 %v835, %v1285
  %v1310 = vmul.f32 %v840, %v1285
  %v1311 = vmul.f32 %v843, %v1285
  %v1312 = vmul.f32 %v848, %v1285
  %v1313 = vmul.f32 %v851, %v1285
  %v1314 = vmul.f32 %v856, %v1285
  %v1315 = vmul.f32 %v859, %v1285
  %v1316 = vmul.f32 %v864, %v1285
  %v1317 = vmul.f32 %v867, %v1285
  %v1318 = vmul.f32 %v872, %v1285
  %v1319 = vmul.f32 %v875, %v1285
  %v1320 = vmul.f32 %v880, %v1285
  %v1321 = vmul.f32 %v883, %v1285
  %v1322 = vmul.f32 %v888, %v1285
  %v1323 = vmul.f32 %v891, %v1285
  %v1324 = vmul.f32 %v896, %v1285
  %v1325 = vmul.f32 %v899, %v1285
  %v1326 = vmul.f32 %v904, %v1285
  %v1327 = vmul.f32 %v907, %v1285
  %v1328 = vmul.f32 %v912, %v1285
  %v1329 = vmul.f32 %v915, %v1285
  %v1330 = vmul.f32 %v920, %v1285
  %v1331 = vmul.f32 %v923, %v1285
  %v1332 = vmul.f32 %v928, %v1285
  %v1333 = vmul.f32 %v931, %v1285
  %v1334 = vmul.f32 %v936, %v1285
  %v1335 = vmul.f32 %v939, %v1285
  %v1336 = vmul.f32 %v944, %v1285
  %v1337 = vmul.f32 %v947, %v1285
  %v1338 = vmul.f32 %v952, %v1285
  %v1339 = vmul.f32 %v955, %v1285
  %v1340 = vmul.f32 %v960, %v1285
  %v1341 = vmul.f32 %v963, %v1285
  %v1342 = vmul.f32 %v968, %v1285
  %v1344 = vlaneseq
  %v1345 = vshrl.u32 %v1344, 7
  %v1346 = vsub.s32 0, %v1345
  %v1347 = vrot.slane %v1281, %v1346
  %v1349 = vadd.f32 %v1286, %v1347
  %v1350 = vadd.f32 %v1287, %v1347
  %v1351 = vadd.f32 %v1288, %v1347
  %v1352 = vadd.f32 %v1289, %v1347
  %v1353 = vadd.f32 %v1290, %v1347
  %v1354 = vadd.f32 %v1291, %v1347
  %v1355 = vadd.f32 %v1292, %v1347
  %v1356 = vadd.f32 %v1293, %v1347
  %v1357 = vadd.f32 %v1294, %v1347
  %v1358 = vadd.f32 %v1295, %v1347
  %v1359 = vadd.f32 %v1296, %v1347
  %v1360 = vadd.f32 %v1297, %v1347
  %v1361 = vadd.f32 %v1298, %v1347
  %v1362 = vadd.f32 %v1299, %v1347
  %v1363 = vadd.f32 %v1300, %v1347
  %v1364 = vadd.f32 %v1301, %v1347
  %v1365 = vadd.f32 %v1302, %v1347
  %v1366 = vadd.f32 %v1303, %v1347
  %v1367 = vadd.f32 %v1304, %v1347
  %v1368 = vadd.f32 %v1305, %v1347
  %v1369 = vadd.f32 %v1306, %v1347
  %v1370 = vadd.f32 %v1307, %v1347
  %v1371 = vadd.f32 %v1308, %v1347
  %v1372 = vadd.f32 %v1309, %v1347
  %v1373 = vadd.f32 %v1310, %v1347
  %v1374 = vadd.f32 %v1311, %v1347
  %v1375 = vadd.f32 %v1312, %v1347
  %v1376 = vadd.f32 %v1313, %v1347
  %v1377 = vadd.f32 %v1314, %v1347
  %v1378 = vadd.f32 %v1315, %v1347
  %v1379 = vadd.f32 %v1316, %v1347
  %v1380 = vadd.f32 %v1317, %v1347
  %v1381 = vadd.f32 %v1318, %v1347
  %v1382 = vadd.f32 %v1319, %v1347
  %v1383 = vadd.f32 %v1320, %v1347
  %v1384 = vadd.f32 %v1321, %v1347
  %v1385 = vadd.f32 %v1322, %v1347
  %v1386 = vadd.f32 %v1323, %v1347
  %v1387 = vadd.f32 %v1324, %v1347
  %v1388 = vadd.f32 %v1325, %v1347
  %v1389 = vadd.f32 %v1326, %v1347
  %v1390 = vadd.f32 %v1327, %v1347
  %v1391 = vadd.f32 %v1328, %v1347
  %v1392 = vadd.f32 %v1329, %v1347
  %v1393 = vadd.f32 %v1330, %v1347
  %v1394 = vadd.f32 %v1331, %v1347
  %v1395 = vadd.f32 %v1332, %v1347
  %v1396 = vadd.f32 %v1333, %v1347
  %v1397 = vadd.f32 %v1334, %v1347
  %v1398 = vadd.f32 %v1335, %v1347
  %v1399 = vadd.f32 %v1336, %v1347
  %v1400 = vadd.f32 %v1337, %v1347
  %v1401 = vadd.f32 %v1338, %v1347
  %v1402 = vadd.f32 %v1339, %v1347
  %v1403 = vadd.f32 %v1340, %v1347
  %v1404 = vadd.f32 %v1341, %v1347
  %v1405 = vadd.f32 %v1342, %v1347
  %1406 = vst.msk [vmem:[%s5] sm:$0xff] %vm973, %v1349
  %1407 = vst.msk [vmem:[%s5 + $0x8] sm:$0xff] %vm973, %v1350
  %1408 = vst.msk [vmem:[%s5 + $0x10] sm:$0xff] %vm973, %v1351
  %1409 = vst.msk [vmem:[%s5 + $0x18] sm:$0xff] %vm973, %v1352
  %1410 = vst.msk [vmem:[%s5 + $0x20] sm:$0xff] %vm973, %v1353
  %1411 = vst.msk [vmem:[%s5 + $0x28] sm:$0xff] %vm973, %v1354
  %1412 = vst.msk [vmem:[%s5 + $0x30] sm:$0xff] %vm973, %v1355
  %1413 = vst.msk [vmem:[%s5 + $0x38] sm:$0xff] %vm973, %v1356
  %1414 = vst.msk [vmem:[%s5 + $0x40] sm:$0xff] %vm973, %v1357
  %1415 = vst.msk [vmem:[%s5 + $0x48] sm:$0xff] %vm973, %v1358
  %1416 = vst.msk [vmem:[%s5 + $0x50] sm:$0xff] %vm973, %v1359
  %1417 = vst.msk [vmem:[%s5 + $0x58] sm:$0xff] %vm973, %v1360
  %1418 = vst.msk [vmem:[%s5 + $0x60] sm:$0xff] %vm973, %v1361
  %1419 = vst.msk [vmem:[%s5 + $0x68] sm:$0xff] %vm973, %v1362
  %1420 = vst.msk [vmem:[%s5 + $0x70] sm:$0xff] %vm973, %v1363
  %1421 = vst.msk [vmem:[%s5 + $0x78] sm:$0xff] %vm973, %v1364
  %1422 = vst.msk [vmem:[%s5 + $0x80] sm:$0xff] %vm973, %v1365
  %1423 = vst.msk [vmem:[%s5 + $0x88] sm:$0xff] %vm973, %v1366
  %1424 = vst.msk [vmem:[%s5 + $0x90] sm:$0xff] %vm973, %v1367
  %1425 = vst.msk [vmem:[%s5 + $0x98] sm:$0xff] %vm973, %v1368
  %1426 = vst.msk [vmem:[%s5 + $0xa0] sm:$0xff] %vm973, %v1369
  %1427 = vst.msk [vmem:[%s5 + $0xa8] sm:$0xff] %vm973, %v1370
  %1428 = vst.msk [vmem:[%s5 + $0xb0] sm:$0xff] %vm973, %v1371
  %1429 = vst.msk [vmem:[%s5 + $0xb8] sm:$0xff] %vm973, %v1372
  %1430 = vst.msk [vmem:[%s5 + $0xc0] sm:$0xff] %vm973, %v1373
  %1431 = vst.msk [vmem:[%s5 + $0xc8] sm:$0xff] %vm973, %v1374
  %1432 = vst.msk [vmem:[%s5 + $0xd0] sm:$0xff] %vm973, %v1375
  %1433 = vst.msk [vmem:[%s5 + $0xd8] sm:$0xff] %vm973, %v1376
  %1434 = vst.msk [vmem:[%s5 + $0xe0] sm:$0xff] %vm973, %v1377
  %1435 = vst.msk [vmem:[%s5 + $0xe8] sm:$0xff] %vm973, %v1378
  %1436 = vst.msk [vmem:[%s5 + $0xf0] sm:$0xff] %vm973, %v1379
  %1437 = vst.msk [vmem:[%s5 + $0xf8] sm:$0xff] %vm973, %v1380
  %1438 = vst.msk [vmem:[%s5 + $0x100] sm:$0xff] %vm973, %v1381
  %1439 = vst.msk [vmem:[%s5 + $0x108] sm:$0xff] %vm973, %v1382
  %1440 = vst.msk [vmem:[%s5 + $0x110] sm:$0xff] %vm973, %v1383
  %1441 = vst.msk [vmem:[%s5 + $0x118] sm:$0xff] %vm973, %v1384
  %1442 = vst.msk [vmem:[%s5 + $0x120] sm:$0xff] %vm973, %v1385
  %1443 = vst.msk [vmem:[%s5 + $0x128] sm:$0xff] %vm973, %v1386
  %1444 = vst.msk [vmem:[%s5 + $0x130] sm:$0xff] %vm973, %v1387
  %1445 = vst.msk [vmem:[%s5 + $0x138] sm:$0xff] %vm973, %v1388
  %1446 = vst.msk [vmem:[%s5 + $0x140] sm:$0xff] %vm973, %v1389
  %1447 = vst.msk [vmem:[%s5 + $0x148] sm:$0xff] %vm973, %v1390
  %1448 = vst.msk [vmem:[%s5 + $0x150] sm:$0xff] %vm973, %v1391
  %1449 = vst.msk [vmem:[%s5 + $0x158] sm:$0xff] %vm973, %v1392
  %1450 = vst.msk [vmem:[%s5 + $0x160] sm:$0xff] %vm973, %v1393
  %1451 = vst.msk [vmem:[%s5 + $0x168] sm:$0xff] %vm973, %v1394
  %1452 = vst.msk [vmem:[%s5 + $0x170] sm:$0xff] %vm973, %v1395
  %1453 = vst.msk [vmem:[%s5 + $0x178] sm:$0xff] %vm973, %v1396
  %1454 = vst.msk [vmem:[%s5 + $0x180] sm:$0xff] %vm973, %v1397
  %1455 = vst.msk [vmem:[%s5 + $0x188] sm:$0xff] %vm973, %v1398
  %1456 = vst.msk [vmem:[%s5 + $0x190] sm:$0xff] %vm973, %v1399
  %1457 = vst.msk [vmem:[%s5 + $0x198] sm:$0xff] %vm973, %v1400
  %1458 = vst.msk [vmem:[%s5 + $0x1a0] sm:$0xff] %vm973, %v1401
  %1459 = vst.msk [vmem:[%s5 + $0x1a8] sm:$0xff] %vm973, %v1402
  %1460 = vst.msk [vmem:[%s5 + $0x1b0] sm:$0xff] %vm973, %v1403
  %1461 = vst.msk [vmem:[%s5 + $0x1b8] sm:$0xff] %vm973, %v1404
  %1462 = vst.msk [vmem:[%s5 + $0x1c0] sm:$0x3] %vm1085, %v1405
  %vm1463 = vcmask 122880
  %1464 = vst.msk [vmem:[%s6] sm:$0x1] %vm1463, %v1281
  // Predicated region
  $region22: #{dvae_encoder_forward.5} parent=0 // pred_check
    _
  $region23: #{dvae_encoder_forward.5} parent=0 // pred_check_branch
    %1466 = sbr.rel (0) target = $region25
  $region24: #{dvae_encoder_forward.5} parent=0 // pred_region
    _
  $region25: #{dvae_encoder_forward.5} parent=0 // pred_fallthru
    _
  // Predicated region
  $region26: #{dvae_encoder_forward.5} parent=0 // pred_check
    _
  $region27: #{dvae_encoder_forward.5} parent=0 // pred_check_branch
    %1468 = sbr.rel (0) target = $region29
  $region28: #{dvae_encoder_forward.5} parent=0 // pred_region
    _
  $region29: #{dvae_encoder_forward.5} parent=0 // pred_fallthru
    _
  // Predicated region
  $region30: #{dvae_encoder_forward.5} parent=0 // pred_check
    _
  $region31: #{dvae_encoder_forward.5} parent=0 // pred_check_branch
    %1470 = sbr.rel (0) target = $region33
  $region32: #{dvae_encoder_forward.5} parent=0 // pred_region
    _
  $region33: #{dvae_encoder_forward.5} parent=0 // pred_fallthru
    _
  // Predicated region
  $region34: #{dvae_encoder_forward.5} parent=0 // pred_check
    _
  $region35: #{dvae_encoder_forward.5} parent=0 // pred_check_branch
    %1472 = sbr.rel (0) target = $region37
  $region36: #{dvae_encoder_forward.5} parent=0 // pred_region
    _
  $region37: #{dvae_encoder_forward.5} parent=0 // pred_fallthru
    _

// kernel: dvae_encoder_forward.6
$region0: #{dvae_encoder_forward.6}
  #allocation0 [shape = 'u32[]', space=smem, size = 0x4, offset = 0x4, fixed_abs, tag = 'smem constant byte address 0x4 - core index']
  #allocation1 [shape = 'u32[144,128]{1,0:T(1,128)}', space=vmem, size = 0x12000, scoped, tag = 'internal scratch']
  %s0 = inlined_call_operand.vmem [shape: bf16[512,576], index: 0, kind: input, shape index: {}]
  %s1 = inlined_call_operand.vmem [shape: bf16[576,16], index: 1, kind: input, shape index: {}]
  %s2 = inlined_call_operand.vmem [shape: f32[1,16], index: 2, kind: input, shape index: {}]
  %s3 = inlined_call_operand.vmem [shape: f32[1,16], index: 3, kind: input, shape index: {}]
  %s4 = inlined_call_operand.vmem [shape: f32[1,16], index: 4, kind: input, shape index: {}]
  %s5 = inlined_call_operand.vmem [shape: f32[512,16], index: 5, kind: output, shape index: {0}]
  %s6 = inlined_call_operand.hbm [shape: f32[1,16], index: 6, kind: output, shape index: {1}]
  %7 = xla_tuple %s5, %s6
  %s8 = sld [smem:[#allocation0]]
  $region38: #{dvae_encoder_forward.6} parent=0
    _
  %s10 = ssub.s32 1, %s8
  %s11 = scalar_select 0, %s10, %s8
  $region1: #{dvae_encoder_forward.6} parent=0
    #allocation2 [shape = 'u8[512]{0}', space=vmem, size = 0x400, scoped, tag = 'output window, operand 1, single buffered']
    #allocation3 [shape = 's32[1]{0}', space=sflag, size = 0x4, scoped, tag = 'scoped memory for dvae_encoder_forward.6']
    %12 = vsyncpa [#allocation3], 0
    // Predicated region
    $region2: #{dvae_encoder_forward.6} parent=1 // pred_check
      _
    $region3: #{dvae_encoder_forward.6} parent=1 // pred_check_branch
      %14 = sbr.rel (0) target = $region5
    $region4: #{dvae_encoder_forward.6} parent=1 // pred_region
      _
    $region5: #{dvae_encoder_forward.6} parent=1 // pred_fallthru
      _
    // Predicated region
    $region6: #{dvae_encoder_forward.6} parent=1 // pred_check
      _
    $region7: #{dvae_encoder_forward.6} parent=1 // pred_check_branch
      %16 = sbr.rel (0) target = $region9
    $region8: #{dvae_encoder_forward.6} parent=1 // pred_region
      _
    $region9: #{dvae_encoder_forward.6} parent=1 // pred_fallthru
      _
    // Predicated region
    $region10: #{dvae_encoder_forward.6} parent=1 // pred_check
      _
    $region11: #{dvae_encoder_forward.6} parent=1 // pred_check_branch
      %18 = sbr.rel (0) target = $region13
    $region12: #{dvae_encoder_forward.6} parent=1 // pred_region
      _
    $region13: #{dvae_encoder_forward.6} parent=1 // pred_fallthru
      _
    // Predicated region
    $region14: #{dvae_encoder_forward.6} parent=1 // pred_check
      _
    $region15: #{dvae_encoder_forward.6} parent=1 // pred_check_branch
      %20 = sbr.rel (0) target = $region17
    $region16: #{dvae_encoder_forward.6} parent=1 // pred_region
      _
    $region17: #{dvae_encoder_forward.6} parent=1 // pred_fallthru
      _
    // Predicated region
    $region18: #{dvae_encoder_forward.6} parent=1 // pred_check
      _
    $region19: #{dvae_encoder_forward.6} parent=1 // pred_check_branch
      %22 = sbr.rel (0) target = $region21
    $region20: #{dvae_encoder_forward.6} parent=1 // pred_region
      _
    $region21: #{dvae_encoder_forward.6} parent=1 // pred_fallthru
      _
    %v25 = vld [vmem:[%s0] sm:$0xff]
    %v26 = vld [vmem:[%s0 + $0x8] sm:$0xff]
    %v27 = vld [vmem:[%s0 + $0x10] sm:$0xf]
    %v28 = vld [vmem:[%s0 + $0x14] sm:$0xff]
    %v29 = vld [vmem:[%s0 + $0x1c] sm:$0xff]
    %v30 = vld [vmem:[%s0 + $0x24] sm:$0xf]
    %v31 = vld [vmem:[%s0 + $0x28] sm:$0xff]
    %v32 = vld [vmem:[%s0 + $0x30] sm:$0xff]
    %v33 = vld [vmem:[%s0 + $0x38] sm:$0xf]
    %v34 = vld [vmem:[%s0 + $0x3c] sm:$0xff]
    %v35 = vld [vmem:[%s0 + $0x44] sm:$0xff]
    %v36 = vld [vmem:[%s0 + $0x4c] sm:$0xf]
    %v37 = vld [vmem:[%s0 + $0x50] sm:$0xff]
    %v38 = vld [vmem:[%s0 + $0x58] sm:$0xff]
    %v39 = vld [vmem:[%s0 + $0x60] sm:$0xf]
    %v40 = vld [vmem:[%s0 + $0x64] sm:$0xff]
    %v41 = vld [vmem:[%s0 + $0x6c] sm:$0xff]
    %v42 = vld [vmem:[%s0 + $0x74] sm:$0xf]
    %v43 = vld [vmem:[%s0 + $0x78] sm:$0xff]
    %v44 = vld [vmem:[%s0 + $0x80] sm:$0xff]
    %v45 = vld [vmem:[%s0 + $0x88] sm:$0xf]
    %v46 = vld [vmem:[%s0 + $0x8c] sm:$0xff]
    %v47 = vld [vmem:[%s0 + $0x94] sm:$0xff]
    %v48 = vld [vmem:[%s0 + $0x9c] sm:$0xf]
    %v49 = vld [vmem:[%s0 + $0xa0] sm:$0xff]
    %v50 = vld [vmem:[%s0 + $0xa8] sm:$0xff]
    %v51 = vld [vmem:[%s0 + $0xb0] sm:$0xf]
    %v52 = vld [vmem:[%s0 + $0xb4] sm:$0xff]
    %v53 = vld [vmem:[%s0 + $0xbc] sm:$0xff]
    %v54 = vld [vmem:[%s0 + $0xc4] sm:$0xf]
    %v55 = vld [vmem:[%s0 + $0xc8] sm:$0xff]
    %v56 = vld [vmem:[%s0 + $0xd0] sm:$0xff]
    %v57 = vld [vmem:[%s0 + $0xd8] sm:$0xf]
    %v58 = vld [vmem:[%s0 + $0xdc] sm:$0xff]
    %v59 = vld [vmem:[%s0 + $0xe4] sm:$0xff]
    %v60 = vld [vmem:[%s0 + $0xec] sm:$0xf]
    %v61 = vld [vmem:[%s0 + $0xf0] sm:$0xff]
    %v62 = vld [vmem:[%s0 + $0xf8] sm:$0xff]
    %v63 = vld [vmem:[%s0 + $0x100] sm:$0xf]
    %v64 = vld [vmem:[%s0 + $0x104] sm:$0xff]
    %v65 = vld [vmem:[%s0 + $0x10c] sm:$0xff]
    %v66 = vld [vmem:[%s0 + $0x114] sm:$0xf]
    %v67 = vld [vmem:[%s0 + $0x118] sm:$0xff]
    %v68 = vld [vmem:[%s0 + $0x120] sm:$0xff]
    %v69 = vld [vmem:[%s0 + $0x128] sm:$0xf]
    %v70 = vld [vmem:[%s0 + $0x12c] sm:$0xff]
    %v71 = vld [vmem:[%s0 + $0x134] sm:$0xff]
    %v72 = vld [vmem:[%s0 + $0x13c] sm:$0xf]
    %v73 = vld [vmem:[%s0 + $0x140] sm:$0xff]
    %v74 = vld [vmem:[%s0 + $0x148] sm:$0xff]
    %v75 = vld [vmem:[%s0 + $0x150] sm:$0xf]
    %v76 = vld [vmem:[%s0 + $0x154] sm:$0xff]
    %v77 = vld [vmem:[%s0 + $0x15c] sm:$0xff]
    %v78 = vld [vmem:[%s0 + $0x164] sm:$0xf]
    %v79 = vld [vmem:[%s0 + $0x168] sm:$0xff]
    %v80 = vld [vmem:[%s0 + $0x170] sm:$0xff]
    %v81 = vld [vmem:[%s0 + $0x178] sm:$0xf]
    %v82 = vld [vmem:[%s0 + $0x17c] sm:$0xff]
    %v83 = vld [vmem:[%s0 + $0x184] sm:$0xff]
    %v84 = vld [vmem:[%s0 + $0x18c] sm:$0xf]
    %v85 = vld [vmem:[%s0 + $0x190] sm:$0xff]
    %v86 = vld [vmem:[%s0 + $0x198] sm:$0xff]
    %v87 = vld [vmem:[%s0 + $0x1a0] sm:$0xf]
    %v88 = vld [vmem:[%s0 + $0x1a4] sm:$0xff]
    %v89 = vld [vmem:[%s0 + $0x1ac] sm:$0xff]
    %v90 = vld [vmem:[%s0 + $0x1b4] sm:$0xf]
    %v91 = vld [vmem:[%s0 + $0x1b8] sm:$0xff]
    %v92 = vld [vmem:[%s0 + $0x1c0] sm:$0xff]
    %v93 = vld [vmem:[%s0 + $0x1c8] sm:$0xf]
    %v94 = vld [vmem:[%s0 + $0x1cc] sm:$0xff]
    %v95 = vld [vmem:[%s0 + $0x1d4] sm:$0xff]
    %v96 = vld [vmem:[%s0 + $0x1dc] sm:$0xf]
    %v97 = vld [vmem:[%s0 + $0x1e0] sm:$0xff]
    %v98 = vld [vmem:[%s0 + $0x1e8] sm:$0xff]
    %v99 = vld [vmem:[%s0 + $0x1f0] sm:$0xf]
    %v100 = vld [vmem:[%s0 + $0x1f4] sm:$0xff]
    %v101 = vld [vmem:[%s0 + $0x1fc] sm:$0xff]
    %v102 = vld [vmem:[%s0 + $0x204] sm:$0xf]
    %v103 = vld [vmem:[%s0 + $0x208] sm:$0xff]
    %v104 = vld [vmem:[%s0 + $0x210] sm:$0xff]
    %v105 = vld [vmem:[%s0 + $0x218] sm:$0xf]
    %v106 = vld [vmem:[%s0 + $0x21c] sm:$0xff]
    %v107 = vld [vmem:[%s0 + $0x224] sm:$0xff]
    %v108 = vld [vmem:[%s0 + $0x22c] sm:$0xf]
    %v109 = vld [vmem:[%s0 + $0x230] sm:$0xff]
    %v110 = vld [vmem:[%s0 + $0x238] sm:$0xff]
    %v111 = vld [vmem:[%s0 + $0x240] sm:$0xf]
    %v112 = vld [vmem:[%s0 + $0x244] sm:$0xff]
    %v113 = vld [vmem:[%s0 + $0x24c] sm:$0xff]
    %v114 = vld [vmem:[%s0 + $0x254] sm:$0xf]
    %v115 = vld [vmem:[%s0 + $0x258] sm:$0xff]
    %v116 = vld [vmem:[%s0 + $0x260] sm:$0xff]
    %v117 = vld [vmem:[%s0 + $0x268] sm:$0xf]
    %v118 = vld [vmem:[%s0 + $0x26c] sm:$0xff]
    %v119 = vld [vmem:[%s0 + $0x274] sm:$0xff]
    %v120 = vld [vmem:[%s0 + $0x27c] sm:$0xf]
    %v121 = vld [vmem:[%s0 + $0x280] sm:$0xff]
    %v122 = vld [vmem:[%s0 + $0x288] sm:$0xff]
    %v123 = vld [vmem:[%s0 + $0x290] sm:$0xf]
    %v124 = vld [vmem:[%s0 + $0x294] sm:$0xff]
    %v125 = vld [vmem:[%s0 + $0x29c] sm:$0xff]
    %v126 = vld [vmem:[%s0 + $0x2a4] sm:$0xf]
    %v127 = vld [vmem:[%s0 + $0x2a8] sm:$0xff]
    %v128 = vld [vmem:[%s0 + $0x2b0] sm:$0xff]
    %v129 = vld [vmem:[%s0 + $0x2b8] sm:$0xf]
    %v130 = vld [vmem:[%s0 + $0x2bc] sm:$0xff]
    %v131 = vld [vmem:[%s0 + $0x2c4] sm:$0xff]
    %v132 = vld [vmem:[%s0 + $0x2cc] sm:$0xf]
    %v133 = vld [vmem:[%s0 + $0x2d0] sm:$0xff]
    %v134 = vld [vmem:[%s0 + $0x2d8] sm:$0xff]
    %v135 = vld [vmem:[%s0 + $0x2e0] sm:$0xf]
    %v136 = vld [vmem:[%s0 + $0x2e4] sm:$0xff]
    %v137 = vld [vmem:[%s0 + $0x2ec] sm:$0xff]
    %v138 = vld [vmem:[%s0 + $0x2f4] sm:$0xf]
    %v139 = vld [vmem:[%s0 + $0x2f8] sm:$0xff]
    %v140 = vld [vmem:[%s0 + $0x300] sm:$0xff]
    %v141 = vld [vmem:[%s0 + $0x308] sm:$0xf]
    %v142 = vld [vmem:[%s0 + $0x30c] sm:$0xff]
    %v143 = vld [vmem:[%s0 + $0x314] sm:$0xff]
    %v144 = vld [vmem:[%s0 + $0x31c] sm:$0xf]
    %v145 = vld [vmem:[%s0 + $0x320] sm:$0xff]
    %v146 = vld [vmem:[%s0 + $0x328] sm:$0xff]
    %v147 = vld [vmem:[%s0 + $0x330] sm:$0xf]
    %v148 = vld [vmem:[%s0 + $0x334] sm:$0xff]
    %v149 = vld [vmem:[%s0 + $0x33c] sm:$0xff]
    %v150 = vld [vmem:[%s0 + $0x344] sm:$0xf]
    %v151 = vld [vmem:[%s0 + $0x348] sm:$0xff]
    %v152 = vld [vmem:[%s0 + $0x350] sm:$0xff]
    %v153 = vld [vmem:[%s0 + $0x358] sm:$0xf]
    %v154 = vld [vmem:[%s0 + $0x35c] sm:$0xff]
    %v155 = vld [vmem:[%s0 + $0x364] sm:$0xff]
    %v156 = vld [vmem:[%s0 + $0x36c] sm:$0xf]
    %v157 = vld [vmem:[%s0 + $0x370] sm:$0xff]
    %v158 = vld [vmem:[%s0 + $0x378] sm:$0xff]
    %v159 = vld [vmem:[%s0 + $0x380] sm:$0xf]
    %v160 = vld [vmem:[%s0 + $0x384] sm:$0xff]
    %v161 = vld [vmem:[%s0 + $0x38c] sm:$0xff]
    %v162 = vld [vmem:[%s0 + $0x394] sm:$0xf]
    %v163 = vld [vmem:[%s0 + $0x398] sm:$0xff]
    %v164 = vld [vmem:[%s0 + $0x3a0] sm:$0xff]
    %v165 = vld [vmem:[%s0 + $0x3a8] sm:$0xf]
    %v166 = vld [vmem:[%s0 + $0x3ac] sm:$0xff]
    %v167 = vld [vmem:[%s0 + $0x3b4] sm:$0xff]
    %v168 = vld [vmem:[%s0 + $0x3bc] sm:$0xf]
    %v169 = vld [vmem:[%s0 + $0x3c0] sm:$0xff]
    %v170 = vld [vmem:[%s0 + $0x3c8] sm:$0xff]
    %v171 = vld [vmem:[%s0 + $0x3d0] sm:$0xf]
    %v172 = vld [vmem:[%s0 + $0x3d4] sm:$0xff]
    %v173 = vld [vmem:[%s0 + $0x3dc] sm:$0xff]
    %v174 = vld [vmem:[%s0 + $0x3e4] sm:$0xf]
    %v175 = vld [vmem:[%s0 + $0x3e8] sm:$0xff]
    %v176 = vld [vmem:[%s0 + $0x3f0] sm:$0xff]
    %v177 = vld [vmem:[%s0 + $0x3f8] sm:$0xf]
    %v178 = vld [vmem:[%s0 + $0x3fc] sm:$0xff]
    %v179 = vld [vmem:[%s0 + $0x404] sm:$0xff]
    %v180 = vld [vmem:[%s0 + $0x40c] sm:$0xf]
    %v181 = vld [vmem:[%s0 + $0x410] sm:$0xff]
    %v182 = vld [vmem:[%s0 + $0x418] sm:$0xff]
    %v183 = vld [vmem:[%s0 + $0x420] sm:$0xf]
    %v184 = vld [vmem:[%s0 + $0x424] sm:$0xff]
    %v185 = vld [vmem:[%s0 + $0x42c] sm:$0xff]
    %v186 = vld [vmem:[%s0 + $0x434] sm:$0xf]
    %v187 = vld [vmem:[%s0 + $0x438] sm:$0xff]
    %v188 = vld [vmem:[%s0 + $0x440] sm:$0xff]
    %v189 = vld [vmem:[%s0 + $0x448] sm:$0xf]
    %v190 = vld [vmem:[%s0 + $0x44c] sm:$0xff]
    %v191 = vld [vmem:[%s0 + $0x454] sm:$0xff]
    %v192 = vld [vmem:[%s0 + $0x45c] sm:$0xf]
    %v193 = vld [vmem:[%s0 + $0x460] sm:$0xff]
    %v194 = vld [vmem:[%s0 + $0x468] sm:$0xff]
    %v195 = vld [vmem:[%s0 + $0x470] sm:$0xf]
    %v196 = vld [vmem:[%s0 + $0x474] sm:$0xff]
    %v197 = vld [vmem:[%s0 + $0x47c] sm:$0xff]
    %v198 = vld [vmem:[%s0 + $0x484] sm:$0xf]
    %v199 = vld [vmem:[%s0 + $0x488] sm:$0xff]
    %v200 = vld [vmem:[%s0 + $0x490] sm:$0xff]
    %v201 = vld [vmem:[%s0 + $0x498] sm:$0xf]
    %v202 = vld [vmem:[%s0 + $0x49c] sm:$0xff]
    %v203 = vld [vmem:[%s0 + $0x4a4] sm:$0xff]
    %v204 = vld [vmem:[%s0 + $0x4ac] sm:$0xf]
    %v205 = vld [vmem:[%s0 + $0x4b0] sm:$0xff]
    %v206 = vld [vmem:[%s0 + $0x4b8] sm:$0xff]
    %v207 = vld [vmem:[%s0 + $0x4c0] sm:$0xf]
    %v208 = vld [vmem:[%s0 + $0x4c4] sm:$0xff]
    %v209 = vld [vmem:[%s0 + $0x4cc] sm:$0xff]
    %v210 = vld [vmem:[%s0 + $0x4d4] sm:$0xf]
    %v211 = vld [vmem:[%s0 + $0x4d8] sm:$0xff]
    %v212 = vld [vmem:[%s0 + $0x4e0] sm:$0xff]
    %v213 = vld [vmem:[%s0 + $0x4e8] sm:$0xf]
    %v214 = vld [vmem:[%s0 + $0x4ec] sm:$0xff]
    %v215 = vld [vmem:[%s0 + $0x4f4] sm:$0xff]
    %v216 = vld [vmem:[%s0 + $0x4fc] sm:$0xf]
    %vm217 = vcmp.ge.bf16.partialorder %v25, 0
    %vm218 = vcmp.ge.bf16.partialorder %v26, 0
    %vm219 = vcmp.ge.bf16.partialorder %v27, 0
    %vm220 = vcmp.ge.bf16.partialorder %v28, 0
    %vm221 = vcmp.ge.bf16.partialorder %v29, 0
    %vm222 = vcmp.ge.bf16.partialorder %v30, 0
    %vm223 = vcmp.ge.bf16.partialorder %v31, 0
    %vm224 = vcmp.ge.bf16.partialorder %v32, 0
    %vm225 = vcmp.ge.bf16.partialorder %v33, 0
    %vm226 = vcmp.ge.bf16.partialorder %v34, 0
    %vm227 = vcmp.ge.bf16.partialorder %v35, 0
    %vm228 = vcmp.ge.bf16.partialorder %v36, 0
    %vm229 = vcmp.ge.bf16.partialorder %v37, 0
    %vm230 = vcmp.ge.bf16.partialorder %v38, 0
    %vm231 = vcmp.ge.bf16.partialorder %v39, 0
    %vm232 = vcmp.ge.bf16.partialorder %v40, 0
    %vm233 = vcmp.ge.bf16.partialorder %v41, 0
    %vm234 = vcmp.ge.bf16.partialorder %v42, 0
    %vm235 = vcmp.ge.bf16.partialorder %v43, 0
    %vm236 = vcmp.ge.bf16.partialorder %v44, 0
    %vm237 = vcmp.ge.bf16.partialorder %v45, 0
    %vm238 = vcmp.ge.bf16.partialorder %v46, 0
    %vm239 = vcmp.ge.bf16.partialorder %v47, 0
    %vm240 = vcmp.ge.bf16.partialorder %v48, 0
    %vm241 = vcmp.ge.bf16.partialorder %v49, 0
    %vm242 = vcmp.ge.bf16.partialorder %v50, 0
    %vm243 = vcmp.ge.bf16.partialorder %v51, 0
    %vm244 = vcmp.ge.bf16.partialorder %v52, 0
    %vm245 = vcmp.ge.bf16.partialorder %v53, 0
    %vm246 = vcmp.ge.bf16.partialorder %v54, 0
    %vm247 = vcmp.ge.bf16.partialorder %v55, 0
    %vm248 = vcmp.ge.bf16.partialorder %v56, 0
    %vm249 = vcmp.ge.bf16.partialorder %v57, 0
    %vm250 = vcmp.ge.bf16.partialorder %v58, 0
    %vm251 = vcmp.ge.bf16.partialorder %v59, 0
    %vm252 = vcmp.ge.bf16.partialorder %v60, 0
    %vm253 = vcmp.ge.bf16.partialorder %v61, 0
    %vm254 = vcmp.ge.bf16.partialorder %v62, 0
    %vm255 = vcmp.ge.bf16.partialorder %v63, 0
    %vm256 = vcmp.ge.bf16.partialorder %v64, 0
    %vm257 = vcmp.ge.bf16.partialorder %v65, 0
    %vm258 = vcmp.ge.bf16.partialorder %v66, 0
    %vm259 = vcmp.ge.bf16.partialorder %v67, 0
    %vm260 = vcmp.ge.bf16.partialorder %v68, 0
    %vm261 = vcmp.ge.bf16.partialorder %v69, 0
    %vm262 = vcmp.ge.bf16.partialorder %v70, 0
    %vm263 = vcmp.ge.bf16.partialorder %v71, 0
    %vm264 = vcmp.ge.bf16.partialorder %v72, 0
    %vm265 = vcmp.ge.bf16.partialorder %v73, 0
    %vm266 = vcmp.ge.bf16.partialorder %v74, 0
    %vm267 = vcmp.ge.bf16.partialorder %v75, 0
    %vm268 = vcmp.ge.bf16.partialorder %v76, 0
    %vm269 = vcmp.ge.bf16.partialorder %v77, 0
    %vm270 = vcmp.ge.bf16.partialorder %v78, 0
    %vm271 = vcmp.ge.bf16.partialorder %v79, 0
    %vm272 = vcmp.ge.bf16.partialorder %v80, 0
    %vm273 = vcmp.ge.bf16.partialorder %v81, 0
    %vm274 = vcmp.ge.bf16.partialorder %v82, 0
    %vm275 = vcmp.ge.bf16.partialorder %v83, 0
    %vm276 = vcmp.ge.bf16.partialorder %v84, 0
    %vm277 = vcmp.ge.bf16.partialorder %v85, 0
    %vm278 = vcmp.ge.bf16.partialorder %v86, 0
    %vm279 = vcmp.ge.bf16.partialorder %v87, 0
    %vm280 = vcmp.ge.bf16.partialorder %v88, 0
    %vm281 = vcmp.ge.bf16.partialorder %v89, 0
    %vm282 = vcmp.ge.bf16.partialorder %v90, 0
    %vm283 = vcmp.ge.bf16.partialorder %v91, 0
    %vm284 = vcmp.ge.bf16.partialorder %v92, 0
    %vm285 = vcmp.ge.bf16.partialorder %v93, 0
    %vm286 = vcmp.ge.bf16.partialorder %v94, 0
    %vm287 = vcmp.ge.bf16.partialorder %v95, 0
    %vm288 = vcmp.ge.bf16.partialorder %v96, 0
    %vm289 = vcmp.ge.bf16.partialorder %v97, 0
    %vm290 = vcmp.ge.bf16.partialorder %v98, 0
    %vm291 = vcmp.ge.bf16.partialorder %v99, 0
    %vm292 = vcmp.ge.bf16.partialorder %v100, 0
    %vm293 = vcmp.ge.bf16.partialorder %v101, 0
    %vm294 = vcmp.ge.bf16.partialorder %v102, 0
    %vm295 = vcmp.ge.bf16.partialorder %v103, 0
    %vm296 = vcmp.ge.bf16.partialorder %v104, 0
    %vm297 = vcmp.ge.bf16.partialorder %v105, 0
    %vm298 = vcmp.ge.bf16.partialorder %v106, 0
    %vm299 = vcmp.ge.bf16.partialorder %v107, 0
    %vm300 = vcmp.ge.bf16.partialorder %v108, 0
    %vm301 = vcmp.ge.bf16.partialorder %v109, 0
    %vm302 = vcmp.ge.bf16.partialorder %v110, 0
    %vm303 = vcmp.ge.bf16.partialorder %v111, 0
    %vm304 = vcmp.ge.bf16.partialorder %v112, 0
    %vm305 = vcmp.ge.bf16.partialorder %v113, 0
    %vm306 = vcmp.ge.bf16.partialorder %v114, 0
    %vm307 = vcmp.ge.bf16.partialorder %v115, 0
    %vm308 = vcmp.ge.bf16.partialorder %v116, 0
    %vm309 = vcmp.ge.bf16.partialorder %v117, 0
    %vm310 = vcmp.ge.bf16.partialorder %v118, 0
    %vm311 = vcmp.ge.bf16.partialorder %v119, 0
    %vm312 = vcmp.ge.bf16.partialorder %v120, 0
    %vm313 = vcmp.ge.bf16.partialorder %v121, 0
    %vm314 = vcmp.ge.bf16.partialorder %v122, 0
    %vm315 = vcmp.ge.bf16.partialorder %v123, 0
    %vm316 = vcmp.ge.bf16.partialorder %v124, 0
    %vm317 = vcmp.ge.bf16.partialorder %v125, 0
    %vm318 = vcmp.ge.bf16.partialorder %v126, 0
    %vm319 = vcmp.ge.bf16.partialorder %v127, 0
    %vm320 = vcmp.ge.bf16.partialorder %v128, 0
    %vm321 = vcmp.ge.bf16.partialorder %v129, 0
    %vm322 = vcmp.ge.bf16.partialorder %v130, 0
    %vm323 = vcmp.ge.bf16.partialorder %v131, 0
    %vm324 = vcmp.ge.bf16.partialorder %v132, 0
    %vm325 = vcmp.ge.bf16.partialorder %v133, 0
    %vm326 = vcmp.ge.bf16.partialorder %v134, 0
    %vm327 = vcmp.ge.bf16.partialorder %v135, 0
    %vm328 = vcmp.ge.bf16.partialorder %v136, 0
    %vm329 = vcmp.ge.bf16.partialorder %v137, 0
    %vm330 = vcmp.ge.bf16.partialorder %v138, 0
    %vm331 = vcmp.ge.bf16.partialorder %v139, 0
    %vm332 = vcmp.ge.bf16.partialorder %v140, 0
    %vm333 = vcmp.ge.bf16.partialorder %v141, 0
    %vm334 = vcmp.ge.bf16.partialorder %v142, 0
    %vm335 = vcmp.ge.bf16.partialorder %v143, 0
    %vm336 = vcmp.ge.bf16.partialorder %v144, 0
    %vm337 = vcmp.ge.bf16.partialorder %v145, 0
    %vm338 = vcmp.ge.bf16.partialorder %v146, 0
    %vm339 = vcmp.ge.bf16.partialorder %v147, 0
    %vm340 = vcmp.ge.bf16.partialorder %v148, 0
    %vm341 = vcmp.ge.bf16.partialorder %v149, 0
    %vm342 = vcmp.ge.bf16.partialorder %v150, 0
    %vm343 = vcmp.ge.bf16.partialorder %v151, 0
    %vm344 = vcmp.ge.bf16.partialorder %v152, 0
    %vm345 = vcmp.ge.bf16.partialorder %v153, 0
    %vm346 = vcmp.ge.bf16.partialorder %v154, 0
    %vm347 = vcmp.ge.bf16.partialorder %v155, 0
    %vm348 = vcmp.ge.bf16.partialorder %v156, 0
    %vm349 = vcmp.ge.bf16.partialorder %v157, 0
    %vm350 = vcmp.ge.bf16.partialorder %v158, 0
    %vm351 = vcmp.ge.bf16.partialorder %v159, 0
    %vm352 = vcmp.ge.bf16.partialorder %v160, 0
    %vm353 = vcmp.ge.bf16.partialorder %v161, 0
    %vm354 = vcmp.ge.bf16.partialorder %v162, 0
    %vm355 = vcmp.ge.bf16.partialorder %v163, 0
    %vm356 = vcmp.ge.bf16.partialorder %v164, 0
    %vm357 = vcmp.ge.bf16.partialorder %v165, 0
    %vm358 = vcmp.ge.bf16.partialorder %v166, 0
    %vm359 = vcmp.ge.bf16.partialorder %v167, 0
    %vm360 = vcmp.ge.bf16.partialorder %v168, 0
    %vm361 = vcmp.ge.bf16.partialorder %v169, 0
    %vm362 = vcmp.ge.bf16.partialorder %v170, 0
    %vm363 = vcmp.ge.bf16.partialorder %v171, 0
    %vm364 = vcmp.ge.bf16.partialorder %v172, 0
    %vm365 = vcmp.ge.bf16.partialorder %v173, 0
    %vm366 = vcmp.ge.bf16.partialorder %v174, 0
    %vm367 = vcmp.ge.bf16.partialorder %v175, 0
    %vm368 = vcmp.ge.bf16.partialorder %v176, 0
    %vm369 = vcmp.ge.bf16.partialorder %v177, 0
    %vm370 = vcmp.ge.bf16.partialorder %v178, 0
    %vm371 = vcmp.ge.bf16.partialorder %v179, 0
    %vm372 = vcmp.ge.bf16.partialorder %v180, 0
    %vm373 = vcmp.ge.bf16.partialorder %v181, 0
    %vm374 = vcmp.ge.bf16.partialorder %v182, 0
    %vm375 = vcmp.ge.bf16.partialorder %v183, 0
    %vm376 = vcmp.ge.bf16.partialorder %v184, 0
    %vm377 = vcmp.ge.bf16.partialorder %v185, 0
    %vm378 = vcmp.ge.bf16.partialorder %v186, 0
    %vm379 = vcmp.ge.bf16.partialorder %v187, 0
    %vm380 = vcmp.ge.bf16.partialorder %v188, 0
    %vm381 = vcmp.ge.bf16.partialorder %v189, 0
    %vm382 = vcmp.ge.bf16.partialorder %v190, 0
    %vm383 = vcmp.ge.bf16.partialorder %v191, 0
    %vm384 = vcmp.ge.bf16.partialorder %v192, 0
    %vm385 = vcmp.ge.bf16.partialorder %v193, 0
    %vm386 = vcmp.ge.bf16.partialorder %v194, 0
    %vm387 = vcmp.ge.bf16.partialorder %v195, 0
    %vm388 = vcmp.ge.bf16.partialorder %v196, 0
    %vm389 = vcmp.ge.bf16.partialorder %v197, 0
    %vm390 = vcmp.ge.bf16.partialorder %v198, 0
    %vm391 = vcmp.ge.bf16.partialorder %v199, 0
    %vm392 = vcmp.ge.bf16.partialorder %v200, 0
    %vm393 = vcmp.ge.bf16.partialorder %v201, 0
    %vm394 = vcmp.ge.bf16.partialorder %v202, 0
    %vm395 = vcmp.ge.bf16.partialorder %v203, 0
    %vm396 = vcmp.ge.bf16.partialorder %v204, 0
    %vm397 = vcmp.ge.bf16.partialorder %v205, 0
    %vm398 = vcmp.ge.bf16.partialorder %v206, 0
    %vm399 = vcmp.ge.bf16.partialorder %v207, 0
    %vm400 = vcmp.ge.bf16.partialorder %v208, 0
    %vm401 = vcmp.ge.bf16.partialorder %v209, 0
    %vm402 = vcmp.ge.bf16.partialorder %v210, 0
    %vm403 = vcmp.ge.bf16.partialorder %v211, 0
    %vm404 = vcmp.ge.bf16.partialorder %v212, 0
    %vm405 = vcmp.ge.bf16.partialorder %v213, 0
    %vm406 = vcmp.ge.bf16.partialorder %v214, 0
    %vm407 = vcmp.ge.bf16.partialorder %v215, 0
    %vm408 = vcmp.ge.bf16.partialorder %v216, 0
    %v409 = vmul.bf16 %v25, 1009007652
    %v410 = vmul.bf16 %v26, 1009007652
    %v411 = vmul.bf16 %v27, 1009007652
    %v412 = vmul.bf16 %v28, 1009007652
    %v413 = vmul.bf16 %v29, 1009007652
    %v414 = vmul.bf16 %v30, 1009007652
    %v415 = vmul.bf16 %v31, 1009007652
    %v416 = vmul.bf16 %v32, 1009007652
    %v417 = vmul.bf16 %v33, 1009007652
    %v418 = vmul.bf16 %v34, 1009007652
    %v419 = vmul.bf16 %v35, 1009007652
    %v420 = vmul.bf16 %v36, 1009007652
    %v421 = vmul.bf16 %v37, 1009007652
    %v422 = vmul.bf16 %v38, 1009007652
    %v423 = vmul.bf16 %v39, 1009007652
    %v424 = vmul.bf16 %v40, 1009007652
    %v425 = vmul.bf16 %v41, 1009007652
    %v426 = vmul.bf16 %v42, 1009007652
    %v427 = vmul.bf16 %v43, 1009007652
    %v428 = vmul.bf16 %v44, 1009007652
    %v429 = vmul.bf16 %v45, 1009007652
    %v430 = vmul.bf16 %v46, 1009007652
    %v431 = vmul.bf16 %v47, 1009007652
    %v432 = vmul.bf16 %v48, 1009007652
    %v433 = vmul.bf16 %v49, 1009007652
    %v434 = vmul.bf16 %v50, 1009007652
    %v435 = vmul.bf16 %v51, 1009007652
    %v436 = vmul.bf16 %v52, 1009007652
    %v437 = vmul.bf16 %v53, 1009007652
    %v438 = vmul.bf16 %v54, 1009007652
    %v439 = vmul.bf16 %v55, 1009007652
    %v440 = vmul.bf16 %v56, 1009007652
    %v441 = vmul.bf16 %v57, 1009007652
    %v442 = vmul.bf16 %v58, 1009007652
    %v443 = vmul.bf16 %v59, 1009007652
    %v444 = vmul.bf16 %v60, 1009007652
    %v445 = vmul.bf16 %v61, 1009007652
    %v446 = vmul.bf16 %v62, 1009007652
    %v447 = vmul.bf16 %v63, 1009007652
    %v448 = vmul.bf16 %v64, 1009007652
    %v449 = vmul.bf16 %v65, 1009007652
    %v450 = vmul.bf16 %v66, 1009007652
    %v451 = vmul.bf16 %v67, 1009007652
    %v452 = vmul.bf16 %v68, 1009007652
    %v453 = vmul.bf16 %v69, 1009007652
    %v454 = vmul.bf16 %v70, 1009007652
    %v455 = vmul.bf16 %v71, 1009007652
    %v456 = vmul.bf16 %v72, 1009007652
    %v457 = vmul.bf16 %v73, 1009007652
    %v458 = vmul.bf16 %v74, 1009007652
    %v459 = vmul.bf16 %v75, 1009007652
    %v460 = vmul.bf16 %v76, 1009007652
    %v461 = vmul.bf16 %v77, 1009007652
    %v462 = vmul.bf16 %v78, 1009007652
    %v463 = vmul.bf16 %v79, 1009007652
    %v464 = vmul.bf16 %v80, 1009007652
    %v465 = vmul.bf16 %v81, 1009007652
    %v466 = vmul.bf16 %v82, 1009007652
    %v467 = vmul.bf16 %v83, 1009007652
    %v468 = vmul.bf16 %v84, 1009007652
    %v469 = vmul.bf16 %v85, 1009007652
    %v470 = vmul.bf16 %v86, 1009007652
    %v471 = vmul.bf16 %v87, 1009007652
    %v472 = vmul.bf16 %v88, 1009007652
    %v473 = vmul.bf16 %v89, 1009007652
    %v474 = vmul.bf16 %v90, 1009007652
    %v475 = vmul.bf16 %v91, 1009007652
    %v476 = vmul.bf16 %v92, 1009007652
    %v477 = vmul.bf16 %v93, 1009007652
    %v478 = vmul.bf16 %v94, 1009007652
    %v479 = vmul.bf16 %v95, 1009007652
    %v480 = vmul.bf16 %v96, 1009007652
    %v481 = vmul.bf16 %v97, 1009007652
    %v482 = vmul.bf16 %v98, 1009007652
    %v483 = vmul.bf16 %v99, 1009007652
    %v484 = vmul.bf16 %v100, 1009007652
    %v485 = vmul.bf16 %v101, 1009007652
    %v486 = vmul.bf16 %v102, 1009007652
    %v487 = vmul.bf16 %v103, 1009007652
    %v488 = vmul.bf16 %v104, 1009007652
    %v489 = vmul.bf16 %v105, 1009007652
    %v490 = vmul.bf16 %v106, 1009007652
    %v491 = vmul.bf16 %v107, 1009007652
    %v492 = vmul.bf16 %v108, 1009007652
    %v493 = vmul.bf16 %v109, 1009007652
    %v494 = vmul.bf16 %v110, 1009007652
    %v495 = vmul.bf16 %v111, 1009007652
    %v496 = vmul.bf16 %v112, 1009007652
    %v497 = vmul.bf16 %v113, 1009007652
    %v498 = vmul.bf16 %v114, 1009007652
    %v499 = vmul.bf16 %v115, 1009007652
    %v500 = vmul.bf16 %v116, 1009007652
    %v501 = vmul.bf16 %v117, 1009007652
    %v502 = vmul.bf16 %v118, 1009007652
    %v503 = vmul.bf16 %v119, 1009007652
    %v504 = vmul.bf16 %v120, 1009007652
    %v505 = vmul.bf16 %v121, 1009007652
    %v506 = vmul.bf16 %v122, 1009007652
    %v507 = vmul.bf16 %v123, 1009007652
    %v508 = vmul.bf16 %v124, 1009007652
    %v509 = vmul.bf16 %v125, 1009007652
    %v510 = vmul.bf16 %v126, 1009007652
    %v511 = vmul.bf16 %v127, 1009007652
    %v512 = vmul.bf16 %v128, 1009007652
    %v513 = vmul.bf16 %v129, 1009007652
    %v514 = vmul.bf16 %v130, 1009007652
    %v515 = vmul.bf16 %v131, 1009007652
    %v516 = vmul.bf16 %v132, 1009007652
    %v517 = vmul.bf16 %v133, 1009007652
    %v518 = vmul.bf16 %v134, 1009007652
    %v519 = vmul.bf16 %v135, 1009007652
    %v520 = vmul.bf16 %v136, 1009007652
    %v521 = vmul.bf16 %v137, 1009007652
    %v522 = vmul.bf16 %v138, 1009007652
    %v523 = vmul.bf16 %v139, 1009007652
    %v524 = vmul.bf16 %v140, 1009007652
    %v525 = vmul.bf16 %v141, 1009007652
    %v526 = vmul.bf16 %v142, 1009007652
    %v527 = vmul.bf16 %v143, 1009007652
    %v528 = vmul.bf16 %v144, 1009007652
    %v529 = vmul.bf16 %v145, 1009007652
    %v530 = vmul.bf16 %v146, 1009007652
    %v531 = vmul.bf16 %v147, 1009007652
    %v532 = vmul.bf16 %v148, 1009007652
    %v533 = vmul.bf16 %v149, 1009007652
    %v534 = vmul.bf16 %v150, 1009007652
    %v535 = vmul.bf16 %v151, 1009007652
    %v536 = vmul.bf16 %v152, 1009007652
    %v537 = vmul.bf16 %v153, 1009007652
    %v538 = vmul.bf16 %v154, 1009007652
    %v539 = vmul.bf16 %v155, 1009007652
    %v540 = vmul.bf16 %v156, 1009007652
    %v541 = vmul.bf16 %v157, 1009007652
    %v542 = vmul.bf16 %v158, 1009007652
    %v543 = vmul.bf16 %v159, 1009007652
    %v544 = vmul.bf16 %v160, 1009007652
    %v545 = vmul.bf16 %v161, 1009007652
    %v546 = vmul.bf16 %v162, 1009007652
    %v547 = vmul.bf16 %v163, 1009007652
    %v548 = vmul.bf16 %v164, 1009007652
    %v549 = vmul.bf16 %v165, 1009007652
    %v550 = vmul.bf16 %v166, 1009007652
    %v551 = vmul.bf16 %v167, 1009007652
    %v552 = vmul.bf16 %v168, 1009007652
    %v553 = vmul.bf16 %v169, 1009007652
    %v554 = vmul.bf16 %v170, 1009007652
    %v555 = vmul.bf16 %v171, 1009007652
    %v556 = vmul.bf16 %v172, 1009007652
    %v557 = vmul.bf16 %v173, 1009007652
    %v558 = vmul.bf16 %v174, 1009007652
    %v559 = vmul.bf16 %v175, 1009007652
    %v560 = vmul.bf16 %v176, 1009007652
    %v561 = vmul.bf16 %v177, 1009007652
    %v562 = vmul.bf16 %v178, 1009007652
    %v563 = vmul.bf16 %v179, 1009007652
    %v564 = vmul.bf16 %v180, 1009007652
    %v565 = vmul.bf16 %v181, 1009007652
    %v566 = vmul.bf16 %v182, 1009007652
    %v567 = vmul.bf16 %v183, 1009007652
    %v568 = vmul.bf16 %v184, 1009007652
    %v569 = vmul.bf16 %v185, 1009007652
    %v570 = vmul.bf16 %v186, 1009007652
    %v571 = vmul.bf16 %v187, 1009007652
    %v572 = vmul.bf16 %v188, 1009007652
    %v573 = vmul.bf16 %v189, 1009007652
    %v574 = vmul.bf16 %v190, 1009007652
    %v575 = vmul.bf16 %v191, 1009007652
    %v576 = vmul.bf16 %v192, 1009007652
    %v577 = vmul.bf16 %v193, 1009007652
    %v578 = vmul.bf16 %v194, 1009007652
    %v579 = vmul.bf16 %v195, 1009007652
    %v580 = vmul.bf16 %v196, 1009007652
    %v581 = vmul.bf16 %v197, 1009007652
    %v582 = vmul.bf16 %v198, 1009007652
    %v583 = vmul.bf16 %v199, 1009007652
    %v584 = vmul.bf16 %v200, 1009007652
    %v585 = vmul.bf16 %v201, 1009007652
    %v586 = vmul.bf16 %v202, 1009007652
    %v587 = vmul.bf16 %v203, 1009007652
    %v588 = vmul.bf16 %v204, 1009007652
    %v589 = vmul.bf16 %v205, 1009007652
    %v590 = vmul.bf16 %v206, 1009007652
    %v591 = vmul.bf16 %v207, 1009007652
    %v592 = vmul.bf16 %v208, 1009007652
    %v593 = vmul.bf16 %v209, 1009007652
    %v594 = vmul.bf16 %v210, 1009007652
    %v595 = vmul.bf16 %v211, 1009007652
    %v596 = vmul.bf16 %v212, 1009007652
    %v597 = vmul.bf16 %v213, 1009007652
    %v598 = vmul.bf16 %v214, 1009007652
    %v599 = vmul.bf16 %v215, 1009007652
    %v600 = vmul.bf16 %v216, 1009007652
    %v601 = vsel %vm217, %v25, %v409
    %v602 = vsel %vm218, %v26, %v410
    %v603 = vsel %vm219, %v27, %v411
    %v604 = vsel %vm220, %v28, %v412
    %v605 = vsel %vm221, %v29, %v413
    %v606 = vsel %vm222, %v30, %v414
    %v607 = vsel %vm223, %v31, %v415
    %v608 = vsel %vm224, %v32, %v416
    %v609 = vsel %vm225, %v33, %v417
    %v610 = vsel %vm226, %v34, %v418
    %v611 = vsel %vm227, %v35, %v419
    %v612 = vsel %vm228, %v36, %v420
    %v613 = vsel %vm229, %v37, %v421
    %v614 = vsel %vm230, %v38, %v422
    %v615 = vsel %vm231, %v39, %v423
    %v616 = vsel %vm232, %v40, %v424
    %v617 = vsel %vm233, %v41, %v425
    %v618 = vsel %vm234, %v42, %v426
    %v619 = vsel %vm235, %v43, %v427
    %v620 = vsel %vm236, %v44, %v428
    %v621 = vsel %vm237, %v45, %v429
    %v622 = vsel %vm238, %v46, %v430
    %v623 = vsel %vm239, %v47, %v431
    %v624 = vsel %vm240, %v48, %v432
    %v625 = vsel %vm241, %v49, %v433
    %v626 = vsel %vm242, %v50, %v434
    %v627 = vsel %vm243, %v51, %v435
    %v628 = vsel %vm244, %v52, %v436
    %v629 = vsel %vm245, %v53, %v437
    %v630 = vsel %vm246, %v54, %v438
    %v631 = vsel %vm247, %v55, %v439
    %v632 = vsel %vm248, %v56, %v440
    %v633 = vsel %vm249, %v57, %v441
    %v634 = vsel %vm250, %v58, %v442
    %v635 = vsel %vm251, %v59, %v443
    %v636 = vsel %vm252, %v60, %v444
    %v637 = vsel %vm253, %v61, %v445
    %v638 = vsel %vm254, %v62, %v446
    %v639 = vsel %vm255, %v63, %v447
    %v640 = vsel %vm256, %v64, %v448
    %v641 = vsel %vm257, %v65, %v449
    %v642 = vsel %vm258, %v66, %v450
    %v643 = vsel %vm259, %v67, %v451
    %v644 = vsel %vm260, %v68, %v452
    %v645 = vsel %vm261, %v69, %v453
    %v646 = vsel %vm262, %v70, %v454
    %v647 = vsel %vm263, %v71, %v455
    %v648 = vsel %vm264, %v72, %v456
    %v649 = vsel %vm265, %v73, %v457
    %v650 = vsel %vm266, %v74, %v458
    %v651 = vsel %vm267, %v75, %v459
    %v652 = vsel %vm268, %v76, %v460
    %v653 = vsel %vm269, %v77, %v461
    %v654 = vsel %vm270, %v78, %v462
    %v655 = vsel %vm271, %v79, %v463
    %v656 = vsel %vm272, %v80, %v464
    %v657 = vsel %vm273, %v81, %v465
    %v658 = vsel %vm274, %v82, %v466
    %v659 = vsel %vm275, %v83, %v467
    %v660 = vsel %vm276, %v84, %v468
    %v661 = vsel %vm277, %v85, %v469
    %v662 = vsel %vm278, %v86, %v470
    %v663 = vsel %vm279, %v87, %v471
    %v664 = vsel %vm280, %v88, %v472
    %v665 = vsel %vm281, %v89, %v473
    %v666 = vsel %vm282, %v90, %v474
    %v667 = vsel %vm283, %v91, %v475
    %v668 = vsel %vm284, %v92, %v476
    %v669 = vsel %vm285, %v93, %v477
    %v670 = vsel %vm286, %v94, %v478
    %v671 = vsel %vm287, %v95, %v479
    %v672 = vsel %vm288, %v96, %v480
    %v673 = vsel %vm289, %v97, %v481
    %v674 = vsel %vm290, %v98, %v482
    %v675 = vsel %vm291, %v99, %v483
    %v676 = vsel %vm292, %v100, %v484
    %v677 = vsel %vm293, %v101, %v485
    %v678 = vsel %vm294, %v102, %v486
    %v679 = vsel %vm295, %v103, %v487
    %v680 = vsel %vm296, %v104, %v488
    %v681 = vsel %vm297, %v105, %v489
    %v682 = vsel %vm298, %v106, %v490
    %v683 = vsel %vm299, %v107, %v491
    %v684 = vsel %vm300, %v108, %v492
    %v685 = vsel %vm301, %v109, %v493
    %v686 = vsel %vm302, %v110, %v494
    %v687 = vsel %vm303, %v111, %v495
    %v688 = vsel %vm304, %v112, %v496
    %v689 = vsel %vm305, %v113, %v497
    %v690 = vsel %vm306, %v114, %v498
    %v691 = vsel %vm307, %v115, %v499
    %v692 = vsel %vm308, %v116, %v500
    %v693 = vsel %vm309, %v117, %v501
    %v694 = vsel %vm310, %v118, %v502
    %v695 = vsel %vm311, %v119, %v503
    %v696 = vsel %vm312, %v120, %v504
    %v697 = vsel %vm313, %v121, %v505
    %v698 = vsel %vm314, %v122, %v506
    %v699 = vsel %vm315, %v123, %v507
    %v700 = vsel %vm316, %v124, %v508
    %v701 = vsel %vm317, %v125, %v509
    %v702 = vsel %vm318, %v126, %v510
    %v703 = vsel %vm319, %v127, %v511
    %v704 = vsel %vm320, %v128, %v512
    %v705 = vsel %vm321, %v129, %v513
    %v706 = vsel %vm322, %v130, %v514
    %v707 = vsel %vm323, %v131, %v515
    %v708 = vsel %vm324, %v132, %v516
    %v709 = vsel %vm325, %v133, %v517
    %v710 = vsel %vm326, %v134, %v518
    %v711 = vsel %vm327, %v135, %v519
    %v712 = vsel %vm328, %v136, %v520
    %v713 = vsel %vm329, %v137, %v521
    %v714 = vsel %vm330, %v138, %v522
    %v715 = vsel %vm331, %v139, %v523
    %v716 = vsel %vm332, %v140, %v524
    %v717 = vsel %vm333, %v141, %v525
    %v718 = vsel %vm334, %v142, %v526
    %v719 = vsel %vm335, %v143, %v527
    %v720 = vsel %vm336, %v144, %v528
    %v721 = vsel %vm337, %v145, %v529
    %v722 = vsel %vm338, %v146, %v530
    %v723 = vsel %vm339, %v147, %v531
    %v724 = vsel %vm340, %v148, %v532
    %v725 = vsel %vm341, %v149, %v533
    %v726 = vsel %vm342, %v150, %v534
    %v727 = vsel %vm343, %v151, %v535
    %v728 = vsel %vm344, %v152, %v536
    %v729 = vsel %vm345, %v153, %v537
    %v730 = vsel %vm346, %v154, %v538
    %v731 = vsel %vm347, %v155, %v539
    %v732 = vsel %vm348, %v156, %v540
    %v733 = vsel %vm349, %v157, %v541
    %v734 = vsel %vm350, %v158, %v542
    %v735 = vsel %vm351, %v159, %v543
    %v736 = vsel %vm352, %v160, %v544
    %v737 = vsel %vm353, %v161, %v545
    %v738 = vsel %vm354, %v162, %v546
    %v739 = vsel %vm355, %v163, %v547
    %v740 = vsel %vm356, %v164, %v548
    %v741 = vsel %vm357, %v165, %v549
    %v742 = vsel %vm358, %v166, %v550
    %v743 = vsel %vm359, %v167, %v551
    %v744 = vsel %vm360, %v168, %v552
    %v745 = vsel %vm361, %v169, %v553
    %v746 = vsel %vm362, %v170, %v554
    %v747 = vsel %vm363, %v171, %v555
    %v748 = vsel %vm364, %v172, %v556
    %v749 = vsel %vm365, %v173, %v557
    %v750 = vsel %vm366, %v174, %v558
    %v751 = vsel %vm367, %v175, %v559
    %v752 = vsel %vm368, %v176, %v560
    %v753 = vsel %vm369, %v177, %v561
    %v754 = vsel %vm370, %v178, %v562
    %v755 = vsel %vm371, %v179, %v563
    %v756 = vsel %vm372, %v180, %v564
    %v757 = vsel %vm373, %v181, %v565
    %v758 = vsel %vm374, %v182, %v566
    %v759 = vsel %vm375, %v183, %v567
    %v760 = vsel %vm376, %v184, %v568
    %v761 = vsel %vm377, %v185, %v569
    %v762 = vsel %vm378, %v186, %v570
    %v763 = vsel %vm379, %v187, %v571
    %v764 = vsel %vm380, %v188, %v572
    %v765 = vsel %vm381, %v189, %v573
    %v766 = vsel %vm382, %v190, %v574
    %v767 = vsel %vm383, %v191, %v575
    %v768 = vsel %vm384, %v192, %v576
    %v769 = vsel %vm385, %v193, %v577
    %v770 = vsel %vm386, %v194, %v578
    %v771 = vsel %vm387, %v195, %v579
    %v772 = vsel %vm388, %v196, %v580
    %v773 = vsel %vm389, %v197, %v581
    %v774 = vsel %vm390, %v198, %v582
    %v775 = vsel %vm391, %v199, %v583
    %v776 = vsel %vm392, %v200, %v584
    %v777 = vsel %vm393, %v201, %v585
    %v778 = vsel %vm394, %v202, %v586
    %v779 = vsel %vm395, %v203, %v587
    %v780 = vsel %vm396, %v204, %v588
    %v781 = vsel %vm397, %v205, %v589
    %v782 = vsel %vm398, %v206, %v590
    %v783 = vsel %vm399, %v207, %v591
    %v784 = vsel %vm400, %v208, %v592
    %v785 = vsel %vm401, %v209, %v593
    %v786 = vsel %vm402, %v210, %v594
    %v787 = vsel %vm403, %v211, %v595
    %v788 = vsel %vm404, %v212, %v596
    %v789 = vsel %vm405, %v213, %v597
    %v790 = vsel %vm406, %v214, %v598
    %v791 = vsel %vm407, %v215, %v599
    %v792 = vsel %vm408, %v216, %v600
    %v793 = vld [vmem:[%s1] sm:$0xf]
    %v794 = vld [vmem:[%s1 + $0x4] sm:$0xf]
    %v795 = vld [vmem:[%s1 + $0x8] sm:$0xf]
    %v796 = vld [vmem:[%s1 + $0xc] sm:$0xf]
    %v797 = vld [vmem:[%s1 + $0x10] sm:$0xf]
    %v798 = vld [vmem:[%s1 + $0x14] sm:$0xf]
    %v799 = vld [vmem:[%s1 + $0x18] sm:$0xf]
    %v800 = vld [vmem:[%s1 + $0x1c] sm:$0xf]
    %v801 = vld [vmem:[%s1 + $0x20] sm:$0xf]
    %v802 = vld [vmem:[%s1 + $0x24] sm:$0xf]
    %v803 = vld [vmem:[%s1 + $0x28] sm:$0xf]
    %v804 = vld [vmem:[%s1 + $0x2c] sm:$0xf]
    %v805 = vld [vmem:[%s1 + $0x30] sm:$0xf]
    %v806 = vld [vmem:[%s1 + $0x34] sm:$0xf]
    %v807 = vld [vmem:[%s1 + $0x38] sm:$0xf]
    %v808 = vld [vmem:[%s1 + $0x3c] sm:$0xf]
    %v809 = vld [vmem:[%s1 + $0x40] sm:$0xf]
    %v810 = vld [vmem:[%s1 + $0x44] sm:$0xf]
    %v811 = vld [vmem:[%s1 + $0x48] sm:$0xf]
    %v812 = vld [vmem:[%s1 + $0x4c] sm:$0xf]
    %v813 = vld [vmem:[%s1 + $0x50] sm:$0xf]
    %v814 = vld [vmem:[%s1 + $0x54] sm:$0xf]
    %v815 = vld [vmem:[%s1 + $0x58] sm:$0xf]
    %v816 = vld [vmem:[%s1 + $0x5c] sm:$0xf]
    %v817 = vld [vmem:[%s1 + $0x60] sm:$0xf]
    %v818 = vld [vmem:[%s1 + $0x64] sm:$0xf]
    %v819 = vld [vmem:[%s1 + $0x68] sm:$0xf]
    %v820 = vld [vmem:[%s1 + $0x6c] sm:$0xf]
    %v821 = vld [vmem:[%s1 + $0x70] sm:$0xf]
    %v822 = vld [vmem:[%s1 + $0x74] sm:$0xf]
    %v823 = vld [vmem:[%s1 + $0x78] sm:$0xf]
    %v824 = vld [vmem:[%s1 + $0x7c] sm:$0xf]
    %v825 = vld [vmem:[%s1 + $0x80] sm:$0xf]
    %v826 = vld [vmem:[%s1 + $0x84] sm:$0xf]
    %v827 = vld [vmem:[%s1 + $0x88] sm:$0xf]
    %v828 = vld [vmem:[%s1 + $0x8c] sm:$0xf]
    %v829 = vld [vmem:[%s1 + $0x90] sm:$0xf]
    %v830 = vld [vmem:[%s1 + $0x94] sm:$0xf]
    %v831 = vld [vmem:[%s1 + $0x98] sm:$0xf]
    %v832 = vld [vmem:[%s1 + $0x9c] sm:$0xf]
    %v833 = vld [vmem:[%s1 + $0xa0] sm:$0xf]
    %v834 = vld [vmem:[%s1 + $0xa4] sm:$0xf]
    %v835 = vld [vmem:[%s1 + $0xa8] sm:$0xf]
    %v836 = vld [vmem:[%s1 + $0xac] sm:$0xf]
    %v837 = vld [vmem:[%s1 + $0xb0] sm:$0xf]
    %v838 = vld [vmem:[%s1 + $0xb4] sm:$0xf]
    %v839 = vld [vmem:[%s1 + $0xb8] sm:$0xf]
    %v840 = vld [vmem:[%s1 + $0xbc] sm:$0xf]
    %v841 = vld [vmem:[%s1 + $0xc0] sm:$0xf]
    %v842 = vld [vmem:[%s1 + $0xc4] sm:$0xf]
    %v843 = vld [vmem:[%s1 + $0xc8] sm:$0xf]
    %v844 = vld [vmem:[%s1 + $0xcc] sm:$0xf]
    %v845 = vld [vmem:[%s1 + $0xd0] sm:$0xf]
    %v846 = vld [vmem:[%s1 + $0xd4] sm:$0xf]
    %v847 = vld [vmem:[%s1 + $0xd8] sm:$0xf]
    %v848 = vld [vmem:[%s1 + $0xdc] sm:$0xf]
    %v849 = vld [vmem:[%s1 + $0xe0] sm:$0xf]
    %v850 = vld [vmem:[%s1 + $0xe4] sm:$0xf]
    %v851 = vld [vmem:[%s1 + $0xe8] sm:$0xf]
    %v852 = vld [vmem:[%s1 + $0xec] sm:$0xf]
    %v853 = vld [vmem:[%s1 + $0xf0] sm:$0xf]
    %v854 = vld [vmem:[%s1 + $0xf4] sm:$0xf]
    %v855 = vld [vmem:[%s1 + $0xf8] sm:$0xf]
    %v856 = vld [vmem:[%s1 + $0xfc] sm:$0xf]
    %v857 = vld [vmem:[%s1 + $0x100] sm:$0xf]
    %v858 = vld [vmem:[%s1 + $0x104] sm:$0xf]
    %v859 = vld [vmem:[%s1 + $0x108] sm:$0xf]
    %v860 = vld [vmem:[%s1 + $0x10c] sm:$0xf]
    %v861 = vld [vmem:[%s1 + $0x110] sm:$0xf]
    %v862 = vld [vmem:[%s1 + $0x114] sm:$0xf]
    %v863 = vld [vmem:[%s1 + $0x118] sm:$0xf]
    %v864 = vld [vmem:[%s1 + $0x11c] sm:$0xf]
    %v865 = vld [vmem:[%s2] sm:$0x1]
    %v867 = vlaneseq
    %v868 = vshrl.u32 %v867, 7
    %v869 = vsub.s32 0, %v868
    %v870 = vrot.slane %v865, %v869
    %v1064 = vunpack.c.l.b16 %v601
    %v1065 = vunpack.c.h.b16 %v601
    %v1066 = vunpack.c.l.b16 %v602
    %v1067 = vunpack.c.h.b16 %v602
    %v1068 = vunpack.c.l.b16 %v603
    %v1069 = vunpack.c.l.b16 %v604
    %v1070 = vunpack.c.h.b16 %v604
    %v1071 = vunpack.c.l.b16 %v605
    %v1072 = vunpack.c.h.b16 %v605
    %v1073 = vunpack.c.l.b16 %v606
    %v1074 = vunpack.c.l.b16 %v607
    %v1075 = vunpack.c.h.b16 %v607
    %v1076 = vunpack.c.l.b16 %v608
    %v1077 = vunpack.c.h.b16 %v608
    %v1078 = vunpack.c.l.b16 %v609
    %v1079 = vunpack.c.l.b16 %v610
    %v1080 = vunpack.c.h.b16 %v610
    %v1081 = vunpack.c.l.b16 %v611
    %v1082 = vunpack.c.h.b16 %v611
    %v1083 = vunpack.c.l.b16 %v612
    %v1084 = vunpack.c.l.b16 %v613
    %v1085 = vunpack.c.h.b16 %v613
    %v1086 = vunpack.c.l.b16 %v614
    %v1087 = vunpack.c.h.b16 %v614
    %v1088 = vunpack.c.l.b16 %v615
    %v1089 = vunpack.c.l.b16 %v616
    %v1090 = vunpack.c.h.b16 %v616
    %v1091 = vunpack.c.l.b16 %v617
    %v1092 = vunpack.c.h.b16 %v617
    %v1093 = vunpack.c.l.b16 %v618
    %v1094 = vunpack.c.l.b16 %v619
    %v1095 = vunpack.c.h.b16 %v619
    %v1096 = vunpack.c.l.b16 %v620
    %v1097 = vunpack.c.h.b16 %v620
    %v1098 = vunpack.c.l.b16 %v621
    %v1099 = vunpack.c.l.b16 %v622
    %v1100 = vunpack.c.h.b16 %v622
    %v1101 = vunpack.c.l.b16 %v623
    %v1102 = vunpack.c.h.b16 %v623
    %v1103 = vunpack.c.l.b16 %v624
    %v1104 = vunpack.c.l.b16 %v625
    %v1105 = vunpack.c.h.b16 %v625
    %v1106 = vunpack.c.l.b16 %v626
    %v1107 = vunpack.c.h.b16 %v626
    %v1108 = vunpack.c.l.b16 %v627
    %v1109 = vunpack.c.l.b16 %v628
    %v1110 = vunpack.c.h.b16 %v628
    %v1111 = vunpack.c.l.b16 %v629
    %v1112 = vunpack.c.h.b16 %v629
    %v1113 = vunpack.c.l.b16 %v630
    %v1114 = vunpack.c.l.b16 %v631
    %v1115 = vunpack.c.h.b16 %v631
    %v1116 = vunpack.c.l.b16 %v632
    %v1117 = vunpack.c.h.b16 %v632
    %v1118 = vunpack.c.l.b16 %v633
    %v1119 = vunpack.c.l.b16 %v634
    %v1120 = vunpack.c.h.b16 %v634
    %v1121 = vunpack.c.l.b16 %v635
    %v1122 = vunpack.c.h.b16 %v635
    %v1123 = vunpack.c.l.b16 %v636
    %v1124 = vunpack.c.l.b16 %v637
    %v1125 = vunpack.c.h.b16 %v637
    %v1126 = vunpack.c.l.b16 %v638
    %v1127 = vunpack.c.h.b16 %v638
    %v1128 = vunpack.c.l.b16 %v639
    %v1129 = vunpack.c.l.b16 %v640
    %v1130 = vunpack.c.h.b16 %v640
    %v1131 = vunpack.c.l.b16 %v641
    %v1132 = vunpack.c.h.b16 %v641
    %v1133 = vunpack.c.l.b16 %v642
    %v1134 = vunpack.c.l.b16 %v643
    %v1135 = vunpack.c.h.b16 %v643
    %v1136 = vunpack.c.l.b16 %v644
    %v1137 = vunpack.c.h.b16 %v644
    %v1138 = vunpack.c.l.b16 %v645
    %v1139 = vunpack.c.l.b16 %v646
    %v1140 = vunpack.c.h.b16 %v646
    %v1141 = vunpack.c.l.b16 %v647
    %v1142 = vunpack.c.h.b16 %v647
    %v1143 = vunpack.c.l.b16 %v648
    %v1144 = vunpack.c.l.b16 %v649
    %v1145 = vunpack.c.h.b16 %v649
    %v1146 = vunpack.c.l.b16 %v650
    %v1147 = vunpack.c.h.b16 %v650
    %v1148 = vunpack.c.l.b16 %v651
    %v1149 = vunpack.c.l.b16 %v652
    %v1150 = vunpack.c.h.b16 %v652
    %v1151 = vunpack.c.l.b16 %v653
    %v1152 = vunpack.c.h.b16 %v653
    %v1153 = vunpack.c.l.b16 %v654
    %v1154 = vunpack.c.l.b16 %v655
    %v1155 = vunpack.c.h.b16 %v655
    %v1156 = vunpack.c.l.b16 %v656
    %v1157 = vunpack.c.h.b16 %v656
    %v1158 = vunpack.c.l.b16 %v657
    %v1159 = vunpack.c.l.b16 %v658
    %v1160 = vunpack.c.h.b16 %v658
    %v1161 = vunpack.c.l.b16 %v659
    %v1162 = vunpack.c.h.b16 %v659
    %v1163 = vunpack.c.l.b16 %v660
    %v1164 = vunpack.c.l.b16 %v661
    %v1165 = vunpack.c.h.b16 %v661
    %v1166 = vunpack.c.l.b16 %v662
    %v1167 = vunpack.c.h.b16 %v662
    %v1168 = vunpack.c.l.b16 %v663
    %v1169 = vunpack.c.l.b16 %v664
    %v1170 = vunpack.c.h.b16 %v664
    %v1171 = vunpack.c.l.b16 %v665
    %v1172 = vunpack.c.h.b16 %v665
    %v1173 = vunpack.c.l.b16 %v666
    %v1174 = vunpack.c.l.b16 %v667
    %v1175 = vunpack.c.h.b16 %v667
    %v1176 = vunpack.c.l.b16 %v668
    %v1177 = vunpack.c.h.b16 %v668
    %v1178 = vunpack.c.l.b16 %v669
    %v1179 = vunpack.c.l.b16 %v670
    %v1180 = vunpack.c.h.b16 %v670
    %v1181 = vunpack.c.l.b16 %v671
    %v1182 = vunpack.c.h.b16 %v671
    %v1183 = vunpack.c.l.b16 %v672
    %v1184 = vunpack.c.l.b16 %v673
    %v1185 = vunpack.c.h.b16 %v673
    %v1186 = vunpack.c.l.b16 %v674
    %v1187 = vunpack.c.h.b16 %v674
    %v1188 = vunpack.c.l.b16 %v675
    %v1189 = vunpack.c.l.b16 %v676
    %v1190 = vunpack.c.h.b16 %v676
    %v1191 = vunpack.c.l.b16 %v677
    %v1192 = vunpack.c.h.b16 %v677
    %v1193 = vunpack.c.l.b16 %v678
    %v1194 = vunpack.c.l.b16 %v679
    %v1195 = vunpack.c.h.b16 %v679
    %v1196 = vunpack.c.l.b16 %v680
    %v1197 = vunpack.c.h.b16 %v680
    %v1198 = vunpack.c.l.b16 %v681
    %v1199 = vunpack.c.l.b16 %v682
    %v1200 = vunpack.c.h.b16 %v682
    %v1201 = vunpack.c.l.b16 %v683
    %v1202 = vunpack.c.h.b16 %v683
    %v1203 = vunpack.c.l.b16 %v684
    %v1204 = vunpack.c.l.b16 %v685
    %v1205 = vunpack.c.h.b16 %v685
    %v1206 = vunpack.c.l.b16 %v686
    %v1207 = vunpack.c.h.b16 %v686
    %v1208 = vunpack.c.l.b16 %v687
    %v1209 = vunpack.c.l.b16 %v688
    %v1210 = vunpack.c.h.b16 %v688
    %v1211 = vunpack.c.l.b16 %v689
    %v1212 = vunpack.c.h.b16 %v689
    %v1213 = vunpack.c.l.b16 %v690
    %v1214 = vunpack.c.l.b16 %v691
    %v1215 = vunpack.c.h.b16 %v691
    %v1216 = vunpack.c.l.b16 %v692
    %v1217 = vunpack.c.h.b16 %v692
    %v1218 = vunpack.c.l.b16 %v693
    %v1219 = vunpack.c.l.b16 %v694
    %v1220 = vunpack.c.h.b16 %v694
    %v1221 = vunpack.c.l.b16 %v695
    %v1222 = vunpack.c.h.b16 %v695
    %v1223 = vunpack.c.l.b16 %v696
    %v1224 = vunpack.c.l.b16 %v697
    %v1225 = vunpack.c.h.b16 %v697
    %v1226 = vunpack.c.l.b16 %v698
    %v1227 = vunpack.c.h.b16 %v698
    %v1228 = vunpack.c.l.b16 %v699
    %v1229 = vunpack.c.l.b16 %v700
    %v1230 = vunpack.c.h.b16 %v700
    %v1231 = vunpack.c.l.b16 %v701
    %v1232 = vunpack.c.h.b16 %v701
    %v1233 = vunpack.c.l.b16 %v702
    %v1234 = vunpack.c.l.b16 %v703
    %v1235 = vunpack.c.h.b16 %v703
    %v1236 = vunpack.c.l.b16 %v704
    %v1237 = vunpack.c.h.b16 %v704
    %v1238 = vunpack.c.l.b16 %v705
    %v1239 = vunpack.c.l.b16 %v706
    %v1240 = vunpack.c.h.b16 %v706
    %v1241 = vunpack.c.l.b16 %v707
    %v1242 = vunpack.c.h.b16 %v707
    %v1243 = vunpack.c.l.b16 %v708
    %v1244 = vunpack.c.l.b16 %v709
    %v1245 = vunpack.c.h.b16 %v709
    %v1246 = vunpack.c.l.b16 %v710
    %v1247 = vunpack.c.h.b16 %v710
    %v1248 = vunpack.c.l.b16 %v711
    %v1249 = vunpack.c.l.b16 %v712
    %v1250 = vunpack.c.h.b16 %v712
    %v1251 = vunpack.c.l.b16 %v713
    %v1252 = vunpack.c.h.b16 %v713
    %v1253 = vunpack.c.l.b16 %v714
    %v1254 = vunpack.c.l.b16 %v715
    %v1255 = vunpack.c.h.b16 %v715
    %v1256 = vunpack.c.l.b16 %v716
    %v1257 = vunpack.c.h.b16 %v716
    %v1258 = vunpack.c.l.b16 %v717
    %v1259 = vunpack.c.l.b16 %v718
    %v1260 = vunpack.c.h.b16 %v718
    %v1261 = vunpack.c.l.b16 %v719
    %v1262 = vunpack.c.h.b16 %v719
    %v1263 = vunpack.c.l.b16 %v720
    %v1264 = vunpack.c.l.b16 %v721
    %v1265 = vunpack.c.h.b16 %v721
    %v1266 = vunpack.c.l.b16 %v722
    %v1267 = vunpack.c.h.b16 %v722
    %v1268 = vunpack.c.l.b16 %v723
    %v1269 = vunpack.c.l.b16 %v724
    %v1270 = vunpack.c.h.b16 %v724
    %v1271 = vunpack.c.l.b16 %v725
    %v1272 = vunpack.c.h.b16 %v725
    %v1273 = vunpack.c.l.b16 %v726
    %v1274 = vunpack.c.l.b16 %v727
    %v1275 = vunpack.c.h.b16 %v727
    %v1276 = vunpack.c.l.b16 %v728
    %v1277 = vunpack.c.h.b16 %v728
    %v1278 = vunpack.c.l.b16 %v729
    %v1279 = vunpack.c.l.b16 %v730
    %v1280 = vunpack.c.h.b16 %v730
    %v1281 = vunpack.c.l.b16 %v731
    %v1282 = vunpack.c.h.b16 %v731
    %v1283 = vunpack.c.l.b16 %v732
    %v1284 = vunpack.c.l.b16 %v733
    %v1285 = vunpack.c.h.b16 %v733
    %v1286 = vunpack.c.l.b16 %v734
    %v1287 = vunpack.c.h.b16 %v734
    %v1288 = vunpack.c.l.b16 %v735
    %v1289 = vunpack.c.l.b16 %v736
    %v1290 = vunpack.c.h.b16 %v736
    %v1291 = vunpack.c.l.b16 %v737
    %v1292 = vunpack.c.h.b16 %v737
    %v1293 = vunpack.c.l.b16 %v738
    %v1294 = vunpack.c.l.b16 %v739
    %v1295 = vunpack.c.h.b16 %v739
    %v1296 = vunpack.c.l.b16 %v740
    %v1297 = vunpack.c.h.b16 %v740
    %v1298 = vunpack.c.l.b16 %v741
    %v1299 = vunpack.c.l.b16 %v742
    %v1300 = vunpack.c.h.b16 %v742
    %v1301 = vunpack.c.l.b16 %v743
    %v1302 = vunpack.c.h.b16 %v743
    %v1303 = vunpack.c.l.b16 %v744
    %v1304 = vunpack.c.l.b16 %v745
    %v1305 = vunpack.c.h.b16 %v745
    %v1306 = vunpack.c.l.b16 %v746
    %v1307 = vunpack.c.h.b16 %v746
    %v1308 = vunpack.c.l.b16 %v747
    %v1309 = vunpack.c.l.b16 %v748
    %v1310 = vunpack.c.h.b16 %v748
    %v1311 = vunpack.c.l.b16 %v749
    %v1312 = vunpack.c.h.b16 %v749
    %v1313 = vunpack.c.l.b16 %v750
    %v1314 = vunpack.c.l.b16 %v751
    %v1315 = vunpack.c.h.b16 %v751
    %v1316 = vunpack.c.l.b16 %v752
    %v1317 = vunpack.c.h.b16 %v752
    %v1318 = vunpack.c.l.b16 %v753
    %v1319 = vunpack.c.l.b16 %v754
    %v1320 = vunpack.c.h.b16 %v754
    %v1321 = vunpack.c.l.b16 %v755
    %v1322 = vunpack.c.h.b16 %v755
    %v1323 = vunpack.c.l.b16 %v756
    %v1324 = vunpack.c.l.b16 %v757
    %v1325 = vunpack.c.h.b16 %v757
    %v1326 = vunpack.c.l.b16 %v758
    %v1327 = vunpack.c.h.b16 %v758
    %v1328 = vunpack.c.l.b16 %v759
    %v1329 = vunpack.c.l.b16 %v760
    %v1330 = vunpack.c.h.b16 %v760
    %v1331 = vunpack.c.l.b16 %v761
    %v1332 = vunpack.c.h.b16 %v761
    %v1333 = vunpack.c.l.b16 %v762
    %v1334 = vunpack.c.l.b16 %v763
    %v1335 = vunpack.c.h.b16 %v763
    %v1336 = vunpack.c.l.b16 %v764
    %v1337 = vunpack.c.h.b16 %v764
    %v1338 = vunpack.c.l.b16 %v765
    %v1339 = vunpack.c.l.b16 %v766
    %v1340 = vunpack.c.h.b16 %v766
    %v1341 = vunpack.c.l.b16 %v767
    %v1342 = vunpack.c.h.b16 %v767
    %v1343 = vunpack.c.l.b16 %v768
    %v1344 = vunpack.c.l.b16 %v769
    %v1345 = vunpack.c.h.b16 %v769
    %v1346 = vunpack.c.l.b16 %v770
    %v1347 = vunpack.c.h.b16 %v770
    %v1348 = vunpack.c.l.b16 %v771
    %v1349 = vunpack.c.l.b16 %v772
    %v1350 = vunpack.c.h.b16 %v772
    %v1351 = vunpack.c.l.b16 %v773
    %v1352 = vunpack.c.h.b16 %v773
    %v1353 = vunpack.c.l.b16 %v774
    %v1354 = vunpack.c.l.b16 %v775
    %v1355 = vunpack.c.h.b16 %v775
    %v1356 = vunpack.c.l.b16 %v776
    %v1357 = vunpack.c.h.b16 %v776
    %v1358 = vunpack.c.l.b16 %v777
    %v1359 = vunpack.c.l.b16 %v778
    %v1360 = vunpack.c.h.b16 %v778
    %v1361 = vunpack.c.l.b16 %v779
    %v1362 = vunpack.c.h.b16 %v779
    %v1363 = vunpack.c.l.b16 %v780
    %v1364 = vunpack.c.l.b16 %v781
    %v1365 = vunpack.c.h.b16 %v781
    %v1366 = vunpack.c.l.b16 %v782
    %v1367 = vunpack.c.h.b16 %v782
    %v1368 = vunpack.c.l.b16 %v783
    %v1369 = vunpack.c.l.b16 %v784
    %v1370 = vunpack.c.h.b16 %v784
    %v1371 = vunpack.c.l.b16 %v785
    %v1372 = vunpack.c.h.b16 %v785
    %v1373 = vunpack.c.l.b16 %v786
    %v1374 = vunpack.c.l.b16 %v787
    %v1375 = vunpack.c.h.b16 %v787
    %v1376 = vunpack.c.l.b16 %v788
    %v1377 = vunpack.c.h.b16 %v788
    %v1378 = vunpack.c.l.b16 %v789
    %v1379 = vunpack.c.l.b16 %v790
    %v1380 = vunpack.c.h.b16 %v790
    %v1381 = vunpack.c.l.b16 %v791
    %v1382 = vunpack.c.h.b16 %v791
    %v1383 = vunpack.c.l.b16 %v792
    %v1384 = vpack.c.b16 %v1069, %v1064
    %v1385 = vpack.c.b16 %v1070, %v1065
    %v1386 = vpack.c.b16 %v1071, %v1066
    %v1387 = vpack.c.b16 %v1072, %v1067
    %v1388 = vpack.c.b16 %v1073, %v1068
    %v1389 = vpack.c.b16 %v1079, %v1074
    %v1390 = vpack.c.b16 %v1080, %v1075
    %v1391 = vpack.c.b16 %v1081, %v1076
    %v1392 = vpack.c.b16 %v1082, %v1077
    %v1393 = vpack.c.b16 %v1083, %v1078
    %v1394 = vpack.c.b16 %v1089, %v1084
    %v1395 = vpack.c.b16 %v1090, %v1085
    %v1396 = vpack.c.b16 %v1091, %v1086
    %v1397 = vpack.c.b16 %v1092, %v1087
    %v1398 = vpack.c.b16 %v1093, %v1088
    %v1399 = vpack.c.b16 %v1099, %v1094
    %v1400 = vpack.c.b16 %v1100, %v1095
    %v1401 = vpack.c.b16 %v1101, %v1096
    %v1402 = vpack.c.b16 %v1102, %v1097
    %v1403 = vpack.c.b16 %v1103, %v1098
    %v1404 = vpack.c.b16 %v1109, %v1104
    %v1405 = vpack.c.b16 %v1110, %v1105
    %v1406 = vpack.c.b16 %v1111, %v1106
    %v1407 = vpack.c.b16 %v1112, %v1107
    %v1408 = vpack.c.b16 %v1113, %v1108
    %v1409 = vpack.c.b16 %v1119, %v1114
    %v1410 = vpack.c.b16 %v1120, %v1115
    %v1411 = vpack.c.b16 %v1121, %v1116
    %v1412 = vpack.c.b16 %v1122, %v1117
    %v1413 = vpack.c.b16 %v1123, %v1118
    %v1414 = vpack.c.b16 %v1129, %v1124
    %v1415 = vpack.c.b16 %v1130, %v1125
    %v1416 = vpack.c.b16 %v1131, %v1126
    %v1417 = vpack.c.b16 %v1132, %v1127
    %v1418 = vpack.c.b16 %v1133, %v1128
    %v1419 = vpack.c.b16 %v1139, %v1134
    %v1420 = vpack.c.b16 %v1140, %v1135
    %v1421 = vpack.c.b16 %v1141, %v1136
    %v1422 = vpack.c.b16 %v1142, %v1137
    %v1423 = vpack.c.b16 %v1143, %v1138
    %v1424 = vpack.c.b16 %v1149, %v1144
    %v1425 = vpack.c.b16 %v1150, %v1145
    %v1426 = vpack.c.b16 %v1151, %v1146
    %v1427 = vpack.c.b16 %v1152, %v1147
    %v1428 = vpack.c.b16 %v1153, %v1148
    %v1429 = vpack.c.b16 %v1159, %v1154
    %v1430 = vpack.c.b16 %v1160, %v1155
    %v1431 = vpack.c.b16 %v1161, %v1156
    %v1432 = vpack.c.b16 %v1162, %v1157
    %v1433 = vpack.c.b16 %v1163, %v1158
    %v1434 = vpack.c.b16 %v1169, %v1164
    %v1435 = vpack.c.b16 %v1170, %v1165
    %v1436 = vpack.c.b16 %v1171, %v1166
    %v1437 = vpack.c.b16 %v1172, %v1167
    %v1438 = vpack.c.b16 %v1173, %v1168
    %v1439 = vpack.c.b16 %v1179, %v1174
    %v1440 = vpack.c.b16 %v1180, %v1175
    %v1441 = vpack.c.b16 %v1181, %v1176
    %v1442 = vpack.c.b16 %v1182, %v1177
    %v1443 = vpack.c.b16 %v1183, %v1178
    %v1444 = vpack.c.b16 %v1189, %v1184
    %v1445 = vpack.c.b16 %v1190, %v1185
    %v1446 = vpack.c.b16 %v1191, %v1186
    %v1447 = vpack.c.b16 %v1192, %v1187
    %v1448 = vpack.c.b16 %v1193, %v1188
    %v1449 = vpack.c.b16 %v1199, %v1194
    %v1450 = vpack.c.b16 %v1200, %v1195
    %v1451 = vpack.c.b16 %v1201, %v1196
    %v1452 = vpack.c.b16 %v1202, %v1197
    %v1453 = vpack.c.b16 %v1203, %v1198
    %v1454 = vpack.c.b16 %v1209, %v1204
    %v1455 = vpack.c.b16 %v1210, %v1205
    %v1456 = vpack.c.b16 %v1211, %v1206
    %v1457 = vpack.c.b16 %v1212, %v1207
    %v1458 = vpack.c.b16 %v1213, %v1208
    %v1459 = vpack.c.b16 %v1219, %v1214
    %v1460 = vpack.c.b16 %v1220, %v1215
    %v1461 = vpack.c.b16 %v1221, %v1216
    %v1462 = vpack.c.b16 %v1222, %v1217
    %v1463 = vpack.c.b16 %v1223, %v1218
    %v1464 = vpack.c.b16 %v1229, %v1224
    %v1465 = vpack.c.b16 %v1230, %v1225
    %v1466 = vpack.c.b16 %v1231, %v1226
    %v1467 = vpack.c.b16 %v1232, %v1227
    %v1468 = vpack.c.b16 %v1233, %v1228
    %v1469 = vpack.c.b16 %v1239, %v1234
    %v1470 = vpack.c.b16 %v1240, %v1235
    %v1471 = vpack.c.b16 %v1241, %v1236
    %v1472 = vpack.c.b16 %v1242, %v1237
    %v1473 = vpack.c.b16 %v1243, %v1238
    %v1474 = vpack.c.b16 %v1249, %v1244
    %v1475 = vpack.c.b16 %v1250, %v1245
    %v1476 = vpack.c.b16 %v1251, %v1246
    %v1477 = vpack.c.b16 %v1252, %v1247
    %v1478 = vpack.c.b16 %v1253, %v1248
    %v1479 = vpack.c.b16 %v1259, %v1254
    %v1480 = vpack.c.b16 %v1260, %v1255
    %v1481 = vpack.c.b16 %v1261, %v1256
    %v1482 = vpack.c.b16 %v1262, %v1257
    %v1483 = vpack.c.b16 %v1263, %v1258
    %v1484 = vpack.c.b16 %v1269, %v1264
    %v1485 = vpack.c.b16 %v1270, %v1265
    %v1486 = vpack.c.b16 %v1271, %v1266
    %v1487 = vpack.c.b16 %v1272, %v1267
    %v1488 = vpack.c.b16 %v1273, %v1268
    %v1489 = vpack.c.b16 %v1279, %v1274
    %v1490 = vpack.c.b16 %v1280, %v1275
    %v1491 = vpack.c.b16 %v1281, %v1276
    %v1492 = vpack.c.b16 %v1282, %v1277
    %v1493 = vpack.c.b16 %v1283, %v1278
    %v1494 = vpack.c.b16 %v1289, %v1284
    %v1495 = vpack.c.b16 %v1290, %v1285
    %v1496 = vpack.c.b16 %v1291, %v1286
    %v1497 = vpack.c.b16 %v1292, %v1287
    %v1498 = vpack.c.b16 %v1293, %v1288
    %v1499 = vpack.c.b16 %v1299, %v1294
    %v1500 = vpack.c.b16 %v1300, %v1295
    %v1501 = vpack.c.b16 %v1301, %v1296
    %v1502 = vpack.c.b16 %v1302, %v1297
    %v1503 = vpack.c.b16 %v1303, %v1298
    %v1504 = vpack.c.b16 %v1309, %v1304
    %v1505 = vpack.c.b16 %v1310, %v1305
    %v1506 = vpack.c.b16 %v1311, %v1306
    %v1507 = vpack.c.b16 %v1312, %v1307
    %v1508 = vpack.c.b16 %v1313, %v1308
    %v1509 = vpack.c.b16 %v1319, %v1314
    %v1510 = vpack.c.b16 %v1320, %v1315
    %v1511 = vpack.c.b16 %v1321, %v1316
    %v1512 = vpack.c.b16 %v1322, %v1317
    %v1513 = vpack.c.b16 %v1323, %v1318
    %v1514 = vpack.c.b16 %v1329, %v1324
    %v1515 = vpack.c.b16 %v1330, %v1325
    %v1516 = vpack.c.b16 %v1331, %v1326
    %v1517 = vpack.c.b16 %v1332, %v1327
    %v1518 = vpack.c.b16 %v1333, %v1328
    %v1519 = vpack.c.b16 %v1339, %v1334
    %v1520 = vpack.c.b16 %v1340, %v1335
    %v1521 = vpack.c.b16 %v1341, %v1336
    %v1522 = vpack.c.b16 %v1342, %v1337
    %v1523 = vpack.c.b16 %v1343, %v1338
    %v1524 = vpack.c.b16 %v1349, %v1344
    %v1525 = vpack.c.b16 %v1350, %v1345
    %v1526 = vpack.c.b16 %v1351, %v1346
    %v1527 = vpack.c.b16 %v1352, %v1347
    %v1528 = vpack.c.b16 %v1353, %v1348
    %v1529 = vpack.c.b16 %v1359, %v1354
    %v1530 = vpack.c.b16 %v1360, %v1355
    %v1531 = vpack.c.b16 %v1361, %v1356
    %v1532 = vpack.c.b16 %v1362, %v1357
    %v1533 = vpack.c.b16 %v1363, %v1358
    %v1534 = vpack.c.b16 %v1369, %v1364
    %v1535 = vpack.c.b16 %v1370, %v1365
    %v1536 = vpack.c.b16 %v1371, %v1366
    %v1537 = vpack.c.b16 %v1372, %v1367
    %v1538 = vpack.c.b16 %v1373, %v1368
    %v1539 = vpack.c.b16 %v1379, %v1374
    %v1540 = vpack.c.b16 %v1380, %v1375
    %v1541 = vpack.c.b16 %v1381, %v1376
    %v1542 = vpack.c.b16 %v1382, %v1377
    %v1543 = vpack.c.b16 %v1383, %v1378
    %v1744 = vunpack.c.l.b16 %v793
    %v1745 = vunpack.c.l.b16 %v794
    %v1746 = vunpack.c.l.b16 %v795
    %v1747 = vunpack.c.l.b16 %v796
    %v1748 = vunpack.c.l.b16 %v797
    %v1749 = vunpack.c.l.b16 %v798
    %v1750 = vunpack.c.l.b16 %v799
    %v1751 = vunpack.c.l.b16 %v800
    %v1752 = vunpack.c.l.b16 %v801
    %v1753 = vunpack.c.l.b16 %v802
    %v1754 = vunpack.c.l.b16 %v803
    %v1755 = vunpack.c.l.b16 %v804
    %v1756 = vunpack.c.l.b16 %v805
    %v1757 = vunpack.c.l.b16 %v806
    %v1758 = vunpack.c.l.b16 %v807
    %v1759 = vunpack.c.l.b16 %v808
    %v1760 = vunpack.c.l.b16 %v809
    %v1761 = vunpack.c.l.b16 %v810
    %v1762 = vunpack.c.l.b16 %v811
    %v1763 = vunpack.c.l.b16 %v812
    %v1764 = vunpack.c.l.b16 %v813
    %v1765 = vunpack.c.l.b16 %v814
    %v1766 = vunpack.c.l.b16 %v815
    %v1767 = vunpack.c.l.b16 %v816
    %v1768 = vunpack.c.l.b16 %v817
    %v1769 = vunpack.c.l.b16 %v818
    %v1770 = vunpack.c.l.b16 %v819
    %v1771 = vunpack.c.l.b16 %v820
    %v1772 = vunpack.c.l.b16 %v821
    %v1773 = vunpack.c.l.b16 %v822
    %v1774 = vunpack.c.l.b16 %v823
    %v1775 = vunpack.c.l.b16 %v824
    %v1776 = vunpack.c.l.b16 %v825
    %v1777 = vunpack.c.l.b16 %v826
    %v1778 = vunpack.c.l.b16 %v827
    %v1779 = vunpack.c.l.b16 %v828
    %v1780 = vunpack.c.l.b16 %v829
    %v1781 = vunpack.c.l.b16 %v830
    %v1782 = vunpack.c.l.b16 %v831
    %v1783 = vunpack.c.l.b16 %v832
    %v1784 = vunpack.c.l.b16 %v833
    %v1785 = vunpack.c.l.b16 %v834
    %v1786 = vunpack.c.l.b16 %v835
    %v1787 = vunpack.c.l.b16 %v836
    %v1788 = vunpack.c.l.b16 %v837
    %v1789 = vunpack.c.l.b16 %v838
    %v1790 = vunpack.c.l.b16 %v839
    %v1791 = vunpack.c.l.b16 %v840
    %v1792 = vunpack.c.l.b16 %v841
    %v1793 = vunpack.c.l.b16 %v842
    %v1794 = vunpack.c.l.b16 %v843
    %v1795 = vunpack.c.l.b16 %v844
    %v1796 = vunpack.c.l.b16 %v845
    %v1797 = vunpack.c.l.b16 %v846
    %v1798 = vunpack.c.l.b16 %v847
    %v1799 = vunpack.c.l.b16 %v848
    %v1800 = vunpack.c.l.b16 %v849
    %v1801 = vunpack.c.l.b16 %v850
    %v1802 = vunpack.c.l.b16 %v851
    %v1803 = vunpack.c.l.b16 %v852
    %v1804 = vunpack.c.l.b16 %v853
    %v1805 = vunpack.c.l.b16 %v854
    %v1806 = vunpack.c.l.b16 %v855
    %v1807 = vunpack.c.l.b16 %v856
    %v1808 = vunpack.c.l.b16 %v857
    %v1809 = vunpack.c.l.b16 %v858
    %v1810 = vunpack.c.l.b16 %v859
    %v1811 = vunpack.c.l.b16 %v860
    %v1812 = vunpack.c.l.b16 %v861
    %v1813 = vunpack.c.l.b16 %v862
    %v1814 = vunpack.c.l.b16 %v863
    %v1815 = vunpack.c.l.b16 %v864
    %v1816 = vpack.c.b16 %v1745, %v1744
    %v1817 = vpack.c.b16 %v1747, %v1746
    %v1818 = vpack.c.b16 %v1749, %v1748
    %v1819 = vpack.c.b16 %v1751, %v1750
    %v1820 = vpack.c.b16 %v1753, %v1752
    %v1821 = vpack.c.b16 %v1755, %v1754
    %v1822 = vpack.c.b16 %v1757, %v1756
    %v1823 = vpack.c.b16 %v1759, %v1758
    %v1824 = vpack.c.b16 %v1761, %v1760
    %v1825 = vpack.c.b16 %v1763, %v1762
    %v1826 = vpack.c.b16 %v1765, %v1764
    %v1827 = vpack.c.b16 %v1767, %v1766
    %v1828 = vpack.c.b16 %v1769, %v1768
    %v1829 = vpack.c.b16 %v1771, %v1770
    %v1830 = vpack.c.b16 %v1773, %v1772
    %v1831 = vpack.c.b16 %v1775, %v1774
    %v1832 = vpack.c.b16 %v1777, %v1776
    %v1833 = vpack.c.b16 %v1779, %v1778
    %v1834 = vpack.c.b16 %v1781, %v1780
    %v1835 = vpack.c.b16 %v1783, %v1782
    %v1836 = vpack.c.b16 %v1785, %v1784
    %v1837 = vpack.c.b16 %v1787, %v1786
    %v1838 = vpack.c.b16 %v1789, %v1788
    %v1839 = vpack.c.b16 %v1791, %v1790
    %v1840 = vpack.c.b16 %v1793, %v1792
    %v1841 = vpack.c.b16 %v1795, %v1794
    %v1842 = vpack.c.b16 %v1797, %v1796
    %v1843 = vpack.c.b16 %v1799, %v1798
    %v1844 = vpack.c.b16 %v1801, %v1800
    %v1845 = vpack.c.b16 %v1803, %v1802
    %v1846 = vpack.c.b16 %v1805, %v1804
    %v1847 = vpack.c.b16 %v1807, %v1806
    %v1848 = vpack.c.b16 %v1809, %v1808
    %v1849 = vpack.c.b16 %v1811, %v1810
    %v1850 = vpack.c.b16 %v1813, %v1812
    %v1851 = vpack.c.b16 %v1815, %v1814
    %vm1888 = vcmask 523264
    %v1890 = vsel %vm1888, %v1388, 0
    %v1893 = vsel %vm1888, %v1393, 0
    %v1896 = vsel %vm1888, %v1398, 0
    %v1899 = vsel %vm1888, %v1403, 0
    %v1902 = vsel %vm1888, %v1408, 0
    %v1905 = vsel %vm1888, %v1413, 0
    %v1908 = vsel %vm1888, %v1418, 0
    %v1911 = vsel %vm1888, %v1423, 0
    %v1914 = vsel %vm1888, %v1428, 0
    %v1917 = vsel %vm1888, %v1433, 0
    %v1920 = vsel %vm1888, %v1438, 0
    %v1923 = vsel %vm1888, %v1443, 0
    %v1926 = vsel %vm1888, %v1448, 0
    %v1929 = vsel %vm1888, %v1453, 0
    %v1932 = vsel %vm1888, %v1458, 0
    %v1935 = vsel %vm1888, %v1463, 0
    %v1938 = vsel %vm1888, %v1468, 0
    %v1941 = vsel %vm1888, %v1473, 0
    %v1944 = vsel %vm1888, %v1478, 0
    %v1947 = vsel %vm1888, %v1483, 0
    %v1950 = vsel %vm1888, %v1488, 0
    %v1953 = vsel %vm1888, %v1493, 0
    %v1956 = vsel %vm1888, %v1498, 0
    %v1959 = vsel %vm1888, %v1503, 0
    %v1962 = vsel %vm1888, %v1508, 0
    %v1965 = vsel %vm1888, %v1513, 0
    %v1968 = vsel %vm1888, %v1518, 0
    %v1971 = vsel %vm1888, %v1523, 0
    %v1974 = vsel %vm1888, %v1528, 0
    %v1977 = vsel %vm1888, %v1533, 0
    %v1980 = vsel %vm1888, %v1538, 0
    %v1983 = vsel %vm1888, %v1543, 0
    %1985 = vmatprep.subr.bf16.mxu0 0
    %1986 = vmatpush1.bf16.msra.mxu0 %v1823
    %1987 = vmatprep.subr.bf16.mxu0 0
    %1988 = vmatpush1.bf16.msra.mxu0 %v1822
    %1989 = vmatprep.subr.bf16.mxu0 0
    %1990 = vmatpush1.bf16.msra.mxu0 %v1821
    %1991 = vmatprep.subr.bf16.mxu0 0
    %1992 = vmatpush1.bf16.msra.mxu0 %v1820
    %1993 = vmatprep.subr.bf16.mxu0 0
    %1994 = vmatpush1.bf16.msra.mxu0 %v1819
    %1995 = vmatprep.subr.bf16.mxu0 0
    %1996 = vmatpush1.bf16.msra.mxu0 %v1818
    %1997 = vmatprep.subr.bf16.mxu0 0
    %1998 = vmatpush1.bf16.msra.mxu0 %v1817
    %1999 = vmatprep.subr.bf16.mxu0 0
    %2000 = vmatpush1.bf16.msra.mxu0 %v1816
    %2001 = vmatprep.subr.bf16.mxu0 0
    %2002 = vmatpush2.bf16.msra.mxu0 %v1831
    %2003 = vmatprep.subr.bf16.mxu0 0
    %2004 = vmatpush2.bf16.msra.mxu0 %v1830
    %2005 = vmatprep.subr.bf16.mxu0 0
    %2006 = vmatpush2.bf16.msra.mxu0 %v1829
    %2007 = vmatprep.subr.bf16.mxu0 0
    %2008 = vmatpush2.bf16.msra.mxu0 %v1828
    %2009 = vmatprep.subr.bf16.mxu0 0
    %2010 = vmatpush2.bf16.msra.mxu0 %v1827
    %2011 = vmatprep.subr.bf16.mxu0 0
    %2012 = vmatpush2.bf16.msra.mxu0 %v1826
    %2013 = vmatprep.subr.bf16.mxu0 0
    %2014 = vmatpush2.bf16.msra.mxu0 %v1825
    %2015 = vmatprep.subr.bf16.mxu0 0
    %2016 = vmatpush2.bf16.msra.mxu0 %v1824
    %2017 = vmatprep.mubr.bf16.mxu0 %v1385
    %2018 = vmatmul.mubr.bf16.gmra.mxu0 %v1384
    %v2019 = vpop.f32.mrf.mxu0
    %v2020 = vadd.f32 %v870, %v2019
    %v2021 = vpop.f32.mrf.mxu0
    %v2022 = vpop.f32.mrf.mxu0
    %v2023 = vadd.f32 %v870, %v2022
    %v2024 = vpop.f32.mrf.mxu0
    %2025 = vmatprep.mubr.bf16.mxu0 %v1390
    %2026 = vmatmul.mubr.bf16.gmra.mxu0 %v1389
    %v2027 = vpop.f32.mrf.mxu0
    %v2028 = vadd.f32 %v870, %v2027
    %v2029 = vpop.f32.mrf.mxu0
    %v2030 = vpop.f32.mrf.mxu0
    %v2031 = vadd.f32 %v870, %v2030
    %v2032 = vpop.f32.mrf.mxu0
    %2033 = vmatprep.mubr.bf16.mxu0 %v1395
    %2034 = vmatmul.mubr.bf16.gmra.mxu0 %v1394
    %v2035 = vpop.f32.mrf.mxu0
    %v2036 = vadd.f32 %v870, %v2035
    %v2037 = vpop.f32.mrf.mxu0
    %v2038 = vpop.f32.mrf.mxu0
    %v2039 = vadd.f32 %v870, %v2038
    %v2040 = vpop.f32.mrf.mxu0
    %2041 = vmatprep.mubr.bf16.mxu0 %v1400
    %2042 = vmatmul.mubr.bf16.gmra.mxu0 %v1399
    %v2043 = vpop.f32.mrf.mxu0
    %v2044 = vadd.f32 %v870, %v2043
    %v2045 = vpop.f32.mrf.mxu0
    %v2046 = vpop.f32.mrf.mxu0
    %v2047 = vadd.f32 %v870, %v2046
    %v2048 = vpop.f32.mrf.mxu0
    %2049 = vmatprep.mubr.bf16.mxu0 %v1405
    %2050 = vmatmul.mubr.bf16.gmra.mxu0 %v1404
    %v2051 = vpop.f32.mrf.mxu0
    %v2052 = vadd.f32 %v870, %v2051
    %v2053 = vpop.f32.mrf.mxu0
    %v2054 = vpop.f32.mrf.mxu0
    %v2055 = vadd.f32 %v870, %v2054
    %v2056 = vpop.f32.mrf.mxu0
    %2057 = vmatprep.mubr.bf16.mxu0 %v1410
    %2058 = vmatmul.mubr.bf16.gmra.mxu0 %v1409
    %v2059 = vpop.f32.mrf.mxu0
    %v2060 = vadd.f32 %v870, %v2059
    %v2061 = vpop.f32.mrf.mxu0
    %v2062 = vpop.f32.mrf.mxu0
    %v2063 = vadd.f32 %v870, %v2062
    %v2064 = vpop.f32.mrf.mxu0
    %2065 = vmatprep.mubr.bf16.mxu0 %v1415
    %2066 = vmatmul.mubr.bf16.gmra.mxu0 %v1414
    %v2067 = vpop.f32.mrf.mxu0
    %v2068 = vadd.f32 %v870, %v2067
    %v2069 = vpop.f32.mrf.mxu0
    %v2070 = vpop.f32.mrf.mxu0
    %v2071 = vadd.f32 %v870, %v2070
    %v2072 = vpop.f32.mrf.mxu0
    %2073 = vmatprep.mubr.bf16.mxu0 %v1420
    %2074 = vmatmul.mubr.bf16.gmra.mxu0 %v1419
    %v2075 = vpop.f32.mrf.mxu0
    %v2076 = vadd.f32 %v870, %v2075
    %v2077 = vpop.f32.mrf.mxu0
    %v2078 = vpop.f32.mrf.mxu0
    %v2079 = vadd.f32 %v870, %v2078
    %v2080 = vpop.f32.mrf.mxu0
    %2081 = vmatprep.mubr.bf16.mxu0 %v1425
    %2082 = vmatmul.mubr.bf16.gmra.mxu0 %v1424
    %v2083 = vpop.f32.mrf.mxu0
    %v2084 = vadd.f32 %v870, %v2083
    %v2085 = vpop.f32.mrf.mxu0
    %v2086 = vpop.f32.mrf.mxu0
    %v2087 = vadd.f32 %v870, %v2086
    %v2088 = vpop.f32.mrf.mxu0
    %2089 = vmatprep.mubr.bf16.mxu0 %v1430
    %2090 = vmatmul.mubr.bf16.gmra.mxu0 %v1429
    %v2091 = vpop.f32.mrf.mxu0
    %v2092 = vadd.f32 %v870, %v2091
    %v2093 = vpop.f32.mrf.mxu0
    %v2094 = vpop.f32.mrf.mxu0
    %v2095 = vadd.f32 %v870, %v2094
    %v2096 = vpop.f32.mrf.mxu0
    %2097 = vmatprep.mubr.bf16.mxu0 %v1435
    %2098 = vmatmul.mubr.bf16.gmra.mxu0 %v1434
    %v2099 = vpop.f32.mrf.mxu0
    %v2100 = vadd.f32 %v870, %v2099
    %v2101 = vpop.f32.mrf.mxu0
    %v2102 = vpop.f32.mrf.mxu0
    %v2103 = vadd.f32 %v870, %v2102
    %v2104 = vpop.f32.mrf.mxu0
    %2105 = vmatprep.mubr.bf16.mxu0 %v1440
    %2106 = vmatmul.mubr.bf16.gmra.mxu0 %v1439
    %v2107 = vpop.f32.mrf.mxu0
    %v2108 = vadd.f32 %v870, %v2107
    %v2109 = vpop.f32.mrf.mxu0
    %v2110 = vpop.f32.mrf.mxu0
    %v2111 = vadd.f32 %v870, %v2110
    %v2112 = vpop.f32.mrf.mxu0
    %2113 = vmatprep.mubr.bf16.mxu0 %v1445
    %2114 = vmatmul.mubr.bf16.gmra.mxu0 %v1444
    %v2115 = vpop.f32.mrf.mxu0
    %v2116 = vadd.f32 %v870, %v2115
    %v2117 = vpop.f32.mrf.mxu0
    %v2118 = vpop.f32.mrf.mxu0
    %v2119 = vadd.f32 %v870, %v2118
    %v2120 = vpop.f32.mrf.mxu0
    %2121 = vmatprep.mubr.bf16.mxu0 %v1450
    %2122 = vmatmul.mubr.bf16.gmra.mxu0 %v1449
    %v2123 = vpop.f32.mrf.mxu0
    %v2124 = vadd.f32 %v870, %v2123
    %v2125 = vpop.f32.mrf.mxu0
    %v2126 = vpop.f32.mrf.mxu0
    %v2127 = vadd.f32 %v870, %v2126
    %v2128 = vpop.f32.mrf.mxu0
    %2129 = vmatprep.mubr.bf16.mxu0 %v1455
    %2130 = vmatmul.mubr.bf16.gmra.mxu0 %v1454
    %v2131 = vpop.f32.mrf.mxu0
    %v2132 = vadd.f32 %v870, %v2131
    %v2133 = vpop.f32.mrf.mxu0
    %v2134 = vpop.f32.mrf.mxu0
    %v2135 = vadd.f32 %v870, %v2134
    %v2136 = vpop.f32.mrf.mxu0
    %2137 = vmatprep.mubr.bf16.mxu0 %v1460
    %2138 = vmatmul.mubr.bf16.gmra.mxu0 %v1459
    %v2139 = vpop.f32.mrf.mxu0
    %v2140 = vadd.f32 %v870, %v2139
    %v2141 = vpop.f32.mrf.mxu0
    %v2142 = vpop.f32.mrf.mxu0
    %v2143 = vadd.f32 %v870, %v2142
    %v2144 = vpop.f32.mrf.mxu0
    %2145 = vmatprep.mubr.bf16.mxu0 %v1465
    %2146 = vmatmul.mubr.bf16.gmra.mxu0 %v1464
    %v2147 = vpop.f32.mrf.mxu0
    %v2148 = vadd.f32 %v870, %v2147
    %v2149 = vpop.f32.mrf.mxu0
    %v2150 = vpop.f32.mrf.mxu0
    %v2151 = vadd.f32 %v870, %v2150
    %v2152 = vpop.f32.mrf.mxu0
    %2153 = vmatprep.mubr.bf16.mxu0 %v1470
    %2154 = vmatmul.mubr.bf16.gmra.mxu0 %v1469
    %v2155 = vpop.f32.mrf.mxu0
    %v2156 = vadd.f32 %v870, %v2155
    %v2157 = vpop.f32.mrf.mxu0
    %v2158 = vpop.f32.mrf.mxu0
    %v2159 = vadd.f32 %v870, %v2158
    %v2160 = vpop.f32.mrf.mxu0
    %2161 = vmatprep.mubr.bf16.mxu0 %v1475
    %2162 = vmatmul.mubr.bf16.gmra.mxu0 %v1474
    %v2163 = vpop.f32.mrf.mxu0
    %v2164 = vadd.f32 %v870, %v2163
    %v2165 = vpop.f32.mrf.mxu0
    %v2166 = vpop.f32.mrf.mxu0
    %v2167 = vadd.f32 %v870, %v2166
    %v2168 = vpop.f32.mrf.mxu0
    %2169 = vmatprep.mubr.bf16.mxu0 %v1480
    %2170 = vmatmul.mubr.bf16.gmra.mxu0 %v1479
    %v2171 = vpop.f32.mrf.mxu0
    %v2172 = vadd.f32 %v870, %v2171
    %v2173 = vpop.f32.mrf.mxu0
    %v2174 = vpop.f32.mrf.mxu0
    %v2175 = vadd.f32 %v870, %v2174
    %v2176 = vpop.f32.mrf.mxu0
    %2177 = vmatprep.mubr.bf16.mxu0 %v1485
    %2178 = vmatmul.mubr.bf16.gmra.mxu0 %v1484
    %v2179 = vpop.f32.mrf.mxu0
    %v2180 = vadd.f32 %v870, %v2179
    %v2181 = vpop.f32.mrf.mxu0
    %v2182 = vpop.f32.mrf.mxu0
    %v2183 = vadd.f32 %v870, %v2182
    %v2184 = vpop.f32.mrf.mxu0
    %2185 = vmatprep.mubr.bf16.mxu0 %v1490
    %2186 = vmatmul.mubr.bf16.gmra.mxu0 %v1489
    %v2187 = vpop.f32.mrf.mxu0
    %v2188 = vadd.f32 %v870, %v2187
    %v2189 = vpop.f32.mrf.mxu0
    %v2190 = vpop.f32.mrf.mxu0
    %v2191 = vadd.f32 %v870, %v2190
    %v2192 = vpop.f32.mrf.mxu0
    %2193 = vmatprep.mubr.bf16.mxu0 %v1495
    %2194 = vmatmul.mubr.bf16.gmra.mxu0 %v1494
    %v2195 = vpop.f32.mrf.mxu0
    %v2196 = vadd.f32 %v870, %v2195
    %v2197 = vpop.f32.mrf.mxu0
    %v2198 = vpop.f32.mrf.mxu0
    %v2199 = vadd.f32 %v870, %v2198
    %v2200 = vpop.f32.mrf.mxu0
    %2201 = vmatprep.mubr.bf16.mxu0 %v1500
    %2202 = vmatmul.mubr.bf16.gmra.mxu0 %v1499
    %v2203 = vpop.f32.mrf.mxu0
    %v2204 = vadd.f32 %v870, %v2203
    %v2205 = vpop.f32.mrf.mxu0
    %v2206 = vpop.f32.mrf.mxu0
    %v2207 = vadd.f32 %v870, %v2206
    %v2208 = vpop.f32.mrf.mxu0
    %2209 = vmatprep.mubr.bf16.mxu0 %v1505
    %2210 = vmatmul.mubr.bf16.gmra.mxu0 %v1504
    %v2211 = vpop.f32.mrf.mxu0
    %v2212 = vadd.f32 %v870, %v2211
    %v2213 = vpop.f32.mrf.mxu0
    %v2214 = vpop.f32.mrf.mxu0
    %v2215 = vadd.f32 %v870, %v2214
    %v2216 = vpop.f32.mrf.mxu0
    %2217 = vmatprep.mubr.bf16.mxu0 %v1510
    %2218 = vmatmul.mubr.bf16.gmra.mxu0 %v1509
    %v2219 = vpop.f32.mrf.mxu0
    %v2220 = vadd.f32 %v870, %v2219
    %v2221 = vpop.f32.mrf.mxu0
    %v2222 = vpop.f32.mrf.mxu0
    %v2223 = vadd.f32 %v870, %v2222
    %v2224 = vpop.f32.mrf.mxu0
    %2225 = vmatprep.mubr.bf16.mxu0 %v1515
    %2226 = vmatmul.mubr.bf16.gmra.mxu0 %v1514
    %v2227 = vpop.f32.mrf.mxu0
    %v2228 = vadd.f32 %v870, %v2227
    %v2229 = vpop.f32.mrf.mxu0
    %v2230 = vpop.f32.mrf.mxu0
    %v2231 = vadd.f32 %v870, %v2230
    %v2232 = vpop.f32.mrf.mxu0
    %2233 = vmatprep.mubr.bf16.mxu0 %v1520
    %2234 = vmatmul.mubr.bf16.gmra.mxu0 %v1519
    %v2235 = vpop.f32.mrf.mxu0
    %v2236 = vadd.f32 %v870, %v2235
    %v2237 = vpop.f32.mrf.mxu0
    %v2238 = vpop.f32.mrf.mxu0
    %v2239 = vadd.f32 %v870, %v2238
    %v2240 = vpop.f32.mrf.mxu0
    %2241 = vmatprep.mubr.bf16.mxu0 %v1525
    %2242 = vmatmul.mubr.bf16.gmra.mxu0 %v1524
    %v2243 = vpop.f32.mrf.mxu0
    %v2244 = vadd.f32 %v870, %v2243
    %v2245 = vpop.f32.mrf.mxu0
    %v2246 = vpop.f32.mrf.mxu0
    %v2247 = vadd.f32 %v870, %v2246
    %v2248 = vpop.f32.mrf.mxu0
    %2249 = vmatprep.mubr.bf16.mxu0 %v1530
    %2250 = vmatmul.mubr.bf16.gmra.mxu0 %v1529
    %v2251 = vpop.f32.mrf.mxu0
    %v2252 = vadd.f32 %v870, %v2251
    %v2253 = vpop.f32.mrf.mxu0
    %v2254 = vpop.f32.mrf.mxu0
    %v2255 = vadd.f32 %v870, %v2254
    %v2256 = vpop.f32.mrf.mxu0
    %2257 = vmatprep.mubr.bf16.mxu0 %v1535
    %2258 = vmatmul.mubr.bf16.gmra.mxu0 %v1534
    %v2259 = vpop.f32.mrf.mxu0
    %v2260 = vadd.f32 %v870, %v2259
    %v2261 = vpop.f32.mrf.mxu0
    %v2262 = vpop.f32.mrf.mxu0
    %v2263 = vadd.f32 %v870, %v2262
    %v2264 = vpop.f32.mrf.mxu0
    %2265 = vmatprep.mubr.bf16.mxu0 %v1540
    %2266 = vmatmul.mubr.bf16.gmra.mxu0 %v1539
    %v2267 = vpop.f32.mrf.mxu0
    %v2268 = vadd.f32 %v870, %v2267
    %v2269 = vpop.f32.mrf.mxu0
    %v2270 = vpop.f32.mrf.mxu0
    %v2271 = vadd.f32 %v870, %v2270
    %v2272 = vpop.f32.mrf.mxu0
    %2273 = vdwg.mxu0
    %2274 = vmatprep.subr.bf16.mxu0 0
    %2275 = vmatpush1.bf16.msra.mxu0 %v1839
    %2276 = vmatprep.subr.bf16.mxu0 0
    %2277 = vmatpush1.bf16.msra.mxu0 %v1838
    %2278 = vmatprep.subr.bf16.mxu0 0
    %2279 = vmatpush1.bf16.msra.mxu0 %v1837
    %2280 = vmatprep.subr.bf16.mxu0 0
    %2281 = vmatpush1.bf16.msra.mxu0 %v1836
    %2282 = vmatprep.subr.bf16.mxu0 0
    %2283 = vmatpush1.bf16.msra.mxu0 %v1835
    %2284 = vmatprep.subr.bf16.mxu0 0
    %2285 = vmatpush1.bf16.msra.mxu0 %v1834
    %2286 = vmatprep.subr.bf16.mxu0 0
    %2287 = vmatpush1.bf16.msra.mxu0 %v1833
    %2288 = vmatprep.subr.bf16.mxu0 0
    %2289 = vmatpush1.bf16.msra.mxu0 %v1832
    %2290 = vmatprep.subr.bf16.mxu0 0
    %2291 = vmatpush2.bf16.msra.mxu0 %v1847
    %2292 = vmatprep.subr.bf16.mxu0 0
    %2293 = vmatpush2.bf16.msra.mxu0 %v1846
    %2294 = vmatprep.subr.bf16.mxu0 0
    %2295 = vmatpush2.bf16.msra.mxu0 %v1845
    %2296 = vmatprep.subr.bf16.mxu0 0
    %2297 = vmatpush2.bf16.msra.mxu0 %v1844
    %2298 = vmatprep.subr.bf16.mxu0 0
    %2299 = vmatpush2.bf16.msra.mxu0 %v1843
    %2300 = vmatprep.subr.bf16.mxu0 0
    %2301 = vmatpush2.bf16.msra.mxu0 %v1842
    %2302 = vmatprep.subr.bf16.mxu0 0
    %2303 = vmatpush2.bf16.msra.mxu0 %v1841
    %2304 = vmatprep.subr.bf16.mxu0 0
    %2305 = vmatpush2.bf16.msra.mxu0 %v1840
    %2306 = vmatprep.mubr.bf16.mxu0 %v1387
    %2307 = vmatmul.mubr.bf16.gmra.mxu0 %v1386
    %v2308 = vpop.f32.mrf.mxu0
    %v2309 = vadd.f32 %v2020, %v2308
    %v2310 = vpop.f32.mrf.mxu0
    %v2311 = vpop.f32.mrf.mxu0
    %v2312 = vadd.f32 %v2023, %v2311
    %v2313 = vpop.f32.mrf.mxu0
    %2314 = vmatprep.mubr.bf16.mxu0 %v1392
    %2315 = vmatmul.mubr.bf16.gmra.mxu0 %v1391
    %v2316 = vpop.f32.mrf.mxu0
    %v2317 = vadd.f32 %v2028, %v2316
    %v2318 = vpop.f32.mrf.mxu0
    %v2319 = vpop.f32.mrf.mxu0
    %v2320 = vadd.f32 %v2031, %v2319
    %v2321 = vpop.f32.mrf.mxu0
    %2322 = vmatprep.mubr.bf16.mxu0 %v1397
    %2323 = vmatmul.mubr.bf16.gmra.mxu0 %v1396
    %v2324 = vpop.f32.mrf.mxu0
    %v2325 = vadd.f32 %v2036, %v2324
    %v2326 = vpop.f32.mrf.mxu0
    %v2327 = vpop.f32.mrf.mxu0
    %v2328 = vadd.f32 %v2039, %v2327
    %v2329 = vpop.f32.mrf.mxu0
    %2330 = vmatprep.mubr.bf16.mxu0 %v1402
    %2331 = vmatmul.mubr.bf16.gmra.mxu0 %v1401
    %v2332 = vpop.f32.mrf.mxu0
    %v2333 = vadd.f32 %v2044, %v2332
    %v2334 = vpop.f32.mrf.mxu0
    %v2335 = vpop.f32.mrf.mxu0
    %v2336 = vadd.f32 %v2047, %v2335
    %v2337 = vpop.f32.mrf.mxu0
    %2338 = vmatprep.mubr.bf16.mxu0 %v1407
    %2339 = vmatmul.mubr.bf16.gmra.mxu0 %v1406
    %v2340 = vpop.f32.mrf.mxu0
    %v2341 = vadd.f32 %v2052, %v2340
    %v2342 = vpop.f32.mrf.mxu0
    %v2343 = vpop.f32.mrf.mxu0
    %v2344 = vadd.f32 %v2055, %v2343
    %v2345 = vpop.f32.mrf.mxu0
    %2346 = vmatprep.mubr.bf16.mxu0 %v1412
    %2347 = vmatmul.mubr.bf16.gmra.mxu0 %v1411
    %v2348 = vpop.f32.mrf.mxu0
    %v2349 = vadd.f32 %v2060, %v2348
    %v2350 = vpop.f32.mrf.mxu0
    %v2351 = vpop.f32.mrf.mxu0
    %v2352 = vadd.f32 %v2063, %v2351
    %v2353 = vpop.f32.mrf.mxu0
    %2354 = vmatprep.mubr.bf16.mxu0 %v1417
    %2355 = vmatmul.mubr.bf16.gmra.mxu0 %v1416
    %v2356 = vpop.f32.mrf.mxu0
    %v2357 = vadd.f32 %v2068, %v2356
    %v2358 = vpop.f32.mrf.mxu0
    %v2359 = vpop.f32.mrf.mxu0
    %v2360 = vadd.f32 %v2071, %v2359
    %v2361 = vpop.f32.mrf.mxu0
    %2362 = vmatprep.mubr.bf16.mxu0 %v1422
    %2363 = vmatmul.mubr.bf16.gmra.mxu0 %v1421
    %v2364 = vpop.f32.mrf.mxu0
    %v2365 = vadd.f32 %v2076, %v2364
    %v2366 = vpop.f32.mrf.mxu0
    %v2367 = vpop.f32.mrf.mxu0
    %v2368 = vadd.f32 %v2079, %v2367
    %v2369 = vpop.f32.mrf.mxu0
    %2370 = vmatprep.mubr.bf16.mxu0 %v1427
    %2371 = vmatmul.mubr.bf16.gmra.mxu0 %v1426
    %v2372 = vpop.f32.mrf.mxu0
    %v2373 = vadd.f32 %v2084, %v2372
    %v2374 = vpop.f32.mrf.mxu0
    %v2375 = vpop.f32.mrf.mxu0
    %v2376 = vadd.f32 %v2087, %v2375
    %v2377 = vpop.f32.mrf.mxu0
    %2378 = vmatprep.mubr.bf16.mxu0 %v1432
    %2379 = vmatmul.mubr.bf16.gmra.mxu0 %v1431
    %v2380 = vpop.f32.mrf.mxu0
    %v2381 = vadd.f32 %v2092, %v2380
    %v2382 = vpop.f32.mrf.mxu0
    %v2383 = vpop.f32.mrf.mxu0
    %v2384 = vadd.f32 %v2095, %v2383
    %v2385 = vpop.f32.mrf.mxu0
    %2386 = vmatprep.mubr.bf16.mxu0 %v1437
    %2387 = vmatmul.mubr.bf16.gmra.mxu0 %v1436
    %v2388 = vpop.f32.mrf.mxu0
    %v2389 = vadd.f32 %v2100, %v2388
    %v2390 = vpop.f32.mrf.mxu0
    %v2391 = vpop.f32.mrf.mxu0
    %v2392 = vadd.f32 %v2103, %v2391
    %v2393 = vpop.f32.mrf.mxu0
    %2394 = vmatprep.mubr.bf16.mxu0 %v1442
    %2395 = vmatmul.mubr.bf16.gmra.mxu0 %v1441
    %v2396 = vpop.f32.mrf.mxu0
    %v2397 = vadd.f32 %v2108, %v2396
    %v2398 = vpop.f32.mrf.mxu0
    %v2399 = vpop.f32.mrf.mxu0
    %v2400 = vadd.f32 %v2111, %v2399
    %v2401 = vpop.f32.mrf.mxu0
    %2402 = vmatprep.mubr.bf16.mxu0 %v1447
    %2403 = vmatmul.mubr.bf16.gmra.mxu0 %v1446
    %v2404 = vpop.f32.mrf.mxu0
    %v2405 = vadd.f32 %v2116, %v2404
    %v2406 = vpop.f32.mrf.mxu0
    %v2407 = vpop.f32.mrf.mxu0
    %v2408 = vadd.f32 %v2119, %v2407
    %v2409 = vpop.f32.mrf.mxu0
    %2410 = vmatprep.mubr.bf16.mxu0 %v1452
    %2411 = vmatmul.mubr.bf16.gmra.mxu0 %v1451
    %v2412 = vpop.f32.mrf.mxu0
    %v2413 = vadd.f32 %v2124, %v2412
    %v2414 = vpop.f32.mrf.mxu0
    %v2415 = vpop.f32.mrf.mxu0
    %v2416 = vadd.f32 %v2127, %v2415
    %v2417 = vpop.f32.mrf.mxu0
    %2418 = vmatprep.mubr.bf16.mxu0 %v1457
    %2419 = vmatmul.mubr.bf16.gmra.mxu0 %v1456
    %v2420 = vpop.f32.mrf.mxu0
    %v2421 = vadd.f32 %v2132, %v2420
    %v2422 = vpop.f32.mrf.mxu0
    %v2423 = vpop.f32.mrf.mxu0
    %v2424 = vadd.f32 %v2135, %v2423
    %v2425 = vpop.f32.mrf.mxu0
    %2426 = vmatprep.mubr.bf16.mxu0 %v1462
    %2427 = vmatmul.mubr.bf16.gmra.mxu0 %v1461
    %v2428 = vpop.f32.mrf.mxu0
    %v2429 = vadd.f32 %v2140, %v2428
    %v2430 = vpop.f32.mrf.mxu0
    %v2431 = vpop.f32.mrf.mxu0
    %v2432 = vadd.f32 %v2143, %v2431
    %v2433 = vpop.f32.mrf.mxu0
    %2434 = vmatprep.mubr.bf16.mxu0 %v1467
    %2435 = vmatmul.mubr.bf16.gmra.mxu0 %v1466
    %v2436 = vpop.f32.mrf.mxu0
    %v2437 = vadd.f32 %v2148, %v2436
    %v2438 = vpop.f32.mrf.mxu0
    %v2439 = vpop.f32.mrf.mxu0
    %v2440 = vadd.f32 %v2151, %v2439
    %v2441 = vpop.f32.mrf.mxu0
    %2442 = vmatprep.mubr.bf16.mxu0 %v1472
    %2443 = vmatmul.mubr.bf16.gmra.mxu0 %v1471
    %v2444 = vpop.f32.mrf.mxu0
    %v2445 = vadd.f32 %v2156, %v2444
    %v2446 = vpop.f32.mrf.mxu0
    %v2447 = vpop.f32.mrf.mxu0
    %v2448 = vadd.f32 %v2159, %v2447
    %v2449 = vpop.f32.mrf.mxu0
    %2450 = vmatprep.mubr.bf16.mxu0 %v1477
    %2451 = vmatmul.mubr.bf16.gmra.mxu0 %v1476
    %v2452 = vpop.f32.mrf.mxu0
    %v2453 = vadd.f32 %v2164, %v2452
    %v2454 = vpop.f32.mrf.mxu0
    %v2455 = vpop.f32.mrf.mxu0
    %v2456 = vadd.f32 %v2167, %v2455
    %v2457 = vpop.f32.mrf.mxu0
    %2458 = vmatprep.mubr.bf16.mxu0 %v1482
    %2459 = vmatmul.mubr.bf16.gmra.mxu0 %v1481
    %v2460 = vpop.f32.mrf.mxu0
    %v2461 = vadd.f32 %v2172, %v2460
    %v2462 = vpop.f32.mrf.mxu0
    %v2463 = vpop.f32.mrf.mxu0
    %v2464 = vadd.f32 %v2175, %v2463
    %v2465 = vpop.f32.mrf.mxu0
    %2466 = vmatprep.mubr.bf16.mxu0 %v1487
    %2467 = vmatmul.mubr.bf16.gmra.mxu0 %v1486
    %v2468 = vpop.f32.mrf.mxu0
    %v2469 = vadd.f32 %v2180, %v2468
    %v2470 = vpop.f32.mrf.mxu0
    %v2471 = vpop.f32.mrf.mxu0
    %v2472 = vadd.f32 %v2183, %v2471
    %v2473 = vpop.f32.mrf.mxu0
    %2474 = vmatprep.mubr.bf16.mxu0 %v1492
    %2475 = vmatmul.mubr.bf16.gmra.mxu0 %v1491
    %v2476 = vpop.f32.mrf.mxu0
    %v2477 = vadd.f32 %v2188, %v2476
    %v2478 = vpop.f32.mrf.mxu0
    %v2479 = vpop.f32.mrf.mxu0
    %v2480 = vadd.f32 %v2191, %v2479
    %v2481 = vpop.f32.mrf.mxu0
    %2482 = vmatprep.mubr.bf16.mxu0 %v1497
    %2483 = vmatmul.mubr.bf16.gmra.mxu0 %v1496
    %v2484 = vpop.f32.mrf.mxu0
    %v2485 = vadd.f32 %v2196, %v2484
    %v2486 = vpop.f32.mrf.mxu0
    %v2487 = vpop.f32.mrf.mxu0
    %v2488 = vadd.f32 %v2199, %v2487
    %v2489 = vpop.f32.mrf.mxu0
    %2490 = vmatprep.mubr.bf16.mxu0 %v1502
    %2491 = vmatmul.mubr.bf16.gmra.mxu0 %v1501
    %v2492 = vpop.f32.mrf.mxu0
    %v2493 = vadd.f32 %v2204, %v2492
    %v2494 = vpop.f32.mrf.mxu0
    %v2495 = vpop.f32.mrf.mxu0
    %v2496 = vadd.f32 %v2207, %v2495
    %v2497 = vpop.f32.mrf.mxu0
    %2498 = vmatprep.mubr.bf16.mxu0 %v1507
    %2499 = vmatmul.mubr.bf16.gmra.mxu0 %v1506
    %v2500 = vpop.f32.mrf.mxu0
    %v2501 = vadd.f32 %v2212, %v2500
    %v2502 = vpop.f32.mrf.mxu0
    %v2503 = vpop.f32.mrf.mxu0
    %v2504 = vadd.f32 %v2215, %v2503
    %v2505 = vpop.f32.mrf.mxu0
    %2506 = vmatprep.mubr.bf16.mxu0 %v1512
    %2507 = vmatmul.mubr.bf16.gmra.mxu0 %v1511
    %v2508 = vpop.f32.mrf.mxu0
    %v2509 = vadd.f32 %v2220, %v2508
    %v2510 = vpop.f32.mrf.mxu0
    %v2511 = vpop.f32.mrf.mxu0
    %v2512 = vadd.f32 %v2223, %v2511
    %v2513 = vpop.f32.mrf.mxu0
    %2514 = vmatprep.mubr.bf16.mxu0 %v1517
    %2515 = vmatmul.mubr.bf16.gmra.mxu0 %v1516
    %v2516 = vpop.f32.mrf.mxu0
    %v2517 = vadd.f32 %v2228, %v2516
    %v2518 = vpop.f32.mrf.mxu0
    %v2519 = vpop.f32.mrf.mxu0
    %v2520 = vadd.f32 %v2231, %v2519
    %v2521 = vpop.f32.mrf.mxu0
    %2522 = vmatprep.mubr.bf16.mxu0 %v1522
    %2523 = vmatmul.mubr.bf16.gmra.mxu0 %v1521
    %v2524 = vpop.f32.mrf.mxu0
    %v2525 = vadd.f32 %v2236, %v2524
    %v2526 = vpop.f32.mrf.mxu0
    %v2527 = vpop.f32.mrf.mxu0
    %v2528 = vadd.f32 %v2239, %v2527
    %v2529 = vpop.f32.mrf.mxu0
    %2530 = vmatprep.mubr.bf16.mxu0 %v1527
    %2531 = vmatmul.mubr.bf16.gmra.mxu0 %v1526
    %v2532 = vpop.f32.mrf.mxu0
    %v2533 = vadd.f32 %v2244, %v2532
    %v2534 = vpop.f32.mrf.mxu0
    %v2535 = vpop.f32.mrf.mxu0
    %v2536 = vadd.f32 %v2247, %v2535
    %v2537 = vpop.f32.mrf.mxu0
    %2538 = vmatprep.mubr.bf16.mxu0 %v1532
    %2539 = vmatmul.mubr.bf16.gmra.mxu0 %v1531
    %v2540 = vpop.f32.mrf.mxu0
    %v2541 = vadd.f32 %v2252, %v2540
    %v2542 = vpop.f32.mrf.mxu0
    %v2543 = vpop.f32.mrf.mxu0
    %v2544 = vadd.f32 %v2255, %v2543
    %v2545 = vpop.f32.mrf.mxu0
    %2546 = vmatprep.mubr.bf16.mxu0 %v1537
    %2547 = vmatmul.mubr.bf16.gmra.mxu0 %v1536
    %v2548 = vpop.f32.mrf.mxu0
    %v2549 = vadd.f32 %v2260, %v2548
    %v2550 = vpop.f32.mrf.mxu0
    %v2551 = vpop.f32.mrf.mxu0
    %v2552 = vadd.f32 %v2263, %v2551
    %v2553 = vpop.f32.mrf.mxu0
    %2554 = vmatprep.mubr.bf16.mxu0 %v1542
    %2555 = vmatmul.mubr.bf16.gmra.mxu0 %v1541
    %v2556 = vpop.f32.mrf.mxu0
    %v2557 = vadd.f32 %v2268, %v2556
    %v2558 = vpop.f32.mrf.mxu0
    %v2559 = vpop.f32.mrf.mxu0
    %v2560 = vadd.f32 %v2271, %v2559
    %v2561 = vpop.f32.mrf.mxu0
    %2562 = vdwg.mxu0
    %2563 = vmatprep.subr.bf16.mxu0 0
    %2564 = vmatpush1.bf16.msra.mxu0 0
    %2565 = vmatprep.subr.bf16.mxu0 0
    %2566 = vmatpush1.bf16.msra.mxu0 0
    %2567 = vmatprep.subr.bf16.mxu0 0
    %2568 = vmatpush1.bf16.msra.mxu0 0
    %2569 = vmatprep.subr.bf16.mxu0 0
    %2570 = vmatpush1.bf16.msra.mxu0 0
    %2571 = vmatprep.subr.bf16.mxu0 0
    %2572 = vmatpush1.bf16.msra.mxu0 %v1851
    %2573 = vmatprep.subr.bf16.mxu0 0
    %2574 = vmatpush1.bf16.msra.mxu0 %v1850
    %2575 = vmatprep.subr.bf16.mxu0 0
    %2576 = vmatpush1.bf16.msra.mxu0 %v1849
    %2577 = vmatprep.subr.bf16.mxu0 0
    %2578 = vmatpush1.bf16.msra.mxu0 %v1848
    %2579 = vmatprep.subr.bf16.mxu0 0
    %2580 = vmatpush2.bf16.msra.mxu0 0
    %2581 = vmatprep.subr.bf16.mxu0 0
    %2582 = vmatpush2.bf16.msra.mxu0 0
    %2583 = vmatprep.subr.bf16.mxu0 0
    %2584 = vmatpush2.bf16.msra.mxu0 0
    %2585 = vmatprep.subr.bf16.mxu0 0
    %2586 = vmatpush2.bf16.msra.mxu0 0
    %2587 = vmatprep.subr.bf16.mxu0 0
    %2588 = vmatpush2.bf16.msra.mxu0 0
    %2589 = vmatprep.subr.bf16.mxu0 0
    %2590 = vmatpush2.bf16.msra.mxu0 0
    %2591 = vmatprep.subr.bf16.mxu0 0
    %2592 = vmatpush2.bf16.msra.mxu0 0
    %2593 = vmatprep.subr.bf16.mxu0 0
    %2594 = vmatpush2.bf16.msra.mxu0 0
    %2595 = vmatprep.mubr.bf16.mxu0 0
    %2596 = vmatmul.mubr.bf16.gmra.mxu0 %v1890
    %v2597 = vpop.f32.mrf.mxu0
    %v2598 = vadd.f32 %v2309, %v2597
    %v2599 = vpop.f32.mrf.mxu0
    %v2600 = vpop.f32.mrf.mxu0
    %v2601 = vadd.f32 %v2312, %v2600
    %v2602 = vpop.f32.mrf.mxu0
    %2603 = vmatprep.mubr.bf16.mxu0 0
    %2604 = vmatmul.mubr.bf16.gmra.mxu0 %v1893
    %v2605 = vpop.f32.mrf.mxu0
    %v2606 = vadd.f32 %v2317, %v2605
    %v2607 = vpop.f32.mrf.mxu0
    %v2608 = vpop.f32.mrf.mxu0
    %v2609 = vadd.f32 %v2320, %v2608
    %v2610 = vpop.f32.mrf.mxu0
    %2611 = vmatprep.mubr.bf16.mxu0 0
    %2612 = vmatmul.mubr.bf16.gmra.mxu0 %v1896
    %v2613 = vpop.f32.mrf.mxu0
    %v2614 = vadd.f32 %v2325, %v2613
    %v2615 = vpop.f32.mrf.mxu0
    %v2616 = vpop.f32.mrf.mxu0
    %v2617 = vadd.f32 %v2328, %v2616
    %v2618 = vpop.f32.mrf.mxu0
    %2619 = vmatprep.mubr.bf16.mxu0 0
    %2620 = vmatmul.mubr.bf16.gmra.mxu0 %v1899
    %v2621 = vpop.f32.mrf.mxu0
    %v2622 = vadd.f32 %v2333, %v2621
    %v2623 = vpop.f32.mrf.mxu0
    %v2624 = vpop.f32.mrf.mxu0
    %v2625 = vadd.f32 %v2336, %v2624
    %v2626 = vpop.f32.mrf.mxu0
    %2627 = vmatprep.mubr.bf16.mxu0 0
    %2628 = vmatmul.mubr.bf16.gmra.mxu0 %v1902
    %v2629 = vpop.f32.mrf.mxu0
    %v2630 = vadd.f32 %v2341, %v2629
    %v2631 = vpop.f32.mrf.mxu0
    %v2632 = vpop.f32.mrf.mxu0
    %v2633 = vadd.f32 %v2344, %v2632
    %v2634 = vpop.f32.mrf.mxu0
    %2635 = vmatprep.mubr.bf16.mxu0 0
    %2636 = vmatmul.mubr.bf16.gmra.mxu0 %v1905
    %v2637 = vpop.f32.mrf.mxu0
    %v2638 = vadd.f32 %v2349, %v2637
    %v2639 = vpop.f32.mrf.mxu0
    %v2640 = vpop.f32.mrf.mxu0
    %v2641 = vadd.f32 %v2352, %v2640
    %v2642 = vpop.f32.mrf.mxu0
    %2643 = vmatprep.mubr.bf16.mxu0 0
    %2644 = vmatmul.mubr.bf16.gmra.mxu0 %v1908
    %v2645 = vpop.f32.mrf.mxu0
    %v2646 = vadd.f32 %v2357, %v2645
    %v2647 = vpop.f32.mrf.mxu0
    %v2648 = vpop.f32.mrf.mxu0
    %v2649 = vadd.f32 %v2360, %v2648
    %v2650 = vpop.f32.mrf.mxu0
    %2651 = vmatprep.mubr.bf16.mxu0 0
    %2652 = vmatmul.mubr.bf16.gmra.mxu0 %v1911
    %v2653 = vpop.f32.mrf.mxu0
    %v2654 = vadd.f32 %v2365, %v2653
    %v2655 = vpop.f32.mrf.mxu0
    %v2656 = vpop.f32.mrf.mxu0
    %v2657 = vadd.f32 %v2368, %v2656
    %v2658 = vpop.f32.mrf.mxu0
    %2659 = vmatprep.mubr.bf16.mxu0 0
    %2660 = vmatmul.mubr.bf16.gmra.mxu0 %v1914
    %v2661 = vpop.f32.mrf.mxu0
    %v2662 = vadd.f32 %v2373, %v2661
    %v2663 = vpop.f32.mrf.mxu0
    %v2664 = vpop.f32.mrf.mxu0
    %v2665 = vadd.f32 %v2376, %v2664
    %v2666 = vpop.f32.mrf.mxu0
    %2667 = vmatprep.mubr.bf16.mxu0 0
    %2668 = vmatmul.mubr.bf16.gmra.mxu0 %v1917
    %v2669 = vpop.f32.mrf.mxu0
    %v2670 = vadd.f32 %v2381, %v2669
    %v2671 = vpop.f32.mrf.mxu0
    %v2672 = vpop.f32.mrf.mxu0
    %v2673 = vadd.f32 %v2384, %v2672
    %v2674 = vpop.f32.mrf.mxu0
    %2675 = vmatprep.mubr.bf16.mxu0 0
    %2676 = vmatmul.mubr.bf16.gmra.mxu0 %v1920
    %v2677 = vpop.f32.mrf.mxu0
    %v2678 = vadd.f32 %v2389, %v2677
    %v2679 = vpop.f32.mrf.mxu0
    %v2680 = vpop.f32.mrf.mxu0
    %v2681 = vadd.f32 %v2392, %v2680
    %v2682 = vpop.f32.mrf.mxu0
    %2683 = vmatprep.mubr.bf16.mxu0 0
    %2684 = vmatmul.mubr.bf16.gmra.mxu0 %v1923
    %v2685 = vpop.f32.mrf.mxu0
    %v2686 = vadd.f32 %v2397, %v2685
    %v2687 = vpop.f32.mrf.mxu0
    %v2688 = vpop.f32.mrf.mxu0
    %v2689 = vadd.f32 %v2400, %v2688
    %v2690 = vpop.f32.mrf.mxu0
    %2691 = vmatprep.mubr.bf16.mxu0 0
    %2692 = vmatmul.mubr.bf16.gmra.mxu0 %v1926
    %v2693 = vpop.f32.mrf.mxu0
    %v2694 = vadd.f32 %v2405, %v2693
    %v2695 = vpop.f32.mrf.mxu0
    %v2696 = vpop.f32.mrf.mxu0
    %v2697 = vadd.f32 %v2408, %v2696
    %v2698 = vpop.f32.mrf.mxu0
    %2699 = vmatprep.mubr.bf16.mxu0 0
    %2700 = vmatmul.mubr.bf16.gmra.mxu0 %v1929
    %v2701 = vpop.f32.mrf.mxu0
    %v2702 = vadd.f32 %v2413, %v2701
    %v2703 = vpop.f32.mrf.mxu0
    %v2704 = vpop.f32.mrf.mxu0
    %v2705 = vadd.f32 %v2416, %v2704
    %v2706 = vpop.f32.mrf.mxu0
    %2707 = vmatprep.mubr.bf16.mxu0 0
    %2708 = vmatmul.mubr.bf16.gmra.mxu0 %v1932
    %v2709 = vpop.f32.mrf.mxu0
    %v2710 = vadd.f32 %v2421, %v2709
    %v2711 = vpop.f32.mrf.mxu0
    %v2712 = vpop.f32.mrf.mxu0
    %v2713 = vadd.f32 %v2424, %v2712
    %v2714 = vpop.f32.mrf.mxu0
    %2715 = vmatprep.mubr.bf16.mxu0 0
    %2716 = vmatmul.mubr.bf16.gmra.mxu0 %v1935
    %v2717 = vpop.f32.mrf.mxu0
    %v2718 = vadd.f32 %v2429, %v2717
    %v2719 = vpop.f32.mrf.mxu0
    %v2720 = vpop.f32.mrf.mxu0
    %v2721 = vadd.f32 %v2432, %v2720
    %v2722 = vpop.f32.mrf.mxu0
    %2723 = vmatprep.mubr.bf16.mxu0 0
    %2724 = vmatmul.mubr.bf16.gmra.mxu0 %v1938
    %v2725 = vpop.f32.mrf.mxu0
    %v2726 = vadd.f32 %v2437, %v2725
    %v2727 = vpop.f32.mrf.mxu0
    %v2728 = vpop.f32.mrf.mxu0
    %v2729 = vadd.f32 %v2440, %v2728
    %v2730 = vpop.f32.mrf.mxu0
    %2731 = vmatprep.mubr.bf16.mxu0 0
    %2732 = vmatmul.mubr.bf16.gmra.mxu0 %v1941
    %v2733 = vpop.f32.mrf.mxu0
    %v2734 = vadd.f32 %v2445, %v2733
    %v2735 = vpop.f32.mrf.mxu0
    %v2736 = vpop.f32.mrf.mxu0
    %v2737 = vadd.f32 %v2448, %v2736
    %v2738 = vpop.f32.mrf.mxu0
    %2739 = vmatprep.mubr.bf16.mxu0 0
    %2740 = vmatmul.mubr.bf16.gmra.mxu0 %v1944
    %v2741 = vpop.f32.mrf.mxu0
    %v2742 = vadd.f32 %v2453, %v2741
    %v2743 = vpop.f32.mrf.mxu0
    %v2744 = vpop.f32.mrf.mxu0
    %v2745 = vadd.f32 %v2456, %v2744
    %v2746 = vpop.f32.mrf.mxu0
    %2747 = vmatprep.mubr.bf16.mxu0 0
    %2748 = vmatmul.mubr.bf16.gmra.mxu0 %v1947
    %v2749 = vpop.f32.mrf.mxu0
    %v2750 = vadd.f32 %v2461, %v2749
    %v2751 = vpop.f32.mrf.mxu0
    %v2752 = vpop.f32.mrf.mxu0
    %v2753 = vadd.f32 %v2464, %v2752
    %v2754 = vpop.f32.mrf.mxu0
    %2755 = vmatprep.mubr.bf16.mxu0 0
    %2756 = vmatmul.mubr.bf16.gmra.mxu0 %v1950
    %v2757 = vpop.f32.mrf.mxu0
    %v2758 = vadd.f32 %v2469, %v2757
    %v2759 = vpop.f32.mrf.mxu0
    %v2760 = vpop.f32.mrf.mxu0
    %v2761 = vadd.f32 %v2472, %v2760
    %v2762 = vpop.f32.mrf.mxu0
    %2763 = vmatprep.mubr.bf16.mxu0 0
    %2764 = vmatmul.mubr.bf16.gmra.mxu0 %v1953
    %v2765 = vpop.f32.mrf.mxu0
    %v2766 = vadd.f32 %v2477, %v2765
    %v2767 = vpop.f32.mrf.mxu0
    %v2768 = vpop.f32.mrf.mxu0
    %v2769 = vadd.f32 %v2480, %v2768
    %v2770 = vpop.f32.mrf.mxu0
    %2771 = vmatprep.mubr.bf16.mxu0 0
    %2772 = vmatmul.mubr.bf16.gmra.mxu0 %v1956
    %v2773 = vpop.f32.mrf.mxu0
    %v2774 = vadd.f32 %v2485, %v2773
    %v2775 = vpop.f32.mrf.mxu0
    %v2776 = vpop.f32.mrf.mxu0
    %v2777 = vadd.f32 %v2488, %v2776
    %v2778 = vpop.f32.mrf.mxu0
    %2779 = vmatprep.mubr.bf16.mxu0 0
    %2780 = vmatmul.mubr.bf16.gmra.mxu0 %v1959
    %v2781 = vpop.f32.mrf.mxu0
    %v2782 = vadd.f32 %v2493, %v2781
    %v2783 = vpop.f32.mrf.mxu0
    %v2784 = vpop.f32.mrf.mxu0
    %v2785 = vadd.f32 %v2496, %v2784
    %v2786 = vpop.f32.mrf.mxu0
    %2787 = vmatprep.mubr.bf16.mxu0 0
    %2788 = vmatmul.mubr.bf16.gmra.mxu0 %v1962
    %v2789 = vpop.f32.mrf.mxu0
    %v2790 = vadd.f32 %v2501, %v2789
    %v2791 = vpop.f32.mrf.mxu0
    %v2792 = vpop.f32.mrf.mxu0
    %v2793 = vadd.f32 %v2504, %v2792
    %v2794 = vpop.f32.mrf.mxu0
    %2795 = vmatprep.mubr.bf16.mxu0 0
    %2796 = vmatmul.mubr.bf16.gmra.mxu0 %v1965
    %v2797 = vpop.f32.mrf.mxu0
    %v2798 = vadd.f32 %v2509, %v2797
    %v2799 = vpop.f32.mrf.mxu0
    %v2800 = vpop.f32.mrf.mxu0
    %v2801 = vadd.f32 %v2512, %v2800
    %v2802 = vpop.f32.mrf.mxu0
    %2803 = vmatprep.mubr.bf16.mxu0 0
    %2804 = vmatmul.mubr.bf16.gmra.mxu0 %v1968
    %v2805 = vpop.f32.mrf.mxu0
    %v2806 = vadd.f32 %v2517, %v2805
    %v2807 = vpop.f32.mrf.mxu0
    %v2808 = vpop.f32.mrf.mxu0
    %v2809 = vadd.f32 %v2520, %v2808
    %v2810 = vpop.f32.mrf.mxu0
    %2811 = vmatprep.mubr.bf16.mxu0 0
    %2812 = vmatmul.mubr.bf16.gmra.mxu0 %v1971
    %v2813 = vpop.f32.mrf.mxu0
    %v2814 = vadd.f32 %v2525, %v2813
    %v2815 = vpop.f32.mrf.mxu0
    %v2816 = vpop.f32.mrf.mxu0
    %v2817 = vadd.f32 %v2528, %v2816
    %v2818 = vpop.f32.mrf.mxu0
    %2819 = vmatprep.mubr.bf16.mxu0 0
    %2820 = vmatmul.mubr.bf16.gmra.mxu0 %v1974
    %v2821 = vpop.f32.mrf.mxu0
    %v2822 = vadd.f32 %v2533, %v2821
    %v2823 = vpop.f32.mrf.mxu0
    %v2824 = vpop.f32.mrf.mxu0
    %v2825 = vadd.f32 %v2536, %v2824
    %v2826 = vpop.f32.mrf.mxu0
    %2827 = vmatprep.mubr.bf16.mxu0 0
    %2828 = vmatmul.mubr.bf16.gmra.mxu0 %v1977
    %v2829 = vpop.f32.mrf.mxu0
    %v2830 = vadd.f32 %v2541, %v2829
    %v2831 = vpop.f32.mrf.mxu0
    %v2832 = vpop.f32.mrf.mxu0
    %v2833 = vadd.f32 %v2544, %v2832
    %v2834 = vpop.f32.mrf.mxu0
    %2835 = vmatprep.mubr.bf16.mxu0 0
    %2836 = vmatmul.mubr.bf16.gmra.mxu0 %v1980
    %v2837 = vpop.f32.mrf.mxu0
    %v2838 = vadd.f32 %v2549, %v2837
    %v2839 = vpop.f32.mrf.mxu0
    %v2840 = vpop.f32.mrf.mxu0
    %v2841 = vadd.f32 %v2552, %v2840
    %v2842 = vpop.f32.mrf.mxu0
    %2843 = vmatprep.mubr.bf16.mxu0 0
    %2844 = vmatmul.mubr.bf16.gmra.mxu0 %v1983
    %v2845 = vpop.f32.mrf.mxu0
    %v2846 = vadd.f32 %v2557, %v2845
    %v2847 = vpop.f32.mrf.mxu0
    %v2848 = vpop.f32.mrf.mxu0
    %v2849 = vadd.f32 %v2560, %v2848
    %v2850 = vpop.f32.mrf.mxu0
    %2851 = vdwg.mxu0
    %vm2852 = vcmask 130048
    %v2853 = vsel %vm2852, %v2598, 0.0
    %v2854 = vsel %vm2852, %v2601, 0.0
    %v2855 = vadd.f32 %v2853, %v2854
    %v2856 = vsel %vm2852, %v2606, 0.0
    %v2857 = vadd.f32 %v2855, %v2856
    %v2858 = vsel %vm2852, %v2609, 0.0
    %v2859 = vadd.f32 %v2857, %v2858
    %v2860 = vsel %vm2852, %v2614, 0.0
    %v2861 = vadd.f32 %v2859, %v2860
    %v2862 = vsel %vm2852, %v2617, 0.0
    %v2863 = vadd.f32 %v2861, %v2862
    %v2864 = vsel %vm2852, %v2622, 0.0
    %v2865 = vadd.f32 %v2863, %v2864
    %v2866 = vsel %vm2852, %v2625, 0.0
    %v2867 = vadd.f32 %v2865, %v2866
    %v2868 = vsel %vm2852, %v2630, 0.0
    %v2869 = vadd.f32 %v2867, %v2868
    %v2870 = vsel %vm2852, %v2633, 0.0
    %v2871 = vadd.f32 %v2869, %v2870
    %v2872 = vsel %vm2852, %v2638, 0.0
    %v2873 = vadd.f32 %v2871, %v2872
    %v2874 = vsel %vm2852, %v2641, 0.0
    %v2875 = vadd.f32 %v2873, %v2874
    %v2876 = vsel %vm2852, %v2646, 0.0
    %v2877 = vadd.f32 %v2875, %v2876
    %v2878 = vsel %vm2852, %v2649, 0.0
    %v2879 = vadd.f32 %v2877, %v2878
    %v2880 = vsel %vm2852, %v2654, 0.0
    %v2881 = vadd.f32 %v2879, %v2880
    %v2882 = vsel %vm2852, %v2657, 0.0
    %v2883 = vadd.f32 %v2881, %v2882
    %v2884 = vsel %vm2852, %v2662, 0.0
    %v2885 = vadd.f32 %v2883, %v2884
    %v2886 = vsel %vm2852, %v2665, 0.0
    %v2887 = vadd.f32 %v2885, %v2886
    %v2888 = vsel %vm2852, %v2670, 0.0
    %v2889 = vadd.f32 %v2887, %v2888
    %v2890 = vsel %vm2852, %v2673, 0.0
    %v2891 = vadd.f32 %v2889, %v2890
    %v2892 = vsel %vm2852, %v2678, 0.0
    %v2893 = vadd.f32 %v2891, %v2892
    %v2894 = vsel %vm2852, %v2681, 0.0
    %v2895 = vadd.f32 %v2893, %v2894
    %v2896 = vsel %vm2852, %v2686, 0.0
    %v2897 = vadd.f32 %v2895, %v2896
    %v2898 = vsel %vm2852, %v2689, 0.0
    %v2899 = vadd.f32 %v2897, %v2898
    %v2900 = vsel %vm2852, %v2694, 0.0
    %v2901 = vadd.f32 %v2899, %v2900
    %v2902 = vsel %vm2852, %v2697, 0.0
    %v2903 = vadd.f32 %v2901, %v2902
    %v2904 = vsel %vm2852, %v2702, 0.0
    %v2905 = vadd.f32 %v2903, %v2904
    %v2906 = vsel %vm2852, %v2705, 0.0
    %v2907 = vadd.f32 %v2905, %v2906
    %v2908 = vsel %vm2852, %v2710, 0.0
    %v2909 = vadd.f32 %v2907, %v2908
    %v2910 = vsel %vm2852, %v2713, 0.0
    %v2911 = vadd.f32 %v2909, %v2910
    %v2912 = vsel %vm2852, %v2718, 0.0
    %v2913 = vadd.f32 %v2911, %v2912
    %v2914 = vsel %vm2852, %v2721, 0.0
    %v2915 = vadd.f32 %v2913, %v2914
    %v2916 = vsel %vm2852, %v2726, 0.0
    %v2917 = vadd.f32 %v2915, %v2916
    %v2918 = vsel %vm2852, %v2729, 0.0
    %v2919 = vadd.f32 %v2917, %v2918
    %v2920 = vsel %vm2852, %v2734, 0.0
    %v2921 = vadd.f32 %v2919, %v2920
    %v2922 = vsel %vm2852, %v2737, 0.0
    %v2923 = vadd.f32 %v2921, %v2922
    %v2924 = vsel %vm2852, %v2742, 0.0
    %v2925 = vadd.f32 %v2923, %v2924
    %v2926 = vsel %vm2852, %v2745, 0.0
    %v2927 = vadd.f32 %v2925, %v2926
    %v2928 = vsel %vm2852, %v2750, 0.0
    %v2929 = vadd.f32 %v2927, %v2928
    %v2930 = vsel %vm2852, %v2753, 0.0
    %v2931 = vadd.f32 %v2929, %v2930
    %v2932 = vsel %vm2852, %v2758, 0.0
    %v2933 = vadd.f32 %v2931, %v2932
    %v2934 = vsel %vm2852, %v2761, 0.0
    %v2935 = vadd.f32 %v2933, %v2934
    %v2936 = vsel %vm2852, %v2766, 0.0
    %v2937 = vadd.f32 %v2935, %v2936
    %v2938 = vsel %vm2852, %v2769, 0.0
    %v2939 = vadd.f32 %v2937, %v2938
    %v2940 = vsel %vm2852, %v2774, 0.0
    %v2941 = vadd.f32 %v2939, %v2940
    %v2942 = vsel %vm2852, %v2777, 0.0
    %v2943 = vadd.f32 %v2941, %v2942
    %v2944 = vsel %vm2852, %v2782, 0.0
    %v2945 = vadd.f32 %v2943, %v2944
    %v2946 = vsel %vm2852, %v2785, 0.0
    %v2947 = vadd.f32 %v2945, %v2946
    %v2948 = vsel %vm2852, %v2790, 0.0
    %v2949 = vadd.f32 %v2947, %v2948
    %v2950 = vsel %vm2852, %v2793, 0.0
    %v2951 = vadd.f32 %v2949, %v2950
    %v2952 = vsel %vm2852, %v2798, 0.0
    %v2953 = vadd.f32 %v2951, %v2952
    %v2954 = vsel %vm2852, %v2801, 0.0
    %v2955 = vadd.f32 %v2953, %v2954
    %v2956 = vsel %vm2852, %v2806, 0.0
    %v2957 = vadd.f32 %v2955, %v2956
    %v2958 = vsel %vm2852, %v2809, 0.0
    %v2959 = vadd.f32 %v2957, %v2958
    %v2960 = vsel %vm2852, %v2814, 0.0
    %v2961 = vadd.f32 %v2959, %v2960
    %v2962 = vsel %vm2852, %v2817, 0.0
    %v2963 = vadd.f32 %v2961, %v2962
    %v2964 = vsel %vm2852, %v2822, 0.0
    %v2965 = vadd.f32 %v2963, %v2964
    %v2966 = vsel %vm2852, %v2825, 0.0
    %v2967 = vadd.f32 %v2965, %v2966
    %v2968 = vsel %vm2852, %v2830, 0.0
    %v2969 = vadd.f32 %v2967, %v2968
    %v2970 = vsel %vm2852, %v2833, 0.0
    %v2971 = vadd.f32 %v2969, %v2970
    %v2972 = vsel %vm2852, %v2838, 0.0
    %v2973 = vadd.f32 %v2971, %v2972
    %v2974 = vsel %vm2852, %v2841, 0.0
    %v2975 = vadd.f32 %v2973, %v2974
    %v2976 = vsel %vm2852, %v2846, 0.0
    %v2977 = vadd.f32 %v2975, %v2976
    %v2978 = vsel %vm2852, %v2849, 0.0
    %v2979 = vadd.f32 %v2977, %v2978
    %v2980 = vrot.slane %v2979, 4
    %v2981 = vadd.f32 %v2979, %v2980
    %v2982 = vrot.slane %v2981, 2
    %v2983 = vadd.f32 %v2981, %v2982
    %v2984 = vrot.slane %v2983, 1
    %v2985 = vadd.f32 %v2983, %v2984
    %v2986 = vmul.f32 %v2598, %v2598
    %v2987 = vmul.f32 %v2601, %v2601
    %v2988 = vmul.f32 %v2606, %v2606
    %v2989 = vmul.f32 %v2609, %v2609
    %v2990 = vmul.f32 %v2614, %v2614
    %v2991 = vmul.f32 %v2617, %v2617
    %v2992 = vmul.f32 %v2622, %v2622
    %v2993 = vmul.f32 %v2625, %v2625
    %v2994 = vmul.f32 %v2630, %v2630
    %v2995 = vmul.f32 %v2633, %v2633
    %v2996 = vmul.f32 %v2638, %v2638
    %v2997 = vmul.f32 %v2641, %v2641
    %v2998 = vmul.f32 %v2646, %v2646
    %v2999 = vmul.f32 %v2649, %v2649
    %v3000 = vmul.f32 %v2654, %v2654
    %v3001 = vmul.f32 %v2657, %v2657
    %v3002 = vmul.f32 %v2662, %v2662
    %v3003 = vmul.f32 %v2665, %v2665
    %v3004 = vmul.f32 %v2670, %v2670
    %v3005 = vmul.f32 %v2673, %v2673
    %v3006 = vmul.f32 %v2678, %v2678
    %v3007 = vmul.f32 %v2681, %v2681
    %v3008 = vmul.f32 %v2686, %v2686
    %v3009 = vmul.f32 %v2689, %v2689
    %v3010 = vmul.f32 %v2694, %v2694
    %v3011 = vmul.f32 %v2697, %v2697
    %v3012 = vmul.f32 %v2702, %v2702
    %v3013 = vmul.f32 %v2705, %v2705
    %v3014 = vmul.f32 %v2710, %v2710
    %v3015 = vmul.f32 %v2713, %v2713
    %v3016 = vmul.f32 %v2718, %v2718
    %v3017 = vmul.f32 %v2721, %v2721
    %v3018 = vmul.f32 %v2726, %v2726
    %v3019 = vmul.f32 %v2729, %v2729
    %v3020 = vmul.f32 %v2734, %v2734
    %v3021 = vmul.f32 %v2737, %v2737
    %v3022 = vmul.f32 %v2742, %v2742
    %v3023 = vmul.f32 %v2745, %v2745
    %v3024 = vmul.f32 %v2750, %v2750
    %v3025 = vmul.f32 %v2753, %v2753
    %v3026 = vmul.f32 %v2758, %v2758
    %v3027 = vmul.f32 %v2761, %v2761
    %v3028 = vmul.f32 %v2766, %v2766
    %v3029 = vmul.f32 %v2769, %v2769
    %v3030 = vmul.f32 %v2774, %v2774
    %v3031 = vmul.f32 %v2777, %v2777
    %v3032 = vmul.f32 %v2782, %v2782
    %v3033 = vmul.f32 %v2785, %v2785
    %v3034 = vmul.f32 %v2790, %v2790
    %v3035 = vmul.f32 %v2793, %v2793
    %v3036 = vmul.f32 %v2798, %v2798
    %v3037 = vmul.f32 %v2801, %v2801
    %v3038 = vmul.f32 %v2806, %v2806
    %v3039 = vmul.f32 %v2809, %v2809
    %v3040 = vmul.f32 %v2814, %v2814
    %v3041 = vmul.f32 %v2817, %v2817
    %v3042 = vmul.f32 %v2822, %v2822
    %v3043 = vmul.f32 %v2825, %v2825
    %v3044 = vmul.f32 %v2830, %v2830
    %v3045 = vmul.f32 %v2833, %v2833
    %v3046 = vmul.f32 %v2838, %v2838
    %v3047 = vmul.f32 %v2841, %v2841
    %v3048 = vmul.f32 %v2846, %v2846
    %v3049 = vmul.f32 %v2849, %v2849
    %v3050 = vsel %vm2852, %v2986, 0.0
    %v3051 = vsel %vm2852, %v2987, 0.0
    %v3052 = vadd.f32 %v3050, %v3051
    %v3053 = vsel %vm2852, %v2988, 0.0
    %v3054 = vadd.f32 %v3052, %v3053
    %v3055 = vsel %vm2852, %v2989, 0.0
    %v3056 = vadd.f32 %v3054, %v3055
    %v3057 = vsel %vm2852, %v2990, 0.0
    %v3058 = vadd.f32 %v3056, %v3057
    %v3059 = vsel %vm2852, %v2991, 0.0
    %v3060 = vadd.f32 %v3058, %v3059
    %v3061 = vsel %vm2852, %v2992, 0.0
    %v3062 = vadd.f32 %v3060, %v3061
    %v3063 = vsel %vm2852, %v2993, 0.0
    %v3064 = vadd.f32 %v3062, %v3063
    %v3065 = vsel %vm2852, %v2994, 0.0
    %v3066 = vadd.f32 %v3064, %v3065
    %v3067 = vsel %vm2852, %v2995, 0.0
    %v3068 = vadd.f32 %v3066, %v3067
    %v3069 = vsel %vm2852, %v2996, 0.0
    %v3070 = vadd.f32 %v3068, %v3069
    %v3071 = vsel %vm2852, %v2997, 0.0
    %v3072 = vadd.f32 %v3070, %v3071
    %v3073 = vsel %vm2852, %v2998, 0.0
    %v3074 = vadd.f32 %v3072, %v3073
    %v3075 = vsel %vm2852, %v2999, 0.0
    %v3076 = vadd.f32 %v3074, %v3075
    %v3077 = vsel %vm2852, %v3000, 0.0
    %v3078 = vadd.f32 %v3076, %v3077
    %v3079 = vsel %vm2852, %v3001, 0.0
    %v3080 = vadd.f32 %v3078, %v3079
    %v3081 = vsel %vm2852, %v3002, 0.0
    %v3082 = vadd.f32 %v3080, %v3081
    %v3083 = vsel %vm2852, %v3003, 0.0
    %v3084 = vadd.f32 %v3082, %v3083
    %v3085 = vsel %vm2852, %v3004, 0.0
    %v3086 = vadd.f32 %v3084, %v3085
    %v3087 = vsel %vm2852, %v3005, 0.0
    %v3088 = vadd.f32 %v3086, %v3087
    %v3089 = vsel %vm2852, %v3006, 0.0
    %v3090 = vadd.f32 %v3088, %v3089
    %v3091 = vsel %vm2852, %v3007, 0.0
    %v3092 = vadd.f32 %v3090, %v3091
    %v3093 = vsel %vm2852, %v3008, 0.0
    %v3094 = vadd.f32 %v3092, %v3093
    %v3095 = vsel %vm2852, %v3009, 0.0
    %v3096 = vadd.f32 %v3094, %v3095
    %v3097 = vsel %vm2852, %v3010, 0.0
    %v3098 = vadd.f32 %v3096, %v3097
    %v3099 = vsel %vm2852, %v3011, 0.0
    %v3100 = vadd.f32 %v3098, %v3099
    %v3101 = vsel %vm2852, %v3012, 0.0
    %v3102 = vadd.f32 %v3100, %v3101
    %v3103 = vsel %vm2852, %v3013, 0.0
    %v3104 = vadd.f32 %v3102, %v3103
    %v3105 = vsel %vm2852, %v3014, 0.0
    %v3106 = vadd.f32 %v3104, %v3105
    %v3107 = vsel %vm2852, %v3015, 0.0
    %v3108 = vadd.f32 %v3106, %v3107
    %v3109 = vsel %vm2852, %v3016, 0.0
    %v3110 = vadd.f32 %v3108, %v3109
    %v3111 = vsel %vm2852, %v3017, 0.0
    %v3112 = vadd.f32 %v3110, %v3111
    %v3113 = vsel %vm2852, %v3018, 0.0
    %v3114 = vadd.f32 %v3112, %v3113
    %v3115 = vsel %vm2852, %v3019, 0.0
    %v3116 = vadd.f32 %v3114, %v3115
    %v3117 = vsel %vm2852, %v3020, 0.0
    %v3118 = vadd.f32 %v3116, %v3117
    %v3119 = vsel %vm2852, %v3021, 0.0
    %v3120 = vadd.f32 %v3118, %v3119
    %v3121 = vsel %vm2852, %v3022, 0.0
    %v3122 = vadd.f32 %v3120, %v3121
    %v3123 = vsel %vm2852, %v3023, 0.0
    %v3124 = vadd.f32 %v3122, %v3123
    %v3125 = vsel %vm2852, %v3024, 0.0
    %v3126 = vadd.f32 %v3124, %v3125
    %v3127 = vsel %vm2852, %v3025, 0.0
    %v3128 = vadd.f32 %v3126, %v3127
    %v3129 = vsel %vm2852, %v3026, 0.0
    %v3130 = vadd.f32 %v3128, %v3129
    %v3131 = vsel %vm2852, %v3027, 0.0
    %v3132 = vadd.f32 %v3130, %v3131
    %v3133 = vsel %vm2852, %v3028, 0.0
    %v3134 = vadd.f32 %v3132, %v3133
    %v3135 = vsel %vm2852, %v3029, 0.0
    %v3136 = vadd.f32 %v3134, %v3135
    %v3137 = vsel %vm2852, %v3030, 0.0
    %v3138 = vadd.f32 %v3136, %v3137
    %v3139 = vsel %vm2852, %v3031, 0.0
    %v3140 = vadd.f32 %v3138, %v3139
    %v3141 = vsel %vm2852, %v3032, 0.0
    %v3142 = vadd.f32 %v3140, %v3141
    %v3143 = vsel %vm2852, %v3033, 0.0
    %v3144 = vadd.f32 %v3142, %v3143
    %v3145 = vsel %vm2852, %v3034, 0.0
    %v3146 = vadd.f32 %v3144, %v3145
    %v3147 = vsel %vm2852, %v3035, 0.0
    %v3148 = vadd.f32 %v3146, %v3147
    %v3149 = vsel %vm2852, %v3036, 0.0
    %v3150 = vadd.f32 %v3148, %v3149
    %v3151 = vsel %vm2852, %v3037, 0.0
    %v3152 = vadd.f32 %v3150, %v3151
    %v3153 = vsel %vm2852, %v3038, 0.0
    %v3154 = vadd.f32 %v3152, %v3153
    %v3155 = vsel %vm2852, %v3039, 0.0
    %v3156 = vadd.f32 %v3154, %v3155
    %v3157 = vsel %vm2852, %v3040, 0.0
    %v3158 = vadd.f32 %v3156, %v3157
    %v3159 = vsel %vm2852, %v3041, 0.0
    %v3160 = vadd.f32 %v3158, %v3159
    %v3161 = vsel %vm2852, %v3042, 0.0
    %v3162 = vadd.f32 %v3160, %v3161
    %v3163 = vsel %vm2852, %v3043, 0.0
    %v3164 = vadd.f32 %v3162, %v3163
    %v3165 = vsel %vm2852, %v3044, 0.0
    %v3166 = vadd.f32 %v3164, %v3165
    %v3167 = vsel %vm2852, %v3045, 0.0
    %v3168 = vadd.f32 %v3166, %v3167
    %v3169 = vsel %vm2852, %v3046, 0.0
    %v3170 = vadd.f32 %v3168, %v3169
    %v3171 = vsel %vm2852, %v3047, 0.0
    %v3172 = vadd.f32 %v3170, %v3171
    %v3173 = vsel %vm2852, %v3048, 0.0
    %v3174 = vadd.f32 %v3172, %v3173
    %v3175 = vsel %vm2852, %v3049, 0.0
    %v3176 = vadd.f32 %v3174, %v3175
    %v3177 = vrot.slane %v3176, 4
    %v3178 = vadd.f32 %v3176, %v3177
    %v3179 = vrot.slane %v3178, 2
    %v3180 = vadd.f32 %v3178, %v3179
    %v3181 = vrot.slane %v3180, 1
    %v3182 = vadd.f32 %v3180, %v3181
    %v3183 = vmul.f32 %v2985, 0.001953125
    %v3184 = vmul.f32 %v3182, 0.001953125
    %v3185 = vmul.f32 %v3183, %v3183
    %v3186 = vsub.f32 %v3184, %v3185
    %v3187 = vmax.f32 %v3186, 0.0
    %v3188 = vadd.f32 %v3187, 1e-05
    %v3189 = vrsqrt.pop %v3188
    %v3190 = vld [vmem:[%s3] sm:$0x1]
    %v3191 = vmul.f32 %v3189, %v3190
    %v3192 = vld [vmem:[%s4] sm:$0x1]
    %v3193 = vmul.f32 %v3183, %v3191
    %v3194 = vsub.f32 %v3192, %v3193
    %v3195 = vlaneseq
    %v3196 = vshrl.u32 %v3195, 7
    %v3197 = vsub.s32 0, %v3196
    %v3198 = vrot.slane %v3191, %v3197
    %v3199 = vmul.f32 %v2598, %v3198
    %v3200 = vmul.f32 %v2601, %v3198
    %v3201 = vmul.f32 %v2606, %v3198
    %v3202 = vmul.f32 %v2609, %v3198
    %v3203 = vmul.f32 %v2614, %v3198
    %v3204 = vmul.f32 %v2617, %v3198
    %v3205 = vmul.f32 %v2622, %v3198
    %v3206 = vmul.f32 %v2625, %v3198
    %v3207 = vmul.f32 %v2630, %v3198
    %v3208 = vmul.f32 %v2633, %v3198
    %v3209 = vmul.f32 %v2638, %v3198
    %v3210 = vmul.f32 %v2641, %v3198
    %v3211 = vmul.f32 %v2646, %v3198
    %v3212 = vmul.f32 %v2649, %v3198
    %v3213 = vmul.f32 %v2654, %v3198
    %v3214 = vmul.f32 %v2657, %v3198
    %v3215 = vmul.f32 %v2662, %v3198
    %v3216 = vmul.f32 %v2665, %v3198
    %v3217 = vmul.f32 %v2670, %v3198
    %v3218 = vmul.f32 %v2673, %v3198
    %v3219 = vmul.f32 %v2678, %v3198
    %v3220 = vmul.f32 %v2681, %v3198
    %v3221 = vmul.f32 %v2686, %v3198
    %v3222 = vmul.f32 %v2689, %v3198
    %v3223 = vmul.f32 %v2694, %v3198
    %v3224 = vmul.f32 %v2697, %v3198
    %v3225 = vmul.f32 %v2702, %v3198
    %v3226 = vmul.f32 %v2705, %v3198
    %v3227 = vmul.f32 %v2710, %v3198
    %v3228 = vmul.f32 %v2713, %v3198
    %v3229 = vmul.f32 %v2718, %v3198
    %v3230 = vmul.f32 %v2721, %v3198
    %v3231 = vmul.f32 %v2726, %v3198
    %v3232 = vmul.f32 %v2729, %v3198
    %v3233 = vmul.f32 %v2734, %v3198
    %v3234 = vmul.f32 %v2737, %v3198
    %v3235 = vmul.f32 %v2742, %v3198
    %v3236 = vmul.f32 %v2745, %v3198
    %v3237 = vmul.f32 %v2750, %v3198
    %v3238 = vmul.f32 %v2753, %v3198
    %v3239 = vmul.f32 %v2758, %v3198
    %v3240 = vmul.f32 %v2761, %v3198
    %v3241 = vmul.f32 %v2766, %v3198
    %v3242 = vmul.f32 %v2769, %v3198
    %v3243 = vmul.f32 %v2774, %v3198
    %v3244 = vmul.f32 %v2777, %v3198
    %v3245 = vmul.f32 %v2782, %v3198
    %v3246 = vmul.f32 %v2785, %v3198
    %v3247 = vmul.f32 %v2790, %v3198
    %v3248 = vmul.f32 %v2793, %v3198
    %v3249 = vmul.f32 %v2798, %v3198
    %v3250 = vmul.f32 %v2801, %v3198
    %v3251 = vmul.f32 %v2806, %v3198
    %v3252 = vmul.f32 %v2809, %v3198
    %v3253 = vmul.f32 %v2814, %v3198
    %v3254 = vmul.f32 %v2817, %v3198
    %v3255 = vmul.f32 %v2822, %v3198
    %v3256 = vmul.f32 %v2825, %v3198
    %v3257 = vmul.f32 %v2830, %v3198
    %v3258 = vmul.f32 %v2833, %v3198
    %v3259 = vmul.f32 %v2838, %v3198
    %v3260 = vmul.f32 %v2841, %v3198
    %v3261 = vmul.f32 %v2846, %v3198
    %v3262 = vmul.f32 %v2849, %v3198
    %v3264 = vlaneseq
    %v3265 = vshrl.u32 %v3264, 7
    %v3266 = vsub.s32 0, %v3265
    %v3267 = vrot.slane %v3194, %v3266
    %v3269 = vadd.f32 %v3199, %v3267
    %v3270 = vadd.f32 %v3200, %v3267
    %v3271 = vadd.f32 %v3201, %v3267
    %v3272 = vadd.f32 %v3202, %v3267
    %v3273 = vadd.f32 %v3203, %v3267
    %v3274 = vadd.f32 %v3204, %v3267
    %v3275 = vadd.f32 %v3205, %v3267
    %v3276 = vadd.f32 %v3206, %v3267
    %v3277 = vadd.f32 %v3207, %v3267
    %v3278 = vadd.f32 %v3208, %v3267
    %v3279 = vadd.f32 %v3209, %v3267
    %v3280 = vadd.f32 %v3210, %v3267
    %v3281 = vadd.f32 %v3211, %v3267
    %v3282 = vadd.f32 %v3212, %v3267
    %v3283 = vadd.f32 %v3213, %v3267
    %v3284 = vadd.f32 %v3214, %v3267
    %v3285 = vadd.f32 %v3215, %v3267
    %v3286 = vadd.f32 %v3216, %v3267
    %v3287 = vadd.f32 %v3217, %v3267
    %v3288 = vadd.f32 %v3218, %v3267
    %v3289 = vadd.f32 %v3219, %v3267
    %v3290 = vadd.f32 %v3220, %v3267
    %v3291 = vadd.f32 %v3221, %v3267
    %v3292 = vadd.f32 %v3222, %v3267
    %v3293 = vadd.f32 %v3223, %v3267
    %v3294 = vadd.f32 %v3224, %v3267
    %v3295 = vadd.f32 %v3225, %v3267
    %v3296 = vadd.f32 %v3226, %v3267
    %v3297 = vadd.f32 %v3227, %v3267
    %v3298 = vadd.f32 %v3228, %v3267
    %v3299 = vadd.f32 %v3229, %v3267
    %v3300 = vadd.f32 %v3230, %v3267
    %v3301 = vadd.f32 %v3231, %v3267
    %v3302 = vadd.f32 %v3232, %v3267
    %v3303 = vadd.f32 %v3233, %v3267
    %v3304 = vadd.f32 %v3234, %v3267
    %v3305 = vadd.f32 %v3235, %v3267
    %v3306 = vadd.f32 %v3236, %v3267
    %v3307 = vadd.f32 %v3237, %v3267
    %v3308 = vadd.f32 %v3238, %v3267
    %v3309 = vadd.f32 %v3239, %v3267
    %v3310 = vadd.f32 %v3240, %v3267
    %v3311 = vadd.f32 %v3241, %v3267
    %v3312 = vadd.f32 %v3242, %v3267
    %v3313 = vadd.f32 %v3243, %v3267
    %v3314 = vadd.f32 %v3244, %v3267
    %v3315 = vadd.f32 %v3245, %v3267
    %v3316 = vadd.f32 %v3246, %v3267
    %v3317 = vadd.f32 %v3247, %v3267
    %v3318 = vadd.f32 %v3248, %v3267
    %v3319 = vadd.f32 %v3249, %v3267
    %v3320 = vadd.f32 %v3250, %v3267
    %v3321 = vadd.f32 %v3251, %v3267
    %v3322 = vadd.f32 %v3252, %v3267
    %v3323 = vadd.f32 %v3253, %v3267
    %v3324 = vadd.f32 %v3254, %v3267
    %v3325 = vadd.f32 %v3255, %v3267
    %v3326 = vadd.f32 %v3256, %v3267
    %v3327 = vadd.f32 %v3257, %v3267
    %v3328 = vadd.f32 %v3258, %v3267
    %v3329 = vadd.f32 %v3259, %v3267
    %v3330 = vadd.f32 %v3260, %v3267
    %v3331 = vadd.f32 %v3261, %v3267
    %v3332 = vadd.f32 %v3262, %v3267
    %3333 = vst.msk [vmem:[%s5] sm:$0xff] %vm2852, %v3269
    %3334 = vst.msk [vmem:[%s5 + $0x8] sm:$0xff] %vm2852, %v3270
    %3335 = vst.msk [vmem:[%s5 + $0x10] sm:$0xff] %vm2852, %v3271
    %3336 = vst.msk [vmem:[%s5 + $0x18] sm:$0xff] %vm2852, %v3272
    %3337 = vst.msk [vmem:[%s5 + $0x20] sm:$0xff] %vm2852, %v3273
    %3338 = vst.msk [vmem:[%s5 + $0x28] sm:$0xff] %vm2852, %v3274
    %3339 = vst.msk [vmem:[%s5 + $0x30] sm:$0xff] %vm2852, %v3275
    %3340 = vst.msk [vmem:[%s5 + $0x38] sm:$0xff] %vm2852, %v3276
    %3341 = vst.msk [vmem:[%s5 + $0x40] sm:$0xff] %vm2852, %v3277
    %3342 = vst.msk [vmem:[%s5 + $0x48] sm:$0xff] %vm2852, %v3278
    %3343 = vst.msk [vmem:[%s5 + $0x50] sm:$0xff] %vm2852, %v3279
    %3344 = vst.msk [vmem:[%s5 + $0x58] sm:$0xff] %vm2852, %v3280
    %3345 = vst.msk [vmem:[%s5 + $0x60] sm:$0xff] %vm2852, %v3281
    %3346 = vst.msk [vmem:[%s5 + $0x68] sm:$0xff] %vm2852, %v3282
    %3347 = vst.msk [vmem:[%s5 + $0x70] sm:$0xff] %vm2852, %v3283
    %3348 = vst.msk [vmem:[%s5 + $0x78] sm:$0xff] %vm2852, %v3284
    %3349 = vst.msk [vmem:[%s5 + $0x80] sm:$0xff] %vm2852, %v3285
    %3350 = vst.msk [vmem:[%s5 + $0x88] sm:$0xff] %vm2852, %v3286
    %3351 = vst.msk [vmem:[%s5 + $0x90] sm:$0xff] %vm2852, %v3287
    %3352 = vst.msk [vmem:[%s5 + $0x98] sm:$0xff] %vm2852, %v3288
    %3353 = vst.msk [vmem:[%s5 + $0xa0] sm:$0xff] %vm2852, %v3289
    %3354 = vst.msk [vmem:[%s5 + $0xa8] sm:$0xff] %vm2852, %v3290
    %3355 = vst.msk [vmem:[%s5 + $0xb0] sm:$0xff] %vm2852, %v3291
    %3356 = vst.msk [vmem:[%s5 + $0xb8] sm:$0xff] %vm2852, %v3292
    %3357 = vst.msk [vmem:[%s5 + $0xc0] sm:$0xff] %vm2852, %v3293
    %3358 = vst.msk [vmem:[%s5 + $0xc8] sm:$0xff] %vm2852, %v3294
    %3359 = vst.msk [vmem:[%s5 + $0xd0] sm:$0xff] %vm2852, %v3295
    %3360 = vst.msk [vmem:[%s5 + $0xd8] sm:$0xff] %vm2852, %v3296
    %3361 = vst.msk [vmem:[%s5 + $0xe0] sm:$0xff] %vm2852, %v3297
    %3362 = vst.msk [vmem:[%s5 + $0xe8] sm:$0xff] %vm2852, %v3298
    %3363 = vst.msk [vmem:[%s5 + $0xf0] sm:$0xff] %vm2852, %v3299
    %3364 = vst.msk [vmem:[%s5 + $0xf8] sm:$0xff] %vm2852, %v3300
    %3365 = vst.msk [vmem:[%s5 + $0x100] sm:$0xff] %vm2852, %v3301
    %3366 = vst.msk [vmem:[%s5 + $0x108] sm:$0xff] %vm2852, %v3302
    %3367 = vst.msk [vmem:[%s5 + $0x110] sm:$0xff] %vm2852, %v3303
    %3368 = vst.msk [vmem:[%s5 + $0x118] sm:$0xff] %vm2852, %v3304
    %3369 = vst.msk [vmem:[%s5 + $0x120] sm:$0xff] %vm2852, %v3305
    %3370 = vst.msk [vmem:[%s5 + $0x128] sm:$0xff] %vm2852, %v3306
    %3371 = vst.msk [vmem:[%s5 + $0x130] sm:$0xff] %vm2852, %v3307
    %3372 = vst.msk [vmem:[%s5 + $0x138] sm:$0xff] %vm2852, %v3308
    %3373 = vst.msk [vmem:[%s5 + $0x140] sm:$0xff] %vm2852, %v3309
    %3374 = vst.msk [vmem:[%s5 + $0x148] sm:$0xff] %vm2852, %v3310
    %3375 = vst.msk [vmem:[%s5 + $0x150] sm:$0xff] %vm2852, %v3311
    %3376 = vst.msk [vmem:[%s5 + $0x158] sm:$0xff] %vm2852, %v3312
    %3377 = vst.msk [vmem:[%s5 + $0x160] sm:$0xff] %vm2852, %v3313
    %3378 = vst.msk [vmem:[%s5 + $0x168] sm:$0xff] %vm2852, %v3314
    %3379 = vst.msk [vmem:[%s5 + $0x170] sm:$0xff] %vm2852, %v3315
    %3380 = vst.msk [vmem:[%s5 + $0x178] sm:$0xff] %vm2852, %v3316
    %3381 = vst.msk [vmem:[%s5 + $0x180] sm:$0xff] %vm2852, %v3317
    %3382 = vst.msk [vmem:[%s5 + $0x188] sm:$0xff] %vm2852, %v3318
    %3383 = vst.msk [vmem:[%s5 + $0x190] sm:$0xff] %vm2852, %v3319
    %3384 = vst.msk [vmem:[%s5 + $0x198] sm:$0xff] %vm2852, %v3320
    %3385 = vst.msk [vmem:[%s5 + $0x1a0] sm:$0xff] %vm2852, %v3321
    %3386 = vst.msk [vmem:[%s5 + $0x1a8] sm:$0xff] %vm2852, %v3322
    %3387 = vst.msk [vmem:[%s5 + $0x1b0] sm:$0xff] %vm2852, %v3323
    %3388 = vst.msk [vmem:[%s5 + $0x1b8] sm:$0xff] %vm2852, %v3324
    %3389 = vst.msk [vmem:[%s5 + $0x1c0] sm:$0xff] %vm2852, %v3325
    %3390 = vst.msk [vmem:[%s5 + $0x1c8] sm:$0xff] %vm2852, %v3326
    %3391 = vst.msk [vmem:[%s5 + $0x1d0] sm:$0xff] %vm2852, %v3327
    %3392 = vst.msk [vmem:[%s5 + $0x1d8] sm:$0xff] %vm2852, %v3328
    %3393 = vst.msk [vmem:[%s5 + $0x1e0] sm:$0xff] %vm2852, %v3329
    %3394 = vst.msk [vmem:[%s5 + $0x1e8] sm:$0xff] %vm2852, %v3330
    %3395 = vst.msk [vmem:[%s5 + $0x1f0] sm:$0xff] %vm2852, %v3331
    %3396 = vst.msk [vmem:[%s5 + $0x1f8] sm:$0xff] %vm2852, %v3332
    %vm3397 = vcmask 122880
    %3398 = vst.msk [vmem:[#allocation2] sm:$0x1] %vm3397, %v3194
    // Predicated region
    $region22: #{dvae_encoder_forward.6} parent=1 // pred_check
      _
    $region23: #{dvae_encoder_forward.6} parent=1 // pred_check_branch
      %3400 = sbr.rel (0) target = $region25
    $region24: #{dvae_encoder_forward.6} parent=1 // pred_region
      _
    $region25: #{dvae_encoder_forward.6} parent=1 // pred_fallthru
      _
    // Predicated region
    $region26: #{dvae_encoder_forward.6} parent=1 // pred_check
      _
    $region27: #{dvae_encoder_forward.6} parent=1 // pred_check_branch
      %3402 = sbr.rel (0) target = $region29
    $region28: #{dvae_encoder_forward.6} parent=1 // pred_region
      %s3404 = ssub.s32 16, 16
      %3405 = vsyncadd [#allocation3], %s3404
      %s3407 = sshll.u32 [#allocation2], 4
      %s3408 = int_to_ptr.vmem [resolvable:$true] %s3407
      %3410 = dma.vmem_to_hbm [thread:$0]  %s3408, 16, %s6, [#allocation3]
    $region29: #{dvae_encoder_forward.6} parent=1 // pred_fallthru
      _
    // Predicated region
    $region30: #{dvae_encoder_forward.6} parent=1 // pred_check
      _
    $region31: #{dvae_encoder_forward.6} parent=1 // pred_check_branch
      %3412 = sbr.rel (0) target = $region33
    $region32: #{dvae_encoder_forward.6} parent=1 // pred_region
      _
    $region33: #{dvae_encoder_forward.6} parent=1 // pred_fallthru
      _
    // Predicated region
    $region34: #{dvae_encoder_forward.6} parent=1 // pred_check
      _
    $region35: #{dvae_encoder_forward.6} parent=1 // pred_check_branch
      %3414 = sbr.rel (0) target = $region37
    $region36: #{dvae_encoder_forward.6} parent=1 // pred_region
      %3415 = dma.done [#allocation3], 16
    $region37: #{dvae_encoder_forward.6} parent=1 // pred_fallthru
      _
    %3416 = vsyncpa [#allocation3], 1

// kernel: dvae_encoder_forward.7
$region0: #{dvae_encoder_forward.7}
  #allocation0 [shape = 'u32[]', space=smem, size = 0x4, offset = 0x4, fixed_abs, tag = 'smem constant byte address 0x4 - core index']
  #allocation1 [shape = 'u32[144,128]{1,0:T(1,128)}', space=vmem, size = 0x12000, scoped, tag = 'internal scratch']
  %s0 = inlined_call_operand.vmem [shape: bf16[18,400], index: 0, kind: input, shape index: {}]
  %s1 = inlined_call_operand.vmem [shape: bf16[400,16], index: 1, kind: input, shape index: {}]
  %s2 = inlined_call_operand.vmem [shape: f32[1,16], index: 2, kind: input, shape index: {}]
  %s3 = inlined_call_operand.vmem [shape: f32[1,16], index: 3, kind: input, shape index: {}]
  %s4 = inlined_call_operand.vmem [shape: f32[1,16], index: 4, kind: input, shape index: {}]
  %s5 = inlined_call_operand.vmem [shape: f32[18,16], index: 5, kind: output, shape index: {0}]
  %s6 = inlined_call_operand.hbm [shape: f32[1,16], index: 6, kind: output, shape index: {1}]
  %7 = xla_tuple %s5, %s6
  %s8 = sld [smem:[#allocation0]]
  $region38: #{dvae_encoder_forward.7} parent=0
    _
  %s10 = ssub.s32 1, %s8
  %s11 = scalar_select 0, %s10, %s8
  $region1: #{dvae_encoder_forward.7} parent=0
    #allocation2 [shape = 'u8[512]{0}', space=vmem, size = 0x400, scoped, tag = 'output window, operand 1, single buffered']
    #allocation3 [shape = 's32[1]{0}', space=sflag, size = 0x4, scoped, tag = 'scoped memory for dvae_encoder_forward.7']
    %12 = vsyncpa [#allocation3], 0
    // Predicated region
    $region2: #{dvae_encoder_forward.7} parent=1 // pred_check
      _
    $region3: #{dvae_encoder_forward.7} parent=1 // pred_check_branch
      %14 = sbr.rel (0) target = $region5
    $region4: #{dvae_encoder_forward.7} parent=1 // pred_region
      _
    $region5: #{dvae_encoder_forward.7} parent=1 // pred_fallthru
      _
    // Predicated region
    $region6: #{dvae_encoder_forward.7} parent=1 // pred_check
      _
    $region7: #{dvae_encoder_forward.7} parent=1 // pred_check_branch
      %16 = sbr.rel (0) target = $region9
    $region8: #{dvae_encoder_forward.7} parent=1 // pred_region
      _
    $region9: #{dvae_encoder_forward.7} parent=1 // pred_fallthru
      _
    // Predicated region
    $region10: #{dvae_encoder_forward.7} parent=1 // pred_check
      _
    $region11: #{dvae_encoder_forward.7} parent=1 // pred_check_branch
      %18 = sbr.rel (0) target = $region13
    $region12: #{dvae_encoder_forward.7} parent=1 // pred_region
      _
    $region13: #{dvae_encoder_forward.7} parent=1 // pred_fallthru
      _
    // Predicated region
    $region14: #{dvae_encoder_forward.7} parent=1 // pred_check
      _
    $region15: #{dvae_encoder_forward.7} parent=1 // pred_check_branch
      %20 = sbr.rel (0) target = $region17
    $region16: #{dvae_encoder_forward.7} parent=1 // pred_region
      _
    $region17: #{dvae_encoder_forward.7} parent=1 // pred_fallthru
      _
    // Predicated region
    $region18: #{dvae_encoder_forward.7} parent=1 // pred_check
      _
    $region19: #{dvae_encoder_forward.7} parent=1 // pred_check_branch
      %22 = sbr.rel (0) target = $region21
    $region20: #{dvae_encoder_forward.7} parent=1 // pred_region
      _
    $region21: #{dvae_encoder_forward.7} parent=1 // pred_fallthru
      _
    %v25 = vld [vmem:[%s0] sm:$0xff]
    %v26 = vld [vmem:[%s0 + $0x8] sm:$0xff]
    %v27 = vld [vmem:[%s0 + $0x10] sm:$0xff]
    %v28 = vld [vmem:[%s0 + $0x18] sm:$0xff]
    %v29 = vld [vmem:[%s0 + $0x20] sm:$0x11]
    %v30 = vld [vmem:[%s0 + $0x28] sm:$0x11]
    %vm31 = vcmp.ge.bf16.partialorder %v25, 0
    %vm32 = vcmp.ge.bf16.partialorder %v26, 0
    %vm33 = vcmp.ge.bf16.partialorder %v27, 0
    %vm34 = vcmp.ge.bf16.partialorder %v28, 0
    %vm35 = vcmp.ge.bf16.partialorder %v29, 0
    %vm36 = vcmp.ge.bf16.partialorder %v30, 0
    %v37 = vmul.bf16 %v25, 1009007652
    %v38 = vmul.bf16 %v26, 1009007652
    %v39 = vmul.bf16 %v27, 1009007652
    %v40 = vmul.bf16 %v28, 1009007652
    %v41 = vmul.bf16 %v29, 1009007652
    %v42 = vmul.bf16 %v30, 1009007652
    %v43 = vsel %vm31, %v25, %v37
    %v44 = vsel %vm32, %v26, %v38
    %v45 = vsel %vm33, %v27, %v39
    %v46 = vsel %vm34, %v28, %v40
    %v47 = vsel %vm35, %v29, %v41
    %v48 = vsel %vm36, %v30, %v42
    %v49 = vld [vmem:[%s1] sm:$0xf]
    %v50 = vld [vmem:[%s1 + $0x4] sm:$0xf]
    %v51 = vld [vmem:[%s1 + $0x8] sm:$0xf]
    %v52 = vld [vmem:[%s1 + $0xc] sm:$0xf]
    %v53 = vld [vmem:[%s1 + $0x10] sm:$0xf]
    %v54 = vld [vmem:[%s1 + $0x14] sm:$0xf]
    %v55 = vld [vmem:[%s1 + $0x18] sm:$0xf]
    %v56 = vld [vmem:[%s1 + $0x1c] sm:$0xf]
    %v57 = vld [vmem:[%s1 + $0x20] sm:$0xf]
    %v58 = vld [vmem:[%s1 + $0x24] sm:$0xf]
    %v59 = vld [vmem:[%s1 + $0x28] sm:$0xf]
    %v60 = vld [vmem:[%s1 + $0x2c] sm:$0xf]
    %v61 = vld [vmem:[%s1 + $0x30] sm:$0xf]
    %v62 = vld [vmem:[%s1 + $0x34] sm:$0xf]
    %v63 = vld [vmem:[%s1 + $0x38] sm:$0xf]
    %v64 = vld [vmem:[%s1 + $0x3c] sm:$0xf]
    %v65 = vld [vmem:[%s1 + $0x40] sm:$0xf]
    %v66 = vld [vmem:[%s1 + $0x44] sm:$0xf]
    %v67 = vld [vmem:[%s1 + $0x48] sm:$0xf]
    %v68 = vld [vmem:[%s1 + $0x4c] sm:$0xf]
    %v69 = vld [vmem:[%s1 + $0x50] sm:$0xf]
    %v70 = vld [vmem:[%s1 + $0x54] sm:$0xf]
    %v71 = vld [vmem:[%s1 + $0x58] sm:$0xf]
    %v72 = vld [vmem:[%s1 + $0x5c] sm:$0xf]
    %v73 = vld [vmem:[%s1 + $0x60] sm:$0xf]
    %v74 = vld [vmem:[%s1 + $0x64] sm:$0xf]
    %v75 = vld [vmem:[%s1 + $0x68] sm:$0xf]
    %v76 = vld [vmem:[%s1 + $0x6c] sm:$0xf]
    %v77 = vld [vmem:[%s1 + $0x70] sm:$0xf]
    %v78 = vld [vmem:[%s1 + $0x74] sm:$0xf]
    %v79 = vld [vmem:[%s1 + $0x78] sm:$0xf]
    %v80 = vld [vmem:[%s1 + $0x7c] sm:$0xf]
    %v81 = vld [vmem:[%s1 + $0x80] sm:$0xf]
    %v82 = vld [vmem:[%s1 + $0x84] sm:$0xf]
    %v83 = vld [vmem:[%s1 + $0x88] sm:$0xf]
    %v84 = vld [vmem:[%s1 + $0x8c] sm:$0xf]
    %v85 = vld [vmem:[%s1 + $0x90] sm:$0xf]
    %v86 = vld [vmem:[%s1 + $0x94] sm:$0xf]
    %v87 = vld [vmem:[%s1 + $0x98] sm:$0xf]
    %v88 = vld [vmem:[%s1 + $0x9c] sm:$0xf]
    %v89 = vld [vmem:[%s1 + $0xa0] sm:$0xf]
    %v90 = vld [vmem:[%s1 + $0xa4] sm:$0xf]
    %v91 = vld [vmem:[%s1 + $0xa8] sm:$0xf]
    %v92 = vld [vmem:[%s1 + $0xac] sm:$0xf]
    %v93 = vld [vmem:[%s1 + $0xb0] sm:$0xf]
    %v94 = vld [vmem:[%s1 + $0xb4] sm:$0xf]
    %v95 = vld [vmem:[%s1 + $0xb8] sm:$0xf]
    %v96 = vld [vmem:[%s1 + $0xbc] sm:$0xf]
    %v97 = vld [vmem:[%s1 + $0xc0] sm:$0xf]
    %v98 = vld [vmem:[%s1 + $0xc4] sm:$0xf]
    %v99 = vld [vmem:[%s2] sm:$0x1]
    %v101 = vlaneseq
    %v102 = vshrl.u32 %v101, 7
    %v103 = vsub.s32 0, %v102
    %v104 = vrot.slane %v99, %v103
    %v112 = vunpack.c.l.b16 %v43
    %v113 = vunpack.c.h.b16 %v43
    %v114 = vunpack.c.l.b16 %v44
    %v115 = vunpack.c.h.b16 %v44
    %v116 = vunpack.c.l.b16 %v45
    %v117 = vunpack.c.h.b16 %v45
    %v118 = vunpack.c.l.b16 %v46
    %v119 = vunpack.c.h.b16 %v46
    %v120 = vunpack.c.l.b16 %v47
    %v121 = vunpack.c.h.b16 %v47
    %v122 = vunpack.c.l.b16 %v48
    %v123 = vunpack.c.h.b16 %v48
    %v124 = vpack.c.b16 %v116, %v112
    %v125 = vpack.c.b16 %v117, %v113
    %v126 = vpack.c.b16 %v118, %v114
    %v127 = vpack.c.b16 %v119, %v115
    %v128 = vpack.c.b16 %v120, %v120
    %v129 = vpack.c.b16 %v121, %v121
    %v130 = vpack.c.b16 %v122, %v122
    %v131 = vpack.c.b16 %v123, %v123
    %v188 = vunpack.c.l.b16 %v49
    %v189 = vunpack.c.l.b16 %v50
    %v190 = vunpack.c.l.b16 %v51
    %v191 = vunpack.c.l.b16 %v52
    %v192 = vunpack.c.l.b16 %v53
    %v193 = vunpack.c.l.b16 %v54
    %v194 = vunpack.c.l.b16 %v55
    %v195 = vunpack.c.l.b16 %v56
    %v196 = vunpack.c.l.b16 %v57
    %v197 = vunpack.c.l.b16 %v58
    %v198 = vunpack.c.l.b16 %v59
    %v199 = vunpack.c.l.b16 %v60
    %v200 = vunpack.c.l.b16 %v61
    %v201 = vunpack.c.l.b16 %v62
    %v202 = vunpack.c.l.b16 %v63
    %v203 = vunpack.c.l.b16 %v64
    %v204 = vunpack.c.l.b16 %v65
    %v205 = vunpack.c.l.b16 %v66
    %v206 = vunpack.c.l.b16 %v67
    %v207 = vunpack.c.l.b16 %v68
    %v208 = vunpack.c.l.b16 %v69
    %v209 = vunpack.c.l.b16 %v70
    %v210 = vunpack.c.l.b16 %v71
    %v211 = vunpack.c.l.b16 %v72
    %v212 = vunpack.c.l.b16 %v73
    %v213 = vunpack.c.l.b16 %v74
    %v214 = vunpack.c.l.b16 %v75
    %v215 = vunpack.c.l.b16 %v76
    %v216 = vunpack.c.l.b16 %v77
    %v217 = vunpack.c.l.b16 %v78
    %v218 = vunpack.c.l.b16 %v79
    %v219 = vunpack.c.l.b16 %v80
    %v220 = vunpack.c.l.b16 %v81
    %v221 = vunpack.c.l.b16 %v82
    %v222 = vunpack.c.l.b16 %v83
    %v223 = vunpack.c.l.b16 %v84
    %v224 = vunpack.c.l.b16 %v85
    %v225 = vunpack.c.l.b16 %v86
    %v226 = vunpack.c.l.b16 %v87
    %v227 = vunpack.c.l.b16 %v88
    %v228 = vunpack.c.l.b16 %v89
    %v229 = vunpack.c.l.b16 %v90
    %v230 = vunpack.c.l.b16 %v91
    %v231 = vunpack.c.l.b16 %v92
    %v232 = vunpack.c.l.b16 %v93
    %v233 = vunpack.c.l.b16 %v94
    %v234 = vunpack.c.l.b16 %v95
    %v235 = vunpack.c.l.b16 %v96
    %v236 = vunpack.c.l.b16 %v97
    %v237 = vunpack.c.l.b16 %v98
    %v238 = vpack.c.b16 %v189, %v188
    %v239 = vpack.c.b16 %v191, %v190
    %v240 = vpack.c.b16 %v193, %v192
    %v241 = vpack.c.b16 %v195, %v194
    %v242 = vpack.c.b16 %v197, %v196
    %v243 = vpack.c.b16 %v199, %v198
    %v244 = vpack.c.b16 %v201, %v200
    %v245 = vpack.c.b16 %v203, %v202
    %v246 = vpack.c.b16 %v205, %v204
    %v247 = vpack.c.b16 %v207, %v206
    %v248 = vpack.c.b16 %v209, %v208
    %v249 = vpack.c.b16 %v211, %v210
    %v250 = vpack.c.b16 %v213, %v212
    %v251 = vpack.c.b16 %v215, %v214
    %v252 = vpack.c.b16 %v217, %v216
    %v253 = vpack.c.b16 %v219, %v218
    %v254 = vpack.c.b16 %v221, %v220
    %v255 = vpack.c.b16 %v223, %v222
    %v256 = vpack.c.b16 %v225, %v224
    %v257 = vpack.c.b16 %v227, %v226
    %v258 = vpack.c.b16 %v229, %v228
    %v259 = vpack.c.b16 %v231, %v230
    %v260 = vpack.c.b16 %v233, %v232
    %v261 = vpack.c.b16 %v235, %v234
    %v262 = vpack.c.b16 %v237, %v236
    %vm288 = vcmask 130048
    %v290 = vsel %vm288, %v127, 0
    %v293 = vsel %vm288, %v131, 0
    %295 = vmatprep.subr.bf16.mxu0 0
    %296 = vmatpush1.bf16.msra.mxu0 %v245
    %297 = vmatprep.subr.bf16.mxu0 0
    %298 = vmatpush1.bf16.msra.mxu0 %v244
    %299 = vmatprep.subr.bf16.mxu0 0
    %300 = vmatpush1.bf16.msra.mxu0 %v243
    %301 = vmatprep.subr.bf16.mxu0 0
    %302 = vmatpush1.bf16.msra.mxu0 %v242
    %303 = vmatprep.subr.bf16.mxu0 0
    %304 = vmatpush1.bf16.msra.mxu0 %v241
    %305 = vmatprep.subr.bf16.mxu0 0
    %306 = vmatpush1.bf16.msra.mxu0 %v240
    %307 = vmatprep.subr.bf16.mxu0 0
    %308 = vmatpush1.bf16.msra.mxu0 %v239
    %309 = vmatprep.subr.bf16.mxu0 0
    %310 = vmatpush1.bf16.msra.mxu0 %v238
    %311 = vmatprep.subr.bf16.mxu0 0
    %312 = vmatpush2.bf16.msra.mxu0 %v253
    %313 = vmatprep.subr.bf16.mxu0 0
    %314 = vmatpush2.bf16.msra.mxu0 %v252
    %315 = vmatprep.subr.bf16.mxu0 0
    %316 = vmatpush2.bf16.msra.mxu0 %v251
    %317 = vmatprep.subr.bf16.mxu0 0
    %318 = vmatpush2.bf16.msra.mxu0 %v250
    %319 = vmatprep.subr.bf16.mxu0 0
    %320 = vmatpush2.bf16.msra.mxu0 %v249
    %321 = vmatprep.subr.bf16.mxu0 0
    %322 = vmatpush2.bf16.msra.mxu0 %v248
    %323 = vmatprep.subr.bf16.mxu0 0
    %324 = vmatpush2.bf16.msra.mxu0 %v247
    %325 = vmatprep.subr.bf16.mxu0 0
    %326 = vmatpush2.bf16.msra.mxu0 %v246
    %327 = vmatprep.mubr.bf16.mxu0 %v125
    %328 = vmatmul.mubr.bf16.gmra.mxu0 %v124
    %v329 = vpop.f32.mrf.mxu0
    %v330 = vadd.f32 %v104, %v329
    %v331 = vpop.f32.mrf.mxu0
    %v332 = vpop.f32.mrf.mxu0
    %v333 = vadd.f32 %v104, %v332
    %v334 = vpop.f32.mrf.mxu0
    %335 = vmatprep.mubr.bf16.mxu0 %v129
    %336 = vmatmul.mubr.bf16.gmra.mxu0 %v128
    %v337 = vpop.f32.mrf.mxu0
    %v338 = vadd.f32 %v104, %v337
    %v339 = vpop.f32.mrf.mxu0
    %v340 = vpop.f32.mrf.mxu0
    %v341 = vpop.f32.mrf.mxu0
    %342 = vdwg.mxu0
    %343 = vmatprep.subr.bf16.mxu0 0
    %344 = vmatpush1.bf16.msra.mxu0 %v261
    %345 = vmatprep.subr.bf16.mxu0 0
    %346 = vmatpush1.bf16.msra.mxu0 %v260
    %347 = vmatprep.subr.bf16.mxu0 0
    %348 = vmatpush1.bf16.msra.mxu0 %v259
    %349 = vmatprep.subr.bf16.mxu0 0
    %350 = vmatpush1.bf16.msra.mxu0 %v258
    %351 = vmatprep.subr.bf16.mxu0 0
    %352 = vmatpush1.bf16.msra.mxu0 %v257
    %353 = vmatprep.subr.bf16.mxu0 0
    %354 = vmatpush1.bf16.msra.mxu0 %v256
    %355 = vmatprep.subr.bf16.mxu0 0
    %356 = vmatpush1.bf16.msra.mxu0 %v255
    %357 = vmatprep.subr.bf16.mxu0 0
    %358 = vmatpush1.bf16.msra.mxu0 %v254
    %359 = vmatprep.subr.bf16.mxu0 0
    %360 = vmatpush2.bf16.msra.mxu0 0
    %361 = vmatprep.subr.bf16.mxu0 0
    %362 = vmatpush2.bf16.msra.mxu0 0
    %363 = vmatprep.subr.bf16.mxu0 0
    %364 = vmatpush2.bf16.msra.mxu0 0
    %365 = vmatprep.subr.bf16.mxu0 0
    %366 = vmatpush2.bf16.msra.mxu0 0
    %367 = vmatprep.subr.bf16.mxu0 0
    %368 = vmatpush2.bf16.msra.mxu0 0
    %369 = vmatprep.subr.bf16.mxu0 0
    %370 = vmatpush2.bf16.msra.mxu0 0
    %371 = vmatprep.subr.bf16.mxu0 0
    %372 = vmatpush2.bf16.msra.mxu0 0
    %373 = vmatprep.subr.bf16.mxu0 0
    %374 = vmatpush2.bf16.msra.mxu0 %v262
    %375 = vmatprep.mubr.bf16.mxu0 %v290
    %376 = vmatmul.mubr.bf16.gmra.mxu0 %v126
    %v377 = vpop.f32.mrf.mxu0
    %v378 = vadd.f32 %v330, %v377
    %v379 = vpop.f32.mrf.mxu0
    %v380 = vpop.f32.mrf.mxu0
    %v381 = vadd.f32 %v333, %v380
    %v382 = vpop.f32.mrf.mxu0
    %383 = vmatprep.mubr.bf16.mxu0 %v293
    %384 = vmatmul.mubr.bf16.gmra.mxu0 %v130
    %v385 = vpop.f32.mrf.mxu0
    %v386 = vadd.f32 %v338, %v385
    %v387 = vpop.f32.mrf.mxu0
    %v388 = vpop.f32.mrf.mxu0
    %v389 = vpop.f32.mrf.mxu0
    %390 = vdwg.mxu0
    %v391 = vsel %vm288, %v378, 0.0
    %v392 = vsel %vm288, %v381, 0.0
    %v393 = vadd.f32 %v391, %v392
    %vm394 = vcmask 123904
    %v395 = vsel %vm394, %v386, 0.0
    %v396 = vadd.f32 %v393, %v395
    %v397 = vrot.slane %v396, 4
    %v398 = vadd.f32 %v396, %v397
    %v399 = vrot.slane %v398, 2
    %v400 = vadd.f32 %v398, %v399
    %v401 = vrot.slane %v400, 1
    %v402 = vadd.f32 %v400, %v401
    %v403 = vmul.f32 %v378, %v378
    %v404 = vmul.f32 %v381, %v381
    %v405 = vmul.f32 %v386, %v386
    %v406 = vsel %vm288, %v403, 0.0
    %v407 = vsel %vm288, %v404, 0.0
    %v408 = vadd.f32 %v406, %v407
    %v409 = vsel %vm394, %v405, 0.0
    %v410 = vadd.f32 %v408, %v409
    %v411 = vrot.slane %v410, 4
    %v412 = vadd.f32 %v410, %v411
    %v413 = vrot.slane %v412, 2
    %v414 = vadd.f32 %v412, %v413
    %v415 = vrot.slane %v414, 1
    %v416 = vadd.f32 %v414, %v415
    %v417 = vmul.f32 %v402, 0.055555556
    %v418 = vmul.f32 %v416, 0.055555556
    %v419 = vmul.f32 %v417, %v417
    %v420 = vsub.f32 %v418, %v419
    %v421 = vmax.f32 %v420, 0.0
    %v422 = vadd.f32 %v421, 1e-05
    %v423 = vrsqrt.pop %v422
    %v424 = vld [vmem:[%s3] sm:$0x1]
    %v425 = vmul.f32 %v423, %v424
    %v426 = vld [vmem:[%s4] sm:$0x1]
    %v427 = vmul.f32 %v417, %v425
    %v428 = vsub.f32 %v426, %v427
    %v429 = vlaneseq
    %v430 = vshrl.u32 %v429, 7
    %v431 = vsub.s32 0, %v430
    %v432 = vrot.slane %v425, %v431
    %v433 = vmul.f32 %v378, %v432
    %v434 = vmul.f32 %v381, %v432
    %v435 = vmul.f32 %v386, %v432
    %v437 = vlaneseq
    %v438 = vshrl.u32 %v437, 7
    %v439 = vsub.s32 0, %v438
    %v440 = vrot.slane %v428, %v439
    %v442 = vadd.f32 %v433, %v440
    %v443 = vadd.f32 %v434, %v440
    %v444 = vadd.f32 %v435, %v440
    %445 = vst.msk [vmem:[%s5] sm:$0xff] %vm288, %v442
    %446 = vst.msk [vmem:[%s5 + $0x8] sm:$0xff] %vm288, %v443
    %447 = vst.msk [vmem:[%s5 + $0x10] sm:$0x3] %vm394, %v444
    %vm448 = vcmask 122880
    %449 = vst.msk [vmem:[#allocation2] sm:$0x1] %vm448, %v428
    // Predicated region
    $region22: #{dvae_encoder_forward.7} parent=1 // pred_check
      _
    $region23: #{dvae_encoder_forward.7} parent=1 // pred_check_branch
      %451 = sbr.rel (0) target = $region25
    $region24: #{dvae_encoder_forward.7} parent=1 // pred_region
      _
    $region25: #{dvae_encoder_forward.7} parent=1 // pred_fallthru
      _
    // Predicated region
    $region26: #{dvae_encoder_forward.7} parent=1 // pred_check
      _
    $region27: #{dvae_encoder_forward.7} parent=1 // pred_check_branch
      %453 = sbr.rel (0) target = $region29
    $region28: #{dvae_encoder_forward.7} parent=1 // pred_region
      %s455 = ssub.s32 16, 16
      %456 = vsyncadd [#allocation3], %s455
      %s458 = sshll.u32 [#allocation2], 4
      %s459 = int_to_ptr.vmem [resolvable:$true] %s458
      %461 = dma.vmem_to_hbm [thread:$0]  %s459, 16, %s6, [#allocation3]
    $region29: #{dvae_encoder_forward.7} parent=1 // pred_fallthru
      _
    // Predicated region
    $region30: #{dvae_encoder_forward.7} parent=1 // pred_check
      _
    $region31: #{dvae_encoder_forward.7} parent=1 // pred_check_branch
      %463 = sbr.rel (0) target = $region33
    $region32: #{dvae_encoder_forward.7} parent=1 // pred_region
      _
    $region33: #{dvae_encoder_forward.7} parent=1 // pred_fallthru
      _
    // Predicated region
    $region34: #{dvae_encoder_forward.7} parent=1 // pred_check
      _
    $region35: #{dvae_encoder_forward.7} parent=1 // pred_check_branch
      %465 = sbr.rel (0) target = $region37
    $region36: #{dvae_encoder_forward.7} parent=1 // pred_region
      %466 = dma.done [#allocation3], 16
    $region37: #{dvae_encoder_forward.7} parent=1 // pred_fallthru
      _
    %467 = vsyncpa [#allocation3], 1

</llo_original>
